<compile_context>
chip_gen: v7x
topology: tpu7x:2x2x1
jax: 0.10.0
libtpu: 0.0.40
codegen_flags: <defaults>
</compile_context>

<pallas_src>
import functools

import jax
import jax.numpy as jnp
import numpy as np
from jax.experimental import pallas as pl
from jax.experimental.pallas import tpu as pltpu


def _round_up(v, m):
    return ((v + m - 1) // m) * m


def _vmem_limit_bytes():
    """Generation-aware scoped-VMEM limit: leave headroom on v7x (64 MiB)."""
    try:
        vmem = getattr(pltpu.get_tpu_info(), "vmem_capacity_bytes", None)
    except Exception:
        vmem = None
    if vmem is not None and vmem <= 64 * 1024 * 1024:
        return 40 * 1024 * 1024          # v7x
    return 48 * 1024 * 1024              # v5e / v6e (128 MiB physical)


def _pick_tm(cin, cout, mps, span, vmem_budget_bytes):
    """M-tile from a VMEM budget (bytes per output column), not a fixed cap."""
    per_col = 2 * (2 * cin * 2)          # x_cur + x_next blocks, double-buffered, bf16
    per_col += 2 * (cout * 4)            # output block, double-buffered, f32
    per_col += 2 * cin * 2               # in-kernel (Cin, 2*TM) bf16 concat value
    per_col += 2 * cout * 4              # f32 accumulator + matmul result
    tm = (vmem_budget_bytes // max(per_col, 1)) // 128 * 128
    # Keep the f32 accumulator small enough to live in vregs / cheap VMEM.
    acc_cap = max(128, ((512 * 1024) // (4 * cout)) // 128 * 128)
    tm = min(tm, 4096, acc_cap)
    tm = min(tm, _round_up(mps, 128))    # no point tiling beyond one padded sample
    tm = max(tm, _round_up(span, 128), 128)   # halo must fit inside the neighbour block
    return int(tm)


def _conv3d_taps_kernel(x_cur_ref, x_nxt_ref, w_ref, b_ref, o_ref, *, offsets):
    """One (task, sample, M-block) step.

    x_cur_ref / x_nxt_ref: (Cin, TM) bf16 — current + next lane-block of the
                           per-sample flattened, zero-padded activations (halo).
    w_ref: (KK, Cout, Cin) bf16 masked filters (invariant over sample / M axes).
    b_ref: (Cout, 1)       f32 masked bias.
    o_ref: (Cout, TM)      lane-dense output block on the padded spatial grid.
    """
    tm = o_ref.shape[-1]
    # Halo'd view of the activations: columns [0, 2*TM) of this sample.
    xcat = jnp.concatenate([x_cur_ref[...], x_nxt_ref[...]], axis=-1)   # (Cin, 2*TM)
    acc = None
    for tap, off in enumerate(offsets):            # static Python loop over KK taps
        piece = xcat[:, off:off + tm]              # static lane-offset slice (tap window)
        part = jnp.dot(w_ref[tap], piece, preferred_element_type=jnp.float32)
        acc = part if acc is None else acc + part
    o_ref[...] = (acc + b_ref[...]).astype(o_ref.dtype)


@functools.partial(jax.jit, static_argnames=("out_dtype",))
def _forward(x, w, w_mask, b, b_mask, out_dtype=jnp.float32):
    """x: (T, N, Cin, D, H, W); w/w_mask: (T, Cout, Cin, Kd, Kh, Kw); b/b_mask: (T, Cout)."""
    T, N, Cin, D, H, W = x.shape
    _, Cout, _, Kd, Kh, Kw = w.shape
    KK = Kd * Kh * Kw

    # 'same' padding for stride 1 (torch: low = (K-1)//2, extra pad on the high side).
    # TODO(synk): strides != 1 and integer-padding variants of the module are not implemented.
    pd, ph, pw = (Kd - 1) // 2, (Kh - 1) // 2, (Kw - 1) // 2
    Dp, Hp, Wp = D + Kd - 1, H + Kh - 1, W + Kw - 1
    MPs = Dp * Hp * Wp                                        # padded spatial size per sample
    SPAN = (Kd - 1) * Hp * Wp + (Kh - 1) * Wp + (Kw - 1)      # largest tap lane shift

    vmem_limit = _vmem_limit_bytes()
    TM = _pick_tm(Cin, Cout, MPs, SPAN, vmem_limit // 2)
    assert SPAN <= TM, "tap halo must fit inside one neighbouring M-block"
    n_mb = _round_up(MPs, TM) // TM
    LEN = (n_mb + 1) * TM          # +1 zero block so the halo (m+1) fetch is always in range

    # Stage activations ONCE: bf16 (documented precision choice), spatially padded,
    # flattened per sample.  NCDHW means no transpose is needed for the flatten.
    xb = x.astype(jnp.bfloat16)
    xb = jnp.pad(xb, ((0, 0), (0, 0), (0, 0),
                      (pd, Kd - 1 - pd), (ph, Kh - 1 - ph), (pw, Kw - 1 - pw)))
    x_flat = xb.reshape(T, N, Cin, MPs)
    x_flat = jnp.pad(x_flat, ((0, 0), (0, 0), (0, 0), (0, LEN - MPs)))

    # Masked filters, tap-major: (T, KK, Cout, Cin) bf16.  Masked bias stays f32.
    w_eff = (w * w_mask).transpose(0, 3, 4, 5, 1, 2).reshape(T, KK, Cout, Cin)
    w_eff = w_eff.astype(jnp.bfloat16)
    b_eff = (b * b_mask).astype(jnp.float32).reshape(T, Cout, 1)

    # Constant lane shift of each tap on the padded grid (same order as w_eff's KK axis).
    offsets = tuple(kd * Hp * Wp + kh * Wp + kw
                    for kd in range(Kd) for kh in range(Kh) for kw in range(Kw))

    kernel = functools.partial(_conv3d_taps_kernel, offsets=offsets)
    out = pl.pallas_call(
        kernel,
        out_shape=jax.ShapeDtypeStruct((T, N, Cout, n_mb * TM), out_dtype),
        grid=(T, N, n_mb),   # T*N*n_mb >= 2 parallel steps keeps both v7x cores busy
        in_specs=[
            pl.BlockSpec((None, None, Cin, TM), lambda t, n, m: (t, n, 0, m)),      # current block
            pl.BlockSpec((None, None, Cin, TM), lambda t, n, m: (t, n, 0, m + 1)),  # halo block
            pl.BlockSpec((None, KK, Cout, Cin), lambda t, n, m: (t, 0, 0, 0)),      # filters
            pl.BlockSpec((None, Cout, 1), lambda t, n, m: (t, 0, 0)),               # bias
        ],
        out_specs=pl.BlockSpec((None, None, Cout, TM), lambda t, n, m: (t, n, 0, m)),
        compiler_params=pltpu.CompilerParams(
            dimension_semantics=("parallel", "parallel", "parallel"),
            vmem_limit_bytes=vmem_limit,
        ),
    )(x_flat, x_flat, w_eff, b_eff)

    # Valid outputs live at padded-grid coords (d < D, h < H, w < W): strided slice,
    # already (T, N, Cout, ...) so no N<->Cout transpose is needed.
    out = out[..., :MPs].reshape(T, N, Cout, Dp, Hp, Wp)[..., :D, :H, :W]
    return out


def multi_masked_conv3d(inputs, w, w_mask, b, b_mask, out_dtype=jnp.float32):
    """Forward of beyondml MultiMaskedConv3D (padding='same', stride 1).

    inputs: list (len = num_tasks) of (N, Cin, D, H, W) arrays.
    w, w_mask: (T, Cout, Cin, Kd, Kh, Kw);  b, b_mask: (T, Cout).
    Returns a list of (N, Cout, D, H, W) arrays.
    """
    x = jnp.stack([jnp.asarray(t) for t in inputs])
    out = _forward(x, w, w_mask, b, b_mask, out_dtype=out_dtype)
    return [out[i] for i in range(out.shape[0])]


if __name__ == "__main__":
    key = jax.random.PRNGKey(0)
    num_tasks, N, Cin, Cout = 2, 2, 4, 8
    D = H = W = 8
    K = 3

    kw_key, kx_key = jax.random.split(key)

    # Deterministic synthetic init mimicking kaiming_normal_(a=sqrt(5)) on a
    # (T, Cout, Cin, K, K, K) tensor: fan_in = Cout * Cin * K^3, gain = sqrt(2/(1+5)).
    fan_in = Cout * Cin * K * K * K
    gain = np.sqrt(2.0 / (1.0 + 5.0))
    std = gain / np.sqrt(fan_in)
    w = std * jax.random.normal(kw_key, (num_tasks, Cout, Cin, K, K, K), jnp.float32)
    w_mask = jnp.ones_like(w)
    b = jnp.zeros((num_tasks, Cout), jnp.float32)      # torch init: zeros
    b_mask = jnp.ones_like(b)

    xkeys = jax.random.split(kx_key, num_tasks)
    inputs = [
        jax.random.normal(xkeys[i], (N, Cin, D, H, W), jnp.float32)
        for i in range(num_tasks)
    ]

    outs = multi_masked_conv3d(inputs, w, w_mask, b, b_mask)
    outs = [jax.block_until_ready(o) for o in outs]

    # Reference check: same bf16-quantized operands, true f32 accumulation.
    ok = True
    for i in range(num_tasks):
        x_q = inputs[i].astype(jnp.bfloat16).astype(jnp.float32)
        w_q = (w[i] * w_mask[i]).astype(jnp.bfloat16).astype(jnp.float32)
        ref = jax.lax.conv_general_dilated(
            x_q, w_q,
            window_strides=(1, 1, 1), padding="SAME",
            dimension_numbers=("NCDHW", "OIDHW", "NCDHW"),
            precision=jax.lax.Precision.HIGHEST)
        ref = ref + (b[i] * b_mask[i])[None, :, None, None, None]
        ok = ok and bool(jnp.allclose(outs[i], ref, atol=1e-4, rtol=1e-4))
    if not ok:
        raise SystemExit("mismatch vs reference")
    print("KERNEL_OK")
</pallas_src>

<mosaic_0001>
module attributes {stable_mosaic.version = 11 : i64} {
  func.func @_conv3d_taps_kernel(%arg0: i32, %arg1: i32, %arg2: i32, %arg3: memref<1x1x4x1024xbf16, #tpu.memory_space<vmem>>, %arg4: memref<1x1x4x1024xbf16, #tpu.memory_space<vmem>>, %arg5: memref<1x27x8x4xbf16, #tpu.memory_space<vmem>>, %arg6: memref<1x8x1xf32, #tpu.memory_space<vmem>>, %arg7: memref<1x1x8x1024xf32, #tpu.memory_space<vmem>>) attributes {dimension_semantics = [#tpu.dimension_semantics<parallel>, #tpu.dimension_semantics<parallel>, #tpu.dimension_semantics<parallel>], iteration_bounds = array<i64: 2, 2, 1>, scalar_prefetch = 0 : i64, scratch_operands = 0 : i64, tpu.core_type = #tpu.core_type<tc>, window_params = [{transform_indices = @transform_0, window_bounds = array<i64: 1, 1, 4, 1024>}, {transform_indices = @transform_1, window_bounds = array<i64: 1, 1, 4, 1024>}, {transform_indices = @transform_2, window_bounds = array<i64: 1, 27, 8, 4>}, {transform_indices = @transform_3, window_bounds = array<i64: 1, 8, 1>}, {transform_indices = @transform_4, window_bounds = array<i64: 1, 1, 8, 1024>}]} {
    %c0 = arith.constant 0 : index
    %c0_0 = arith.constant 0 : index
    %c0_1 = arith.constant 0 : index
    %c0_2 = arith.constant 0 : index
    %0 = vector.load %arg3[%c0, %c0_0, %c0_1, %c0_2] : memref<1x1x4x1024xbf16, #tpu.memory_space<vmem>>, vector<1x1x4x1024xbf16>
    %1 = vector.shape_cast %0 : vector<1x1x4x1024xbf16> to vector<4x1024xbf16>
    %c0_3 = arith.constant 0 : index
    %c0_4 = arith.constant 0 : index
    %c0_5 = arith.constant 0 : index
    %c0_6 = arith.constant 0 : index
    %2 = vector.load %arg4[%c0_3, %c0_4, %c0_5, %c0_6] : memref<1x1x4x1024xbf16, #tpu.memory_space<vmem>>, vector<1x1x4x1024xbf16>
    %3 = vector.shape_cast %2 : vector<1x1x4x1024xbf16> to vector<4x1024xbf16>
    %4 = tpu.concatenate %1, %3 in 1 : vector<4x1024xbf16>, vector<4x1024xbf16> -> vector<4x2048xbf16>
    %5 = vector.extract_strided_slice %4 {offsets = [0, 0], sizes = [4, 1024], strides = [1, 1]} : vector<4x2048xbf16> to vector<4x1024xbf16>
    %c0_7 = arith.constant 0 : index
    %c0_8 = arith.constant 0 : index
    %c0_9 = arith.constant 0 : index
    %c0_10 = arith.constant 0 : index
    %6 = vector.load %arg5[%c0_7, %c0_8, %c0_9, %c0_10] : memref<1x27x8x4xbf16, #tpu.memory_space<vmem>>, vector<1x1x8x4xbf16>
    %7 = vector.shape_cast %6 : vector<1x1x8x4xbf16> to vector<8x4xbf16>
    %cst = arith.constant dense<0.000000e+00> : vector<8x1024xf32>
    %8 = tpu.matmul %7, %5, %cst {dimension_numbers = #tpu.dot_dimension_numbers<[1], [0], [0], [1], [0, 0, 1, 1], [], []>} : vector<8x4xbf16>, vector<4x1024xbf16>, vector<8x1024xf32> -> vector<8x1024xf32>
    %9 = vector.extract_strided_slice %4 {offsets = [0, 1], sizes = [4, 1024], strides = [1, 1]} : vector<4x2048xbf16> to vector<4x1024xbf16>
    %c0_11 = arith.constant 0 : index
    %c1 = arith.constant 1 : index
    %c0_12 = arith.constant 0 : index
    %c0_13 = arith.constant 0 : index
    %10 = vector.load %arg5[%c0_11, %c1, %c0_12, %c0_13] : memref<1x27x8x4xbf16, #tpu.memory_space<vmem>>, vector<1x1x8x4xbf16>
    %11 = vector.shape_cast %10 : vector<1x1x8x4xbf16> to vector<8x4xbf16>
    %cst_14 = arith.constant dense<0.000000e+00> : vector<8x1024xf32>
    %12 = tpu.matmul %11, %9, %cst_14 {dimension_numbers = #tpu.dot_dimension_numbers<[1], [0], [0], [1], [0, 0, 1, 1], [], []>} : vector<8x4xbf16>, vector<4x1024xbf16>, vector<8x1024xf32> -> vector<8x1024xf32>
    %13 = arith.addf %8, %12 : vector<8x1024xf32>
    %14 = vector.extract_strided_slice %4 {offsets = [0, 2], sizes = [4, 1024], strides = [1, 1]} : vector<4x2048xbf16> to vector<4x1024xbf16>
    %c0_15 = arith.constant 0 : index
    %c2 = arith.constant 2 : index
    %c0_16 = arith.constant 0 : index
    %c0_17 = arith.constant 0 : index
    %15 = vector.load %arg5[%c0_15, %c2, %c0_16, %c0_17] : memref<1x27x8x4xbf16, #tpu.memory_space<vmem>>, vector<1x1x8x4xbf16>
    %16 = vector.shape_cast %15 : vector<1x1x8x4xbf16> to vector<8x4xbf16>
    %cst_18 = arith.constant dense<0.000000e+00> : vector<8x1024xf32>
    %17 = tpu.matmul %16, %14, %cst_18 {dimension_numbers = #tpu.dot_dimension_numbers<[1], [0], [0], [1], [0, 0, 1, 1], [], []>} : vector<8x4xbf16>, vector<4x1024xbf16>, vector<8x1024xf32> -> vector<8x1024xf32>
    %18 = arith.addf %13, %17 : vector<8x1024xf32>
    %19 = vector.extract_strided_slice %4 {offsets = [0, 10], sizes = [4, 1024], strides = [1, 1]} : vector<4x2048xbf16> to vector<4x1024xbf16>
    %c0_19 = arith.constant 0 : index
    %c3 = arith.constant 3 : index
    %c0_20 = arith.constant 0 : index
    %c0_21 = arith.constant 0 : index
    %20 = vector.load %arg5[%c0_19, %c3, %c0_20, %c0_21] : memref<1x27x8x4xbf16, #tpu.memory_space<vmem>>, vector<1x1x8x4xbf16>
    %21 = vector.shape_cast %20 : vector<1x1x8x4xbf16> to vector<8x4xbf16>
    %cst_22 = arith.constant dense<0.000000e+00> : vector<8x1024xf32>
    %22 = tpu.matmul %21, %19, %cst_22 {dimension_numbers = #tpu.dot_dimension_numbers<[1], [0], [0], [1], [0, 0, 1, 1], [], []>} : vector<8x4xbf16>, vector<4x1024xbf16>, vector<8x1024xf32> -> vector<8x1024xf32>
    %23 = arith.addf %18, %22 : vector<8x1024xf32>
    %24 = vector.extract_strided_slice %4 {offsets = [0, 11], sizes = [4, 1024], strides = [1, 1]} : vector<4x2048xbf16> to vector<4x1024xbf16>
    %c0_23 = arith.constant 0 : index
    %c4 = arith.constant 4 : index
    %c0_24 = arith.constant 0 : index
    %c0_25 = arith.constant 0 : index
    %25 = vector.load %arg5[%c0_23, %c4, %c0_24, %c0_25] : memref<1x27x8x4xbf16, #tpu.memory_space<vmem>>, vector<1x1x8x4xbf16>
    %26 = vector.shape_cast %25 : vector<1x1x8x4xbf16> to vector<8x4xbf16>
    %cst_26 = arith.constant dense<0.000000e+00> : vector<8x1024xf32>
    %27 = tpu.matmul %26, %24, %cst_26 {dimension_numbers = #tpu.dot_dimension_numbers<[1], [0], [0], [1], [0, 0, 1, 1], [], []>} : vector<8x4xbf16>, vector<4x1024xbf16>, vector<8x1024xf32> -> vector<8x1024xf32>
    %28 = arith.addf %23, %27 : vector<8x1024xf32>
    %29 = vector.extract_strided_slice %4 {offsets = [0, 12], sizes = [4, 1024], strides = [1, 1]} : vector<4x2048xbf16> to vector<4x1024xbf16>
    %c0_27 = arith.constant 0 : index
    %c5 = arith.constant 5 : index
    %c0_28 = arith.constant 0 : index
    %c0_29 = arith.constant 0 : index
    %30 = vector.load %arg5[%c0_27, %c5, %c0_28, %c0_29] : memref<1x27x8x4xbf16, #tpu.memory_space<vmem>>, vector<1x1x8x4xbf16>
    %31 = vector.shape_cast %30 : vector<1x1x8x4xbf16> to vector<8x4xbf16>
    %cst_30 = arith.constant dense<0.000000e+00> : vector<8x1024xf32>
    %32 = tpu.matmul %31, %29, %cst_30 {dimension_numbers = #tpu.dot_dimension_numbers<[1], [0], [0], [1], [0, 0, 1, 1], [], []>} : vector<8x4xbf16>, vector<4x1024xbf16>, vector<8x1024xf32> -> vector<8x1024xf32>
    %33 = arith.addf %28, %32 : vector<8x1024xf32>
    %34 = vector.extract_strided_slice %4 {offsets = [0, 20], sizes = [4, 1024], strides = [1, 1]} : vector<4x2048xbf16> to vector<4x1024xbf16>
    %c0_31 = arith.constant 0 : index
    %c6 = arith.constant 6 : index
    %c0_32 = arith.constant 0 : index
    %c0_33 = arith.constant 0 : index
    %35 = vector.load %arg5[%c0_31, %c6, %c0_32, %c0_33] : memref<1x27x8x4xbf16, #tpu.memory_space<vmem>>, vector<1x1x8x4xbf16>
    %36 = vector.shape_cast %35 : vector<1x1x8x4xbf16> to vector<8x4xbf16>
    %cst_34 = arith.constant dense<0.000000e+00> : vector<8x1024xf32>
    %37 = tpu.matmul %36, %34, %cst_34 {dimension_numbers = #tpu.dot_dimension_numbers<[1], [0], [0], [1], [0, 0, 1, 1], [], []>} : vector<8x4xbf16>, vector<4x1024xbf16>, vector<8x1024xf32> -> vector<8x1024xf32>
    %38 = arith.addf %33, %37 : vector<8x1024xf32>
    %39 = vector.extract_strided_slice %4 {offsets = [0, 21], sizes = [4, 1024], strides = [1, 1]} : vector<4x2048xbf16> to vector<4x1024xbf16>
    %c0_35 = arith.constant 0 : index
    %c7 = arith.constant 7 : index
    %c0_36 = arith.constant 0 : index
    %c0_37 = arith.constant 0 : index
    %40 = vector.load %arg5[%c0_35, %c7, %c0_36, %c0_37] : memref<1x27x8x4xbf16, #tpu.memory_space<vmem>>, vector<1x1x8x4xbf16>
    %41 = vector.shape_cast %40 : vector<1x1x8x4xbf16> to vector<8x4xbf16>
    %cst_38 = arith.constant dense<0.000000e+00> : vector<8x1024xf32>
    %42 = tpu.matmul %41, %39, %cst_38 {dimension_numbers = #tpu.dot_dimension_numbers<[1], [0], [0], [1], [0, 0, 1, 1], [], []>} : vector<8x4xbf16>, vector<4x1024xbf16>, vector<8x1024xf32> -> vector<8x1024xf32>
    %43 = arith.addf %38, %42 : vector<8x1024xf32>
    %44 = vector.extract_strided_slice %4 {offsets = [0, 22], sizes = [4, 1024], strides = [1, 1]} : vector<4x2048xbf16> to vector<4x1024xbf16>
    %c0_39 = arith.constant 0 : index
    %c8 = arith.constant 8 : index
    %c0_40 = arith.constant 0 : index
    %c0_41 = arith.constant 0 : index
    %45 = vector.load %arg5[%c0_39, %c8, %c0_40, %c0_41] : memref<1x27x8x4xbf16, #tpu.memory_space<vmem>>, vector<1x1x8x4xbf16>
    %46 = vector.shape_cast %45 : vector<1x1x8x4xbf16> to vector<8x4xbf16>
    %cst_42 = arith.constant dense<0.000000e+00> : vector<8x1024xf32>
    %47 = tpu.matmul %46, %44, %cst_42 {dimension_numbers = #tpu.dot_dimension_numbers<[1], [0], [0], [1], [0, 0, 1, 1], [], []>} : vector<8x4xbf16>, vector<4x1024xbf16>, vector<8x1024xf32> -> vector<8x1024xf32>
    %48 = arith.addf %43, %47 : vector<8x1024xf32>
    %49 = vector.extract_strided_slice %4 {offsets = [0, 100], sizes = [4, 1024], strides = [1, 1]} : vector<4x2048xbf16> to vector<4x1024xbf16>
    %c0_43 = arith.constant 0 : index
    %c9 = arith.constant 9 : index
    %c0_44 = arith.constant 0 : index
    %c0_45 = arith.constant 0 : index
    %50 = vector.load %arg5[%c0_43, %c9, %c0_44, %c0_45] : memref<1x27x8x4xbf16, #tpu.memory_space<vmem>>, vector<1x1x8x4xbf16>
    %51 = vector.shape_cast %50 : vector<1x1x8x4xbf16> to vector<8x4xbf16>
    %cst_46 = arith.constant dense<0.000000e+00> : vector<8x1024xf32>
    %52 = tpu.matmul %51, %49, %cst_46 {dimension_numbers = #tpu.dot_dimension_numbers<[1], [0], [0], [1], [0, 0, 1, 1], [], []>} : vector<8x4xbf16>, vector<4x1024xbf16>, vector<8x1024xf32> -> vector<8x1024xf32>
    %53 = arith.addf %48, %52 : vector<8x1024xf32>
    %54 = vector.extract_strided_slice %4 {offsets = [0, 101], sizes = [4, 1024], strides = [1, 1]} : vector<4x2048xbf16> to vector<4x1024xbf16>
    %c0_47 = arith.constant 0 : index
    %c10 = arith.constant 10 : index
    %c0_48 = arith.constant 0 : index
    %c0_49 = arith.constant 0 : index
    %55 = vector.load %arg5[%c0_47, %c10, %c0_48, %c0_49] : memref<1x27x8x4xbf16, #tpu.memory_space<vmem>>, vector<1x1x8x4xbf16>
    %56 = vector.shape_cast %55 : vector<1x1x8x4xbf16> to vector<8x4xbf16>
    %cst_50 = arith.constant dense<0.000000e+00> : vector<8x1024xf32>
    %57 = tpu.matmul %56, %54, %cst_50 {dimension_numbers = #tpu.dot_dimension_numbers<[1], [0], [0], [1], [0, 0, 1, 1], [], []>} : vector<8x4xbf16>, vector<4x1024xbf16>, vector<8x1024xf32> -> vector<8x1024xf32>
    %58 = arith.addf %53, %57 : vector<8x1024xf32>
    %59 = vector.extract_strided_slice %4 {offsets = [0, 102], sizes = [4, 1024], strides = [1, 1]} : vector<4x2048xbf16> to vector<4x1024xbf16>
    %c0_51 = arith.constant 0 : index
    %c11 = arith.constant 11 : index
    %c0_52 = arith.constant 0 : index
    %c0_53 = arith.constant 0 : index
    %60 = vector.load %arg5[%c0_51, %c11, %c0_52, %c0_53] : memref<1x27x8x4xbf16, #tpu.memory_space<vmem>>, vector<1x1x8x4xbf16>
    %61 = vector.shape_cast %60 : vector<1x1x8x4xbf16> to vector<8x4xbf16>
    %cst_54 = arith.constant dense<0.000000e+00> : vector<8x1024xf32>
    %62 = tpu.matmul %61, %59, %cst_54 {dimension_numbers = #tpu.dot_dimension_numbers<[1], [0], [0], [1], [0, 0, 1, 1], [], []>} : vector<8x4xbf16>, vector<4x1024xbf16>, vector<8x1024xf32> -> vector<8x1024xf32>
    %63 = arith.addf %58, %62 : vector<8x1024xf32>
    %64 = vector.extract_strided_slice %4 {offsets = [0, 110], sizes = [4, 1024], strides = [1, 1]} : vector<4x2048xbf16> to vector<4x1024xbf16>
    %c0_55 = arith.constant 0 : index
    %c12 = arith.constant 12 : index
    %c0_56 = arith.constant 0 : index
    %c0_57 = arith.constant 0 : index
    %65 = vector.load %arg5[%c0_55, %c12, %c0_56, %c0_57] : memref<1x27x8x4xbf16, #tpu.memory_space<vmem>>, vector<1x1x8x4xbf16>
    %66 = vector.shape_cast %65 : vector<1x1x8x4xbf16> to vector<8x4xbf16>
    %cst_58 = arith.constant dense<0.000000e+00> : vector<8x1024xf32>
    %67 = tpu.matmul %66, %64, %cst_58 {dimension_numbers = #tpu.dot_dimension_numbers<[1], [0], [0], [1], [0, 0, 1, 1], [], []>} : vector<8x4xbf16>, vector<4x1024xbf16>, vector<8x1024xf32> -> vector<8x1024xf32>
    %68 = arith.addf %63, %67 : vector<8x1024xf32>
    %69 = vector.extract_strided_slice %4 {offsets = [0, 111], sizes = [4, 1024], strides = [1, 1]} : vector<4x2048xbf16> to vector<4x1024xbf16>
    %c0_59 = arith.constant 0 : index
    %c13 = arith.constant 13 : index
    %c0_60 = arith.constant 0 : index
    %c0_61 = arith.constant 0 : index
    %70 = vector.load %arg5[%c0_59, %c13, %c0_60, %c0_61] : memref<1x27x8x4xbf16, #tpu.memory_space<vmem>>, vector<1x1x8x4xbf16>
    %71 = vector.shape_cast %70 : vector<1x1x8x4xbf16> to vector<8x4xbf16>
    %cst_62 = arith.constant dense<0.000000e+00> : vector<8x1024xf32>
    %72 = tpu.matmul %71, %69, %cst_62 {dimension_numbers = #tpu.dot_dimension_numbers<[1], [0], [0], [1], [0, 0, 1, 1], [], []>} : vector<8x4xbf16>, vector<4x1024xbf16>, vector<8x1024xf32> -> vector<8x1024xf32>
    %73 = arith.addf %68, %72 : vector<8x1024xf32>
    %74 = vector.extract_strided_slice %4 {offsets = [0, 112], sizes = [4, 1024], strides = [1, 1]} : vector<4x2048xbf16> to vector<4x1024xbf16>
    %c0_63 = arith.constant 0 : index
    %c14 = arith.constant 14 : index
    %c0_64 = arith.constant 0 : index
    %c0_65 = arith.constant 0 : index
    %75 = vector.load %arg5[%c0_63, %c14, %c0_64, %c0_65] : memref<1x27x8x4xbf16, #tpu.memory_space<vmem>>, vector<1x1x8x4xbf16>
    %76 = vector.shape_cast %75 : vector<1x1x8x4xbf16> to vector<8x4xbf16>
    %cst_66 = arith.constant dense<0.000000e+00> : vector<8x1024xf32>
    %77 = tpu.matmul %76, %74, %cst_66 {dimension_numbers = #tpu.dot_dimension_numbers<[1], [0], [0], [1], [0, 0, 1, 1], [], []>} : vector<8x4xbf16>, vector<4x1024xbf16>, vector<8x1024xf32> -> vector<8x1024xf32>
    %78 = arith.addf %73, %77 : vector<8x1024xf32>
    %79 = vector.extract_strided_slice %4 {offsets = [0, 120], sizes = [4, 1024], strides = [1, 1]} : vector<4x2048xbf16> to vector<4x1024xbf16>
    %c0_67 = arith.constant 0 : index
    %c15 = arith.constant 15 : index
    %c0_68 = arith.constant 0 : index
    %c0_69 = arith.constant 0 : index
    %80 = vector.load %arg5[%c0_67, %c15, %c0_68, %c0_69] : memref<1x27x8x4xbf16, #tpu.memory_space<vmem>>, vector<1x1x8x4xbf16>
    %81 = vector.shape_cast %80 : vector<1x1x8x4xbf16> to vector<8x4xbf16>
    %cst_70 = arith.constant dense<0.000000e+00> : vector<8x1024xf32>
    %82 = tpu.matmul %81, %79, %cst_70 {dimension_numbers = #tpu.dot_dimension_numbers<[1], [0], [0], [1], [0, 0, 1, 1], [], []>} : vector<8x4xbf16>, vector<4x1024xbf16>, vector<8x1024xf32> -> vector<8x1024xf32>
    %83 = arith.addf %78, %82 : vector<8x1024xf32>
    %84 = vector.extract_strided_slice %4 {offsets = [0, 121], sizes = [4, 1024], strides = [1, 1]} : vector<4x2048xbf16> to vector<4x1024xbf16>
    %c0_71 = arith.constant 0 : index
    %c16 = arith.constant 16 : index
    %c0_72 = arith.constant 0 : index
    %c0_73 = arith.constant 0 : index
    %85 = vector.load %arg5[%c0_71, %c16, %c0_72, %c0_73] : memref<1x27x8x4xbf16, #tpu.memory_space<vmem>>, vector<1x1x8x4xbf16>
    %86 = vector.shape_cast %85 : vector<1x1x8x4xbf16> to vector<8x4xbf16>
    %cst_74 = arith.constant dense<0.000000e+00> : vector<8x1024xf32>
    %87 = tpu.matmul %86, %84, %cst_74 {dimension_numbers = #tpu.dot_dimension_numbers<[1], [0], [0], [1], [0, 0, 1, 1], [], []>} : vector<8x4xbf16>, vector<4x1024xbf16>, vector<8x1024xf32> -> vector<8x1024xf32>
    %88 = arith.addf %83, %87 : vector<8x1024xf32>
    %89 = vector.extract_strided_slice %4 {offsets = [0, 122], sizes = [4, 1024], strides = [1, 1]} : vector<4x2048xbf16> to vector<4x1024xbf16>
    %c0_75 = arith.constant 0 : index
    %c17 = arith.constant 17 : index
    %c0_76 = arith.constant 0 : index
    %c0_77 = arith.constant 0 : index
    %90 = vector.load %arg5[%c0_75, %c17, %c0_76, %c0_77] : memref<1x27x8x4xbf16, #tpu.memory_space<vmem>>, vector<1x1x8x4xbf16>
    %91 = vector.shape_cast %90 : vector<1x1x8x4xbf16> to vector<8x4xbf16>
    %cst_78 = arith.constant dense<0.000000e+00> : vector<8x1024xf32>
    %92 = tpu.matmul %91, %89, %cst_78 {dimension_numbers = #tpu.dot_dimension_numbers<[1], [0], [0], [1], [0, 0, 1, 1], [], []>} : vector<8x4xbf16>, vector<4x1024xbf16>, vector<8x1024xf32> -> vector<8x1024xf32>
    %93 = arith.addf %88, %92 : vector<8x1024xf32>
    %94 = vector.extract_strided_slice %4 {offsets = [0, 200], sizes = [4, 1024], strides = [1, 1]} : vector<4x2048xbf16> to vector<4x1024xbf16>
    %c0_79 = arith.constant 0 : index
    %c18 = arith.constant 18 : index
    %c0_80 = arith.constant 0 : index
    %c0_81 = arith.constant 0 : index
    %95 = vector.load %arg5[%c0_79, %c18, %c0_80, %c0_81] : memref<1x27x8x4xbf16, #tpu.memory_space<vmem>>, vector<1x1x8x4xbf16>
    %96 = vector.shape_cast %95 : vector<1x1x8x4xbf16> to vector<8x4xbf16>
    %cst_82 = arith.constant dense<0.000000e+00> : vector<8x1024xf32>
    %97 = tpu.matmul %96, %94, %cst_82 {dimension_numbers = #tpu.dot_dimension_numbers<[1], [0], [0], [1], [0, 0, 1, 1], [], []>} : vector<8x4xbf16>, vector<4x1024xbf16>, vector<8x1024xf32> -> vector<8x1024xf32>
    %98 = arith.addf %93, %97 : vector<8x1024xf32>
    %99 = vector.extract_strided_slice %4 {offsets = [0, 201], sizes = [4, 1024], strides = [1, 1]} : vector<4x2048xbf16> to vector<4x1024xbf16>
    %c0_83 = arith.constant 0 : index
    %c19 = arith.constant 19 : index
    %c0_84 = arith.constant 0 : index
    %c0_85 = arith.constant 0 : index
    %100 = vector.load %arg5[%c0_83, %c19, %c0_84, %c0_85] : memref<1x27x8x4xbf16, #tpu.memory_space<vmem>>, vector<1x1x8x4xbf16>
    %101 = vector.shape_cast %100 : vector<1x1x8x4xbf16> to vector<8x4xbf16>
    %cst_86 = arith.constant dense<0.000000e+00> : vector<8x1024xf32>
    %102 = tpu.matmul %101, %99, %cst_86 {dimension_numbers = #tpu.dot_dimension_numbers<[1], [0], [0], [1], [0, 0, 1, 1], [], []>} : vector<8x4xbf16>, vector<4x1024xbf16>, vector<8x1024xf32> -> vector<8x1024xf32>
    %103 = arith.addf %98, %102 : vector<8x1024xf32>
    %104 = vector.extract_strided_slice %4 {offsets = [0, 202], sizes = [4, 1024], strides = [1, 1]} : vector<4x2048xbf16> to vector<4x1024xbf16>
    %c0_87 = arith.constant 0 : index
    %c20 = arith.constant 20 : index
    %c0_88 = arith.constant 0 : index
    %c0_89 = arith.constant 0 : index
    %105 = vector.load %arg5[%c0_87, %c20, %c0_88, %c0_89] : memref<1x27x8x4xbf16, #tpu.memory_space<vmem>>, vector<1x1x8x4xbf16>
    %106 = vector.shape_cast %105 : vector<1x1x8x4xbf16> to vector<8x4xbf16>
    %cst_90 = arith.constant dense<0.000000e+00> : vector<8x1024xf32>
    %107 = tpu.matmul %106, %104, %cst_90 {dimension_numbers = #tpu.dot_dimension_numbers<[1], [0], [0], [1], [0, 0, 1, 1], [], []>} : vector<8x4xbf16>, vector<4x1024xbf16>, vector<8x1024xf32> -> vector<8x1024xf32>
    %108 = arith.addf %103, %107 : vector<8x1024xf32>
    %109 = vector.extract_strided_slice %4 {offsets = [0, 210], sizes = [4, 1024], strides = [1, 1]} : vector<4x2048xbf16> to vector<4x1024xbf16>
    %c0_91 = arith.constant 0 : index
    %c21 = arith.constant 21 : index
    %c0_92 = arith.constant 0 : index
    %c0_93 = arith.constant 0 : index
    %110 = vector.load %arg5[%c0_91, %c21, %c0_92, %c0_93] : memref<1x27x8x4xbf16, #tpu.memory_space<vmem>>, vector<1x1x8x4xbf16>
    %111 = vector.shape_cast %110 : vector<1x1x8x4xbf16> to vector<8x4xbf16>
    %cst_94 = arith.constant dense<0.000000e+00> : vector<8x1024xf32>
    %112 = tpu.matmul %111, %109, %cst_94 {dimension_numbers = #tpu.dot_dimension_numbers<[1], [0], [0], [1], [0, 0, 1, 1], [], []>} : vector<8x4xbf16>, vector<4x1024xbf16>, vector<8x1024xf32> -> vector<8x1024xf32>
    %113 = arith.addf %108, %112 : vector<8x1024xf32>
    %114 = vector.extract_strided_slice %4 {offsets = [0, 211], sizes = [4, 1024], strides = [1, 1]} : vector<4x2048xbf16> to vector<4x1024xbf16>
    %c0_95 = arith.constant 0 : index
    %c22 = arith.constant 22 : index
    %c0_96 = arith.constant 0 : index
    %c0_97 = arith.constant 0 : index
    %115 = vector.load %arg5[%c0_95, %c22, %c0_96, %c0_97] : memref<1x27x8x4xbf16, #tpu.memory_space<vmem>>, vector<1x1x8x4xbf16>
    %116 = vector.shape_cast %115 : vector<1x1x8x4xbf16> to vector<8x4xbf16>
    %cst_98 = arith.constant dense<0.000000e+00> : vector<8x1024xf32>
    %117 = tpu.matmul %116, %114, %cst_98 {dimension_numbers = #tpu.dot_dimension_numbers<[1], [0], [0], [1], [0, 0, 1, 1], [], []>} : vector<8x4xbf16>, vector<4x1024xbf16>, vector<8x1024xf32> -> vector<8x1024xf32>
    %118 = arith.addf %113, %117 : vector<8x1024xf32>
    %119 = vector.extract_strided_slice %4 {offsets = [0, 212], sizes = [4, 1024], strides = [1, 1]} : vector<4x2048xbf16> to vector<4x1024xbf16>
    %c0_99 = arith.constant 0 : index
    %c23 = arith.constant 23 : index
    %c0_100 = arith.constant 0 : index
    %c0_101 = arith.constant 0 : index
    %120 = vector.load %arg5[%c0_99, %c23, %c0_100, %c0_101] : memref<1x27x8x4xbf16, #tpu.memory_space<vmem>>, vector<1x1x8x4xbf16>
    %121 = vector.shape_cast %120 : vector<1x1x8x4xbf16> to vector<8x4xbf16>
    %cst_102 = arith.constant dense<0.000000e+00> : vector<8x1024xf32>
    %122 = tpu.matmul %121, %119, %cst_102 {dimension_numbers = #tpu.dot_dimension_numbers<[1], [0], [0], [1], [0, 0, 1, 1], [], []>} : vector<8x4xbf16>, vector<4x1024xbf16>, vector<8x1024xf32> -> vector<8x1024xf32>
    %123 = arith.addf %118, %122 : vector<8x1024xf32>
    %124 = vector.extract_strided_slice %4 {offsets = [0, 220], sizes = [4, 1024], strides = [1, 1]} : vector<4x2048xbf16> to vector<4x1024xbf16>
    %c0_103 = arith.constant 0 : index
    %c24 = arith.constant 24 : index
    %c0_104 = arith.constant 0 : index
    %c0_105 = arith.constant 0 : index
    %125 = vector.load %arg5[%c0_103, %c24, %c0_104, %c0_105] : memref<1x27x8x4xbf16, #tpu.memory_space<vmem>>, vector<1x1x8x4xbf16>
    %126 = vector.shape_cast %125 : vector<1x1x8x4xbf16> to vector<8x4xbf16>
    %cst_106 = arith.constant dense<0.000000e+00> : vector<8x1024xf32>
    %127 = tpu.matmul %126, %124, %cst_106 {dimension_numbers = #tpu.dot_dimension_numbers<[1], [0], [0], [1], [0, 0, 1, 1], [], []>} : vector<8x4xbf16>, vector<4x1024xbf16>, vector<8x1024xf32> -> vector<8x1024xf32>
    %128 = arith.addf %123, %127 : vector<8x1024xf32>
    %129 = vector.extract_strided_slice %4 {offsets = [0, 221], sizes = [4, 1024], strides = [1, 1]} : vector<4x2048xbf16> to vector<4x1024xbf16>
    %c0_107 = arith.constant 0 : index
    %c25 = arith.constant 25 : index
    %c0_108 = arith.constant 0 : index
    %c0_109 = arith.constant 0 : index
    %130 = vector.load %arg5[%c0_107, %c25, %c0_108, %c0_109] : memref<1x27x8x4xbf16, #tpu.memory_space<vmem>>, vector<1x1x8x4xbf16>
    %131 = vector.shape_cast %130 : vector<1x1x8x4xbf16> to vector<8x4xbf16>
    %cst_110 = arith.constant dense<0.000000e+00> : vector<8x1024xf32>
    %132 = tpu.matmul %131, %129, %cst_110 {dimension_numbers = #tpu.dot_dimension_numbers<[1], [0], [0], [1], [0, 0, 1, 1], [], []>} : vector<8x4xbf16>, vector<4x1024xbf16>, vector<8x1024xf32> -> vector<8x1024xf32>
    %133 = arith.addf %128, %132 : vector<8x1024xf32>
    %134 = vector.extract_strided_slice %4 {offsets = [0, 222], sizes = [4, 1024], strides = [1, 1]} : vector<4x2048xbf16> to vector<4x1024xbf16>
    %c0_111 = arith.constant 0 : index
    %c26 = arith.constant 26 : index
    %c0_112 = arith.constant 0 : index
    %c0_113 = arith.constant 0 : index
    %135 = vector.load %arg5[%c0_111, %c26, %c0_112, %c0_113] : memref<1x27x8x4xbf16, #tpu.memory_space<vmem>>, vector<1x1x8x4xbf16>
    %136 = vector.shape_cast %135 : vector<1x1x8x4xbf16> to vector<8x4xbf16>
    %cst_114 = arith.constant dense<0.000000e+00> : vector<8x1024xf32>
    %137 = tpu.matmul %136, %134, %cst_114 {dimension_numbers = #tpu.dot_dimension_numbers<[1], [0], [0], [1], [0, 0, 1, 1], [], []>} : vector<8x4xbf16>, vector<4x1024xbf16>, vector<8x1024xf32> -> vector<8x1024xf32>
    %138 = arith.addf %133, %137 : vector<8x1024xf32>
    %c0_115 = arith.constant 0 : index
    %c0_116 = arith.constant 0 : index
    %c0_117 = arith.constant 0 : index
    %139 = vector.load %arg6[%c0_115, %c0_116, %c0_117] : memref<1x8x1xf32, #tpu.memory_space<vmem>>, vector<1x8x1xf32>
    %140 = vector.shape_cast %139 : vector<1x8x1xf32> to vector<8x1xf32>
    %141 = vector.broadcast %140 : vector<8x1xf32> to vector<8x1024xf32>
    %142 = arith.addf %138, %141 : vector<8x1024xf32>
    %c0_118 = arith.constant 0 : index
    %c0_119 = arith.constant 0 : index
    %c0_120 = arith.constant 0 : index
    %c0_121 = arith.constant 0 : index
    %143 = vector.load %arg7[%c0_118, %c0_119, %c0_120, %c0_121] : memref<1x1x8x1024xf32, #tpu.memory_space<vmem>>, vector<1x1x8x1024xf32>
    %144 = vector.shape_cast %143 : vector<1x1x8x1024xf32> to vector<8x1024xf32>
    %145 = vector.shape_cast %142 : vector<8x1024xf32> to vector<1x1x8x1024xf32>
    tpu.vector_store %arg7[%c0_118, %c0_119, %c0_120, %c0_121], %145 {strides = array<i32>} : memref<1x1x8x1024xf32, #tpu.memory_space<vmem>>, vector<1x1x8x1024xf32>,
    return
  }
  func.func @transform_0(%arg0: i32, %arg1: i32, %arg2: i32) -> (i32, i32, i32, i32) {
    %c0_i32 = arith.constant 0 : i32
    %c0_i32_0 = arith.constant 0 : i32
    return %arg0, %arg1, %c0_i32, %arg2 : i32, i32, i32, i32
  }
  func.func @transform_1(%arg0: i32, %arg1: i32, %arg2: i32) -> (i32, i32, i32, i32) {
    %c1_i32 = arith.constant 1 : i32
    %0 = arith.addi %arg2, %c1_i32 : i32
    %c0_i32 = arith.constant 0 : i32
    %c0_i32_0 = arith.constant 0 : i32
    return %arg0, %arg1, %c0_i32, %0 : i32, i32, i32, i32
  }
  func.func @transform_2(%arg0: i32, %arg1: i32, %arg2: i32) -> (i32, i32, i32, i32) {
    %c0_i32 = arith.constant 0 : i32
    %c0_i32_0 = arith.constant 0 : i32
    %c0_i32_1 = arith.constant 0 : i32
    %c0_i32_2 = arith.constant 0 : i32
    return %arg0, %c0_i32, %c0_i32_0, %c0_i32_1 : i32, i32, i32, i32
  }
  func.func @transform_3(%arg0: i32, %arg1: i32, %arg2: i32) -> (i32, i32, i32) {
    %c0_i32 = arith.constant 0 : i32
    %c0_i32_0 = arith.constant 0 : i32
    %c0_i32_1 = arith.constant 0 : i32
    return %arg0, %c0_i32, %c0_i32_0 : i32, i32, i32
  }
  func.func @transform_4(%arg0: i32, %arg1: i32, %arg2: i32) -> (i32, i32, i32, i32) {
    %c0_i32 = arith.constant 0 : i32
    %c0_i32_0 = arith.constant 0 : i32
    return %arg0, %arg1, %c0_i32, %arg2 : i32, i32, i32, i32
  }
}

</mosaic_0001>

<llo_original>
// kernel: _forward.1
$region0: #{_forward.1}
  #allocation0 [shape = 'u32[]', space=smem, size = 0x4, offset = 0x4, fixed_abs, tag = 'smem constant byte address 0x4 - core index']
  #allocation1 [shape = 'u32[144,128]{1,0:T(1,128)}', space=vmem, size = 0x12000, scoped, tag = 'internal scratch']
  %s0 = inlined_call_operand.vmem [shape: bf16[2,2,4,2048], index: 0, kind: input, shape index: {}, may-alias: {0,1}]
  %s1 = inlined_call_operand.vmem [shape: bf16[2,2,4,2048], index: 1, kind: input, shape index: {}, may-alias: {0,1}]
  %s2 = inlined_call_operand.vmem [shape: bf16[2,27,8,4], index: 2, kind: input, shape index: {}]
  %s3 = inlined_call_operand.vmem [shape: f32[2,8,1], index: 3, kind: input, shape index: {}]
  %s4 = inlined_call_operand.vmem [shape: f32[2,2,8,1024], index: 4, kind: output, shape index: {}]
  %s5 = sld [smem:[#allocation0]]
  $region49: #{_forward.1} parent=0
    _
  %s7 = ssub.s32 1, %s5
  %s8 = scalar_select 0, %s7, %s5
  loop: start=0, step=1, limit=6
  $region2: #{_forward.1} parent=0 // loop_pre_header
    _
  $region3: #{_forward.1} parent=0 // loop_header
    %s10 = sphi 0, %s14
    %p11 = scmp.ge.s32.totalorder %s10, 6
    %s17 = sphi 0, %s36
    %s18 = sphi 0, %s32
    %s19 = sphi 0, %s28
    %s20 = sphi 0, %s17
    %s21 = sphi 0, %s18
    %s22 = sphi 0, %s19
    %s23 = sphi 0, %s20
    %s24 = sphi 0, %s21
    %s25 = sphi 0, %s22
    %s43 = sphi 0, %s45
    %s46 = sphi 0, %s43
    %s47 = sphi 0, %s46
    %s63 = sphi 0, %s47
    %s75 = sphi 0, %s77
    %s78 = sphi 0, %s75
    %s79 = sphi 0, %s78
    %s95 = sphi 0, %s79
    %s101 = sphi 0, %s103
    %s104 = sphi 0, %s101
    %s105 = sphi 0, %s104
    %s121 = sphi 0, %s105
    %s127 = sphi 0, %s129
    %s130 = sphi 0, %s127
    %s131 = sphi 0, %s130
    %s147 = sphi 0, %s131
    %s157 = sphi 0, %s159
    %s160 = sphi 0, %s157
    %s161 = sphi 0, %s160
    %s177 = sphi 0, %s161
  $region4: #{_forward.1} parent=0 // loop_header_branch
    %13 = sbr.rel (%p11) target = $region8
  $region5: #{_forward.1} parent=0 // loop_body
    %s15 = ssub.s32 %s10, 1
    %s16 = ssub.s32 %s10, 2
    %s26 = sadd.s32 1, %s19
    %p27 = scmp.ge.s32.totalorder %s26, 1
    %s28 = scalar_select %p27, 0, %s26
    %s29 = sadd.s32 1, %s18
    %s30 = scalar_select %p27, %s29, %s18
    %p31 = scmp.ge.s32.totalorder %s30, 2
    %s32 = scalar_select %p31, 0, %s30
    %s33 = sadd.s32 1, %s17
    %s34 = scalar_select %p31, %s33, %s17
    %p35 = scmp.ge.s32.totalorder %s34, 2
    %s36 = scalar_select %p35, 0, %s34
    %s37 = ssub.s32 %s17, %s36
    %s38 = ssub.s32 %s18, %s32
    %s39 = sor.u32 %s37, %s38
    %s40 = ssub.s32 %s19, %s28
    %s41 = sor.u32 %s39, %s40
    %p42 = scmp.eq.s32.totalorder %s41, 0
    %s44 = sadd.s32 %s43, 1
    %s45 = scalar_select %p42, %s43, %s44
    %p48 = pneg %p42
    %p49 = scmp.eq.s32.totalorder %s10, 3
    %p50 = por %p48, %p49
    %p51 = scmp.ne.s32.totalorder %s43, %s46
    %p52 = scmp.eq.s32.totalorder %s10, 0
    %p53 = por %p51, %p52
    %p54 = scmp.ne.s32.totalorder %s43, %s46
    %p55 = scmp.eq.s32.totalorder %s15, 3
    %p56 = por %p54, %p55
    %p57 = scmp.ne.s32.totalorder %s46, %s47
    %p58 = scmp.eq.s32.totalorder %s15, 0
    %p59 = por %p57, %p58
    %p60 = scmp.ne.s32.totalorder %s46, %s47
    %p61 = scmp.eq.s32.totalorder %s16, 3
    %p62 = por %p60, %p61
    %p64 = scmp.ne.s32.totalorder %s47, %s63
    %p65 = scmp.eq.s32.totalorder %s16, 0
    %p66 = por %p64, %p65
    %s67 = sadd.s32 %s19, 1
    %s68 = sadd.s32 %s28, 1
    %s69 = ssub.s32 %s17, %s36
    %s70 = ssub.s32 %s18, %s32
    %s71 = sor.u32 %s69, %s70
    %s72 = ssub.s32 %s67, %s68
    %s73 = sor.u32 %s71, %s72
    %p74 = scmp.eq.s32.totalorder %s73, 0
    %s76 = sadd.s32 %s75, 1
    %s77 = scalar_select %p74, %s75, %s76
    %p80 = pneg %p74
    %p81 = scmp.eq.s32.totalorder %s10, 3
    %p82 = por %p80, %p81
    %p83 = scmp.ne.s32.totalorder %s75, %s78
    %p84 = scmp.eq.s32.totalorder %s10, 0
    %p85 = por %p83, %p84
    %p86 = scmp.ne.s32.totalorder %s75, %s78
    %p87 = scmp.eq.s32.totalorder %s15, 3
    %p88 = por %p86, %p87
    %p89 = scmp.ne.s32.totalorder %s78, %s79
    %p90 = scmp.eq.s32.totalorder %s15, 0
    %p91 = por %p89, %p90
    %p92 = scmp.ne.s32.totalorder %s78, %s79
    %p93 = scmp.eq.s32.totalorder %s16, 3
    %p94 = por %p92, %p93
    %p96 = scmp.ne.s32.totalorder %s79, %s95
    %p97 = scmp.eq.s32.totalorder %s16, 0
    %p98 = por %p96, %p97
    %s99 = ssub.s32 %s17, %s36
    %p100 = scmp.eq.s32.totalorder %s99, 0
    %s102 = sadd.s32 %s101, 1
    %s103 = scalar_select %p100, %s101, %s102
    %p106 = pneg %p100
    %p107 = scmp.eq.s32.totalorder %s10, 3
    %p108 = por %p106, %p107
    %p109 = scmp.ne.s32.totalorder %s101, %s104
    %p110 = scmp.eq.s32.totalorder %s10, 0
    %p111 = por %p109, %p110
    %p112 = scmp.ne.s32.totalorder %s101, %s104
    %p113 = scmp.eq.s32.totalorder %s15, 3
    %p114 = por %p112, %p113
    %p115 = scmp.ne.s32.totalorder %s104, %s105
    %p116 = scmp.eq.s32.totalorder %s15, 0
    %p117 = por %p115, %p116
    %p118 = scmp.ne.s32.totalorder %s104, %s105
    %p119 = scmp.eq.s32.totalorder %s16, 3
    %p120 = por %p118, %p119
    %p122 = scmp.ne.s32.totalorder %s105, %s121
    %p123 = scmp.eq.s32.totalorder %s16, 0
    %p124 = por %p122, %p123
    %s125 = ssub.s32 %s17, %s36
    %p126 = scmp.eq.s32.totalorder %s125, 0
    %s128 = sadd.s32 %s127, 1
    %s129 = scalar_select %p126, %s127, %s128
    %p132 = pneg %p126
    %p133 = scmp.eq.s32.totalorder %s10, 3
    %p134 = por %p132, %p133
    %p135 = scmp.ne.s32.totalorder %s127, %s130
    %p136 = scmp.eq.s32.totalorder %s10, 0
    %p137 = por %p135, %p136
    %p138 = scmp.ne.s32.totalorder %s127, %s130
    %p139 = scmp.eq.s32.totalorder %s15, 3
    %p140 = por %p138, %p139
    %p141 = scmp.ne.s32.totalorder %s130, %s131
    %p142 = scmp.eq.s32.totalorder %s15, 0
    %p143 = por %p141, %p142
    %p144 = scmp.ne.s32.totalorder %s130, %s131
    %p145 = scmp.eq.s32.totalorder %s16, 3
    %p146 = por %p144, %p145
    %p148 = scmp.ne.s32.totalorder %s131, %s147
    %p149 = scmp.eq.s32.totalorder %s16, 0
    %p150 = por %p148, %p149
    %s151 = ssub.s32 %s17, %s36
    %s152 = ssub.s32 %s18, %s32
    %s153 = sor.u32 %s151, %s152
    %s154 = ssub.s32 %s19, %s28
    %s155 = sor.u32 %s153, %s154
    %p156 = scmp.eq.s32.totalorder %s155, 0
    %s158 = sadd.s32 %s157, 1
    %s159 = scalar_select %p156, %s157, %s158
    %p162 = pneg %p156
    %p163 = scmp.eq.s32.totalorder %s10, 3
    %p164 = por %p162, %p163
    %p165 = scmp.ne.s32.totalorder %s157, %s160
    %p166 = scmp.eq.s32.totalorder %s10, 0
    %p167 = por %p165, %p166
    %p168 = scmp.ne.s32.totalorder %s157, %s160
    %p169 = scmp.eq.s32.totalorder %s15, 3
    %p170 = por %p168, %p169
    %p171 = scmp.ne.s32.totalorder %s160, %s161
    %p172 = scmp.eq.s32.totalorder %s15, 0
    %p173 = por %p171, %p172
    %p174 = scmp.ne.s32.totalorder %s160, %s161
    %p175 = scmp.eq.s32.totalorder %s16, 3
    %p176 = por %p174, %p175
    %p178 = scmp.ne.s32.totalorder %s161, %s177
    %p179 = scmp.eq.s32.totalorder %s16, 0
    %p180 = por %p178, %p179
    %p181 = scmp.le.s32.totalorder 1, %s10
    %p182 = scmp.lt.s32.totalorder %s10, 5
    %p183 = pnand %p181, %p182
    %p184 = pneg %p183
    // Predicated region
    $region9: #{_forward.1} parent=5 // pred_check
      _
    $region10: #{_forward.1} parent=5 // pred_check_branch
      %186 = sbr.rel (%p183) target = $region12
    $region11: #{_forward.1} parent=5 // pred_region
      %s187 = ssub.s32 %s10, 1
    $region12: #{_forward.1} parent=5 // pred_fallthru
      _
    %p188 = scmp.lt.s32.totalorder %s10, 4
    // Predicated region
    $region13: #{_forward.1} parent=5 // pred_check
      %p189 = pneg %p188
    $region14: #{_forward.1} parent=5 // pred_check_branch
      %191 = sbr.rel (%p189) target = $region16
    $region15: #{_forward.1} parent=5 // pred_region
      // Predicated region
      $region17: #{_forward.1} parent=15 // pred_check
        %p192 = pneg %p53
      $region18: #{_forward.1} parent=15 // pred_check_branch
        %194 = sbr.rel (%p192) target = $region20
      $region19: #{_forward.1} parent=15 // pred_region
        %s195 = smul.u32 8, %s19
        %p196 = scmp.lt.s32.totalorder %s17, 1
        %s197 = scalar_select %p196, %s17, 1
        %p198 = scmp.lt.s32.totalorder %s18, 1
        %s199 = scalar_select %p198, %s18, 1
        %p200 = scmp.lt.s32.totalorder %s195, 15
        %s201 = scalar_select %p200, %s195, 15
        %s202 = smul.addr %s199, 16
        %s203 = sadd.s32 %s201, %s202
        %s204 = smul.addr %s197, 32
        %s205 = sadd.s32 %s203, %s204
        %s206 = smul.addr %s205, 2
        %s207 = scalar_lea.vmem %s0, %s206
        %s208 = smul.u32 8, %s19
      $region20: #{_forward.1} parent=15 // pred_fallthru
        _
      // Predicated region
      $region21: #{_forward.1} parent=15 // pred_check
        %p209 = pneg %p85
      $region22: #{_forward.1} parent=15 // pred_check_branch
        %211 = sbr.rel (%p209) target = $region24
      $region23: #{_forward.1} parent=15 // pred_region
        %s212 = sadd.s32 %s19, 1
        %s213 = smul.u32 8, %s212
        %p214 = scmp.lt.s32.totalorder %s17, 1
        %s215 = scalar_select %p214, %s17, 1
        %p216 = scmp.lt.s32.totalorder %s18, 1
        %s217 = scalar_select %p216, %s18, 1
        %p218 = scmp.lt.s32.totalorder %s213, 15
        %s219 = scalar_select %p218, %s213, 15
        %s220 = smul.addr %s217, 16
        %s221 = sadd.s32 %s219, %s220
        %s222 = smul.addr %s215, 32
        %s223 = sadd.s32 %s221, %s222
        %s224 = smul.addr %s223, 2
        %s225 = scalar_lea.vmem %s1, %s224
        %s226 = sadd.s32 %s19, 1
        %s227 = smul.u32 8, %s226
      $region24: #{_forward.1} parent=15 // pred_fallthru
        _
      // Predicated region
      $region25: #{_forward.1} parent=15 // pred_check
        %p228 = pneg %p111
      $region26: #{_forward.1} parent=15 // pred_check_branch
        %230 = sbr.rel (%p228) target = $region28
      $region27: #{_forward.1} parent=15 // pred_region
        %p231 = scmp.lt.s32.totalorder %s17, 1
        %s232 = scalar_select %p231, %s17, 1
        %s233 = smul.addr %s232, 27
        %s234 = smul.addr %s233, 4
        %s235 = scalar_lea.vmem %s2, %s234
      $region28: #{_forward.1} parent=15 // pred_fallthru
        _
      // Predicated region
      $region29: #{_forward.1} parent=15 // pred_check
        %p236 = pneg %p137
      $region30: #{_forward.1} parent=15 // pred_check_branch
        %238 = sbr.rel (%p236) target = $region32
      $region31: #{_forward.1} parent=15 // pred_region
        %p239 = scmp.lt.s32.totalorder %s17, 1
        %s240 = scalar_select %p239, %s17, 1
        %s241 = smul.addr %s240, 8
        %s242 = scalar_lea.vmem %s3, %s241
      $region32: #{_forward.1} parent=15 // pred_fallthru
        _
    $region16: #{_forward.1} parent=5 // pred_fallthru
      _
    %p243 = scmp.le.s32.totalorder 1, %s10
    %p244 = scmp.lt.s32.totalorder %s10, 5
    %p245 = pnand %p243, %p244
    %p246 = pneg %p245
    // Predicated region
    $region33: #{_forward.1} parent=5 // pred_check
      _
    $region34: #{_forward.1} parent=5 // pred_check_branch
      %248 = sbr.rel (%p245) target = $region36
    $region35: #{_forward.1} parent=5 // pred_region
      %s249 = ssub.s32 %s10, 1
      %s250 = smul.u32 8, %s22
      %p251 = scmp.lt.s32.totalorder %s20, 1
      %s252 = scalar_select %p251, %s20, 1
      %p253 = scmp.lt.s32.totalorder %s21, 1
      %s254 = scalar_select %p253, %s21, 1
      %p255 = scmp.lt.s32.totalorder %s250, 15
      %s256 = scalar_select %p255, %s250, 15
      %s257 = smul.addr %s254, 16
      %s258 = sadd.s32 %s256, %s257
      %s259 = smul.addr %s252, 32
      %s260 = sadd.s32 %s258, %s259
      %s261 = smul.addr %s260, 2
      %s262 = scalar_lea.vmem %s0, %s261
      %p263 = pneg %p59
      %p264 = pneg %p56
      %s265 = sadd.s32 %s22, 1
      %s266 = smul.u32 8, %s265
      %p267 = scmp.lt.s32.totalorder %s20, 1
      %s268 = scalar_select %p267, %s20, 1
      %p269 = scmp.lt.s32.totalorder %s21, 1
      %s270 = scalar_select %p269, %s21, 1
      %p271 = scmp.lt.s32.totalorder %s266, 15
      %s272 = scalar_select %p271, %s266, 15
      %s273 = smul.addr %s270, 16
      %s274 = sadd.s32 %s272, %s273
      %s275 = smul.addr %s268, 32
      %s276 = sadd.s32 %s274, %s275
      %s277 = smul.addr %s276, 2
      %s278 = scalar_lea.vmem %s1, %s277
      %p279 = pneg %p91
      %p280 = pneg %p88
      %p281 = scmp.lt.s32.totalorder %s20, 1
      %s282 = scalar_select %p281, %s20, 1
      %s283 = smul.addr %s282, 27
      %s284 = smul.addr %s283, 4
      %s285 = scalar_lea.vmem %s2, %s284
      %p286 = pneg %p117
      %p287 = pneg %p114
      %p288 = scmp.lt.s32.totalorder %s20, 1
      %s289 = scalar_select %p288, %s20, 1
      %s290 = smul.addr %s289, 8
      %s291 = scalar_lea.vmem %s3, %s290
      %p292 = pneg %p143
      %p293 = pneg %p140
      %p294 = pneg %p173
      %p295 = pneg %p170
      %s296 = smul.u32 8, %s22
      %p297 = scmp.lt.s32.totalorder %s20, 1
      %s298 = scalar_select %p297, %s20, 1
      %p299 = scmp.lt.s32.totalorder %s21, 1
      %s300 = scalar_select %p299, %s21, 1
      %p301 = scmp.lt.s32.totalorder %s296, 7
      %s302 = scalar_select %p301, %s296, 7
      %s303 = smul.addr %s300, 8
      %s304 = sadd.s32 %s302, %s303
      %s305 = smul.addr %s298, 16
      %s306 = sadd.s32 %s304, %s305
      %s307 = smul.addr %s306, 8
      %s308 = scalar_lea.vmem %s4, %s307
      %s309 = smul.u32 8, %s22
      %p310 = scmp.lt.s32.totalorder %s20, 1
      %s311 = scalar_select %p310, %s20, 1
      %p312 = scmp.lt.s32.totalorder %s21, 1
      %s313 = scalar_select %p312, %s21, 1
      %p314 = scmp.lt.s32.totalorder %s309, 15
      %s315 = scalar_select %p314, %s309, 15
      %s316 = smul.addr %s313, 16
      %s317 = sadd.s32 %s315, %s316
      %s318 = smul.addr %s311, 32
      %s319 = sadd.s32 %s317, %s318
      %s320 = smul.addr %s319, 2
      %s321 = scalar_lea.vmem %s0, %s320
      %s322 = smul.u32 8, %s22
      %s323 = sadd.s32 %s22, 1
      %s324 = smul.u32 8, %s323
      %p325 = scmp.lt.s32.totalorder %s20, 1
      %s326 = scalar_select %p325, %s20, 1
      %p327 = scmp.lt.s32.totalorder %s21, 1
      %s328 = scalar_select %p327, %s21, 1
      %p329 = scmp.lt.s32.totalorder %s324, 15
      %s330 = scalar_select %p329, %s324, 15
      %s331 = smul.addr %s328, 16
      %s332 = sadd.s32 %s330, %s331
      %s333 = smul.addr %s326, 32
      %s334 = sadd.s32 %s332, %s333
      %s335 = smul.addr %s334, 2
      %s336 = scalar_lea.vmem %s1, %s335
      %s337 = sadd.s32 %s22, 1
      %s338 = smul.u32 8, %s337
      %p339 = scmp.lt.s32.totalorder %s20, 1
      %s340 = scalar_select %p339, %s20, 1
      %s341 = smul.addr %s340, 27
      %s342 = smul.addr %s341, 4
      %s343 = scalar_lea.vmem %s2, %s342
      %p344 = scmp.lt.s32.totalorder %s20, 1
      %s345 = scalar_select %p344, %s20, 1
      %s346 = smul.addr %s345, 8
      %s347 = scalar_lea.vmem %s3, %s346
      %s348 = smul.u32 8, %s22
      %p349 = scmp.lt.s32.totalorder %s20, 1
      %s350 = scalar_select %p349, %s20, 1
      %p351 = scmp.lt.s32.totalorder %s21, 1
      %s352 = scalar_select %p351, %s21, 1
      %p353 = scmp.lt.s32.totalorder %s348, 7
      %s354 = scalar_select %p353, %s348, 7
      %s355 = smul.addr %s352, 8
      %s356 = sadd.s32 %s354, %s355
      %s357 = smul.addr %s350, 16
      %s358 = sadd.s32 %s356, %s357
      %s359 = smul.addr %s358, 8
      %s360 = scalar_lea.vmem %s4, %s359
      %s361 = smul.u32 8, %s22
      %v363 = vld [vmem:[%s321] sm:$0xff]
      %v364 = vld [vmem:[%s321 + $0x8] sm:$0xff]
      %v365 = vld [vmem:[%s336] sm:$0xff]
      %v368 = vcombine.high %v363, %v363
      %v370 = vunpack.c.l.s4 1983009808
      %v371 = vunpack.c.0.s8 %v370
      %v372 = vlaneseq
      %v373 = vshrl.u32 %v372, 7
      %v374 = vsub.s32 %v371, %v373
      %v375 = vrot.slane %v363, %v374
      %v377 = vunpack.c.l.s4 1983009808
      %v378 = vunpack.c.0.s8 %v377
      %v379 = vlaneseq
      %v380 = vshrl.u32 %v379, 7
      %v381 = vsub.s32 %v378, %v380
      %v382 = vrot.slane %v368, %v381
      %v383 = vcombine.high %v375, %v375
      %v384 = vcombine.high %v382, %v382
      %v385 = vcombine.high %v364, %v364
      %v387 = vunpack.c.l.s4 1983009808
      %v388 = vunpack.c.0.s8 %v387
      %v389 = vlaneseq
      %v390 = vshrl.u32 %v389, 7
      %v391 = vsub.s32 %v388, %v390
      %v392 = vrot.slane %v364, %v391
      %v394 = vunpack.c.l.s4 1983009808
      %v395 = vunpack.c.0.s8 %v394
      %v396 = vlaneseq
      %v397 = vshrl.u32 %v396, 7
      %v398 = vsub.s32 %v395, %v397
      %v399 = vrot.slane %v385, %v398
      %v400 = vcombine.high %v392, %v392
      %v401 = vcombine.high %v399, %v399
      %v404 = vunpack.c.l.s4 1983009808
      %v405 = vunpack.c.0.s8 %v404
      %v406 = vlaneseq
      %v407 = vshrl.u32 %v406, 7
      %v408 = vsub.s32 %v405, %v407
      %v409 = vrot.slane %v365, %v408
      %v410 = vcombine.high %v409, %v409
      %v411 = vld [vmem:[%s343] sm:$0xf]
      %s412 = scalar_lea.vmem %s343, 4
      %v413 = vld [vmem:[%s412] sm:$0xf]
      %414 = vrot.lane.b32.xlu0 %v375, 127
      %v415 = vpop.permute.xlu0 %414
      %416 = vrot.lane.b32.xlu0 %v383, 127
      %v417 = vpop.permute.xlu0 %416
      %418 = vrot.lane.b32.xlu0 %v382, 127
      %v419 = vpop.permute.xlu0 %418
      %420 = vrot.lane.b32.xlu0 %v384, 127
      %v421 = vpop.permute.xlu0 %420
      %422 = vrot.lane.b32.xlu0 %v392, 127
      %v423 = vpop.permute.xlu0 %422
      %424 = vrot.lane.b32.xlu0 %v400, 127
      %v425 = vpop.permute.xlu0 %424
      %426 = vrot.lane.b32.xlu0 %v399, 127
      %v427 = vpop.permute.xlu0 %426
      %428 = vrot.lane.b32.xlu0 %v401, 127
      %v429 = vpop.permute.xlu0 %428
      %430 = vrot.lane.b32.xlu0 %v409, 127
      %v431 = vpop.permute.xlu0 %430
      %vm432 = vcmask 1039360
      %v433 = vsel %vm432, %v415, %v417
      %v434 = vsel %vm432, %v417, %v419
      %v435 = vsel %vm432, %v419, %v421
      %v436 = vsel %vm432, %v421, %v423
      %v437 = vsel %vm432, %v423, %v425
      %v438 = vsel %vm432, %v425, %v427
      %v439 = vsel %vm432, %v427, %v429
      %v440 = vsel %vm432, %v429, %v431
      %vm441 = vcmask 31744
      %v443 = vsel %vm441, %v413, 0
      %vm445 = vcmask 1041408
      %v447 = vsel %vm445, %v433, 0
      %v450 = vsel %vm445, %v434, 0
      %v453 = vsel %vm445, %v435, 0
      %v456 = vsel %vm445, %v436, 0
      %v459 = vsel %vm445, %v437, 0
      %v462 = vsel %vm445, %v438, 0
      %v465 = vsel %vm445, %v439, 0
      %v468 = vsel %vm445, %v440, 0
      %470 = vmatprep.subr.bf16.mxu0 %v450
      %471 = vmatpush1.bf16.msra.mxu0 %v447
      %472 = vmatprep.subr.bf16.mxu0 0
      %473 = vmatpush1.bf16.msra.mxu0 0
      %474 = vmatprep.subr.bf16.mxu0 0
      %475 = vmatpush1.bf16.msra.mxu0 0
      %476 = vmatprep.subr.bf16.mxu0 0
      %477 = vmatpush1.bf16.msra.mxu0 0
      %478 = vmatprep.subr.bf16.mxu0 0
      %479 = vmatpush1.bf16.msra.mxu0 0
      %480 = vmatprep.subr.bf16.mxu0 0
      %481 = vmatpush1.bf16.msra.mxu0 0
      %482 = vmatprep.subr.bf16.mxu0 0
      %483 = vmatpush1.bf16.msra.mxu0 0
      %484 = vmatprep.subr.bf16.mxu0 0
      %485 = vmatpush1.bf16.msra.mxu0 0
      %486 = vmatprep.subr.bf16.mxu0 0
      %487 = vmatpush1.bf16.msra.mxu0 0
      %488 = vmatprep.subr.bf16.mxu0 0
      %489 = vmatpush1.bf16.msra.mxu0 0
      %490 = vmatprep.subr.bf16.mxu0 0
      %491 = vmatpush1.bf16.msra.mxu0 0
      %492 = vmatprep.subr.bf16.mxu0 0
      %493 = vmatpush1.bf16.msra.mxu0 0
      %494 = vmatprep.subr.bf16.mxu0 0
      %495 = vmatpush1.bf16.msra.mxu0 0
      %496 = vmatprep.subr.bf16.mxu0 0
      %497 = vmatpush1.bf16.msra.mxu0 0
      %498 = vmatprep.subr.bf16.mxu0 0
      %499 = vmatpush1.bf16.msra.mxu0 0
      %500 = vmatprep.subr.bf16.mxu0 0
      %501 = vmatpush1.bf16.msra.mxu0 0
      %502 = vmatprep.mubr.bf16.mxu0 0
      %503 = vmatmul.mubr.bf16.gmra.mrb[0].mxu0 %v443
      %v504 = vpop.f32.mrb[0].mxu0
      %v505 = vadd.f32 0.0, %v504
      %v506 = vpop.f32.mrb[0].mxu0
      %v507 = vadd.f32 0.0, %v506
      %v508 = vpop.f32.mrb[0].mxu0
      %v509 = vpop.f32.mrb[0].mxu0
      %510 = vdwg.mxu0
      %511 = vmatprep.subr.bf16.mxu0 %v456
      %512 = vmatpush1.bf16.msra.mxu0 %v453
      %513 = vmatprep.subr.bf16.mxu0 0
      %514 = vmatpush1.bf16.msra.mxu0 0
      %515 = vmatprep.subr.bf16.mxu0 0
      %516 = vmatpush1.bf16.msra.mxu0 0
      %517 = vmatprep.subr.bf16.mxu0 0
      %518 = vmatpush1.bf16.msra.mxu0 0
      %519 = vmatprep.subr.bf16.mxu0 0
      %520 = vmatpush1.bf16.msra.mxu0 0
      %521 = vmatprep.subr.bf16.mxu0 0
      %522 = vmatpush1.bf16.msra.mxu0 0
      %523 = vmatprep.subr.bf16.mxu0 0
      %524 = vmatpush1.bf16.msra.mxu0 0
      %525 = vmatprep.subr.bf16.mxu0 0
      %526 = vmatpush1.bf16.msra.mxu0 0
      %527 = vmatprep.subr.bf16.mxu0 0
      %528 = vmatpush1.bf16.msra.mxu0 0
      %529 = vmatprep.subr.bf16.mxu0 0
      %530 = vmatpush1.bf16.msra.mxu0 0
      %531 = vmatprep.subr.bf16.mxu0 0
      %532 = vmatpush1.bf16.msra.mxu0 0
      %533 = vmatprep.subr.bf16.mxu0 0
      %534 = vmatpush1.bf16.msra.mxu0 0
      %535 = vmatprep.subr.bf16.mxu0 0
      %536 = vmatpush1.bf16.msra.mxu0 0
      %537 = vmatprep.subr.bf16.mxu0 0
      %538 = vmatpush1.bf16.msra.mxu0 0
      %539 = vmatprep.subr.bf16.mxu0 0
      %540 = vmatpush1.bf16.msra.mxu0 0
      %541 = vmatprep.subr.bf16.mxu0 0
      %542 = vmatpush1.bf16.msra.mxu0 0
      %543 = vmatprep.mubr.bf16.mxu0 0
      %544 = vmatmul.mubr.bf16.gmra.mrb[0].mxu0 %v443
      %v545 = vpop.f32.mrb[0].mxu0
      %v546 = vadd.f32 0.0, %v545
      %v547 = vpop.f32.mrb[0].mxu0
      %v548 = vadd.f32 0.0, %v547
      %v549 = vpop.f32.mrb[0].mxu0
      %v550 = vpop.f32.mrb[0].mxu0
      %551 = vdwg.mxu0
      %552 = vmatprep.subr.bf16.mxu0 %v462
      %553 = vmatpush1.bf16.msra.mxu0 %v459
      %554 = vmatprep.subr.bf16.mxu0 0
      %555 = vmatpush1.bf16.msra.mxu0 0
      %556 = vmatprep.subr.bf16.mxu0 0
      %557 = vmatpush1.bf16.msra.mxu0 0
      %558 = vmatprep.subr.bf16.mxu0 0
      %559 = vmatpush1.bf16.msra.mxu0 0
      %560 = vmatprep.subr.bf16.mxu0 0
      %561 = vmatpush1.bf16.msra.mxu0 0
      %562 = vmatprep.subr.bf16.mxu0 0
      %563 = vmatpush1.bf16.msra.mxu0 0
      %564 = vmatprep.subr.bf16.mxu0 0
      %565 = vmatpush1.bf16.msra.mxu0 0
      %566 = vmatprep.subr.bf16.mxu0 0
      %567 = vmatpush1.bf16.msra.mxu0 0
      %568 = vmatprep.subr.bf16.mxu0 0
      %569 = vmatpush1.bf16.msra.mxu0 0
      %570 = vmatprep.subr.bf16.mxu0 0
      %571 = vmatpush1.bf16.msra.mxu0 0
      %572 = vmatprep.subr.bf16.mxu0 0
      %573 = vmatpush1.bf16.msra.mxu0 0
      %574 = vmatprep.subr.bf16.mxu0 0
      %575 = vmatpush1.bf16.msra.mxu0 0
      %576 = vmatprep.subr.bf16.mxu0 0
      %577 = vmatpush1.bf16.msra.mxu0 0
      %578 = vmatprep.subr.bf16.mxu0 0
      %579 = vmatpush1.bf16.msra.mxu0 0
      %580 = vmatprep.subr.bf16.mxu0 0
      %581 = vmatpush1.bf16.msra.mxu0 0
      %582 = vmatprep.subr.bf16.mxu0 0
      %583 = vmatpush1.bf16.msra.mxu0 0
      %584 = vmatprep.mubr.bf16.mxu0 0
      %585 = vmatmul.mubr.bf16.gmra.mrb[0].mxu0 %v443
      %v586 = vpop.f32.mrb[0].mxu0
      %v587 = vadd.f32 0.0, %v586
      %v588 = vpop.f32.mrb[0].mxu0
      %v589 = vadd.f32 0.0, %v588
      %v590 = vpop.f32.mrb[0].mxu0
      %v591 = vpop.f32.mrb[0].mxu0
      %592 = vdwg.mxu0
      %593 = vmatprep.subr.bf16.mxu0 %v468
      %594 = vmatpush1.bf16.msra.mxu0 %v465
      %595 = vmatprep.subr.bf16.mxu0 0
      %596 = vmatpush1.bf16.msra.mxu0 0
      %597 = vmatprep.subr.bf16.mxu0 0
      %598 = vmatpush1.bf16.msra.mxu0 0
      %599 = vmatprep.subr.bf16.mxu0 0
      %600 = vmatpush1.bf16.msra.mxu0 0
      %601 = vmatprep.subr.bf16.mxu0 0
      %602 = vmatpush1.bf16.msra.mxu0 0
      %603 = vmatprep.subr.bf16.mxu0 0
      %604 = vmatpush1.bf16.msra.mxu0 0
      %605 = vmatprep.subr.bf16.mxu0 0
      %606 = vmatpush1.bf16.msra.mxu0 0
      %607 = vmatprep.subr.bf16.mxu0 0
      %608 = vmatpush1.bf16.msra.mxu0 0
      %609 = vmatprep.subr.bf16.mxu0 0
      %610 = vmatpush1.bf16.msra.mxu0 0
      %611 = vmatprep.subr.bf16.mxu0 0
      %612 = vmatpush1.bf16.msra.mxu0 0
      %613 = vmatprep.subr.bf16.mxu0 0
      %614 = vmatpush1.bf16.msra.mxu0 0
      %615 = vmatprep.subr.bf16.mxu0 0
      %616 = vmatpush1.bf16.msra.mxu0 0
      %617 = vmatprep.subr.bf16.mxu0 0
      %618 = vmatpush1.bf16.msra.mxu0 0
      %619 = vmatprep.subr.bf16.mxu0 0
      %620 = vmatpush1.bf16.msra.mxu0 0
      %621 = vmatprep.subr.bf16.mxu0 0
      %622 = vmatpush1.bf16.msra.mxu0 0
      %623 = vmatprep.subr.bf16.mxu0 0
      %624 = vmatpush1.bf16.msra.mxu0 0
      %625 = vmatprep.mubr.bf16.mxu0 0
      %626 = vmatmul.mubr.bf16.gmra.mrb[0].mxu0 %v443
      %v627 = vpop.f32.mrb[0].mxu0
      %v628 = vadd.f32 0.0, %v627
      %v629 = vpop.f32.mrb[0].mxu0
      %v630 = vadd.f32 0.0, %v629
      %v631 = vpop.f32.mrb[0].mxu0
      %v632 = vpop.f32.mrb[0].mxu0
      %633 = vdwg.mxu0
      %v635 = vsel %vm441, %v411, 0
      %v638 = vsel %vm445, %v375, 0
      %v641 = vsel %vm445, %v383, 0
      %v644 = vsel %vm445, %v382, 0
      %v647 = vsel %vm445, %v384, 0
      %v650 = vsel %vm445, %v392, 0
      %v653 = vsel %vm445, %v400, 0
      %v656 = vsel %vm445, %v399, 0
      %v659 = vsel %vm445, %v401, 0
      %661 = vmatprep.subr.bf16.mxu0 %v641
      %662 = vmatpush1.bf16.msra.mxu0 %v638
      %663 = vmatprep.subr.bf16.mxu0 0
      %664 = vmatpush1.bf16.msra.mxu0 0
      %665 = vmatprep.subr.bf16.mxu0 0
      %666 = vmatpush1.bf16.msra.mxu0 0
      %667 = vmatprep.subr.bf16.mxu0 0
      %668 = vmatpush1.bf16.msra.mxu0 0
      %669 = vmatprep.subr.bf16.mxu0 0
      %670 = vmatpush1.bf16.msra.mxu0 0
      %671 = vmatprep.subr.bf16.mxu0 0
      %672 = vmatpush1.bf16.msra.mxu0 0
      %673 = vmatprep.subr.bf16.mxu0 0
      %674 = vmatpush1.bf16.msra.mxu0 0
      %675 = vmatprep.subr.bf16.mxu0 0
      %676 = vmatpush1.bf16.msra.mxu0 0
      %677 = vmatprep.subr.bf16.mxu0 0
      %678 = vmatpush1.bf16.msra.mxu0 0
      %679 = vmatprep.subr.bf16.mxu0 0
      %680 = vmatpush1.bf16.msra.mxu0 0
      %681 = vmatprep.subr.bf16.mxu0 0
      %682 = vmatpush1.bf16.msra.mxu0 0
      %683 = vmatprep.subr.bf16.mxu0 0
      %684 = vmatpush1.bf16.msra.mxu0 0
      %685 = vmatprep.subr.bf16.mxu0 0
      %686 = vmatpush1.bf16.msra.mxu0 0
      %687 = vmatprep.subr.bf16.mxu0 0
      %688 = vmatpush1.bf16.msra.mxu0 0
      %689 = vmatprep.subr.bf16.mxu0 0
      %690 = vmatpush1.bf16.msra.mxu0 0
      %691 = vmatprep.subr.bf16.mxu0 0
      %692 = vmatpush1.bf16.msra.mxu0 0
      %693 = vmatprep.mubr.bf16.mxu0 0
      %694 = vmatmul.mubr.bf16.gmra.mrb[0].mxu0 %v635
      %v695 = vpop.f32.mrb[0].mxu0
      %v696 = vadd.f32 %v505, %v695
      %v697 = vpop.f32.mrb[0].mxu0
      %v698 = vadd.f32 %v507, %v697
      %v699 = vpop.f32.mrb[0].mxu0
      %v700 = vpop.f32.mrb[0].mxu0
      %701 = vdwg.mxu0
      %702 = vmatprep.subr.bf16.mxu0 %v647
      %703 = vmatpush1.bf16.msra.mxu0 %v644
      %704 = vmatprep.subr.bf16.mxu0 0
      %705 = vmatpush1.bf16.msra.mxu0 0
      %706 = vmatprep.subr.bf16.mxu0 0
      %707 = vmatpush1.bf16.msra.mxu0 0
      %708 = vmatprep.subr.bf16.mxu0 0
      %709 = vmatpush1.bf16.msra.mxu0 0
      %710 = vmatprep.subr.bf16.mxu0 0
      %711 = vmatpush1.bf16.msra.mxu0 0
      %712 = vmatprep.subr.bf16.mxu0 0
      %713 = vmatpush1.bf16.msra.mxu0 0
      %714 = vmatprep.subr.bf16.mxu0 0
      %715 = vmatpush1.bf16.msra.mxu0 0
      %716 = vmatprep.subr.bf16.mxu0 0
      %717 = vmatpush1.bf16.msra.mxu0 0
      %718 = vmatprep.subr.bf16.mxu0 0
      %719 = vmatpush1.bf16.msra.mxu0 0
      %720 = vmatprep.subr.bf16.mxu0 0
      %721 = vmatpush1.bf16.msra.mxu0 0
      %722 = vmatprep.subr.bf16.mxu0 0
      %723 = vmatpush1.bf16.msra.mxu0 0
      %724 = vmatprep.subr.bf16.mxu0 0
      %725 = vmatpush1.bf16.msra.mxu0 0
      %726 = vmatprep.subr.bf16.mxu0 0
      %727 = vmatpush1.bf16.msra.mxu0 0
      %728 = vmatprep.subr.bf16.mxu0 0
      %729 = vmatpush1.bf16.msra.mxu0 0
      %730 = vmatprep.subr.bf16.mxu0 0
      %731 = vmatpush1.bf16.msra.mxu0 0
      %732 = vmatprep.subr.bf16.mxu0 0
      %733 = vmatpush1.bf16.msra.mxu0 0
      %734 = vmatprep.mubr.bf16.mxu0 0
      %735 = vmatmul.mubr.bf16.gmra.mrb[0].mxu0 %v635
      %v736 = vpop.f32.mrb[0].mxu0
      %v737 = vadd.f32 %v546, %v736
      %v738 = vpop.f32.mrb[0].mxu0
      %v739 = vadd.f32 %v548, %v738
      %v740 = vpop.f32.mrb[0].mxu0
      %v741 = vpop.f32.mrb[0].mxu0
      %742 = vdwg.mxu0
      %743 = vmatprep.subr.bf16.mxu0 %v653
      %744 = vmatpush1.bf16.msra.mxu0 %v650
      %745 = vmatprep.subr.bf16.mxu0 0
      %746 = vmatpush1.bf16.msra.mxu0 0
      %747 = vmatprep.subr.bf16.mxu0 0
      %748 = vmatpush1.bf16.msra.mxu0 0
      %749 = vmatprep.subr.bf16.mxu0 0
      %750 = vmatpush1.bf16.msra.mxu0 0
      %751 = vmatprep.subr.bf16.mxu0 0
      %752 = vmatpush1.bf16.msra.mxu0 0
      %753 = vmatprep.subr.bf16.mxu0 0
      %754 = vmatpush1.bf16.msra.mxu0 0
      %755 = vmatprep.subr.bf16.mxu0 0
      %756 = vmatpush1.bf16.msra.mxu0 0
      %757 = vmatprep.subr.bf16.mxu0 0
      %758 = vmatpush1.bf16.msra.mxu0 0
      %759 = vmatprep.subr.bf16.mxu0 0
      %760 = vmatpush1.bf16.msra.mxu0 0
      %761 = vmatprep.subr.bf16.mxu0 0
      %762 = vmatpush1.bf16.msra.mxu0 0
      %763 = vmatprep.subr.bf16.mxu0 0
      %764 = vmatpush1.bf16.msra.mxu0 0
      %765 = vmatprep.subr.bf16.mxu0 0
      %766 = vmatpush1.bf16.msra.mxu0 0
      %767 = vmatprep.subr.bf16.mxu0 0
      %768 = vmatpush1.bf16.msra.mxu0 0
      %769 = vmatprep.subr.bf16.mxu0 0
      %770 = vmatpush1.bf16.msra.mxu0 0
      %771 = vmatprep.subr.bf16.mxu0 0
      %772 = vmatpush1.bf16.msra.mxu0 0
      %773 = vmatprep.subr.bf16.mxu0 0
      %774 = vmatpush1.bf16.msra.mxu0 0
      %775 = vmatprep.mubr.bf16.mxu0 0
      %776 = vmatmul.mubr.bf16.gmra.mrb[0].mxu0 %v635
      %v777 = vpop.f32.mrb[0].mxu0
      %v778 = vadd.f32 %v587, %v777
      %v779 = vpop.f32.mrb[0].mxu0
      %v780 = vadd.f32 %v589, %v779
      %v781 = vpop.f32.mrb[0].mxu0
      %v782 = vpop.f32.mrb[0].mxu0
      %783 = vdwg.mxu0
      %784 = vmatprep.subr.bf16.mxu0 %v659
      %785 = vmatpush1.bf16.msra.mxu0 %v656
      %786 = vmatprep.subr.bf16.mxu0 0
      %787 = vmatpush1.bf16.msra.mxu0 0
      %788 = vmatprep.subr.bf16.mxu0 0
      %789 = vmatpush1.bf16.msra.mxu0 0
      %790 = vmatprep.subr.bf16.mxu0 0
      %791 = vmatpush1.bf16.msra.mxu0 0
      %792 = vmatprep.subr.bf16.mxu0 0
      %793 = vmatpush1.bf16.msra.mxu0 0
      %794 = vmatprep.subr.bf16.mxu0 0
      %795 = vmatpush1.bf16.msra.mxu0 0
      %796 = vmatprep.subr.bf16.mxu0 0
      %797 = vmatpush1.bf16.msra.mxu0 0
      %798 = vmatprep.subr.bf16.mxu0 0
      %799 = vmatpush1.bf16.msra.mxu0 0
      %800 = vmatprep.subr.bf16.mxu0 0
      %801 = vmatpush1.bf16.msra.mxu0 0
      %802 = vmatprep.subr.bf16.mxu0 0
      %803 = vmatpush1.bf16.msra.mxu0 0
      %804 = vmatprep.subr.bf16.mxu0 0
      %805 = vmatpush1.bf16.msra.mxu0 0
      %806 = vmatprep.subr.bf16.mxu0 0
      %807 = vmatpush1.bf16.msra.mxu0 0
      %808 = vmatprep.subr.bf16.mxu0 0
      %809 = vmatpush1.bf16.msra.mxu0 0
      %810 = vmatprep.subr.bf16.mxu0 0
      %811 = vmatpush1.bf16.msra.mxu0 0
      %812 = vmatprep.subr.bf16.mxu0 0
      %813 = vmatpush1.bf16.msra.mxu0 0
      %814 = vmatprep.subr.bf16.mxu0 0
      %815 = vmatpush1.bf16.msra.mxu0 0
      %816 = vmatprep.mubr.bf16.mxu0 0
      %817 = vmatmul.mubr.bf16.gmra.mrb[0].mxu0 %v635
      %v818 = vpop.f32.mrb[0].mxu0
      %v819 = vadd.f32 %v628, %v818
      %v820 = vpop.f32.mrb[0].mxu0
      %v821 = vadd.f32 %v630, %v820
      %v822 = vpop.f32.mrb[0].mxu0
      %v823 = vpop.f32.mrb[0].mxu0
      %824 = vdwg.mxu0
      %s825 = scalar_lea.vmem %s343, 8
      %v826 = vld [vmem:[%s825] sm:$0xf]
      %827 = vrot.lane.b32.xlu0 %v375, 126
      %v828 = vpop.permute.xlu0 %827
      %829 = vrot.lane.b32.xlu0 %v383, 126
      %v830 = vpop.permute.xlu0 %829
      %831 = vrot.lane.b32.xlu0 %v382, 126
      %v832 = vpop.permute.xlu0 %831
      %833 = vrot.lane.b32.xlu0 %v384, 126
      %v834 = vpop.permute.xlu0 %833
      %835 = vrot.lane.b32.xlu0 %v392, 126
      %v836 = vpop.permute.xlu0 %835
      %837 = vrot.lane.b32.xlu0 %v400, 126
      %v838 = vpop.permute.xlu0 %837
      %839 = vrot.lane.b32.xlu0 %v399, 126
      %v840 = vpop.permute.xlu0 %839
      %841 = vrot.lane.b32.xlu0 %v401, 126
      %v842 = vpop.permute.xlu0 %841
      %843 = vrot.lane.b32.xlu0 %v409, 126
      %v844 = vpop.permute.xlu0 %843
      %vm845 = vcmask 1031168
      %v846 = vsel %vm845, %v828, %v830
      %v847 = vsel %vm845, %v830, %v832
      %v848 = vsel %vm845, %v832, %v834
      %v849 = vsel %vm845, %v834, %v836
      %v850 = vsel %vm845, %v836, %v838
      %v851 = vsel %vm845, %v838, %v840
      %v852 = vsel %vm845, %v840, %v842
      %v853 = vsel %vm845, %v842, %v844
      %v855 = vsel %vm441, %v826, 0
      %v858 = vsel %vm445, %v846, 0
      %v861 = vsel %vm445, %v847, 0
      %v864 = vsel %vm445, %v848, 0
      %v867 = vsel %vm445, %v849, 0
      %v870 = vsel %vm445, %v850, 0
      %v873 = vsel %vm445, %v851, 0
      %v876 = vsel %vm445, %v852, 0
      %v879 = vsel %vm445, %v853, 0
      %881 = vmatprep.subr.bf16.mxu0 %v861
      %882 = vmatpush1.bf16.msra.mxu0 %v858
      %883 = vmatprep.subr.bf16.mxu0 0
      %884 = vmatpush1.bf16.msra.mxu0 0
      %885 = vmatprep.subr.bf16.mxu0 0
      %886 = vmatpush1.bf16.msra.mxu0 0
      %887 = vmatprep.subr.bf16.mxu0 0
      %888 = vmatpush1.bf16.msra.mxu0 0
      %889 = vmatprep.subr.bf16.mxu0 0
      %890 = vmatpush1.bf16.msra.mxu0 0
      %891 = vmatprep.subr.bf16.mxu0 0
      %892 = vmatpush1.bf16.msra.mxu0 0
      %893 = vmatprep.subr.bf16.mxu0 0
      %894 = vmatpush1.bf16.msra.mxu0 0
      %895 = vmatprep.subr.bf16.mxu0 0
      %896 = vmatpush1.bf16.msra.mxu0 0
      %897 = vmatprep.subr.bf16.mxu0 0
      %898 = vmatpush1.bf16.msra.mxu0 0
      %899 = vmatprep.subr.bf16.mxu0 0
      %900 = vmatpush1.bf16.msra.mxu0 0
      %901 = vmatprep.subr.bf16.mxu0 0
      %902 = vmatpush1.bf16.msra.mxu0 0
      %903 = vmatprep.subr.bf16.mxu0 0
      %904 = vmatpush1.bf16.msra.mxu0 0
      %905 = vmatprep.subr.bf16.mxu0 0
      %906 = vmatpush1.bf16.msra.mxu0 0
      %907 = vmatprep.subr.bf16.mxu0 0
      %908 = vmatpush1.bf16.msra.mxu0 0
      %909 = vmatprep.subr.bf16.mxu0 0
      %910 = vmatpush1.bf16.msra.mxu0 0
      %911 = vmatprep.subr.bf16.mxu0 0
      %912 = vmatpush1.bf16.msra.mxu0 0
      %913 = vmatprep.mubr.bf16.mxu0 0
      %914 = vmatmul.mubr.bf16.gmra.mrb[0].mxu0 %v855
      %v915 = vpop.f32.mrb[0].mxu0
      %v916 = vadd.f32 0.0, %v915
      %v917 = vpop.f32.mrb[0].mxu0
      %v918 = vadd.f32 0.0, %v917
      %v919 = vpop.f32.mrb[0].mxu0
      %v920 = vpop.f32.mrb[0].mxu0
      %921 = vdwg.mxu0
      %922 = vmatprep.subr.bf16.mxu0 %v867
      %923 = vmatpush1.bf16.msra.mxu0 %v864
      %924 = vmatprep.subr.bf16.mxu0 0
      %925 = vmatpush1.bf16.msra.mxu0 0
      %926 = vmatprep.subr.bf16.mxu0 0
      %927 = vmatpush1.bf16.msra.mxu0 0
      %928 = vmatprep.subr.bf16.mxu0 0
      %929 = vmatpush1.bf16.msra.mxu0 0
      %930 = vmatprep.subr.bf16.mxu0 0
      %931 = vmatpush1.bf16.msra.mxu0 0
      %932 = vmatprep.subr.bf16.mxu0 0
      %933 = vmatpush1.bf16.msra.mxu0 0
      %934 = vmatprep.subr.bf16.mxu0 0
      %935 = vmatpush1.bf16.msra.mxu0 0
      %936 = vmatprep.subr.bf16.mxu0 0
      %937 = vmatpush1.bf16.msra.mxu0 0
      %938 = vmatprep.subr.bf16.mxu0 0
      %939 = vmatpush1.bf16.msra.mxu0 0
      %940 = vmatprep.subr.bf16.mxu0 0
      %941 = vmatpush1.bf16.msra.mxu0 0
      %942 = vmatprep.subr.bf16.mxu0 0
      %943 = vmatpush1.bf16.msra.mxu0 0
      %944 = vmatprep.subr.bf16.mxu0 0
      %945 = vmatpush1.bf16.msra.mxu0 0
      %946 = vmatprep.subr.bf16.mxu0 0
      %947 = vmatpush1.bf16.msra.mxu0 0
      %948 = vmatprep.subr.bf16.mxu0 0
      %949 = vmatpush1.bf16.msra.mxu0 0
      %950 = vmatprep.subr.bf16.mxu0 0
      %951 = vmatpush1.bf16.msra.mxu0 0
      %952 = vmatprep.subr.bf16.mxu0 0
      %953 = vmatpush1.bf16.msra.mxu0 0
      %954 = vmatprep.mubr.bf16.mxu0 0
      %955 = vmatmul.mubr.bf16.gmra.mrb[0].mxu0 %v855
      %v956 = vpop.f32.mrb[0].mxu0
      %v957 = vadd.f32 0.0, %v956
      %v958 = vpop.f32.mrb[0].mxu0
      %v959 = vadd.f32 0.0, %v958
      %v960 = vpop.f32.mrb[0].mxu0
      %v961 = vpop.f32.mrb[0].mxu0
      %962 = vdwg.mxu0
      %963 = vmatprep.subr.bf16.mxu0 %v873
      %964 = vmatpush1.bf16.msra.mxu0 %v870
      %965 = vmatprep.subr.bf16.mxu0 0
      %966 = vmatpush1.bf16.msra.mxu0 0
      %967 = vmatprep.subr.bf16.mxu0 0
      %968 = vmatpush1.bf16.msra.mxu0 0
      %969 = vmatprep.subr.bf16.mxu0 0
      %970 = vmatpush1.bf16.msra.mxu0 0
      %971 = vmatprep.subr.bf16.mxu0 0
      %972 = vmatpush1.bf16.msra.mxu0 0
      %973 = vmatprep.subr.bf16.mxu0 0
      %974 = vmatpush1.bf16.msra.mxu0 0
      %975 = vmatprep.subr.bf16.mxu0 0
      %976 = vmatpush1.bf16.msra.mxu0 0
      %977 = vmatprep.subr.bf16.mxu0 0
      %978 = vmatpush1.bf16.msra.mxu0 0
      %979 = vmatprep.subr.bf16.mxu0 0
      %980 = vmatpush1.bf16.msra.mxu0 0
      %981 = vmatprep.subr.bf16.mxu0 0
      %982 = vmatpush1.bf16.msra.mxu0 0
      %983 = vmatprep.subr.bf16.mxu0 0
      %984 = vmatpush1.bf16.msra.mxu0 0
      %985 = vmatprep.subr.bf16.mxu0 0
      %986 = vmatpush1.bf16.msra.mxu0 0
      %987 = vmatprep.subr.bf16.mxu0 0
      %988 = vmatpush1.bf16.msra.mxu0 0
      %989 = vmatprep.subr.bf16.mxu0 0
      %990 = vmatpush1.bf16.msra.mxu0 0
      %991 = vmatprep.subr.bf16.mxu0 0
      %992 = vmatpush1.bf16.msra.mxu0 0
      %993 = vmatprep.subr.bf16.mxu0 0
      %994 = vmatpush1.bf16.msra.mxu0 0
      %995 = vmatprep.mubr.bf16.mxu0 0
      %996 = vmatmul.mubr.bf16.gmra.mrb[0].mxu0 %v855
      %v997 = vpop.f32.mrb[0].mxu0
      %v998 = vadd.f32 0.0, %v997
      %v999 = vpop.f32.mrb[0].mxu0
      %v1000 = vadd.f32 0.0, %v999
      %v1001 = vpop.f32.mrb[0].mxu0
      %v1002 = vpop.f32.mrb[0].mxu0
      %1003 = vdwg.mxu0
      %1004 = vmatprep.subr.bf16.mxu0 %v879
      %1005 = vmatpush1.bf16.msra.mxu0 %v876
      %1006 = vmatprep.subr.bf16.mxu0 0
      %1007 = vmatpush1.bf16.msra.mxu0 0
      %1008 = vmatprep.subr.bf16.mxu0 0
      %1009 = vmatpush1.bf16.msra.mxu0 0
      %1010 = vmatprep.subr.bf16.mxu0 0
      %1011 = vmatpush1.bf16.msra.mxu0 0
      %1012 = vmatprep.subr.bf16.mxu0 0
      %1013 = vmatpush1.bf16.msra.mxu0 0
      %1014 = vmatprep.subr.bf16.mxu0 0
      %1015 = vmatpush1.bf16.msra.mxu0 0
      %1016 = vmatprep.subr.bf16.mxu0 0
      %1017 = vmatpush1.bf16.msra.mxu0 0
      %1018 = vmatprep.subr.bf16.mxu0 0
      %1019 = vmatpush1.bf16.msra.mxu0 0
      %1020 = vmatprep.subr.bf16.mxu0 0
      %1021 = vmatpush1.bf16.msra.mxu0 0
      %1022 = vmatprep.subr.bf16.mxu0 0
      %1023 = vmatpush1.bf16.msra.mxu0 0
      %1024 = vmatprep.subr.bf16.mxu0 0
      %1025 = vmatpush1.bf16.msra.mxu0 0
      %1026 = vmatprep.subr.bf16.mxu0 0
      %1027 = vmatpush1.bf16.msra.mxu0 0
      %1028 = vmatprep.subr.bf16.mxu0 0
      %1029 = vmatpush1.bf16.msra.mxu0 0
      %1030 = vmatprep.subr.bf16.mxu0 0
      %1031 = vmatpush1.bf16.msra.mxu0 0
      %1032 = vmatprep.subr.bf16.mxu0 0
      %1033 = vmatpush1.bf16.msra.mxu0 0
      %1034 = vmatprep.subr.bf16.mxu0 0
      %1035 = vmatpush1.bf16.msra.mxu0 0
      %1036 = vmatprep.mubr.bf16.mxu0 0
      %1037 = vmatmul.mubr.bf16.gmra.mrb[0].mxu0 %v855
      %v1038 = vpop.f32.mrb[0].mxu0
      %v1039 = vadd.f32 0.0, %v1038
      %v1040 = vpop.f32.mrb[0].mxu0
      %v1041 = vadd.f32 0.0, %v1040
      %v1042 = vpop.f32.mrb[0].mxu0
      %v1043 = vpop.f32.mrb[0].mxu0
      %1044 = vdwg.mxu0
      %v1045 = vadd.f32 %v696, %v916
      %v1046 = vadd.f32 %v698, %v918
      %v1047 = vadd.f32 %v737, %v957
      %v1048 = vadd.f32 %v739, %v959
      %v1049 = vadd.f32 %v778, %v998
      %v1050 = vadd.f32 %v780, %v1000
      %v1051 = vadd.f32 %v819, %v1039
      %v1052 = vadd.f32 %v821, %v1041
      %s1053 = scalar_lea.vmem %s343, 12
      %v1054 = vld [vmem:[%s1053] sm:$0xf]
      %1055 = vrot.lane.b32.xlu0 %v375, 118
      %v1056 = vpop.permute.xlu0 %1055
      %1057 = vrot.lane.b32.xlu0 %v383, 118
      %v1058 = vpop.permute.xlu0 %1057
      %1059 = vrot.lane.b32.xlu0 %v382, 118
      %v1060 = vpop.permute.xlu0 %1059
      %1061 = vrot.lane.b32.xlu0 %v384, 118
      %v1062 = vpop.permute.xlu0 %1061
      %1063 = vrot.lane.b32.xlu0 %v392, 118
      %v1064 = vpop.permute.xlu0 %1063
      %1065 = vrot.lane.b32.xlu0 %v400, 118
      %v1066 = vpop.permute.xlu0 %1065
      %1067 = vrot.lane.b32.xlu0 %v399, 118
      %v1068 = vpop.permute.xlu0 %1067
      %1069 = vrot.lane.b32.xlu0 %v401, 118
      %v1070 = vpop.permute.xlu0 %1069
      %1071 = vrot.lane.b32.xlu0 %v409, 118
      %v1072 = vpop.permute.xlu0 %1071
      %vm1073 = vcmask 965632
      %v1074 = vsel %vm1073, %v1056, %v1058
      %v1075 = vsel %vm1073, %v1058, %v1060
      %v1076 = vsel %vm1073, %v1060, %v1062
      %v1077 = vsel %vm1073, %v1062, %v1064
      %v1078 = vsel %vm1073, %v1064, %v1066
      %v1079 = vsel %vm1073, %v1066, %v1068
      %v1080 = vsel %vm1073, %v1068, %v1070
      %v1081 = vsel %vm1073, %v1070, %v1072
      %v1083 = vsel %vm441, %v1054, 0
      %v1086 = vsel %vm445, %v1074, 0
      %v1089 = vsel %vm445, %v1075, 0
      %v1092 = vsel %vm445, %v1076, 0
      %v1095 = vsel %vm445, %v1077, 0
      %v1098 = vsel %vm445, %v1078, 0
      %v1101 = vsel %vm445, %v1079, 0
      %v1104 = vsel %vm445, %v1080, 0
      %v1107 = vsel %vm445, %v1081, 0
      %1109 = vmatprep.subr.bf16.mxu0 %v1089
      %1110 = vmatpush1.bf16.msra.mxu0 %v1086
      %1111 = vmatprep.subr.bf16.mxu0 0
      %1112 = vmatpush1.bf16.msra.mxu0 0
      %1113 = vmatprep.subr.bf16.mxu0 0
      %1114 = vmatpush1.bf16.msra.mxu0 0
      %1115 = vmatprep.subr.bf16.mxu0 0
      %1116 = vmatpush1.bf16.msra.mxu0 0
      %1117 = vmatprep.subr.bf16.mxu0 0
      %1118 = vmatpush1.bf16.msra.mxu0 0
      %1119 = vmatprep.subr.bf16.mxu0 0
      %1120 = vmatpush1.bf16.msra.mxu0 0
      %1121 = vmatprep.subr.bf16.mxu0 0
      %1122 = vmatpush1.bf16.msra.mxu0 0
      %1123 = vmatprep.subr.bf16.mxu0 0
      %1124 = vmatpush1.bf16.msra.mxu0 0
      %1125 = vmatprep.subr.bf16.mxu0 0
      %1126 = vmatpush1.bf16.msra.mxu0 0
      %1127 = vmatprep.subr.bf16.mxu0 0
      %1128 = vmatpush1.bf16.msra.mxu0 0
      %1129 = vmatprep.subr.bf16.mxu0 0
      %1130 = vmatpush1.bf16.msra.mxu0 0
      %1131 = vmatprep.subr.bf16.mxu0 0
      %1132 = vmatpush1.bf16.msra.mxu0 0
      %1133 = vmatprep.subr.bf16.mxu0 0
      %1134 = vmatpush1.bf16.msra.mxu0 0
      %1135 = vmatprep.subr.bf16.mxu0 0
      %1136 = vmatpush1.bf16.msra.mxu0 0
      %1137 = vmatprep.subr.bf16.mxu0 0
      %1138 = vmatpush1.bf16.msra.mxu0 0
      %1139 = vmatprep.subr.bf16.mxu0 0
      %1140 = vmatpush1.bf16.msra.mxu0 0
      %1141 = vmatprep.mubr.bf16.mxu0 0
      %1142 = vmatmul.mubr.bf16.gmra.mrb[0].mxu0 %v1083
      %v1143 = vpop.f32.mrb[0].mxu0
      %v1144 = vadd.f32 0.0, %v1143
      %v1145 = vpop.f32.mrb[0].mxu0
      %v1146 = vadd.f32 0.0, %v1145
      %v1147 = vpop.f32.mrb[0].mxu0
      %v1148 = vpop.f32.mrb[0].mxu0
      %1149 = vdwg.mxu0
      %1150 = vmatprep.subr.bf16.mxu0 %v1095
      %1151 = vmatpush1.bf16.msra.mxu0 %v1092
      %1152 = vmatprep.subr.bf16.mxu0 0
      %1153 = vmatpush1.bf16.msra.mxu0 0
      %1154 = vmatprep.subr.bf16.mxu0 0
      %1155 = vmatpush1.bf16.msra.mxu0 0
      %1156 = vmatprep.subr.bf16.mxu0 0
      %1157 = vmatpush1.bf16.msra.mxu0 0
      %1158 = vmatprep.subr.bf16.mxu0 0
      %1159 = vmatpush1.bf16.msra.mxu0 0
      %1160 = vmatprep.subr.bf16.mxu0 0
      %1161 = vmatpush1.bf16.msra.mxu0 0
      %1162 = vmatprep.subr.bf16.mxu0 0
      %1163 = vmatpush1.bf16.msra.mxu0 0
      %1164 = vmatprep.subr.bf16.mxu0 0
      %1165 = vmatpush1.bf16.msra.mxu0 0
      %1166 = vmatprep.subr.bf16.mxu0 0
      %1167 = vmatpush1.bf16.msra.mxu0 0
      %1168 = vmatprep.subr.bf16.mxu0 0
      %1169 = vmatpush1.bf16.msra.mxu0 0
      %1170 = vmatprep.subr.bf16.mxu0 0
      %1171 = vmatpush1.bf16.msra.mxu0 0
      %1172 = vmatprep.subr.bf16.mxu0 0
      %1173 = vmatpush1.bf16.msra.mxu0 0
      %1174 = vmatprep.subr.bf16.mxu0 0
      %1175 = vmatpush1.bf16.msra.mxu0 0
      %1176 = vmatprep.subr.bf16.mxu0 0
      %1177 = vmatpush1.bf16.msra.mxu0 0
      %1178 = vmatprep.subr.bf16.mxu0 0
      %1179 = vmatpush1.bf16.msra.mxu0 0
      %1180 = vmatprep.subr.bf16.mxu0 0
      %1181 = vmatpush1.bf16.msra.mxu0 0
      %1182 = vmatprep.mubr.bf16.mxu0 0
      %1183 = vmatmul.mubr.bf16.gmra.mrb[0].mxu0 %v1083
      %v1184 = vpop.f32.mrb[0].mxu0
      %v1185 = vadd.f32 0.0, %v1184
      %v1186 = vpop.f32.mrb[0].mxu0
      %v1187 = vadd.f32 0.0, %v1186
      %v1188 = vpop.f32.mrb[0].mxu0
      %v1189 = vpop.f32.mrb[0].mxu0
      %1190 = vdwg.mxu0
      %1191 = vmatprep.subr.bf16.mxu0 %v1101
      %1192 = vmatpush1.bf16.msra.mxu0 %v1098
      %1193 = vmatprep.subr.bf16.mxu0 0
      %1194 = vmatpush1.bf16.msra.mxu0 0
      %1195 = vmatprep.subr.bf16.mxu0 0
      %1196 = vmatpush1.bf16.msra.mxu0 0
      %1197 = vmatprep.subr.bf16.mxu0 0
      %1198 = vmatpush1.bf16.msra.mxu0 0
      %1199 = vmatprep.subr.bf16.mxu0 0
      %1200 = vmatpush1.bf16.msra.mxu0 0
      %1201 = vmatprep.subr.bf16.mxu0 0
      %1202 = vmatpush1.bf16.msra.mxu0 0
      %1203 = vmatprep.subr.bf16.mxu0 0
      %1204 = vmatpush1.bf16.msra.mxu0 0
      %1205 = vmatprep.subr.bf16.mxu0 0
      %1206 = vmatpush1.bf16.msra.mxu0 0
      %1207 = vmatprep.subr.bf16.mxu0 0
      %1208 = vmatpush1.bf16.msra.mxu0 0
      %1209 = vmatprep.subr.bf16.mxu0 0
      %1210 = vmatpush1.bf16.msra.mxu0 0
      %1211 = vmatprep.subr.bf16.mxu0 0
      %1212 = vmatpush1.bf16.msra.mxu0 0
      %1213 = vmatprep.subr.bf16.mxu0 0
      %1214 = vmatpush1.bf16.msra.mxu0 0
      %1215 = vmatprep.subr.bf16.mxu0 0
      %1216 = vmatpush1.bf16.msra.mxu0 0
      %1217 = vmatprep.subr.bf16.mxu0 0
      %1218 = vmatpush1.bf16.msra.mxu0 0
      %1219 = vmatprep.subr.bf16.mxu0 0
      %1220 = vmatpush1.bf16.msra.mxu0 0
      %1221 = vmatprep.subr.bf16.mxu0 0
      %1222 = vmatpush1.bf16.msra.mxu0 0
      %1223 = vmatprep.mubr.bf16.mxu0 0
      %1224 = vmatmul.mubr.bf16.gmra.mrb[0].mxu0 %v1083
      %v1225 = vpop.f32.mrb[0].mxu0
      %v1226 = vadd.f32 0.0, %v1225
      %v1227 = vpop.f32.mrb[0].mxu0
      %v1228 = vadd.f32 0.0, %v1227
      %v1229 = vpop.f32.mrb[0].mxu0
      %v1230 = vpop.f32.mrb[0].mxu0
      %1231 = vdwg.mxu0
      %1232 = vmatprep.subr.bf16.mxu0 %v1107
      %1233 = vmatpush1.bf16.msra.mxu0 %v1104
      %1234 = vmatprep.subr.bf16.mxu0 0
      %1235 = vmatpush1.bf16.msra.mxu0 0
      %1236 = vmatprep.subr.bf16.mxu0 0
      %1237 = vmatpush1.bf16.msra.mxu0 0
      %1238 = vmatprep.subr.bf16.mxu0 0
      %1239 = vmatpush1.bf16.msra.mxu0 0
      %1240 = vmatprep.subr.bf16.mxu0 0
      %1241 = vmatpush1.bf16.msra.mxu0 0
      %1242 = vmatprep.subr.bf16.mxu0 0
      %1243 = vmatpush1.bf16.msra.mxu0 0
      %1244 = vmatprep.subr.bf16.mxu0 0
      %1245 = vmatpush1.bf16.msra.mxu0 0
      %1246 = vmatprep.subr.bf16.mxu0 0
      %1247 = vmatpush1.bf16.msra.mxu0 0
      %1248 = vmatprep.subr.bf16.mxu0 0
      %1249 = vmatpush1.bf16.msra.mxu0 0
      %1250 = vmatprep.subr.bf16.mxu0 0
      %1251 = vmatpush1.bf16.msra.mxu0 0
      %1252 = vmatprep.subr.bf16.mxu0 0
      %1253 = vmatpush1.bf16.msra.mxu0 0
      %1254 = vmatprep.subr.bf16.mxu0 0
      %1255 = vmatpush1.bf16.msra.mxu0 0
      %1256 = vmatprep.subr.bf16.mxu0 0
      %1257 = vmatpush1.bf16.msra.mxu0 0
      %1258 = vmatprep.subr.bf16.mxu0 0
      %1259 = vmatpush1.bf16.msra.mxu0 0
      %1260 = vmatprep.subr.bf16.mxu0 0
      %1261 = vmatpush1.bf16.msra.mxu0 0
      %1262 = vmatprep.subr.bf16.mxu0 0
      %1263 = vmatpush1.bf16.msra.mxu0 0
      %1264 = vmatprep.mubr.bf16.mxu0 0
      %1265 = vmatmul.mubr.bf16.gmra.mrb[0].mxu0 %v1083
      %v1266 = vpop.f32.mrb[0].mxu0
      %v1267 = vadd.f32 0.0, %v1266
      %v1268 = vpop.f32.mrb[0].mxu0
      %v1269 = vadd.f32 0.0, %v1268
      %v1270 = vpop.f32.mrb[0].mxu0
      %v1271 = vpop.f32.mrb[0].mxu0
      %1272 = vdwg.mxu0
      %v1273 = vadd.f32 %v1045, %v1144
      %v1274 = vadd.f32 %v1046, %v1146
      %v1275 = vadd.f32 %v1047, %v1185
      %v1276 = vadd.f32 %v1048, %v1187
      %v1277 = vadd.f32 %v1049, %v1226
      %v1278 = vadd.f32 %v1050, %v1228
      %v1279 = vadd.f32 %v1051, %v1267
      %v1280 = vadd.f32 %v1052, %v1269
      %s1281 = scalar_lea.vmem %s343, 16
      %v1282 = vld [vmem:[%s1281] sm:$0xf]
      %1283 = vrot.lane.b32.xlu0 %v375, 117
      %v1284 = vpop.permute.xlu0 %1283
      %1285 = vrot.lane.b32.xlu0 %v383, 117
      %v1286 = vpop.permute.xlu0 %1285
      %1287 = vrot.lane.b32.xlu0 %v382, 117
      %v1288 = vpop.permute.xlu0 %1287
      %1289 = vrot.lane.b32.xlu0 %v384, 117
      %v1290 = vpop.permute.xlu0 %1289
      %1291 = vrot.lane.b32.xlu0 %v392, 117
      %v1292 = vpop.permute.xlu0 %1291
      %1293 = vrot.lane.b32.xlu0 %v400, 117
      %v1294 = vpop.permute.xlu0 %1293
      %1295 = vrot.lane.b32.xlu0 %v399, 117
      %v1296 = vpop.permute.xlu0 %1295
      %1297 = vrot.lane.b32.xlu0 %v401, 117
      %v1298 = vpop.permute.xlu0 %1297
      %1299 = vrot.lane.b32.xlu0 %v409, 117
      %v1300 = vpop.permute.xlu0 %1299
      %vm1301 = vcmask 957440
      %v1302 = vsel %vm1301, %v1284, %v1286
      %v1303 = vsel %vm1301, %v1286, %v1288
      %v1304 = vsel %vm1301, %v1288, %v1290
      %v1305 = vsel %vm1301, %v1290, %v1292
      %v1306 = vsel %vm1301, %v1292, %v1294
      %v1307 = vsel %vm1301, %v1294, %v1296
      %v1308 = vsel %vm1301, %v1296, %v1298
      %v1309 = vsel %vm1301, %v1298, %v1300
      %v1311 = vsel %vm441, %v1282, 0
      %v1314 = vsel %vm445, %v1302, 0
      %v1317 = vsel %vm445, %v1303, 0
      %v1320 = vsel %vm445, %v1304, 0
      %v1323 = vsel %vm445, %v1305, 0
      %v1326 = vsel %vm445, %v1306, 0
      %v1329 = vsel %vm445, %v1307, 0
      %v1332 = vsel %vm445, %v1308, 0
      %v1335 = vsel %vm445, %v1309, 0
      %1337 = vmatprep.subr.bf16.mxu0 %v1317
      %1338 = vmatpush1.bf16.msra.mxu0 %v1314
      %1339 = vmatprep.subr.bf16.mxu0 0
      %1340 = vmatpush1.bf16.msra.mxu0 0
      %1341 = vmatprep.subr.bf16.mxu0 0
      %1342 = vmatpush1.bf16.msra.mxu0 0
      %1343 = vmatprep.subr.bf16.mxu0 0
      %1344 = vmatpush1.bf16.msra.mxu0 0
      %1345 = vmatprep.subr.bf16.mxu0 0
      %1346 = vmatpush1.bf16.msra.mxu0 0
      %1347 = vmatprep.subr.bf16.mxu0 0
      %1348 = vmatpush1.bf16.msra.mxu0 0
      %1349 = vmatprep.subr.bf16.mxu0 0
      %1350 = vmatpush1.bf16.msra.mxu0 0
      %1351 = vmatprep.subr.bf16.mxu0 0
      %1352 = vmatpush1.bf16.msra.mxu0 0
      %1353 = vmatprep.subr.bf16.mxu0 0
      %1354 = vmatpush1.bf16.msra.mxu0 0
      %1355 = vmatprep.subr.bf16.mxu0 0
      %1356 = vmatpush1.bf16.msra.mxu0 0
      %1357 = vmatprep.subr.bf16.mxu0 0
      %1358 = vmatpush1.bf16.msra.mxu0 0
      %1359 = vmatprep.subr.bf16.mxu0 0
      %1360 = vmatpush1.bf16.msra.mxu0 0
      %1361 = vmatprep.subr.bf16.mxu0 0
      %1362 = vmatpush1.bf16.msra.mxu0 0
      %1363 = vmatprep.subr.bf16.mxu0 0
      %1364 = vmatpush1.bf16.msra.mxu0 0
      %1365 = vmatprep.subr.bf16.mxu0 0
      %1366 = vmatpush1.bf16.msra.mxu0 0
      %1367 = vmatprep.subr.bf16.mxu0 0
      %1368 = vmatpush1.bf16.msra.mxu0 0
      %1369 = vmatprep.mubr.bf16.mxu0 0
      %1370 = vmatmul.mubr.bf16.gmra.mrb[0].mxu0 %v1311
      %v1371 = vpop.f32.mrb[0].mxu0
      %v1372 = vadd.f32 0.0, %v1371
      %v1373 = vpop.f32.mrb[0].mxu0
      %v1374 = vadd.f32 0.0, %v1373
      %v1375 = vpop.f32.mrb[0].mxu0
      %v1376 = vpop.f32.mrb[0].mxu0
      %1377 = vdwg.mxu0
      %1378 = vmatprep.subr.bf16.mxu0 %v1323
      %1379 = vmatpush1.bf16.msra.mxu0 %v1320
      %1380 = vmatprep.subr.bf16.mxu0 0
      %1381 = vmatpush1.bf16.msra.mxu0 0
      %1382 = vmatprep.subr.bf16.mxu0 0
      %1383 = vmatpush1.bf16.msra.mxu0 0
      %1384 = vmatprep.subr.bf16.mxu0 0
      %1385 = vmatpush1.bf16.msra.mxu0 0
      %1386 = vmatprep.subr.bf16.mxu0 0
      %1387 = vmatpush1.bf16.msra.mxu0 0
      %1388 = vmatprep.subr.bf16.mxu0 0
      %1389 = vmatpush1.bf16.msra.mxu0 0
      %1390 = vmatprep.subr.bf16.mxu0 0
      %1391 = vmatpush1.bf16.msra.mxu0 0
      %1392 = vmatprep.subr.bf16.mxu0 0
      %1393 = vmatpush1.bf16.msra.mxu0 0
      %1394 = vmatprep.subr.bf16.mxu0 0
      %1395 = vmatpush1.bf16.msra.mxu0 0
      %1396 = vmatprep.subr.bf16.mxu0 0
      %1397 = vmatpush1.bf16.msra.mxu0 0
      %1398 = vmatprep.subr.bf16.mxu0 0
      %1399 = vmatpush1.bf16.msra.mxu0 0
      %1400 = vmatprep.subr.bf16.mxu0 0
      %1401 = vmatpush1.bf16.msra.mxu0 0
      %1402 = vmatprep.subr.bf16.mxu0 0
      %1403 = vmatpush1.bf16.msra.mxu0 0
      %1404 = vmatprep.subr.bf16.mxu0 0
      %1405 = vmatpush1.bf16.msra.mxu0 0
      %1406 = vmatprep.subr.bf16.mxu0 0
      %1407 = vmatpush1.bf16.msra.mxu0 0
      %1408 = vmatprep.subr.bf16.mxu0 0
      %1409 = vmatpush1.bf16.msra.mxu0 0
      %1410 = vmatprep.mubr.bf16.mxu0 0
      %1411 = vmatmul.mubr.bf16.gmra.mrb[0].mxu0 %v1311
      %v1412 = vpop.f32.mrb[0].mxu0
      %v1413 = vadd.f32 0.0, %v1412
      %v1414 = vpop.f32.mrb[0].mxu0
      %v1415 = vadd.f32 0.0, %v1414
      %v1416 = vpop.f32.mrb[0].mxu0
      %v1417 = vpop.f32.mrb[0].mxu0
      %1418 = vdwg.mxu0
      %1419 = vmatprep.subr.bf16.mxu0 %v1329
      %1420 = vmatpush1.bf16.msra.mxu0 %v1326
      %1421 = vmatprep.subr.bf16.mxu0 0
      %1422 = vmatpush1.bf16.msra.mxu0 0
      %1423 = vmatprep.subr.bf16.mxu0 0
      %1424 = vmatpush1.bf16.msra.mxu0 0
      %1425 = vmatprep.subr.bf16.mxu0 0
      %1426 = vmatpush1.bf16.msra.mxu0 0
      %1427 = vmatprep.subr.bf16.mxu0 0
      %1428 = vmatpush1.bf16.msra.mxu0 0
      %1429 = vmatprep.subr.bf16.mxu0 0
      %1430 = vmatpush1.bf16.msra.mxu0 0
      %1431 = vmatprep.subr.bf16.mxu0 0
      %1432 = vmatpush1.bf16.msra.mxu0 0
      %1433 = vmatprep.subr.bf16.mxu0 0
      %1434 = vmatpush1.bf16.msra.mxu0 0
      %1435 = vmatprep.subr.bf16.mxu0 0
      %1436 = vmatpush1.bf16.msra.mxu0 0
      %1437 = vmatprep.subr.bf16.mxu0 0
      %1438 = vmatpush1.bf16.msra.mxu0 0
      %1439 = vmatprep.subr.bf16.mxu0 0
      %1440 = vmatpush1.bf16.msra.mxu0 0
      %1441 = vmatprep.subr.bf16.mxu0 0
      %1442 = vmatpush1.bf16.msra.mxu0 0
      %1443 = vmatprep.subr.bf16.mxu0 0
      %1444 = vmatpush1.bf16.msra.mxu0 0
      %1445 = vmatprep.subr.bf16.mxu0 0
      %1446 = vmatpush1.bf16.msra.mxu0 0
      %1447 = vmatprep.subr.bf16.mxu0 0
      %1448 = vmatpush1.bf16.msra.mxu0 0
      %1449 = vmatprep.subr.bf16.mxu0 0
      %1450 = vmatpush1.bf16.msra.mxu0 0
      %1451 = vmatprep.mubr.bf16.mxu0 0
      %1452 = vmatmul.mubr.bf16.gmra.mrb[0].mxu0 %v1311
      %v1453 = vpop.f32.mrb[0].mxu0
      %v1454 = vadd.f32 0.0, %v1453
      %v1455 = vpop.f32.mrb[0].mxu0
      %v1456 = vadd.f32 0.0, %v1455
      %v1457 = vpop.f32.mrb[0].mxu0
      %v1458 = vpop.f32.mrb[0].mxu0
      %1459 = vdwg.mxu0
      %1460 = vmatprep.subr.bf16.mxu0 %v1335
      %1461 = vmatpush1.bf16.msra.mxu0 %v1332
      %1462 = vmatprep.subr.bf16.mxu0 0
      %1463 = vmatpush1.bf16.msra.mxu0 0
      %1464 = vmatprep.subr.bf16.mxu0 0
      %1465 = vmatpush1.bf16.msra.mxu0 0
      %1466 = vmatprep.subr.bf16.mxu0 0
      %1467 = vmatpush1.bf16.msra.mxu0 0
      %1468 = vmatprep.subr.bf16.mxu0 0
      %1469 = vmatpush1.bf16.msra.mxu0 0
      %1470 = vmatprep.subr.bf16.mxu0 0
      %1471 = vmatpush1.bf16.msra.mxu0 0
      %1472 = vmatprep.subr.bf16.mxu0 0
      %1473 = vmatpush1.bf16.msra.mxu0 0
      %1474 = vmatprep.subr.bf16.mxu0 0
      %1475 = vmatpush1.bf16.msra.mxu0 0
      %1476 = vmatprep.subr.bf16.mxu0 0
      %1477 = vmatpush1.bf16.msra.mxu0 0
      %1478 = vmatprep.subr.bf16.mxu0 0
      %1479 = vmatpush1.bf16.msra.mxu0 0
      %1480 = vmatprep.subr.bf16.mxu0 0
      %1481 = vmatpush1.bf16.msra.mxu0 0
      %1482 = vmatprep.subr.bf16.mxu0 0
      %1483 = vmatpush1.bf16.msra.mxu0 0
      %1484 = vmatprep.subr.bf16.mxu0 0
      %1485 = vmatpush1.bf16.msra.mxu0 0
      %1486 = vmatprep.subr.bf16.mxu0 0
      %1487 = vmatpush1.bf16.msra.mxu0 0
      %1488 = vmatprep.subr.bf16.mxu0 0
      %1489 = vmatpush1.bf16.msra.mxu0 0
      %1490 = vmatprep.subr.bf16.mxu0 0
      %1491 = vmatpush1.bf16.msra.mxu0 0
      %1492 = vmatprep.mubr.bf16.mxu0 0
      %1493 = vmatmul.mubr.bf16.gmra.mrb[0].mxu0 %v1311
      %v1494 = vpop.f32.mrb[0].mxu0
      %v1495 = vadd.f32 0.0, %v1494
      %v1496 = vpop.f32.mrb[0].mxu0
      %v1497 = vadd.f32 0.0, %v1496
      %v1498 = vpop.f32.mrb[0].mxu0
      %v1499 = vpop.f32.mrb[0].mxu0
      %1500 = vdwg.mxu0
      %v1501 = vadd.f32 %v1273, %v1372
      %v1502 = vadd.f32 %v1274, %v1374
      %v1503 = vadd.f32 %v1275, %v1413
      %v1504 = vadd.f32 %v1276, %v1415
      %v1505 = vadd.f32 %v1277, %v1454
      %v1506 = vadd.f32 %v1278, %v1456
      %v1507 = vadd.f32 %v1279, %v1495
      %v1508 = vadd.f32 %v1280, %v1497
      %s1509 = scalar_lea.vmem %s343, 20
      %v1510 = vld [vmem:[%s1509] sm:$0xf]
      %1511 = vrot.lane.b32.xlu0 %v375, 116
      %v1512 = vpop.permute.xlu0 %1511
      %1513 = vrot.lane.b32.xlu0 %v383, 116
      %v1514 = vpop.permute.xlu0 %1513
      %1515 = vrot.lane.b32.xlu0 %v382, 116
      %v1516 = vpop.permute.xlu0 %1515
      %1517 = vrot.lane.b32.xlu0 %v384, 116
      %v1518 = vpop.permute.xlu0 %1517
      %1519 = vrot.lane.b32.xlu0 %v392, 116
      %v1520 = vpop.permute.xlu0 %1519
      %1521 = vrot.lane.b32.xlu0 %v400, 116
      %v1522 = vpop.permute.xlu0 %1521
      %1523 = vrot.lane.b32.xlu0 %v399, 116
      %v1524 = vpop.permute.xlu0 %1523
      %1525 = vrot.lane.b32.xlu0 %v401, 116
      %v1526 = vpop.permute.xlu0 %1525
      %1527 = vrot.lane.b32.xlu0 %v409, 116
      %v1528 = vpop.permute.xlu0 %1527
      %vm1529 = vcmask 949248
      %v1530 = vsel %vm1529, %v1512, %v1514
      %v1531 = vsel %vm1529, %v1514, %v1516
      %v1532 = vsel %vm1529, %v1516, %v1518
      %v1533 = vsel %vm1529, %v1518, %v1520
      %v1534 = vsel %vm1529, %v1520, %v1522
      %v1535 = vsel %vm1529, %v1522, %v1524
      %v1536 = vsel %vm1529, %v1524, %v1526
      %v1537 = vsel %vm1529, %v1526, %v1528
      %v1539 = vsel %vm441, %v1510, 0
      %v1542 = vsel %vm445, %v1530, 0
      %v1545 = vsel %vm445, %v1531, 0
      %v1548 = vsel %vm445, %v1532, 0
      %v1551 = vsel %vm445, %v1533, 0
      %v1554 = vsel %vm445, %v1534, 0
      %v1557 = vsel %vm445, %v1535, 0
      %v1560 = vsel %vm445, %v1536, 0
      %v1563 = vsel %vm445, %v1537, 0
      %1565 = vmatprep.subr.bf16.mxu0 %v1545
      %1566 = vmatpush1.bf16.msra.mxu0 %v1542
      %1567 = vmatprep.subr.bf16.mxu0 0
      %1568 = vmatpush1.bf16.msra.mxu0 0
      %1569 = vmatprep.subr.bf16.mxu0 0
      %1570 = vmatpush1.bf16.msra.mxu0 0
      %1571 = vmatprep.subr.bf16.mxu0 0
      %1572 = vmatpush1.bf16.msra.mxu0 0
      %1573 = vmatprep.subr.bf16.mxu0 0
      %1574 = vmatpush1.bf16.msra.mxu0 0
      %1575 = vmatprep.subr.bf16.mxu0 0
      %1576 = vmatpush1.bf16.msra.mxu0 0
      %1577 = vmatprep.subr.bf16.mxu0 0
      %1578 = vmatpush1.bf16.msra.mxu0 0
      %1579 = vmatprep.subr.bf16.mxu0 0
      %1580 = vmatpush1.bf16.msra.mxu0 0
      %1581 = vmatprep.subr.bf16.mxu0 0
      %1582 = vmatpush1.bf16.msra.mxu0 0
      %1583 = vmatprep.subr.bf16.mxu0 0
      %1584 = vmatpush1.bf16.msra.mxu0 0
      %1585 = vmatprep.subr.bf16.mxu0 0
      %1586 = vmatpush1.bf16.msra.mxu0 0
      %1587 = vmatprep.subr.bf16.mxu0 0
      %1588 = vmatpush1.bf16.msra.mxu0 0
      %1589 = vmatprep.subr.bf16.mxu0 0
      %1590 = vmatpush1.bf16.msra.mxu0 0
      %1591 = vmatprep.subr.bf16.mxu0 0
      %1592 = vmatpush1.bf16.msra.mxu0 0
      %1593 = vmatprep.subr.bf16.mxu0 0
      %1594 = vmatpush1.bf16.msra.mxu0 0
      %1595 = vmatprep.subr.bf16.mxu0 0
      %1596 = vmatpush1.bf16.msra.mxu0 0
      %1597 = vmatprep.mubr.bf16.mxu0 0
      %1598 = vmatmul.mubr.bf16.gmra.mrb[0].mxu0 %v1539
      %v1599 = vpop.f32.mrb[0].mxu0
      %v1600 = vadd.f32 0.0, %v1599
      %v1601 = vpop.f32.mrb[0].mxu0
      %v1602 = vadd.f32 0.0, %v1601
      %v1603 = vpop.f32.mrb[0].mxu0
      %v1604 = vpop.f32.mrb[0].mxu0
      %1605 = vdwg.mxu0
      %1606 = vmatprep.subr.bf16.mxu0 %v1551
      %1607 = vmatpush1.bf16.msra.mxu0 %v1548
      %1608 = vmatprep.subr.bf16.mxu0 0
      %1609 = vmatpush1.bf16.msra.mxu0 0
      %1610 = vmatprep.subr.bf16.mxu0 0
      %1611 = vmatpush1.bf16.msra.mxu0 0
      %1612 = vmatprep.subr.bf16.mxu0 0
      %1613 = vmatpush1.bf16.msra.mxu0 0
      %1614 = vmatprep.subr.bf16.mxu0 0
      %1615 = vmatpush1.bf16.msra.mxu0 0
      %1616 = vmatprep.subr.bf16.mxu0 0
      %1617 = vmatpush1.bf16.msra.mxu0 0
      %1618 = vmatprep.subr.bf16.mxu0 0
      %1619 = vmatpush1.bf16.msra.mxu0 0
      %1620 = vmatprep.subr.bf16.mxu0 0
      %1621 = vmatpush1.bf16.msra.mxu0 0
      %1622 = vmatprep.subr.bf16.mxu0 0
      %1623 = vmatpush1.bf16.msra.mxu0 0
      %1624 = vmatprep.subr.bf16.mxu0 0
      %1625 = vmatpush1.bf16.msra.mxu0 0
      %1626 = vmatprep.subr.bf16.mxu0 0
      %1627 = vmatpush1.bf16.msra.mxu0 0
      %1628 = vmatprep.subr.bf16.mxu0 0
      %1629 = vmatpush1.bf16.msra.mxu0 0
      %1630 = vmatprep.subr.bf16.mxu0 0
      %1631 = vmatpush1.bf16.msra.mxu0 0
      %1632 = vmatprep.subr.bf16.mxu0 0
      %1633 = vmatpush1.bf16.msra.mxu0 0
      %1634 = vmatprep.subr.bf16.mxu0 0
      %1635 = vmatpush1.bf16.msra.mxu0 0
      %1636 = vmatprep.subr.bf16.mxu0 0
      %1637 = vmatpush1.bf16.msra.mxu0 0
      %1638 = vmatprep.mubr.bf16.mxu0 0
      %1639 = vmatmul.mubr.bf16.gmra.mrb[0].mxu0 %v1539
      %v1640 = vpop.f32.mrb[0].mxu0
      %v1641 = vadd.f32 0.0, %v1640
      %v1642 = vpop.f32.mrb[0].mxu0
      %v1643 = vadd.f32 0.0, %v1642
      %v1644 = vpop.f32.mrb[0].mxu0
      %v1645 = vpop.f32.mrb[0].mxu0
      %1646 = vdwg.mxu0
      %1647 = vmatprep.subr.bf16.mxu0 %v1557
      %1648 = vmatpush1.bf16.msra.mxu0 %v1554
      %1649 = vmatprep.subr.bf16.mxu0 0
      %1650 = vmatpush1.bf16.msra.mxu0 0
      %1651 = vmatprep.subr.bf16.mxu0 0
      %1652 = vmatpush1.bf16.msra.mxu0 0
      %1653 = vmatprep.subr.bf16.mxu0 0
      %1654 = vmatpush1.bf16.msra.mxu0 0
      %1655 = vmatprep.subr.bf16.mxu0 0
      %1656 = vmatpush1.bf16.msra.mxu0 0
      %1657 = vmatprep.subr.bf16.mxu0 0
      %1658 = vmatpush1.bf16.msra.mxu0 0
      %1659 = vmatprep.subr.bf16.mxu0 0
      %1660 = vmatpush1.bf16.msra.mxu0 0
      %1661 = vmatprep.subr.bf16.mxu0 0
      %1662 = vmatpush1.bf16.msra.mxu0 0
      %1663 = vmatprep.subr.bf16.mxu0 0
      %1664 = vmatpush1.bf16.msra.mxu0 0
      %1665 = vmatprep.subr.bf16.mxu0 0
      %1666 = vmatpush1.bf16.msra.mxu0 0
      %1667 = vmatprep.subr.bf16.mxu0 0
      %1668 = vmatpush1.bf16.msra.mxu0 0
      %1669 = vmatprep.subr.bf16.mxu0 0
      %1670 = vmatpush1.bf16.msra.mxu0 0
      %1671 = vmatprep.subr.bf16.mxu0 0
      %1672 = vmatpush1.bf16.msra.mxu0 0
      %1673 = vmatprep.subr.bf16.mxu0 0
      %1674 = vmatpush1.bf16.msra.mxu0 0
      %1675 = vmatprep.subr.bf16.mxu0 0
      %1676 = vmatpush1.bf16.msra.mxu0 0
      %1677 = vmatprep.subr.bf16.mxu0 0
      %1678 = vmatpush1.bf16.msra.mxu0 0
      %1679 = vmatprep.mubr.bf16.mxu0 0
      %1680 = vmatmul.mubr.bf16.gmra.mrb[0].mxu0 %v1539
      %v1681 = vpop.f32.mrb[0].mxu0
      %v1682 = vadd.f32 0.0, %v1681
      %v1683 = vpop.f32.mrb[0].mxu0
      %v1684 = vadd.f32 0.0, %v1683
      %v1685 = vpop.f32.mrb[0].mxu0
      %v1686 = vpop.f32.mrb[0].mxu0
      %1687 = vdwg.mxu0
      %1688 = vmatprep.subr.bf16.mxu0 %v1563
      %1689 = vmatpush1.bf16.msra.mxu0 %v1560
      %1690 = vmatprep.subr.bf16.mxu0 0
      %1691 = vmatpush1.bf16.msra.mxu0 0
      %1692 = vmatprep.subr.bf16.mxu0 0
      %1693 = vmatpush1.bf16.msra.mxu0 0
      %1694 = vmatprep.subr.bf16.mxu0 0
      %1695 = vmatpush1.bf16.msra.mxu0 0
      %1696 = vmatprep.subr.bf16.mxu0 0
      %1697 = vmatpush1.bf16.msra.mxu0 0
      %1698 = vmatprep.subr.bf16.mxu0 0
      %1699 = vmatpush1.bf16.msra.mxu0 0
      %1700 = vmatprep.subr.bf16.mxu0 0
      %1701 = vmatpush1.bf16.msra.mxu0 0
      %1702 = vmatprep.subr.bf16.mxu0 0
      %1703 = vmatpush1.bf16.msra.mxu0 0
      %1704 = vmatprep.subr.bf16.mxu0 0
      %1705 = vmatpush1.bf16.msra.mxu0 0
      %1706 = vmatprep.subr.bf16.mxu0 0
      %1707 = vmatpush1.bf16.msra.mxu0 0
      %1708 = vmatprep.subr.bf16.mxu0 0
      %1709 = vmatpush1.bf16.msra.mxu0 0
      %1710 = vmatprep.subr.bf16.mxu0 0
      %1711 = vmatpush1.bf16.msra.mxu0 0
      %1712 = vmatprep.subr.bf16.mxu0 0
      %1713 = vmatpush1.bf16.msra.mxu0 0
      %1714 = vmatprep.subr.bf16.mxu0 0
      %1715 = vmatpush1.bf16.msra.mxu0 0
      %1716 = vmatprep.subr.bf16.mxu0 0
      %1717 = vmatpush1.bf16.msra.mxu0 0
      %1718 = vmatprep.subr.bf16.mxu0 0
      %1719 = vmatpush1.bf16.msra.mxu0 0
      %1720 = vmatprep.mubr.bf16.mxu0 0
      %1721 = vmatmul.mubr.bf16.gmra.mrb[0].mxu0 %v1539
      %v1722 = vpop.f32.mrb[0].mxu0
      %v1723 = vadd.f32 0.0, %v1722
      %v1724 = vpop.f32.mrb[0].mxu0
      %v1725 = vadd.f32 0.0, %v1724
      %v1726 = vpop.f32.mrb[0].mxu0
      %v1727 = vpop.f32.mrb[0].mxu0
      %1728 = vdwg.mxu0
      %v1729 = vadd.f32 %v1501, %v1600
      %v1730 = vadd.f32 %v1502, %v1602
      %v1731 = vadd.f32 %v1503, %v1641
      %v1732 = vadd.f32 %v1504, %v1643
      %v1733 = vadd.f32 %v1505, %v1682
      %v1734 = vadd.f32 %v1506, %v1684
      %v1735 = vadd.f32 %v1507, %v1723
      %v1736 = vadd.f32 %v1508, %v1725
      %s1737 = scalar_lea.vmem %s343, 24
      %v1738 = vld [vmem:[%s1737] sm:$0xf]
      %1739 = vrot.lane.b32.xlu0 %v375, 108
      %v1740 = vpop.permute.xlu0 %1739
      %1741 = vrot.lane.b32.xlu0 %v383, 108
      %v1742 = vpop.permute.xlu0 %1741
      %1743 = vrot.lane.b32.xlu0 %v382, 108
      %v1744 = vpop.permute.xlu0 %1743
      %1745 = vrot.lane.b32.xlu0 %v384, 108
      %v1746 = vpop.permute.xlu0 %1745
      %1747 = vrot.lane.b32.xlu0 %v392, 108
      %v1748 = vpop.permute.xlu0 %1747
      %1749 = vrot.lane.b32.xlu0 %v400, 108
      %v1750 = vpop.permute.xlu0 %1749
      %1751 = vrot.lane.b32.xlu0 %v399, 108
      %v1752 = vpop.permute.xlu0 %1751
      %1753 = vrot.lane.b32.xlu0 %v401, 108
      %v1754 = vpop.permute.xlu0 %1753
      %1755 = vrot.lane.b32.xlu0 %v409, 108
      %v1756 = vpop.permute.xlu0 %1755
      %vm1757 = vcmask 883712
      %v1758 = vsel %vm1757, %v1740, %v1742
      %v1759 = vsel %vm1757, %v1742, %v1744
      %v1760 = vsel %vm1757, %v1744, %v1746
      %v1761 = vsel %vm1757, %v1746, %v1748
      %v1762 = vsel %vm1757, %v1748, %v1750
      %v1763 = vsel %vm1757, %v1750, %v1752
      %v1764 = vsel %vm1757, %v1752, %v1754
      %v1765 = vsel %vm1757, %v1754, %v1756
      %v1767 = vsel %vm441, %v1738, 0
      %v1770 = vsel %vm445, %v1758, 0
      %v1773 = vsel %vm445, %v1759, 0
      %v1776 = vsel %vm445, %v1760, 0
      %v1779 = vsel %vm445, %v1761, 0
      %v1782 = vsel %vm445, %v1762, 0
      %v1785 = vsel %vm445, %v1763, 0
      %v1788 = vsel %vm445, %v1764, 0
      %v1791 = vsel %vm445, %v1765, 0
      %1793 = vmatprep.subr.bf16.mxu0 %v1773
      %1794 = vmatpush1.bf16.msra.mxu0 %v1770
      %1795 = vmatprep.subr.bf16.mxu0 0
      %1796 = vmatpush1.bf16.msra.mxu0 0
      %1797 = vmatprep.subr.bf16.mxu0 0
      %1798 = vmatpush1.bf16.msra.mxu0 0
      %1799 = vmatprep.subr.bf16.mxu0 0
      %1800 = vmatpush1.bf16.msra.mxu0 0
      %1801 = vmatprep.subr.bf16.mxu0 0
      %1802 = vmatpush1.bf16.msra.mxu0 0
      %1803 = vmatprep.subr.bf16.mxu0 0
      %1804 = vmatpush1.bf16.msra.mxu0 0
      %1805 = vmatprep.subr.bf16.mxu0 0
      %1806 = vmatpush1.bf16.msra.mxu0 0
      %1807 = vmatprep.subr.bf16.mxu0 0
      %1808 = vmatpush1.bf16.msra.mxu0 0
      %1809 = vmatprep.subr.bf16.mxu0 0
      %1810 = vmatpush1.bf16.msra.mxu0 0
      %1811 = vmatprep.subr.bf16.mxu0 0
      %1812 = vmatpush1.bf16.msra.mxu0 0
      %1813 = vmatprep.subr.bf16.mxu0 0
      %1814 = vmatpush1.bf16.msra.mxu0 0
      %1815 = vmatprep.subr.bf16.mxu0 0
      %1816 = vmatpush1.bf16.msra.mxu0 0
      %1817 = vmatprep.subr.bf16.mxu0 0
      %1818 = vmatpush1.bf16.msra.mxu0 0
      %1819 = vmatprep.subr.bf16.mxu0 0
      %1820 = vmatpush1.bf16.msra.mxu0 0
      %1821 = vmatprep.subr.bf16.mxu0 0
      %1822 = vmatpush1.bf16.msra.mxu0 0
      %1823 = vmatprep.subr.bf16.mxu0 0
      %1824 = vmatpush1.bf16.msra.mxu0 0
      %1825 = vmatprep.mubr.bf16.mxu0 0
      %1826 = vmatmul.mubr.bf16.gmra.mrb[0].mxu0 %v1767
      %v1827 = vpop.f32.mrb[0].mxu0
      %v1828 = vadd.f32 0.0, %v1827
      %v1829 = vpop.f32.mrb[0].mxu0
      %v1830 = vadd.f32 0.0, %v1829
      %v1831 = vpop.f32.mrb[0].mxu0
      %v1832 = vpop.f32.mrb[0].mxu0
      %1833 = vdwg.mxu0
      %1834 = vmatprep.subr.bf16.mxu0 %v1779
      %1835 = vmatpush1.bf16.msra.mxu0 %v1776
      %1836 = vmatprep.subr.bf16.mxu0 0
      %1837 = vmatpush1.bf16.msra.mxu0 0
      %1838 = vmatprep.subr.bf16.mxu0 0
      %1839 = vmatpush1.bf16.msra.mxu0 0
      %1840 = vmatprep.subr.bf16.mxu0 0
      %1841 = vmatpush1.bf16.msra.mxu0 0
      %1842 = vmatprep.subr.bf16.mxu0 0
      %1843 = vmatpush1.bf16.msra.mxu0 0
      %1844 = vmatprep.subr.bf16.mxu0 0
      %1845 = vmatpush1.bf16.msra.mxu0 0
      %1846 = vmatprep.subr.bf16.mxu0 0
      %1847 = vmatpush1.bf16.msra.mxu0 0
      %1848 = vmatprep.subr.bf16.mxu0 0
      %1849 = vmatpush1.bf16.msra.mxu0 0
      %1850 = vmatprep.subr.bf16.mxu0 0
      %1851 = vmatpush1.bf16.msra.mxu0 0
      %1852 = vmatprep.subr.bf16.mxu0 0
      %1853 = vmatpush1.bf16.msra.mxu0 0
      %1854 = vmatprep.subr.bf16.mxu0 0
      %1855 = vmatpush1.bf16.msra.mxu0 0
      %1856 = vmatprep.subr.bf16.mxu0 0
      %1857 = vmatpush1.bf16.msra.mxu0 0
      %1858 = vmatprep.subr.bf16.mxu0 0
      %1859 = vmatpush1.bf16.msra.mxu0 0
      %1860 = vmatprep.subr.bf16.mxu0 0
      %1861 = vmatpush1.bf16.msra.mxu0 0
      %1862 = vmatprep.subr.bf16.mxu0 0
      %1863 = vmatpush1.bf16.msra.mxu0 0
      %1864 = vmatprep.subr.bf16.mxu0 0
      %1865 = vmatpush1.bf16.msra.mxu0 0
      %1866 = vmatprep.mubr.bf16.mxu0 0
      %1867 = vmatmul.mubr.bf16.gmra.mrb[0].mxu0 %v1767
      %v1868 = vpop.f32.mrb[0].mxu0
      %v1869 = vadd.f32 0.0, %v1868
      %v1870 = vpop.f32.mrb[0].mxu0
      %v1871 = vadd.f32 0.0, %v1870
      %v1872 = vpop.f32.mrb[0].mxu0
      %v1873 = vpop.f32.mrb[0].mxu0
      %1874 = vdwg.mxu0
      %1875 = vmatprep.subr.bf16.mxu0 %v1785
      %1876 = vmatpush1.bf16.msra.mxu0 %v1782
      %1877 = vmatprep.subr.bf16.mxu0 0
      %1878 = vmatpush1.bf16.msra.mxu0 0
      %1879 = vmatprep.subr.bf16.mxu0 0
      %1880 = vmatpush1.bf16.msra.mxu0 0
      %1881 = vmatprep.subr.bf16.mxu0 0
      %1882 = vmatpush1.bf16.msra.mxu0 0
      %1883 = vmatprep.subr.bf16.mxu0 0
      %1884 = vmatpush1.bf16.msra.mxu0 0
      %1885 = vmatprep.subr.bf16.mxu0 0
      %1886 = vmatpush1.bf16.msra.mxu0 0
      %1887 = vmatprep.subr.bf16.mxu0 0
      %1888 = vmatpush1.bf16.msra.mxu0 0
      %1889 = vmatprep.subr.bf16.mxu0 0
      %1890 = vmatpush1.bf16.msra.mxu0 0
      %1891 = vmatprep.subr.bf16.mxu0 0
      %1892 = vmatpush1.bf16.msra.mxu0 0
      %1893 = vmatprep.subr.bf16.mxu0 0
      %1894 = vmatpush1.bf16.msra.mxu0 0
      %1895 = vmatprep.subr.bf16.mxu0 0
      %1896 = vmatpush1.bf16.msra.mxu0 0
      %1897 = vmatprep.subr.bf16.mxu0 0
      %1898 = vmatpush1.bf16.msra.mxu0 0
      %1899 = vmatprep.subr.bf16.mxu0 0
      %1900 = vmatpush1.bf16.msra.mxu0 0
      %1901 = vmatprep.subr.bf16.mxu0 0
      %1902 = vmatpush1.bf16.msra.mxu0 0
      %1903 = vmatprep.subr.bf16.mxu0 0
      %1904 = vmatpush1.bf16.msra.mxu0 0
      %1905 = vmatprep.subr.bf16.mxu0 0
      %1906 = vmatpush1.bf16.msra.mxu0 0
      %1907 = vmatprep.mubr.bf16.mxu0 0
      %1908 = vmatmul.mubr.bf16.gmra.mrb[0].mxu0 %v1767
      %v1909 = vpop.f32.mrb[0].mxu0
      %v1910 = vadd.f32 0.0, %v1909
      %v1911 = vpop.f32.mrb[0].mxu0
      %v1912 = vadd.f32 0.0, %v1911
      %v1913 = vpop.f32.mrb[0].mxu0
      %v1914 = vpop.f32.mrb[0].mxu0
      %1915 = vdwg.mxu0
      %1916 = vmatprep.subr.bf16.mxu0 %v1791
      %1917 = vmatpush1.bf16.msra.mxu0 %v1788
      %1918 = vmatprep.subr.bf16.mxu0 0
      %1919 = vmatpush1.bf16.msra.mxu0 0
      %1920 = vmatprep.subr.bf16.mxu0 0
      %1921 = vmatpush1.bf16.msra.mxu0 0
      %1922 = vmatprep.subr.bf16.mxu0 0
      %1923 = vmatpush1.bf16.msra.mxu0 0
      %1924 = vmatprep.subr.bf16.mxu0 0
      %1925 = vmatpush1.bf16.msra.mxu0 0
      %1926 = vmatprep.subr.bf16.mxu0 0
      %1927 = vmatpush1.bf16.msra.mxu0 0
      %1928 = vmatprep.subr.bf16.mxu0 0
      %1929 = vmatpush1.bf16.msra.mxu0 0
      %1930 = vmatprep.subr.bf16.mxu0 0
      %1931 = vmatpush1.bf16.msra.mxu0 0
      %1932 = vmatprep.subr.bf16.mxu0 0
      %1933 = vmatpush1.bf16.msra.mxu0 0
      %1934 = vmatprep.subr.bf16.mxu0 0
      %1935 = vmatpush1.bf16.msra.mxu0 0
      %1936 = vmatprep.subr.bf16.mxu0 0
      %1937 = vmatpush1.bf16.msra.mxu0 0
      %1938 = vmatprep.subr.bf16.mxu0 0
      %1939 = vmatpush1.bf16.msra.mxu0 0
      %1940 = vmatprep.subr.bf16.mxu0 0
      %1941 = vmatpush1.bf16.msra.mxu0 0
      %1942 = vmatprep.subr.bf16.mxu0 0
      %1943 = vmatpush1.bf16.msra.mxu0 0
      %1944 = vmatprep.subr.bf16.mxu0 0
      %1945 = vmatpush1.bf16.msra.mxu0 0
      %1946 = vmatprep.subr.bf16.mxu0 0
      %1947 = vmatpush1.bf16.msra.mxu0 0
      %1948 = vmatprep.mubr.bf16.mxu0 0
      %1949 = vmatmul.mubr.bf16.gmra.mrb[0].mxu0 %v1767
      %v1950 = vpop.f32.mrb[0].mxu0
      %v1951 = vadd.f32 0.0, %v1950
      %v1952 = vpop.f32.mrb[0].mxu0
      %v1953 = vadd.f32 0.0, %v1952
      %v1954 = vpop.f32.mrb[0].mxu0
      %v1955 = vpop.f32.mrb[0].mxu0
      %1956 = vdwg.mxu0
      %v1957 = vadd.f32 %v1729, %v1828
      %v1958 = vadd.f32 %v1730, %v1830
      %v1959 = vadd.f32 %v1731, %v1869
      %v1960 = vadd.f32 %v1732, %v1871
      %v1961 = vadd.f32 %v1733, %v1910
      %v1962 = vadd.f32 %v1734, %v1912
      %v1963 = vadd.f32 %v1735, %v1951
      %v1964 = vadd.f32 %v1736, %v1953
      %s1965 = scalar_lea.vmem %s343, 28
      %v1966 = vld [vmem:[%s1965] sm:$0xf]
      %1967 = vrot.lane.b32.xlu0 %v375, 107
      %v1968 = vpop.permute.xlu0 %1967
      %1969 = vrot.lane.b32.xlu0 %v383, 107
      %v1970 = vpop.permute.xlu0 %1969
      %1971 = vrot.lane.b32.xlu0 %v382, 107
      %v1972 = vpop.permute.xlu0 %1971
      %1973 = vrot.lane.b32.xlu0 %v384, 107
      %v1974 = vpop.permute.xlu0 %1973
      %1975 = vrot.lane.b32.xlu0 %v392, 107
      %v1976 = vpop.permute.xlu0 %1975
      %1977 = vrot.lane.b32.xlu0 %v400, 107
      %v1978 = vpop.permute.xlu0 %1977
      %1979 = vrot.lane.b32.xlu0 %v399, 107
      %v1980 = vpop.permute.xlu0 %1979
      %1981 = vrot.lane.b32.xlu0 %v401, 107
      %v1982 = vpop.permute.xlu0 %1981
      %1983 = vrot.lane.b32.xlu0 %v409, 107
      %v1984 = vpop.permute.xlu0 %1983
      %vm1985 = vcmask 875520
      %v1986 = vsel %vm1985, %v1968, %v1970
      %v1987 = vsel %vm1985, %v1970, %v1972
      %v1988 = vsel %vm1985, %v1972, %v1974
      %v1989 = vsel %vm1985, %v1974, %v1976
      %v1990 = vsel %vm1985, %v1976, %v1978
      %v1991 = vsel %vm1985, %v1978, %v1980
      %v1992 = vsel %vm1985, %v1980, %v1982
      %v1993 = vsel %vm1985, %v1982, %v1984
      %v1995 = vsel %vm441, %v1966, 0
      %v1998 = vsel %vm445, %v1986, 0
      %v2001 = vsel %vm445, %v1987, 0
      %v2004 = vsel %vm445, %v1988, 0
      %v2007 = vsel %vm445, %v1989, 0
      %v2010 = vsel %vm445, %v1990, 0
      %v2013 = vsel %vm445, %v1991, 0
      %v2016 = vsel %vm445, %v1992, 0
      %v2019 = vsel %vm445, %v1993, 0
      %2021 = vmatprep.subr.bf16.mxu0 %v2001
      %2022 = vmatpush1.bf16.msra.mxu0 %v1998
      %2023 = vmatprep.subr.bf16.mxu0 0
      %2024 = vmatpush1.bf16.msra.mxu0 0
      %2025 = vmatprep.subr.bf16.mxu0 0
      %2026 = vmatpush1.bf16.msra.mxu0 0
      %2027 = vmatprep.subr.bf16.mxu0 0
      %2028 = vmatpush1.bf16.msra.mxu0 0
      %2029 = vmatprep.subr.bf16.mxu0 0
      %2030 = vmatpush1.bf16.msra.mxu0 0
      %2031 = vmatprep.subr.bf16.mxu0 0
      %2032 = vmatpush1.bf16.msra.mxu0 0
      %2033 = vmatprep.subr.bf16.mxu0 0
      %2034 = vmatpush1.bf16.msra.mxu0 0
      %2035 = vmatprep.subr.bf16.mxu0 0
      %2036 = vmatpush1.bf16.msra.mxu0 0
      %2037 = vmatprep.subr.bf16.mxu0 0
      %2038 = vmatpush1.bf16.msra.mxu0 0
      %2039 = vmatprep.subr.bf16.mxu0 0
      %2040 = vmatpush1.bf16.msra.mxu0 0
      %2041 = vmatprep.subr.bf16.mxu0 0
      %2042 = vmatpush1.bf16.msra.mxu0 0
      %2043 = vmatprep.subr.bf16.mxu0 0
      %2044 = vmatpush1.bf16.msra.mxu0 0
      %2045 = vmatprep.subr.bf16.mxu0 0
      %2046 = vmatpush1.bf16.msra.mxu0 0
      %2047 = vmatprep.subr.bf16.mxu0 0
      %2048 = vmatpush1.bf16.msra.mxu0 0
      %2049 = vmatprep.subr.bf16.mxu0 0
      %2050 = vmatpush1.bf16.msra.mxu0 0
      %2051 = vmatprep.subr.bf16.mxu0 0
      %2052 = vmatpush1.bf16.msra.mxu0 0
      %2053 = vmatprep.mubr.bf16.mxu0 0
      %2054 = vmatmul.mubr.bf16.gmra.mrb[0].mxu0 %v1995
      %v2055 = vpop.f32.mrb[0].mxu0
      %v2056 = vadd.f32 0.0, %v2055
      %v2057 = vpop.f32.mrb[0].mxu0
      %v2058 = vadd.f32 0.0, %v2057
      %v2059 = vpop.f32.mrb[0].mxu0
      %v2060 = vpop.f32.mrb[0].mxu0
      %2061 = vdwg.mxu0
      %2062 = vmatprep.subr.bf16.mxu0 %v2007
      %2063 = vmatpush1.bf16.msra.mxu0 %v2004
      %2064 = vmatprep.subr.bf16.mxu0 0
      %2065 = vmatpush1.bf16.msra.mxu0 0
      %2066 = vmatprep.subr.bf16.mxu0 0
      %2067 = vmatpush1.bf16.msra.mxu0 0
      %2068 = vmatprep.subr.bf16.mxu0 0
      %2069 = vmatpush1.bf16.msra.mxu0 0
      %2070 = vmatprep.subr.bf16.mxu0 0
      %2071 = vmatpush1.bf16.msra.mxu0 0
      %2072 = vmatprep.subr.bf16.mxu0 0
      %2073 = vmatpush1.bf16.msra.mxu0 0
      %2074 = vmatprep.subr.bf16.mxu0 0
      %2075 = vmatpush1.bf16.msra.mxu0 0
      %2076 = vmatprep.subr.bf16.mxu0 0
      %2077 = vmatpush1.bf16.msra.mxu0 0
      %2078 = vmatprep.subr.bf16.mxu0 0
      %2079 = vmatpush1.bf16.msra.mxu0 0
      %2080 = vmatprep.subr.bf16.mxu0 0
      %2081 = vmatpush1.bf16.msra.mxu0 0
      %2082 = vmatprep.subr.bf16.mxu0 0
      %2083 = vmatpush1.bf16.msra.mxu0 0
      %2084 = vmatprep.subr.bf16.mxu0 0
      %2085 = vmatpush1.bf16.msra.mxu0 0
      %2086 = vmatprep.subr.bf16.mxu0 0
      %2087 = vmatpush1.bf16.msra.mxu0 0
      %2088 = vmatprep.subr.bf16.mxu0 0
      %2089 = vmatpush1.bf16.msra.mxu0 0
      %2090 = vmatprep.subr.bf16.mxu0 0
      %2091 = vmatpush1.bf16.msra.mxu0 0
      %2092 = vmatprep.subr.bf16.mxu0 0
      %2093 = vmatpush1.bf16.msra.mxu0 0
      %2094 = vmatprep.mubr.bf16.mxu0 0
      %2095 = vmatmul.mubr.bf16.gmra.mrb[0].mxu0 %v1995
      %v2096 = vpop.f32.mrb[0].mxu0
      %v2097 = vadd.f32 0.0, %v2096
      %v2098 = vpop.f32.mrb[0].mxu0
      %v2099 = vadd.f32 0.0, %v2098
      %v2100 = vpop.f32.mrb[0].mxu0
      %v2101 = vpop.f32.mrb[0].mxu0
      %2102 = vdwg.mxu0
      %2103 = vmatprep.subr.bf16.mxu0 %v2013
      %2104 = vmatpush1.bf16.msra.mxu0 %v2010
      %2105 = vmatprep.subr.bf16.mxu0 0
      %2106 = vmatpush1.bf16.msra.mxu0 0
      %2107 = vmatprep.subr.bf16.mxu0 0
      %2108 = vmatpush1.bf16.msra.mxu0 0
      %2109 = vmatprep.subr.bf16.mxu0 0
      %2110 = vmatpush1.bf16.msra.mxu0 0
      %2111 = vmatprep.subr.bf16.mxu0 0
      %2112 = vmatpush1.bf16.msra.mxu0 0
      %2113 = vmatprep.subr.bf16.mxu0 0
      %2114 = vmatpush1.bf16.msra.mxu0 0
      %2115 = vmatprep.subr.bf16.mxu0 0
      %2116 = vmatpush1.bf16.msra.mxu0 0
      %2117 = vmatprep.subr.bf16.mxu0 0
      %2118 = vmatpush1.bf16.msra.mxu0 0
      %2119 = vmatprep.subr.bf16.mxu0 0
      %2120 = vmatpush1.bf16.msra.mxu0 0
      %2121 = vmatprep.subr.bf16.mxu0 0
      %2122 = vmatpush1.bf16.msra.mxu0 0
      %2123 = vmatprep.subr.bf16.mxu0 0
      %2124 = vmatpush1.bf16.msra.mxu0 0
      %2125 = vmatprep.subr.bf16.mxu0 0
      %2126 = vmatpush1.bf16.msra.mxu0 0
      %2127 = vmatprep.subr.bf16.mxu0 0
      %2128 = vmatpush1.bf16.msra.mxu0 0
      %2129 = vmatprep.subr.bf16.mxu0 0
      %2130 = vmatpush1.bf16.msra.mxu0 0
      %2131 = vmatprep.subr.bf16.mxu0 0
      %2132 = vmatpush1.bf16.msra.mxu0 0
      %2133 = vmatprep.subr.bf16.mxu0 0
      %2134 = vmatpush1.bf16.msra.mxu0 0
      %2135 = vmatprep.mubr.bf16.mxu0 0
      %2136 = vmatmul.mubr.bf16.gmra.mrb[0].mxu0 %v1995
      %v2137 = vpop.f32.mrb[0].mxu0
      %v2138 = vadd.f32 0.0, %v2137
      %v2139 = vpop.f32.mrb[0].mxu0
      %v2140 = vadd.f32 0.0, %v2139
      %v2141 = vpop.f32.mrb[0].mxu0
      %v2142 = vpop.f32.mrb[0].mxu0
      %2143 = vdwg.mxu0
      %2144 = vmatprep.subr.bf16.mxu0 %v2019
      %2145 = vmatpush1.bf16.msra.mxu0 %v2016
      %2146 = vmatprep.subr.bf16.mxu0 0
      %2147 = vmatpush1.bf16.msra.mxu0 0
      %2148 = vmatprep.subr.bf16.mxu0 0
      %2149 = vmatpush1.bf16.msra.mxu0 0
      %2150 = vmatprep.subr.bf16.mxu0 0
      %2151 = vmatpush1.bf16.msra.mxu0 0
      %2152 = vmatprep.subr.bf16.mxu0 0
      %2153 = vmatpush1.bf16.msra.mxu0 0
      %2154 = vmatprep.subr.bf16.mxu0 0
      %2155 = vmatpush1.bf16.msra.mxu0 0
      %2156 = vmatprep.subr.bf16.mxu0 0
      %2157 = vmatpush1.bf16.msra.mxu0 0
      %2158 = vmatprep.subr.bf16.mxu0 0
      %2159 = vmatpush1.bf16.msra.mxu0 0
      %2160 = vmatprep.subr.bf16.mxu0 0
      %2161 = vmatpush1.bf16.msra.mxu0 0
      %2162 = vmatprep.subr.bf16.mxu0 0
      %2163 = vmatpush1.bf16.msra.mxu0 0
      %2164 = vmatprep.subr.bf16.mxu0 0
      %2165 = vmatpush1.bf16.msra.mxu0 0
      %2166 = vmatprep.subr.bf16.mxu0 0
      %2167 = vmatpush1.bf16.msra.mxu0 0
      %2168 = vmatprep.subr.bf16.mxu0 0
      %2169 = vmatpush1.bf16.msra.mxu0 0
      %2170 = vmatprep.subr.bf16.mxu0 0
      %2171 = vmatpush1.bf16.msra.mxu0 0
      %2172 = vmatprep.subr.bf16.mxu0 0
      %2173 = vmatpush1.bf16.msra.mxu0 0
      %2174 = vmatprep.subr.bf16.mxu0 0
      %2175 = vmatpush1.bf16.msra.mxu0 0
      %2176 = vmatprep.mubr.bf16.mxu0 0
      %2177 = vmatmul.mubr.bf16.gmra.mrb[0].mxu0 %v1995
      %v2178 = vpop.f32.mrb[0].mxu0
      %v2179 = vadd.f32 0.0, %v2178
      %v2180 = vpop.f32.mrb[0].mxu0
      %v2181 = vadd.f32 0.0, %v2180
      %v2182 = vpop.f32.mrb[0].mxu0
      %v2183 = vpop.f32.mrb[0].mxu0
      %2184 = vdwg.mxu0
      %v2185 = vadd.f32 %v1957, %v2056
      %v2186 = vadd.f32 %v1958, %v2058
      %v2187 = vadd.f32 %v1959, %v2097
      %v2188 = vadd.f32 %v1960, %v2099
      %v2189 = vadd.f32 %v1961, %v2138
      %v2190 = vadd.f32 %v1962, %v2140
      %v2191 = vadd.f32 %v1963, %v2179
      %v2192 = vadd.f32 %v1964, %v2181
      %s2193 = scalar_lea.vmem %s343, 32
      %v2194 = vld [vmem:[%s2193] sm:$0xf]
      %2195 = vrot.lane.b32.xlu0 %v375, 106
      %v2196 = vpop.permute.xlu0 %2195
      %2197 = vrot.lane.b32.xlu0 %v383, 106
      %v2198 = vpop.permute.xlu0 %2197
      %2199 = vrot.lane.b32.xlu0 %v382, 106
      %v2200 = vpop.permute.xlu0 %2199
      %2201 = vrot.lane.b32.xlu0 %v384, 106
      %v2202 = vpop.permute.xlu0 %2201
      %2203 = vrot.lane.b32.xlu0 %v392, 106
      %v2204 = vpop.permute.xlu0 %2203
      %2205 = vrot.lane.b32.xlu0 %v400, 106
      %v2206 = vpop.permute.xlu0 %2205
      %2207 = vrot.lane.b32.xlu0 %v399, 106
      %v2208 = vpop.permute.xlu0 %2207
      %2209 = vrot.lane.b32.xlu0 %v401, 106
      %v2210 = vpop.permute.xlu0 %2209
      %2211 = vrot.lane.b32.xlu0 %v409, 106
      %v2212 = vpop.permute.xlu0 %2211
      %vm2213 = vcmask 867328
      %v2214 = vsel %vm2213, %v2196, %v2198
      %v2215 = vsel %vm2213, %v2198, %v2200
      %v2216 = vsel %vm2213, %v2200, %v2202
      %v2217 = vsel %vm2213, %v2202, %v2204
      %v2218 = vsel %vm2213, %v2204, %v2206
      %v2219 = vsel %vm2213, %v2206, %v2208
      %v2220 = vsel %vm2213, %v2208, %v2210
      %v2221 = vsel %vm2213, %v2210, %v2212
      %v2223 = vsel %vm441, %v2194, 0
      %v2226 = vsel %vm445, %v2214, 0
      %v2229 = vsel %vm445, %v2215, 0
      %v2232 = vsel %vm445, %v2216, 0
      %v2235 = vsel %vm445, %v2217, 0
      %v2238 = vsel %vm445, %v2218, 0
      %v2241 = vsel %vm445, %v2219, 0
      %v2244 = vsel %vm445, %v2220, 0
      %v2247 = vsel %vm445, %v2221, 0
      %2249 = vmatprep.subr.bf16.mxu0 %v2229
      %2250 = vmatpush1.bf16.msra.mxu0 %v2226
      %2251 = vmatprep.subr.bf16.mxu0 0
      %2252 = vmatpush1.bf16.msra.mxu0 0
      %2253 = vmatprep.subr.bf16.mxu0 0
      %2254 = vmatpush1.bf16.msra.mxu0 0
      %2255 = vmatprep.subr.bf16.mxu0 0
      %2256 = vmatpush1.bf16.msra.mxu0 0
      %2257 = vmatprep.subr.bf16.mxu0 0
      %2258 = vmatpush1.bf16.msra.mxu0 0
      %2259 = vmatprep.subr.bf16.mxu0 0
      %2260 = vmatpush1.bf16.msra.mxu0 0
      %2261 = vmatprep.subr.bf16.mxu0 0
      %2262 = vmatpush1.bf16.msra.mxu0 0
      %2263 = vmatprep.subr.bf16.mxu0 0
      %2264 = vmatpush1.bf16.msra.mxu0 0
      %2265 = vmatprep.subr.bf16.mxu0 0
      %2266 = vmatpush1.bf16.msra.mxu0 0
      %2267 = vmatprep.subr.bf16.mxu0 0
      %2268 = vmatpush1.bf16.msra.mxu0 0
      %2269 = vmatprep.subr.bf16.mxu0 0
      %2270 = vmatpush1.bf16.msra.mxu0 0
      %2271 = vmatprep.subr.bf16.mxu0 0
      %2272 = vmatpush1.bf16.msra.mxu0 0
      %2273 = vmatprep.subr.bf16.mxu0 0
      %2274 = vmatpush1.bf16.msra.mxu0 0
      %2275 = vmatprep.subr.bf16.mxu0 0
      %2276 = vmatpush1.bf16.msra.mxu0 0
      %2277 = vmatprep.subr.bf16.mxu0 0
      %2278 = vmatpush1.bf16.msra.mxu0 0
      %2279 = vmatprep.subr.bf16.mxu0 0
      %2280 = vmatpush1.bf16.msra.mxu0 0
      %2281 = vmatprep.mubr.bf16.mxu0 0
      %2282 = vmatmul.mubr.bf16.gmra.mrb[0].mxu0 %v2223
      %v2283 = vpop.f32.mrb[0].mxu0
      %v2284 = vadd.f32 0.0, %v2283
      %v2285 = vpop.f32.mrb[0].mxu0
      %v2286 = vadd.f32 0.0, %v2285
      %v2287 = vpop.f32.mrb[0].mxu0
      %v2288 = vpop.f32.mrb[0].mxu0
      %2289 = vdwg.mxu0
      %2290 = vmatprep.subr.bf16.mxu0 %v2235
      %2291 = vmatpush1.bf16.msra.mxu0 %v2232
      %2292 = vmatprep.subr.bf16.mxu0 0
      %2293 = vmatpush1.bf16.msra.mxu0 0
      %2294 = vmatprep.subr.bf16.mxu0 0
      %2295 = vmatpush1.bf16.msra.mxu0 0
      %2296 = vmatprep.subr.bf16.mxu0 0
      %2297 = vmatpush1.bf16.msra.mxu0 0
      %2298 = vmatprep.subr.bf16.mxu0 0
      %2299 = vmatpush1.bf16.msra.mxu0 0
      %2300 = vmatprep.subr.bf16.mxu0 0
      %2301 = vmatpush1.bf16.msra.mxu0 0
      %2302 = vmatprep.subr.bf16.mxu0 0
      %2303 = vmatpush1.bf16.msra.mxu0 0
      %2304 = vmatprep.subr.bf16.mxu0 0
      %2305 = vmatpush1.bf16.msra.mxu0 0
      %2306 = vmatprep.subr.bf16.mxu0 0
      %2307 = vmatpush1.bf16.msra.mxu0 0
      %2308 = vmatprep.subr.bf16.mxu0 0
      %2309 = vmatpush1.bf16.msra.mxu0 0
      %2310 = vmatprep.subr.bf16.mxu0 0
      %2311 = vmatpush1.bf16.msra.mxu0 0
      %2312 = vmatprep.subr.bf16.mxu0 0
      %2313 = vmatpush1.bf16.msra.mxu0 0
      %2314 = vmatprep.subr.bf16.mxu0 0
      %2315 = vmatpush1.bf16.msra.mxu0 0
      %2316 = vmatprep.subr.bf16.mxu0 0
      %2317 = vmatpush1.bf16.msra.mxu0 0
      %2318 = vmatprep.subr.bf16.mxu0 0
      %2319 = vmatpush1.bf16.msra.mxu0 0
      %2320 = vmatprep.subr.bf16.mxu0 0
      %2321 = vmatpush1.bf16.msra.mxu0 0
      %2322 = vmatprep.mubr.bf16.mxu0 0
      %2323 = vmatmul.mubr.bf16.gmra.mrb[0].mxu0 %v2223
      %v2324 = vpop.f32.mrb[0].mxu0
      %v2325 = vadd.f32 0.0, %v2324
      %v2326 = vpop.f32.mrb[0].mxu0
      %v2327 = vadd.f32 0.0, %v2326
      %v2328 = vpop.f32.mrb[0].mxu0
      %v2329 = vpop.f32.mrb[0].mxu0
      %2330 = vdwg.mxu0
      %2331 = vmatprep.subr.bf16.mxu0 %v2241
      %2332 = vmatpush1.bf16.msra.mxu0 %v2238
      %2333 = vmatprep.subr.bf16.mxu0 0
      %2334 = vmatpush1.bf16.msra.mxu0 0
      %2335 = vmatprep.subr.bf16.mxu0 0
      %2336 = vmatpush1.bf16.msra.mxu0 0
      %2337 = vmatprep.subr.bf16.mxu0 0
      %2338 = vmatpush1.bf16.msra.mxu0 0
      %2339 = vmatprep.subr.bf16.mxu0 0
      %2340 = vmatpush1.bf16.msra.mxu0 0
      %2341 = vmatprep.subr.bf16.mxu0 0
      %2342 = vmatpush1.bf16.msra.mxu0 0
      %2343 = vmatprep.subr.bf16.mxu0 0
      %2344 = vmatpush1.bf16.msra.mxu0 0
      %2345 = vmatprep.subr.bf16.mxu0 0
      %2346 = vmatpush1.bf16.msra.mxu0 0
      %2347 = vmatprep.subr.bf16.mxu0 0
      %2348 = vmatpush1.bf16.msra.mxu0 0
      %2349 = vmatprep.subr.bf16.mxu0 0
      %2350 = vmatpush1.bf16.msra.mxu0 0
      %2351 = vmatprep.subr.bf16.mxu0 0
      %2352 = vmatpush1.bf16.msra.mxu0 0
      %2353 = vmatprep.subr.bf16.mxu0 0
      %2354 = vmatpush1.bf16.msra.mxu0 0
      %2355 = vmatprep.subr.bf16.mxu0 0
      %2356 = vmatpush1.bf16.msra.mxu0 0
      %2357 = vmatprep.subr.bf16.mxu0 0
      %2358 = vmatpush1.bf16.msra.mxu0 0
      %2359 = vmatprep.subr.bf16.mxu0 0
      %2360 = vmatpush1.bf16.msra.mxu0 0
      %2361 = vmatprep.subr.bf16.mxu0 0
      %2362 = vmatpush1.bf16.msra.mxu0 0
      %2363 = vmatprep.mubr.bf16.mxu0 0
      %2364 = vmatmul.mubr.bf16.gmra.mrb[0].mxu0 %v2223
      %v2365 = vpop.f32.mrb[0].mxu0
      %v2366 = vadd.f32 0.0, %v2365
      %v2367 = vpop.f32.mrb[0].mxu0
      %v2368 = vadd.f32 0.0, %v2367
      %v2369 = vpop.f32.mrb[0].mxu0
      %v2370 = vpop.f32.mrb[0].mxu0
      %2371 = vdwg.mxu0
      %2372 = vmatprep.subr.bf16.mxu0 %v2247
      %2373 = vmatpush1.bf16.msra.mxu0 %v2244
      %2374 = vmatprep.subr.bf16.mxu0 0
      %2375 = vmatpush1.bf16.msra.mxu0 0
      %2376 = vmatprep.subr.bf16.mxu0 0
      %2377 = vmatpush1.bf16.msra.mxu0 0
      %2378 = vmatprep.subr.bf16.mxu0 0
      %2379 = vmatpush1.bf16.msra.mxu0 0
      %2380 = vmatprep.subr.bf16.mxu0 0
      %2381 = vmatpush1.bf16.msra.mxu0 0
      %2382 = vmatprep.subr.bf16.mxu0 0
      %2383 = vmatpush1.bf16.msra.mxu0 0
      %2384 = vmatprep.subr.bf16.mxu0 0
      %2385 = vmatpush1.bf16.msra.mxu0 0
      %2386 = vmatprep.subr.bf16.mxu0 0
      %2387 = vmatpush1.bf16.msra.mxu0 0
      %2388 = vmatprep.subr.bf16.mxu0 0
      %2389 = vmatpush1.bf16.msra.mxu0 0
      %2390 = vmatprep.subr.bf16.mxu0 0
      %2391 = vmatpush1.bf16.msra.mxu0 0
      %2392 = vmatprep.subr.bf16.mxu0 0
      %2393 = vmatpush1.bf16.msra.mxu0 0
      %2394 = vmatprep.subr.bf16.mxu0 0
      %2395 = vmatpush1.bf16.msra.mxu0 0
      %2396 = vmatprep.subr.bf16.mxu0 0
      %2397 = vmatpush1.bf16.msra.mxu0 0
      %2398 = vmatprep.subr.bf16.mxu0 0
      %2399 = vmatpush1.bf16.msra.mxu0 0
      %2400 = vmatprep.subr.bf16.mxu0 0
      %2401 = vmatpush1.bf16.msra.mxu0 0
      %2402 = vmatprep.subr.bf16.mxu0 0
      %2403 = vmatpush1.bf16.msra.mxu0 0
      %2404 = vmatprep.mubr.bf16.mxu0 0
      %2405 = vmatmul.mubr.bf16.gmra.mrb[0].mxu0 %v2223
      %v2406 = vpop.f32.mrb[0].mxu0
      %v2407 = vadd.f32 0.0, %v2406
      %v2408 = vpop.f32.mrb[0].mxu0
      %v2409 = vadd.f32 0.0, %v2408
      %v2410 = vpop.f32.mrb[0].mxu0
      %v2411 = vpop.f32.mrb[0].mxu0
      %2412 = vdwg.mxu0
      %v2413 = vadd.f32 %v2185, %v2284
      %v2414 = vadd.f32 %v2186, %v2286
      %v2415 = vadd.f32 %v2187, %v2325
      %v2416 = vadd.f32 %v2188, %v2327
      %v2417 = vadd.f32 %v2189, %v2366
      %v2418 = vadd.f32 %v2190, %v2368
      %v2419 = vadd.f32 %v2191, %v2407
      %v2420 = vadd.f32 %v2192, %v2409
      %s2421 = scalar_lea.vmem %s343, 36
      %v2422 = vld [vmem:[%s2421] sm:$0xf]
      %2423 = vrot.lane.b32.xlu0 %v375, 28
      %v2424 = vpop.permute.xlu0 %2423
      %2425 = vrot.lane.b32.xlu0 %v383, 28
      %v2426 = vpop.permute.xlu0 %2425
      %2427 = vrot.lane.b32.xlu0 %v382, 28
      %v2428 = vpop.permute.xlu0 %2427
      %2429 = vrot.lane.b32.xlu0 %v384, 28
      %v2430 = vpop.permute.xlu0 %2429
      %2431 = vrot.lane.b32.xlu0 %v392, 28
      %v2432 = vpop.permute.xlu0 %2431
      %2433 = vrot.lane.b32.xlu0 %v400, 28
      %v2434 = vpop.permute.xlu0 %2433
      %2435 = vrot.lane.b32.xlu0 %v399, 28
      %v2436 = vpop.permute.xlu0 %2435
      %2437 = vrot.lane.b32.xlu0 %v401, 28
      %v2438 = vpop.permute.xlu0 %2437
      %2439 = vrot.lane.b32.xlu0 %v409, 28
      %v2440 = vpop.permute.xlu0 %2439
      %vm2441 = vcmask 228352
      %v2442 = vsel %vm2441, %v2424, %v2426
      %v2443 = vsel %vm2441, %v2426, %v2428
      %v2444 = vsel %vm2441, %v2428, %v2430
      %v2445 = vsel %vm2441, %v2430, %v2432
      %v2446 = vsel %vm2441, %v2432, %v2434
      %v2447 = vsel %vm2441, %v2434, %v2436
      %v2448 = vsel %vm2441, %v2436, %v2438
      %v2449 = vsel %vm2441, %v2438, %v2440
      %v2451 = vsel %vm441, %v2422, 0
      %v2454 = vsel %vm445, %v2442, 0
      %v2457 = vsel %vm445, %v2443, 0
      %v2460 = vsel %vm445, %v2444, 0
      %v2463 = vsel %vm445, %v2445, 0
      %v2466 = vsel %vm445, %v2446, 0
      %v2469 = vsel %vm445, %v2447, 0
      %v2472 = vsel %vm445, %v2448, 0
      %v2475 = vsel %vm445, %v2449, 0
      %2477 = vmatprep.subr.bf16.mxu0 %v2457
      %2478 = vmatpush1.bf16.msra.mxu0 %v2454
      %2479 = vmatprep.subr.bf16.mxu0 0
      %2480 = vmatpush1.bf16.msra.mxu0 0
      %2481 = vmatprep.subr.bf16.mxu0 0
      %2482 = vmatpush1.bf16.msra.mxu0 0
      %2483 = vmatprep.subr.bf16.mxu0 0
      %2484 = vmatpush1.bf16.msra.mxu0 0
      %2485 = vmatprep.subr.bf16.mxu0 0
      %2486 = vmatpush1.bf16.msra.mxu0 0
      %2487 = vmatprep.subr.bf16.mxu0 0
      %2488 = vmatpush1.bf16.msra.mxu0 0
      %2489 = vmatprep.subr.bf16.mxu0 0
      %2490 = vmatpush1.bf16.msra.mxu0 0
      %2491 = vmatprep.subr.bf16.mxu0 0
      %2492 = vmatpush1.bf16.msra.mxu0 0
      %2493 = vmatprep.subr.bf16.mxu0 0
      %2494 = vmatpush1.bf16.msra.mxu0 0
      %2495 = vmatprep.subr.bf16.mxu0 0
      %2496 = vmatpush1.bf16.msra.mxu0 0
      %2497 = vmatprep.subr.bf16.mxu0 0
      %2498 = vmatpush1.bf16.msra.mxu0 0
      %2499 = vmatprep.subr.bf16.mxu0 0
      %2500 = vmatpush1.bf16.msra.mxu0 0
      %2501 = vmatprep.subr.bf16.mxu0 0
      %2502 = vmatpush1.bf16.msra.mxu0 0
      %2503 = vmatprep.subr.bf16.mxu0 0
      %2504 = vmatpush1.bf16.msra.mxu0 0
      %2505 = vmatprep.subr.bf16.mxu0 0
      %2506 = vmatpush1.bf16.msra.mxu0 0
      %2507 = vmatprep.subr.bf16.mxu0 0
      %2508 = vmatpush1.bf16.msra.mxu0 0
      %2509 = vmatprep.mubr.bf16.mxu0 0
      %2510 = vmatmul.mubr.bf16.gmra.mrb[0].mxu0 %v2451
      %v2511 = vpop.f32.mrb[0].mxu0
      %v2512 = vadd.f32 0.0, %v2511
      %v2513 = vpop.f32.mrb[0].mxu0
      %v2514 = vadd.f32 0.0, %v2513
      %v2515 = vpop.f32.mrb[0].mxu0
      %v2516 = vpop.f32.mrb[0].mxu0
      %2517 = vdwg.mxu0
      %2518 = vmatprep.subr.bf16.mxu0 %v2463
      %2519 = vmatpush1.bf16.msra.mxu0 %v2460
      %2520 = vmatprep.subr.bf16.mxu0 0
      %2521 = vmatpush1.bf16.msra.mxu0 0
      %2522 = vmatprep.subr.bf16.mxu0 0
      %2523 = vmatpush1.bf16.msra.mxu0 0
      %2524 = vmatprep.subr.bf16.mxu0 0
      %2525 = vmatpush1.bf16.msra.mxu0 0
      %2526 = vmatprep.subr.bf16.mxu0 0
      %2527 = vmatpush1.bf16.msra.mxu0 0
      %2528 = vmatprep.subr.bf16.mxu0 0
      %2529 = vmatpush1.bf16.msra.mxu0 0
      %2530 = vmatprep.subr.bf16.mxu0 0
      %2531 = vmatpush1.bf16.msra.mxu0 0
      %2532 = vmatprep.subr.bf16.mxu0 0
      %2533 = vmatpush1.bf16.msra.mxu0 0
      %2534 = vmatprep.subr.bf16.mxu0 0
      %2535 = vmatpush1.bf16.msra.mxu0 0
      %2536 = vmatprep.subr.bf16.mxu0 0
      %2537 = vmatpush1.bf16.msra.mxu0 0
      %2538 = vmatprep.subr.bf16.mxu0 0
      %2539 = vmatpush1.bf16.msra.mxu0 0
      %2540 = vmatprep.subr.bf16.mxu0 0
      %2541 = vmatpush1.bf16.msra.mxu0 0
      %2542 = vmatprep.subr.bf16.mxu0 0
      %2543 = vmatpush1.bf16.msra.mxu0 0
      %2544 = vmatprep.subr.bf16.mxu0 0
      %2545 = vmatpush1.bf16.msra.mxu0 0
      %2546 = vmatprep.subr.bf16.mxu0 0
      %2547 = vmatpush1.bf16.msra.mxu0 0
      %2548 = vmatprep.subr.bf16.mxu0 0
      %2549 = vmatpush1.bf16.msra.mxu0 0
      %2550 = vmatprep.mubr.bf16.mxu0 0
      %2551 = vmatmul.mubr.bf16.gmra.mrb[0].mxu0 %v2451
      %v2552 = vpop.f32.mrb[0].mxu0
      %v2553 = vadd.f32 0.0, %v2552
      %v2554 = vpop.f32.mrb[0].mxu0
      %v2555 = vadd.f32 0.0, %v2554
      %v2556 = vpop.f32.mrb[0].mxu0
      %v2557 = vpop.f32.mrb[0].mxu0
      %2558 = vdwg.mxu0
      %2559 = vmatprep.subr.bf16.mxu0 %v2469
      %2560 = vmatpush1.bf16.msra.mxu0 %v2466
      %2561 = vmatprep.subr.bf16.mxu0 0
      %2562 = vmatpush1.bf16.msra.mxu0 0
      %2563 = vmatprep.subr.bf16.mxu0 0
      %2564 = vmatpush1.bf16.msra.mxu0 0
      %2565 = vmatprep.subr.bf16.mxu0 0
      %2566 = vmatpush1.bf16.msra.mxu0 0
      %2567 = vmatprep.subr.bf16.mxu0 0
      %2568 = vmatpush1.bf16.msra.mxu0 0
      %2569 = vmatprep.subr.bf16.mxu0 0
      %2570 = vmatpush1.bf16.msra.mxu0 0
      %2571 = vmatprep.subr.bf16.mxu0 0
      %2572 = vmatpush1.bf16.msra.mxu0 0
      %2573 = vmatprep.subr.bf16.mxu0 0
      %2574 = vmatpush1.bf16.msra.mxu0 0
      %2575 = vmatprep.subr.bf16.mxu0 0
      %2576 = vmatpush1.bf16.msra.mxu0 0
      %2577 = vmatprep.subr.bf16.mxu0 0
      %2578 = vmatpush1.bf16.msra.mxu0 0
      %2579 = vmatprep.subr.bf16.mxu0 0
      %2580 = vmatpush1.bf16.msra.mxu0 0
      %2581 = vmatprep.subr.bf16.mxu0 0
      %2582 = vmatpush1.bf16.msra.mxu0 0
      %2583 = vmatprep.subr.bf16.mxu0 0
      %2584 = vmatpush1.bf16.msra.mxu0 0
      %2585 = vmatprep.subr.bf16.mxu0 0
      %2586 = vmatpush1.bf16.msra.mxu0 0
      %2587 = vmatprep.subr.bf16.mxu0 0
      %2588 = vmatpush1.bf16.msra.mxu0 0
      %2589 = vmatprep.subr.bf16.mxu0 0
      %2590 = vmatpush1.bf16.msra.mxu0 0
      %2591 = vmatprep.mubr.bf16.mxu0 0
      %2592 = vmatmul.mubr.bf16.gmra.mrb[0].mxu0 %v2451
      %v2593 = vpop.f32.mrb[0].mxu0
      %v2594 = vadd.f32 0.0, %v2593
      %v2595 = vpop.f32.mrb[0].mxu0
      %v2596 = vadd.f32 0.0, %v2595
      %v2597 = vpop.f32.mrb[0].mxu0
      %v2598 = vpop.f32.mrb[0].mxu0
      %2599 = vdwg.mxu0
      %2600 = vmatprep.subr.bf16.mxu0 %v2475
      %2601 = vmatpush1.bf16.msra.mxu0 %v2472
      %2602 = vmatprep.subr.bf16.mxu0 0
      %2603 = vmatpush1.bf16.msra.mxu0 0
      %2604 = vmatprep.subr.bf16.mxu0 0
      %2605 = vmatpush1.bf16.msra.mxu0 0
      %2606 = vmatprep.subr.bf16.mxu0 0
      %2607 = vmatpush1.bf16.msra.mxu0 0
      %2608 = vmatprep.subr.bf16.mxu0 0
      %2609 = vmatpush1.bf16.msra.mxu0 0
      %2610 = vmatprep.subr.bf16.mxu0 0
      %2611 = vmatpush1.bf16.msra.mxu0 0
      %2612 = vmatprep.subr.bf16.mxu0 0
      %2613 = vmatpush1.bf16.msra.mxu0 0
      %2614 = vmatprep.subr.bf16.mxu0 0
      %2615 = vmatpush1.bf16.msra.mxu0 0
      %2616 = vmatprep.subr.bf16.mxu0 0
      %2617 = vmatpush1.bf16.msra.mxu0 0
      %2618 = vmatprep.subr.bf16.mxu0 0
      %2619 = vmatpush1.bf16.msra.mxu0 0
      %2620 = vmatprep.subr.bf16.mxu0 0
      %2621 = vmatpush1.bf16.msra.mxu0 0
      %2622 = vmatprep.subr.bf16.mxu0 0
      %2623 = vmatpush1.bf16.msra.mxu0 0
      %2624 = vmatprep.subr.bf16.mxu0 0
      %2625 = vmatpush1.bf16.msra.mxu0 0
      %2626 = vmatprep.subr.bf16.mxu0 0
      %2627 = vmatpush1.bf16.msra.mxu0 0
      %2628 = vmatprep.subr.bf16.mxu0 0
      %2629 = vmatpush1.bf16.msra.mxu0 0
      %2630 = vmatprep.subr.bf16.mxu0 0
      %2631 = vmatpush1.bf16.msra.mxu0 0
      %2632 = vmatprep.mubr.bf16.mxu0 0
      %2633 = vmatmul.mubr.bf16.gmra.mrb[0].mxu0 %v2451
      %v2634 = vpop.f32.mrb[0].mxu0
      %v2635 = vadd.f32 0.0, %v2634
      %v2636 = vpop.f32.mrb[0].mxu0
      %v2637 = vadd.f32 0.0, %v2636
      %v2638 = vpop.f32.mrb[0].mxu0
      %v2639 = vpop.f32.mrb[0].mxu0
      %2640 = vdwg.mxu0
      %v2641 = vadd.f32 %v2413, %v2512
      %v2642 = vadd.f32 %v2414, %v2514
      %v2643 = vadd.f32 %v2415, %v2553
      %v2644 = vadd.f32 %v2416, %v2555
      %v2645 = vadd.f32 %v2417, %v2594
      %v2646 = vadd.f32 %v2418, %v2596
      %v2647 = vadd.f32 %v2419, %v2635
      %v2648 = vadd.f32 %v2420, %v2637
      %s2649 = scalar_lea.vmem %s343, 40
      %v2650 = vld [vmem:[%s2649] sm:$0xf]
      %2651 = vrot.lane.b32.xlu0 %v375, 27
      %v2652 = vpop.permute.xlu0 %2651
      %2653 = vrot.lane.b32.xlu0 %v383, 27
      %v2654 = vpop.permute.xlu0 %2653
      %2655 = vrot.lane.b32.xlu0 %v382, 27
      %v2656 = vpop.permute.xlu0 %2655
      %2657 = vrot.lane.b32.xlu0 %v384, 27
      %v2658 = vpop.permute.xlu0 %2657
      %2659 = vrot.lane.b32.xlu0 %v392, 27
      %v2660 = vpop.permute.xlu0 %2659
      %2661 = vrot.lane.b32.xlu0 %v400, 27
      %v2662 = vpop.permute.xlu0 %2661
      %2663 = vrot.lane.b32.xlu0 %v399, 27
      %v2664 = vpop.permute.xlu0 %2663
      %2665 = vrot.lane.b32.xlu0 %v401, 27
      %v2666 = vpop.permute.xlu0 %2665
      %2667 = vrot.lane.b32.xlu0 %v409, 27
      %v2668 = vpop.permute.xlu0 %2667
      %vm2669 = vcmask 220160
      %v2670 = vsel %vm2669, %v2652, %v2654
      %v2671 = vsel %vm2669, %v2654, %v2656
      %v2672 = vsel %vm2669, %v2656, %v2658
      %v2673 = vsel %vm2669, %v2658, %v2660
      %v2674 = vsel %vm2669, %v2660, %v2662
      %v2675 = vsel %vm2669, %v2662, %v2664
      %v2676 = vsel %vm2669, %v2664, %v2666
      %v2677 = vsel %vm2669, %v2666, %v2668
      %v2679 = vsel %vm441, %v2650, 0
      %v2682 = vsel %vm445, %v2670, 0
      %v2685 = vsel %vm445, %v2671, 0
      %v2688 = vsel %vm445, %v2672, 0
      %v2691 = vsel %vm445, %v2673, 0
      %v2694 = vsel %vm445, %v2674, 0
      %v2697 = vsel %vm445, %v2675, 0
      %v2700 = vsel %vm445, %v2676, 0
      %v2703 = vsel %vm445, %v2677, 0
      %2705 = vmatprep.subr.bf16.mxu0 %v2685
      %2706 = vmatpush1.bf16.msra.mxu0 %v2682
      %2707 = vmatprep.subr.bf16.mxu0 0
      %2708 = vmatpush1.bf16.msra.mxu0 0
      %2709 = vmatprep.subr.bf16.mxu0 0
      %2710 = vmatpush1.bf16.msra.mxu0 0
      %2711 = vmatprep.subr.bf16.mxu0 0
      %2712 = vmatpush1.bf16.msra.mxu0 0
      %2713 = vmatprep.subr.bf16.mxu0 0
      %2714 = vmatpush1.bf16.msra.mxu0 0
      %2715 = vmatprep.subr.bf16.mxu0 0
      %2716 = vmatpush1.bf16.msra.mxu0 0
      %2717 = vmatprep.subr.bf16.mxu0 0
      %2718 = vmatpush1.bf16.msra.mxu0 0
      %2719 = vmatprep.subr.bf16.mxu0 0
      %2720 = vmatpush1.bf16.msra.mxu0 0
      %2721 = vmatprep.subr.bf16.mxu0 0
      %2722 = vmatpush1.bf16.msra.mxu0 0
      %2723 = vmatprep.subr.bf16.mxu0 0
      %2724 = vmatpush1.bf16.msra.mxu0 0
      %2725 = vmatprep.subr.bf16.mxu0 0
      %2726 = vmatpush1.bf16.msra.mxu0 0
      %2727 = vmatprep.subr.bf16.mxu0 0
      %2728 = vmatpush1.bf16.msra.mxu0 0
      %2729 = vmatprep.subr.bf16.mxu0 0
      %2730 = vmatpush1.bf16.msra.mxu0 0
      %2731 = vmatprep.subr.bf16.mxu0 0
      %2732 = vmatpush1.bf16.msra.mxu0 0
      %2733 = vmatprep.subr.bf16.mxu0 0
      %2734 = vmatpush1.bf16.msra.mxu0 0
      %2735 = vmatprep.subr.bf16.mxu0 0
      %2736 = vmatpush1.bf16.msra.mxu0 0
      %2737 = vmatprep.mubr.bf16.mxu0 0
      %2738 = vmatmul.mubr.bf16.gmra.mrb[0].mxu0 %v2679
      %v2739 = vpop.f32.mrb[0].mxu0
      %v2740 = vadd.f32 0.0, %v2739
      %v2741 = vpop.f32.mrb[0].mxu0
      %v2742 = vadd.f32 0.0, %v2741
      %v2743 = vpop.f32.mrb[0].mxu0
      %v2744 = vpop.f32.mrb[0].mxu0
      %2745 = vdwg.mxu0
      %2746 = vmatprep.subr.bf16.mxu0 %v2691
      %2747 = vmatpush1.bf16.msra.mxu0 %v2688
      %2748 = vmatprep.subr.bf16.mxu0 0
      %2749 = vmatpush1.bf16.msra.mxu0 0
      %2750 = vmatprep.subr.bf16.mxu0 0
      %2751 = vmatpush1.bf16.msra.mxu0 0
      %2752 = vmatprep.subr.bf16.mxu0 0
      %2753 = vmatpush1.bf16.msra.mxu0 0
      %2754 = vmatprep.subr.bf16.mxu0 0
      %2755 = vmatpush1.bf16.msra.mxu0 0
      %2756 = vmatprep.subr.bf16.mxu0 0
      %2757 = vmatpush1.bf16.msra.mxu0 0
      %2758 = vmatprep.subr.bf16.mxu0 0
      %2759 = vmatpush1.bf16.msra.mxu0 0
      %2760 = vmatprep.subr.bf16.mxu0 0
      %2761 = vmatpush1.bf16.msra.mxu0 0
      %2762 = vmatprep.subr.bf16.mxu0 0
      %2763 = vmatpush1.bf16.msra.mxu0 0
      %2764 = vmatprep.subr.bf16.mxu0 0
      %2765 = vmatpush1.bf16.msra.mxu0 0
      %2766 = vmatprep.subr.bf16.mxu0 0
      %2767 = vmatpush1.bf16.msra.mxu0 0
      %2768 = vmatprep.subr.bf16.mxu0 0
      %2769 = vmatpush1.bf16.msra.mxu0 0
      %2770 = vmatprep.subr.bf16.mxu0 0
      %2771 = vmatpush1.bf16.msra.mxu0 0
      %2772 = vmatprep.subr.bf16.mxu0 0
      %2773 = vmatpush1.bf16.msra.mxu0 0
      %2774 = vmatprep.subr.bf16.mxu0 0
      %2775 = vmatpush1.bf16.msra.mxu0 0
      %2776 = vmatprep.subr.bf16.mxu0 0
      %2777 = vmatpush1.bf16.msra.mxu0 0
      %2778 = vmatprep.mubr.bf16.mxu0 0
      %2779 = vmatmul.mubr.bf16.gmra.mrb[0].mxu0 %v2679
      %v2780 = vpop.f32.mrb[0].mxu0
      %v2781 = vadd.f32 0.0, %v2780
      %v2782 = vpop.f32.mrb[0].mxu0
      %v2783 = vadd.f32 0.0, %v2782
      %v2784 = vpop.f32.mrb[0].mxu0
      %v2785 = vpop.f32.mrb[0].mxu0
      %2786 = vdwg.mxu0
      %2787 = vmatprep.subr.bf16.mxu0 %v2697
      %2788 = vmatpush1.bf16.msra.mxu0 %v2694
      %2789 = vmatprep.subr.bf16.mxu0 0
      %2790 = vmatpush1.bf16.msra.mxu0 0
      %2791 = vmatprep.subr.bf16.mxu0 0
      %2792 = vmatpush1.bf16.msra.mxu0 0
      %2793 = vmatprep.subr.bf16.mxu0 0
      %2794 = vmatpush1.bf16.msra.mxu0 0
      %2795 = vmatprep.subr.bf16.mxu0 0
      %2796 = vmatpush1.bf16.msra.mxu0 0
      %2797 = vmatprep.subr.bf16.mxu0 0
      %2798 = vmatpush1.bf16.msra.mxu0 0
      %2799 = vmatprep.subr.bf16.mxu0 0
      %2800 = vmatpush1.bf16.msra.mxu0 0
      %2801 = vmatprep.subr.bf16.mxu0 0
      %2802 = vmatpush1.bf16.msra.mxu0 0
      %2803 = vmatprep.subr.bf16.mxu0 0
      %2804 = vmatpush1.bf16.msra.mxu0 0
      %2805 = vmatprep.subr.bf16.mxu0 0
      %2806 = vmatpush1.bf16.msra.mxu0 0
      %2807 = vmatprep.subr.bf16.mxu0 0
      %2808 = vmatpush1.bf16.msra.mxu0 0
      %2809 = vmatprep.subr.bf16.mxu0 0
      %2810 = vmatpush1.bf16.msra.mxu0 0
      %2811 = vmatprep.subr.bf16.mxu0 0
      %2812 = vmatpush1.bf16.msra.mxu0 0
      %2813 = vmatprep.subr.bf16.mxu0 0
      %2814 = vmatpush1.bf16.msra.mxu0 0
      %2815 = vmatprep.subr.bf16.mxu0 0
      %2816 = vmatpush1.bf16.msra.mxu0 0
      %2817 = vmatprep.subr.bf16.mxu0 0
      %2818 = vmatpush1.bf16.msra.mxu0 0
      %2819 = vmatprep.mubr.bf16.mxu0 0
      %2820 = vmatmul.mubr.bf16.gmra.mrb[0].mxu0 %v2679
      %v2821 = vpop.f32.mrb[0].mxu0
      %v2822 = vadd.f32 0.0, %v2821
      %v2823 = vpop.f32.mrb[0].mxu0
      %v2824 = vadd.f32 0.0, %v2823
      %v2825 = vpop.f32.mrb[0].mxu0
      %v2826 = vpop.f32.mrb[0].mxu0
      %2827 = vdwg.mxu0
      %2828 = vmatprep.subr.bf16.mxu0 %v2703
      %2829 = vmatpush1.bf16.msra.mxu0 %v2700
      %2830 = vmatprep.subr.bf16.mxu0 0
      %2831 = vmatpush1.bf16.msra.mxu0 0
      %2832 = vmatprep.subr.bf16.mxu0 0
      %2833 = vmatpush1.bf16.msra.mxu0 0
      %2834 = vmatprep.subr.bf16.mxu0 0
      %2835 = vmatpush1.bf16.msra.mxu0 0
      %2836 = vmatprep.subr.bf16.mxu0 0
      %2837 = vmatpush1.bf16.msra.mxu0 0
      %2838 = vmatprep.subr.bf16.mxu0 0
      %2839 = vmatpush1.bf16.msra.mxu0 0
      %2840 = vmatprep.subr.bf16.mxu0 0
      %2841 = vmatpush1.bf16.msra.mxu0 0
      %2842 = vmatprep.subr.bf16.mxu0 0
      %2843 = vmatpush1.bf16.msra.mxu0 0
      %2844 = vmatprep.subr.bf16.mxu0 0
      %2845 = vmatpush1.bf16.msra.mxu0 0
      %2846 = vmatprep.subr.bf16.mxu0 0
      %2847 = vmatpush1.bf16.msra.mxu0 0
      %2848 = vmatprep.subr.bf16.mxu0 0
      %2849 = vmatpush1.bf16.msra.mxu0 0
      %2850 = vmatprep.subr.bf16.mxu0 0
      %2851 = vmatpush1.bf16.msra.mxu0 0
      %2852 = vmatprep.subr.bf16.mxu0 0
      %2853 = vmatpush1.bf16.msra.mxu0 0
      %2854 = vmatprep.subr.bf16.mxu0 0
      %2855 = vmatpush1.bf16.msra.mxu0 0
      %2856 = vmatprep.subr.bf16.mxu0 0
      %2857 = vmatpush1.bf16.msra.mxu0 0
      %2858 = vmatprep.subr.bf16.mxu0 0
      %2859 = vmatpush1.bf16.msra.mxu0 0
      %2860 = vmatprep.mubr.bf16.mxu0 0
      %2861 = vmatmul.mubr.bf16.gmra.mrb[0].mxu0 %v2679
      %v2862 = vpop.f32.mrb[0].mxu0
      %v2863 = vadd.f32 0.0, %v2862
      %v2864 = vpop.f32.mrb[0].mxu0
      %v2865 = vadd.f32 0.0, %v2864
      %v2866 = vpop.f32.mrb[0].mxu0
      %v2867 = vpop.f32.mrb[0].mxu0
      %2868 = vdwg.mxu0
      %v2869 = vadd.f32 %v2641, %v2740
      %v2870 = vadd.f32 %v2642, %v2742
      %v2871 = vadd.f32 %v2643, %v2781
      %v2872 = vadd.f32 %v2644, %v2783
      %v2873 = vadd.f32 %v2645, %v2822
      %v2874 = vadd.f32 %v2646, %v2824
      %v2875 = vadd.f32 %v2647, %v2863
      %v2876 = vadd.f32 %v2648, %v2865
      %s2877 = scalar_lea.vmem %s343, 44
      %v2878 = vld [vmem:[%s2877] sm:$0xf]
      %2879 = vrot.lane.b32.xlu0 %v375, 26
      %v2880 = vpop.permute.xlu0 %2879
      %2881 = vrot.lane.b32.xlu0 %v383, 26
      %v2882 = vpop.permute.xlu0 %2881
      %2883 = vrot.lane.b32.xlu0 %v382, 26
      %v2884 = vpop.permute.xlu0 %2883
      %2885 = vrot.lane.b32.xlu0 %v384, 26
      %v2886 = vpop.permute.xlu0 %2885
      %2887 = vrot.lane.b32.xlu0 %v392, 26
      %v2888 = vpop.permute.xlu0 %2887
      %2889 = vrot.lane.b32.xlu0 %v400, 26
      %v2890 = vpop.permute.xlu0 %2889
      %2891 = vrot.lane.b32.xlu0 %v399, 26
      %v2892 = vpop.permute.xlu0 %2891
      %2893 = vrot.lane.b32.xlu0 %v401, 26
      %v2894 = vpop.permute.xlu0 %2893
      %2895 = vrot.lane.b32.xlu0 %v409, 26
      %v2896 = vpop.permute.xlu0 %2895
      %vm2897 = vcmask 211968
      %v2898 = vsel %vm2897, %v2880, %v2882
      %v2899 = vsel %vm2897, %v2882, %v2884
      %v2900 = vsel %vm2897, %v2884, %v2886
      %v2901 = vsel %vm2897, %v2886, %v2888
      %v2902 = vsel %vm2897, %v2888, %v2890
      %v2903 = vsel %vm2897, %v2890, %v2892
      %v2904 = vsel %vm2897, %v2892, %v2894
      %v2905 = vsel %vm2897, %v2894, %v2896
      %v2907 = vsel %vm441, %v2878, 0
      %v2910 = vsel %vm445, %v2898, 0
      %v2913 = vsel %vm445, %v2899, 0
      %v2916 = vsel %vm445, %v2900, 0
      %v2919 = vsel %vm445, %v2901, 0
      %v2922 = vsel %vm445, %v2902, 0
      %v2925 = vsel %vm445, %v2903, 0
      %v2928 = vsel %vm445, %v2904, 0
      %v2931 = vsel %vm445, %v2905, 0
      %2933 = vmatprep.subr.bf16.mxu0 %v2913
      %2934 = vmatpush1.bf16.msra.mxu0 %v2910
      %2935 = vmatprep.subr.bf16.mxu0 0
      %2936 = vmatpush1.bf16.msra.mxu0 0
      %2937 = vmatprep.subr.bf16.mxu0 0
      %2938 = vmatpush1.bf16.msra.mxu0 0
      %2939 = vmatprep.subr.bf16.mxu0 0
      %2940 = vmatpush1.bf16.msra.mxu0 0
      %2941 = vmatprep.subr.bf16.mxu0 0
      %2942 = vmatpush1.bf16.msra.mxu0 0
      %2943 = vmatprep.subr.bf16.mxu0 0
      %2944 = vmatpush1.bf16.msra.mxu0 0
      %2945 = vmatprep.subr.bf16.mxu0 0
      %2946 = vmatpush1.bf16.msra.mxu0 0
      %2947 = vmatprep.subr.bf16.mxu0 0
      %2948 = vmatpush1.bf16.msra.mxu0 0
      %2949 = vmatprep.subr.bf16.mxu0 0
      %2950 = vmatpush1.bf16.msra.mxu0 0
      %2951 = vmatprep.subr.bf16.mxu0 0
      %2952 = vmatpush1.bf16.msra.mxu0 0
      %2953 = vmatprep.subr.bf16.mxu0 0
      %2954 = vmatpush1.bf16.msra.mxu0 0
      %2955 = vmatprep.subr.bf16.mxu0 0
      %2956 = vmatpush1.bf16.msra.mxu0 0
      %2957 = vmatprep.subr.bf16.mxu0 0
      %2958 = vmatpush1.bf16.msra.mxu0 0
      %2959 = vmatprep.subr.bf16.mxu0 0
      %2960 = vmatpush1.bf16.msra.mxu0 0
      %2961 = vmatprep.subr.bf16.mxu0 0
      %2962 = vmatpush1.bf16.msra.mxu0 0
      %2963 = vmatprep.subr.bf16.mxu0 0
      %2964 = vmatpush1.bf16.msra.mxu0 0
      %2965 = vmatprep.mubr.bf16.mxu0 0
      %2966 = vmatmul.mubr.bf16.gmra.mrb[0].mxu0 %v2907
      %v2967 = vpop.f32.mrb[0].mxu0
      %v2968 = vadd.f32 0.0, %v2967
      %v2969 = vpop.f32.mrb[0].mxu0
      %v2970 = vadd.f32 0.0, %v2969
      %v2971 = vpop.f32.mrb[0].mxu0
      %v2972 = vpop.f32.mrb[0].mxu0
      %2973 = vdwg.mxu0
      %2974 = vmatprep.subr.bf16.mxu0 %v2919
      %2975 = vmatpush1.bf16.msra.mxu0 %v2916
      %2976 = vmatprep.subr.bf16.mxu0 0
      %2977 = vmatpush1.bf16.msra.mxu0 0
      %2978 = vmatprep.subr.bf16.mxu0 0
      %2979 = vmatpush1.bf16.msra.mxu0 0
      %2980 = vmatprep.subr.bf16.mxu0 0
      %2981 = vmatpush1.bf16.msra.mxu0 0
      %2982 = vmatprep.subr.bf16.mxu0 0
      %2983 = vmatpush1.bf16.msra.mxu0 0
      %2984 = vmatprep.subr.bf16.mxu0 0
      %2985 = vmatpush1.bf16.msra.mxu0 0
      %2986 = vmatprep.subr.bf16.mxu0 0
      %2987 = vmatpush1.bf16.msra.mxu0 0
      %2988 = vmatprep.subr.bf16.mxu0 0
      %2989 = vmatpush1.bf16.msra.mxu0 0
      %2990 = vmatprep.subr.bf16.mxu0 0
      %2991 = vmatpush1.bf16.msra.mxu0 0
      %2992 = vmatprep.subr.bf16.mxu0 0
      %2993 = vmatpush1.bf16.msra.mxu0 0
      %2994 = vmatprep.subr.bf16.mxu0 0
      %2995 = vmatpush1.bf16.msra.mxu0 0
      %2996 = vmatprep.subr.bf16.mxu0 0
      %2997 = vmatpush1.bf16.msra.mxu0 0
      %2998 = vmatprep.subr.bf16.mxu0 0
      %2999 = vmatpush1.bf16.msra.mxu0 0
      %3000 = vmatprep.subr.bf16.mxu0 0
      %3001 = vmatpush1.bf16.msra.mxu0 0
      %3002 = vmatprep.subr.bf16.mxu0 0
      %3003 = vmatpush1.bf16.msra.mxu0 0
      %3004 = vmatprep.subr.bf16.mxu0 0
      %3005 = vmatpush1.bf16.msra.mxu0 0
      %3006 = vmatprep.mubr.bf16.mxu0 0
      %3007 = vmatmul.mubr.bf16.gmra.mrb[0].mxu0 %v2907
      %v3008 = vpop.f32.mrb[0].mxu0
      %v3009 = vadd.f32 0.0, %v3008
      %v3010 = vpop.f32.mrb[0].mxu0
      %v3011 = vadd.f32 0.0, %v3010
      %v3012 = vpop.f32.mrb[0].mxu0
      %v3013 = vpop.f32.mrb[0].mxu0
      %3014 = vdwg.mxu0
      %3015 = vmatprep.subr.bf16.mxu0 %v2925
      %3016 = vmatpush1.bf16.msra.mxu0 %v2922
      %3017 = vmatprep.subr.bf16.mxu0 0
      %3018 = vmatpush1.bf16.msra.mxu0 0
      %3019 = vmatprep.subr.bf16.mxu0 0
      %3020 = vmatpush1.bf16.msra.mxu0 0
      %3021 = vmatprep.subr.bf16.mxu0 0
      %3022 = vmatpush1.bf16.msra.mxu0 0
      %3023 = vmatprep.subr.bf16.mxu0 0
      %3024 = vmatpush1.bf16.msra.mxu0 0
      %3025 = vmatprep.subr.bf16.mxu0 0
      %3026 = vmatpush1.bf16.msra.mxu0 0
      %3027 = vmatprep.subr.bf16.mxu0 0
      %3028 = vmatpush1.bf16.msra.mxu0 0
      %3029 = vmatprep.subr.bf16.mxu0 0
      %3030 = vmatpush1.bf16.msra.mxu0 0
      %3031 = vmatprep.subr.bf16.mxu0 0
      %3032 = vmatpush1.bf16.msra.mxu0 0
      %3033 = vmatprep.subr.bf16.mxu0 0
      %3034 = vmatpush1.bf16.msra.mxu0 0
      %3035 = vmatprep.subr.bf16.mxu0 0
      %3036 = vmatpush1.bf16.msra.mxu0 0
      %3037 = vmatprep.subr.bf16.mxu0 0
      %3038 = vmatpush1.bf16.msra.mxu0 0
      %3039 = vmatprep.subr.bf16.mxu0 0
      %3040 = vmatpush1.bf16.msra.mxu0 0
      %3041 = vmatprep.subr.bf16.mxu0 0
      %3042 = vmatpush1.bf16.msra.mxu0 0
      %3043 = vmatprep.subr.bf16.mxu0 0
      %3044 = vmatpush1.bf16.msra.mxu0 0
      %3045 = vmatprep.subr.bf16.mxu0 0
      %3046 = vmatpush1.bf16.msra.mxu0 0
      %3047 = vmatprep.mubr.bf16.mxu0 0
      %3048 = vmatmul.mubr.bf16.gmra.mrb[0].mxu0 %v2907
      %v3049 = vpop.f32.mrb[0].mxu0
      %v3050 = vadd.f32 0.0, %v3049
      %v3051 = vpop.f32.mrb[0].mxu0
      %v3052 = vadd.f32 0.0, %v3051
      %v3053 = vpop.f32.mrb[0].mxu0
      %v3054 = vpop.f32.mrb[0].mxu0
      %3055 = vdwg.mxu0
      %3056 = vmatprep.subr.bf16.mxu0 %v2931
      %3057 = vmatpush1.bf16.msra.mxu0 %v2928
      %3058 = vmatprep.subr.bf16.mxu0 0
      %3059 = vmatpush1.bf16.msra.mxu0 0
      %3060 = vmatprep.subr.bf16.mxu0 0
      %3061 = vmatpush1.bf16.msra.mxu0 0
      %3062 = vmatprep.subr.bf16.mxu0 0
      %3063 = vmatpush1.bf16.msra.mxu0 0
      %3064 = vmatprep.subr.bf16.mxu0 0
      %3065 = vmatpush1.bf16.msra.mxu0 0
      %3066 = vmatprep.subr.bf16.mxu0 0
      %3067 = vmatpush1.bf16.msra.mxu0 0
      %3068 = vmatprep.subr.bf16.mxu0 0
      %3069 = vmatpush1.bf16.msra.mxu0 0
      %3070 = vmatprep.subr.bf16.mxu0 0
      %3071 = vmatpush1.bf16.msra.mxu0 0
      %3072 = vmatprep.subr.bf16.mxu0 0
      %3073 = vmatpush1.bf16.msra.mxu0 0
      %3074 = vmatprep.subr.bf16.mxu0 0
      %3075 = vmatpush1.bf16.msra.mxu0 0
      %3076 = vmatprep.subr.bf16.mxu0 0
      %3077 = vmatpush1.bf16.msra.mxu0 0
      %3078 = vmatprep.subr.bf16.mxu0 0
      %3079 = vmatpush1.bf16.msra.mxu0 0
      %3080 = vmatprep.subr.bf16.mxu0 0
      %3081 = vmatpush1.bf16.msra.mxu0 0
      %3082 = vmatprep.subr.bf16.mxu0 0
      %3083 = vmatpush1.bf16.msra.mxu0 0
      %3084 = vmatprep.subr.bf16.mxu0 0
      %3085 = vmatpush1.bf16.msra.mxu0 0
      %3086 = vmatprep.subr.bf16.mxu0 0
      %3087 = vmatpush1.bf16.msra.mxu0 0
      %3088 = vmatprep.mubr.bf16.mxu0 0
      %3089 = vmatmul.mubr.bf16.gmra.mrb[0].mxu0 %v2907
      %v3090 = vpop.f32.mrb[0].mxu0
      %v3091 = vadd.f32 0.0, %v3090
      %v3092 = vpop.f32.mrb[0].mxu0
      %v3093 = vadd.f32 0.0, %v3092
      %v3094 = vpop.f32.mrb[0].mxu0
      %v3095 = vpop.f32.mrb[0].mxu0
      %3096 = vdwg.mxu0
      %v3097 = vadd.f32 %v2869, %v2968
      %v3098 = vadd.f32 %v2870, %v2970
      %v3099 = vadd.f32 %v2871, %v3009
      %v3100 = vadd.f32 %v2872, %v3011
      %v3101 = vadd.f32 %v2873, %v3050
      %v3102 = vadd.f32 %v2874, %v3052
      %v3103 = vadd.f32 %v2875, %v3091
      %v3104 = vadd.f32 %v2876, %v3093
      %s3105 = scalar_lea.vmem %s343, 48
      %v3106 = vld [vmem:[%s3105] sm:$0xf]
      %3107 = vrot.lane.b32.xlu0 %v375, 18
      %v3108 = vpop.permute.xlu0 %3107
      %3109 = vrot.lane.b32.xlu0 %v383, 18
      %v3110 = vpop.permute.xlu0 %3109
      %3111 = vrot.lane.b32.xlu0 %v382, 18
      %v3112 = vpop.permute.xlu0 %3111
      %3113 = vrot.lane.b32.xlu0 %v384, 18
      %v3114 = vpop.permute.xlu0 %3113
      %3115 = vrot.lane.b32.xlu0 %v392, 18
      %v3116 = vpop.permute.xlu0 %3115
      %3117 = vrot.lane.b32.xlu0 %v400, 18
      %v3118 = vpop.permute.xlu0 %3117
      %3119 = vrot.lane.b32.xlu0 %v399, 18
      %v3120 = vpop.permute.xlu0 %3119
      %3121 = vrot.lane.b32.xlu0 %v401, 18
      %v3122 = vpop.permute.xlu0 %3121
      %3123 = vrot.lane.b32.xlu0 %v409, 18
      %v3124 = vpop.permute.xlu0 %3123
      %vm3125 = vcmask 146432
      %v3126 = vsel %vm3125, %v3108, %v3110
      %v3127 = vsel %vm3125, %v3110, %v3112
      %v3128 = vsel %vm3125, %v3112, %v3114
      %v3129 = vsel %vm3125, %v3114, %v3116
      %v3130 = vsel %vm3125, %v3116, %v3118
      %v3131 = vsel %vm3125, %v3118, %v3120
      %v3132 = vsel %vm3125, %v3120, %v3122
      %v3133 = vsel %vm3125, %v3122, %v3124
      %v3135 = vsel %vm441, %v3106, 0
      %v3138 = vsel %vm445, %v3126, 0
      %v3141 = vsel %vm445, %v3127, 0
      %v3144 = vsel %vm445, %v3128, 0
      %v3147 = vsel %vm445, %v3129, 0
      %v3150 = vsel %vm445, %v3130, 0
      %v3153 = vsel %vm445, %v3131, 0
      %v3156 = vsel %vm445, %v3132, 0
      %v3159 = vsel %vm445, %v3133, 0
      %3161 = vmatprep.subr.bf16.mxu0 %v3141
      %3162 = vmatpush1.bf16.msra.mxu0 %v3138
      %3163 = vmatprep.subr.bf16.mxu0 0
      %3164 = vmatpush1.bf16.msra.mxu0 0
      %3165 = vmatprep.subr.bf16.mxu0 0
      %3166 = vmatpush1.bf16.msra.mxu0 0
      %3167 = vmatprep.subr.bf16.mxu0 0
      %3168 = vmatpush1.bf16.msra.mxu0 0
      %3169 = vmatprep.subr.bf16.mxu0 0
      %3170 = vmatpush1.bf16.msra.mxu0 0
      %3171 = vmatprep.subr.bf16.mxu0 0
      %3172 = vmatpush1.bf16.msra.mxu0 0
      %3173 = vmatprep.subr.bf16.mxu0 0
      %3174 = vmatpush1.bf16.msra.mxu0 0
      %3175 = vmatprep.subr.bf16.mxu0 0
      %3176 = vmatpush1.bf16.msra.mxu0 0
      %3177 = vmatprep.subr.bf16.mxu0 0
      %3178 = vmatpush1.bf16.msra.mxu0 0
      %3179 = vmatprep.subr.bf16.mxu0 0
      %3180 = vmatpush1.bf16.msra.mxu0 0
      %3181 = vmatprep.subr.bf16.mxu0 0
      %3182 = vmatpush1.bf16.msra.mxu0 0
      %3183 = vmatprep.subr.bf16.mxu0 0
      %3184 = vmatpush1.bf16.msra.mxu0 0
      %3185 = vmatprep.subr.bf16.mxu0 0
      %3186 = vmatpush1.bf16.msra.mxu0 0
      %3187 = vmatprep.subr.bf16.mxu0 0
      %3188 = vmatpush1.bf16.msra.mxu0 0
      %3189 = vmatprep.subr.bf16.mxu0 0
      %3190 = vmatpush1.bf16.msra.mxu0 0
      %3191 = vmatprep.subr.bf16.mxu0 0
      %3192 = vmatpush1.bf16.msra.mxu0 0
      %3193 = vmatprep.mubr.bf16.mxu0 0
      %3194 = vmatmul.mubr.bf16.gmra.mrb[0].mxu0 %v3135
      %v3195 = vpop.f32.mrb[0].mxu0
      %v3196 = vadd.f32 0.0, %v3195
      %v3197 = vpop.f32.mrb[0].mxu0
      %v3198 = vadd.f32 0.0, %v3197
      %v3199 = vpop.f32.mrb[0].mxu0
      %v3200 = vpop.f32.mrb[0].mxu0
      %3201 = vdwg.mxu0
      %3202 = vmatprep.subr.bf16.mxu0 %v3147
      %3203 = vmatpush1.bf16.msra.mxu0 %v3144
      %3204 = vmatprep.subr.bf16.mxu0 0
      %3205 = vmatpush1.bf16.msra.mxu0 0
      %3206 = vmatprep.subr.bf16.mxu0 0
      %3207 = vmatpush1.bf16.msra.mxu0 0
      %3208 = vmatprep.subr.bf16.mxu0 0
      %3209 = vmatpush1.bf16.msra.mxu0 0
      %3210 = vmatprep.subr.bf16.mxu0 0
      %3211 = vmatpush1.bf16.msra.mxu0 0
      %3212 = vmatprep.subr.bf16.mxu0 0
      %3213 = vmatpush1.bf16.msra.mxu0 0
      %3214 = vmatprep.subr.bf16.mxu0 0
      %3215 = vmatpush1.bf16.msra.mxu0 0
      %3216 = vmatprep.subr.bf16.mxu0 0
      %3217 = vmatpush1.bf16.msra.mxu0 0
      %3218 = vmatprep.subr.bf16.mxu0 0
      %3219 = vmatpush1.bf16.msra.mxu0 0
      %3220 = vmatprep.subr.bf16.mxu0 0
      %3221 = vmatpush1.bf16.msra.mxu0 0
      %3222 = vmatprep.subr.bf16.mxu0 0
      %3223 = vmatpush1.bf16.msra.mxu0 0
      %3224 = vmatprep.subr.bf16.mxu0 0
      %3225 = vmatpush1.bf16.msra.mxu0 0
      %3226 = vmatprep.subr.bf16.mxu0 0
      %3227 = vmatpush1.bf16.msra.mxu0 0
      %3228 = vmatprep.subr.bf16.mxu0 0
      %3229 = vmatpush1.bf16.msra.mxu0 0
      %3230 = vmatprep.subr.bf16.mxu0 0
      %3231 = vmatpush1.bf16.msra.mxu0 0
      %3232 = vmatprep.subr.bf16.mxu0 0
      %3233 = vmatpush1.bf16.msra.mxu0 0
      %3234 = vmatprep.mubr.bf16.mxu0 0
      %3235 = vmatmul.mubr.bf16.gmra.mrb[0].mxu0 %v3135
      %v3236 = vpop.f32.mrb[0].mxu0
      %v3237 = vadd.f32 0.0, %v3236
      %v3238 = vpop.f32.mrb[0].mxu0
      %v3239 = vadd.f32 0.0, %v3238
      %v3240 = vpop.f32.mrb[0].mxu0
      %v3241 = vpop.f32.mrb[0].mxu0
      %3242 = vdwg.mxu0
      %3243 = vmatprep.subr.bf16.mxu0 %v3153
      %3244 = vmatpush1.bf16.msra.mxu0 %v3150
      %3245 = vmatprep.subr.bf16.mxu0 0
      %3246 = vmatpush1.bf16.msra.mxu0 0
      %3247 = vmatprep.subr.bf16.mxu0 0
      %3248 = vmatpush1.bf16.msra.mxu0 0
      %3249 = vmatprep.subr.bf16.mxu0 0
      %3250 = vmatpush1.bf16.msra.mxu0 0
      %3251 = vmatprep.subr.bf16.mxu0 0
      %3252 = vmatpush1.bf16.msra.mxu0 0
      %3253 = vmatprep.subr.bf16.mxu0 0
      %3254 = vmatpush1.bf16.msra.mxu0 0
      %3255 = vmatprep.subr.bf16.mxu0 0
      %3256 = vmatpush1.bf16.msra.mxu0 0
      %3257 = vmatprep.subr.bf16.mxu0 0
      %3258 = vmatpush1.bf16.msra.mxu0 0
      %3259 = vmatprep.subr.bf16.mxu0 0
      %3260 = vmatpush1.bf16.msra.mxu0 0
      %3261 = vmatprep.subr.bf16.mxu0 0
      %3262 = vmatpush1.bf16.msra.mxu0 0
      %3263 = vmatprep.subr.bf16.mxu0 0
      %3264 = vmatpush1.bf16.msra.mxu0 0
      %3265 = vmatprep.subr.bf16.mxu0 0
      %3266 = vmatpush1.bf16.msra.mxu0 0
      %3267 = vmatprep.subr.bf16.mxu0 0
      %3268 = vmatpush1.bf16.msra.mxu0 0
      %3269 = vmatprep.subr.bf16.mxu0 0
      %3270 = vmatpush1.bf16.msra.mxu0 0
      %3271 = vmatprep.subr.bf16.mxu0 0
      %3272 = vmatpush1.bf16.msra.mxu0 0
      %3273 = vmatprep.subr.bf16.mxu0 0
      %3274 = vmatpush1.bf16.msra.mxu0 0
      %3275 = vmatprep.mubr.bf16.mxu0 0
      %3276 = vmatmul.mubr.bf16.gmra.mrb[0].mxu0 %v3135
      %v3277 = vpop.f32.mrb[0].mxu0
      %v3278 = vadd.f32 0.0, %v3277
      %v3279 = vpop.f32.mrb[0].mxu0
      %v3280 = vadd.f32 0.0, %v3279
      %v3281 = vpop.f32.mrb[0].mxu0
      %v3282 = vpop.f32.mrb[0].mxu0
      %3283 = vdwg.mxu0
      %3284 = vmatprep.subr.bf16.mxu0 %v3159
      %3285 = vmatpush1.bf16.msra.mxu0 %v3156
      %3286 = vmatprep.subr.bf16.mxu0 0
      %3287 = vmatpush1.bf16.msra.mxu0 0
      %3288 = vmatprep.subr.bf16.mxu0 0
      %3289 = vmatpush1.bf16.msra.mxu0 0
      %3290 = vmatprep.subr.bf16.mxu0 0
      %3291 = vmatpush1.bf16.msra.mxu0 0
      %3292 = vmatprep.subr.bf16.mxu0 0
      %3293 = vmatpush1.bf16.msra.mxu0 0
      %3294 = vmatprep.subr.bf16.mxu0 0
      %3295 = vmatpush1.bf16.msra.mxu0 0
      %3296 = vmatprep.subr.bf16.mxu0 0
      %3297 = vmatpush1.bf16.msra.mxu0 0
      %3298 = vmatprep.subr.bf16.mxu0 0
      %3299 = vmatpush1.bf16.msra.mxu0 0
      %3300 = vmatprep.subr.bf16.mxu0 0
      %3301 = vmatpush1.bf16.msra.mxu0 0
      %3302 = vmatprep.subr.bf16.mxu0 0
      %3303 = vmatpush1.bf16.msra.mxu0 0
      %3304 = vmatprep.subr.bf16.mxu0 0
      %3305 = vmatpush1.bf16.msra.mxu0 0
      %3306 = vmatprep.subr.bf16.mxu0 0
      %3307 = vmatpush1.bf16.msra.mxu0 0
      %3308 = vmatprep.subr.bf16.mxu0 0
      %3309 = vmatpush1.bf16.msra.mxu0 0
      %3310 = vmatprep.subr.bf16.mxu0 0
      %3311 = vmatpush1.bf16.msra.mxu0 0
      %3312 = vmatprep.subr.bf16.mxu0 0
      %3313 = vmatpush1.bf16.msra.mxu0 0
      %3314 = vmatprep.subr.bf16.mxu0 0
      %3315 = vmatpush1.bf16.msra.mxu0 0
      %3316 = vmatprep.mubr.bf16.mxu0 0
      %3317 = vmatmul.mubr.bf16.gmra.mrb[0].mxu0 %v3135
      %v3318 = vpop.f32.mrb[0].mxu0
      %v3319 = vadd.f32 0.0, %v3318
      %v3320 = vpop.f32.mrb[0].mxu0
      %v3321 = vadd.f32 0.0, %v3320
      %v3322 = vpop.f32.mrb[0].mxu0
      %v3323 = vpop.f32.mrb[0].mxu0
      %3324 = vdwg.mxu0
      %v3325 = vadd.f32 %v3097, %v3196
      %v3326 = vadd.f32 %v3098, %v3198
      %v3327 = vadd.f32 %v3099, %v3237
      %v3328 = vadd.f32 %v3100, %v3239
      %v3329 = vadd.f32 %v3101, %v3278
      %v3330 = vadd.f32 %v3102, %v3280
      %v3331 = vadd.f32 %v3103, %v3319
      %v3332 = vadd.f32 %v3104, %v3321
      %s3333 = scalar_lea.vmem %s343, 52
      %v3334 = vld [vmem:[%s3333] sm:$0xf]
      %3335 = vrot.lane.b32.xlu0 %v375, 17
      %v3336 = vpop.permute.xlu0 %3335
      %3337 = vrot.lane.b32.xlu0 %v383, 17
      %v3338 = vpop.permute.xlu0 %3337
      %3339 = vrot.lane.b32.xlu0 %v382, 17
      %v3340 = vpop.permute.xlu0 %3339
      %3341 = vrot.lane.b32.xlu0 %v384, 17
      %v3342 = vpop.permute.xlu0 %3341
      %3343 = vrot.lane.b32.xlu0 %v392, 17
      %v3344 = vpop.permute.xlu0 %3343
      %3345 = vrot.lane.b32.xlu0 %v400, 17
      %v3346 = vpop.permute.xlu0 %3345
      %3347 = vrot.lane.b32.xlu0 %v399, 17
      %v3348 = vpop.permute.xlu0 %3347
      %3349 = vrot.lane.b32.xlu0 %v401, 17
      %v3350 = vpop.permute.xlu0 %3349
      %3351 = vrot.lane.b32.xlu0 %v409, 17
      %v3352 = vpop.permute.xlu0 %3351
      %vm3353 = vcmask 138240
      %v3354 = vsel %vm3353, %v3336, %v3338
      %v3355 = vsel %vm3353, %v3338, %v3340
      %v3356 = vsel %vm3353, %v3340, %v3342
      %v3357 = vsel %vm3353, %v3342, %v3344
      %v3358 = vsel %vm3353, %v3344, %v3346
      %v3359 = vsel %vm3353, %v3346, %v3348
      %v3360 = vsel %vm3353, %v3348, %v3350
      %v3361 = vsel %vm3353, %v3350, %v3352
      %v3363 = vsel %vm441, %v3334, 0
      %v3366 = vsel %vm445, %v3354, 0
      %v3369 = vsel %vm445, %v3355, 0
      %v3372 = vsel %vm445, %v3356, 0
      %v3375 = vsel %vm445, %v3357, 0
      %v3378 = vsel %vm445, %v3358, 0
      %v3381 = vsel %vm445, %v3359, 0
      %v3384 = vsel %vm445, %v3360, 0
      %v3387 = vsel %vm445, %v3361, 0
      %3389 = vmatprep.subr.bf16.mxu0 %v3369
      %3390 = vmatpush1.bf16.msra.mxu0 %v3366
      %3391 = vmatprep.subr.bf16.mxu0 0
      %3392 = vmatpush1.bf16.msra.mxu0 0
      %3393 = vmatprep.subr.bf16.mxu0 0
      %3394 = vmatpush1.bf16.msra.mxu0 0
      %3395 = vmatprep.subr.bf16.mxu0 0
      %3396 = vmatpush1.bf16.msra.mxu0 0
      %3397 = vmatprep.subr.bf16.mxu0 0
      %3398 = vmatpush1.bf16.msra.mxu0 0
      %3399 = vmatprep.subr.bf16.mxu0 0
      %3400 = vmatpush1.bf16.msra.mxu0 0
      %3401 = vmatprep.subr.bf16.mxu0 0
      %3402 = vmatpush1.bf16.msra.mxu0 0
      %3403 = vmatprep.subr.bf16.mxu0 0
      %3404 = vmatpush1.bf16.msra.mxu0 0
      %3405 = vmatprep.subr.bf16.mxu0 0
      %3406 = vmatpush1.bf16.msra.mxu0 0
      %3407 = vmatprep.subr.bf16.mxu0 0
      %3408 = vmatpush1.bf16.msra.mxu0 0
      %3409 = vmatprep.subr.bf16.mxu0 0
      %3410 = vmatpush1.bf16.msra.mxu0 0
      %3411 = vmatprep.subr.bf16.mxu0 0
      %3412 = vmatpush1.bf16.msra.mxu0 0
      %3413 = vmatprep.subr.bf16.mxu0 0
      %3414 = vmatpush1.bf16.msra.mxu0 0
      %3415 = vmatprep.subr.bf16.mxu0 0
      %3416 = vmatpush1.bf16.msra.mxu0 0
      %3417 = vmatprep.subr.bf16.mxu0 0
      %3418 = vmatpush1.bf16.msra.mxu0 0
      %3419 = vmatprep.subr.bf16.mxu0 0
      %3420 = vmatpush1.bf16.msra.mxu0 0
      %3421 = vmatprep.mubr.bf16.mxu0 0
      %3422 = vmatmul.mubr.bf16.gmra.mrb[0].mxu0 %v3363
      %v3423 = vpop.f32.mrb[0].mxu0
      %v3424 = vadd.f32 0.0, %v3423
      %v3425 = vpop.f32.mrb[0].mxu0
      %v3426 = vadd.f32 0.0, %v3425
      %v3427 = vpop.f32.mrb[0].mxu0
      %v3428 = vpop.f32.mrb[0].mxu0
      %3429 = vdwg.mxu0
      %3430 = vmatprep.subr.bf16.mxu0 %v3375
      %3431 = vmatpush1.bf16.msra.mxu0 %v3372
      %3432 = vmatprep.subr.bf16.mxu0 0
      %3433 = vmatpush1.bf16.msra.mxu0 0
      %3434 = vmatprep.subr.bf16.mxu0 0
      %3435 = vmatpush1.bf16.msra.mxu0 0
      %3436 = vmatprep.subr.bf16.mxu0 0
      %3437 = vmatpush1.bf16.msra.mxu0 0
      %3438 = vmatprep.subr.bf16.mxu0 0
      %3439 = vmatpush1.bf16.msra.mxu0 0
      %3440 = vmatprep.subr.bf16.mxu0 0
      %3441 = vmatpush1.bf16.msra.mxu0 0
      %3442 = vmatprep.subr.bf16.mxu0 0
      %3443 = vmatpush1.bf16.msra.mxu0 0
      %3444 = vmatprep.subr.bf16.mxu0 0
      %3445 = vmatpush1.bf16.msra.mxu0 0
      %3446 = vmatprep.subr.bf16.mxu0 0
      %3447 = vmatpush1.bf16.msra.mxu0 0
      %3448 = vmatprep.subr.bf16.mxu0 0
      %3449 = vmatpush1.bf16.msra.mxu0 0
      %3450 = vmatprep.subr.bf16.mxu0 0
      %3451 = vmatpush1.bf16.msra.mxu0 0
      %3452 = vmatprep.subr.bf16.mxu0 0
      %3453 = vmatpush1.bf16.msra.mxu0 0
      %3454 = vmatprep.subr.bf16.mxu0 0
      %3455 = vmatpush1.bf16.msra.mxu0 0
      %3456 = vmatprep.subr.bf16.mxu0 0
      %3457 = vmatpush1.bf16.msra.mxu0 0
      %3458 = vmatprep.subr.bf16.mxu0 0
      %3459 = vmatpush1.bf16.msra.mxu0 0
      %3460 = vmatprep.subr.bf16.mxu0 0
      %3461 = vmatpush1.bf16.msra.mxu0 0
      %3462 = vmatprep.mubr.bf16.mxu0 0
      %3463 = vmatmul.mubr.bf16.gmra.mrb[0].mxu0 %v3363
      %v3464 = vpop.f32.mrb[0].mxu0
      %v3465 = vadd.f32 0.0, %v3464
      %v3466 = vpop.f32.mrb[0].mxu0
      %v3467 = vadd.f32 0.0, %v3466
      %v3468 = vpop.f32.mrb[0].mxu0
      %v3469 = vpop.f32.mrb[0].mxu0
      %3470 = vdwg.mxu0
      %3471 = vmatprep.subr.bf16.mxu0 %v3381
      %3472 = vmatpush1.bf16.msra.mxu0 %v3378
      %3473 = vmatprep.subr.bf16.mxu0 0
      %3474 = vmatpush1.bf16.msra.mxu0 0
      %3475 = vmatprep.subr.bf16.mxu0 0
      %3476 = vmatpush1.bf16.msra.mxu0 0
      %3477 = vmatprep.subr.bf16.mxu0 0
      %3478 = vmatpush1.bf16.msra.mxu0 0
      %3479 = vmatprep.subr.bf16.mxu0 0
      %3480 = vmatpush1.bf16.msra.mxu0 0
      %3481 = vmatprep.subr.bf16.mxu0 0
      %3482 = vmatpush1.bf16.msra.mxu0 0
      %3483 = vmatprep.subr.bf16.mxu0 0
      %3484 = vmatpush1.bf16.msra.mxu0 0
      %3485 = vmatprep.subr.bf16.mxu0 0
      %3486 = vmatpush1.bf16.msra.mxu0 0
      %3487 = vmatprep.subr.bf16.mxu0 0
      %3488 = vmatpush1.bf16.msra.mxu0 0
      %3489 = vmatprep.subr.bf16.mxu0 0
      %3490 = vmatpush1.bf16.msra.mxu0 0
      %3491 = vmatprep.subr.bf16.mxu0 0
      %3492 = vmatpush1.bf16.msra.mxu0 0
      %3493 = vmatprep.subr.bf16.mxu0 0
      %3494 = vmatpush1.bf16.msra.mxu0 0
      %3495 = vmatprep.subr.bf16.mxu0 0
      %3496 = vmatpush1.bf16.msra.mxu0 0
      %3497 = vmatprep.subr.bf16.mxu0 0
      %3498 = vmatpush1.bf16.msra.mxu0 0
      %3499 = vmatprep.subr.bf16.mxu0 0
      %3500 = vmatpush1.bf16.msra.mxu0 0
      %3501 = vmatprep.subr.bf16.mxu0 0
      %3502 = vmatpush1.bf16.msra.mxu0 0
      %3503 = vmatprep.mubr.bf16.mxu0 0
      %3504 = vmatmul.mubr.bf16.gmra.mrb[0].mxu0 %v3363
      %v3505 = vpop.f32.mrb[0].mxu0
      %v3506 = vadd.f32 0.0, %v3505
      %v3507 = vpop.f32.mrb[0].mxu0
      %v3508 = vadd.f32 0.0, %v3507
      %v3509 = vpop.f32.mrb[0].mxu0
      %v3510 = vpop.f32.mrb[0].mxu0
      %3511 = vdwg.mxu0
      %3512 = vmatprep.subr.bf16.mxu0 %v3387
      %3513 = vmatpush1.bf16.msra.mxu0 %v3384
      %3514 = vmatprep.subr.bf16.mxu0 0
      %3515 = vmatpush1.bf16.msra.mxu0 0
      %3516 = vmatprep.subr.bf16.mxu0 0
      %3517 = vmatpush1.bf16.msra.mxu0 0
      %3518 = vmatprep.subr.bf16.mxu0 0
      %3519 = vmatpush1.bf16.msra.mxu0 0
      %3520 = vmatprep.subr.bf16.mxu0 0
      %3521 = vmatpush1.bf16.msra.mxu0 0
      %3522 = vmatprep.subr.bf16.mxu0 0
      %3523 = vmatpush1.bf16.msra.mxu0 0
      %3524 = vmatprep.subr.bf16.mxu0 0
      %3525 = vmatpush1.bf16.msra.mxu0 0
      %3526 = vmatprep.subr.bf16.mxu0 0
      %3527 = vmatpush1.bf16.msra.mxu0 0
      %3528 = vmatprep.subr.bf16.mxu0 0
      %3529 = vmatpush1.bf16.msra.mxu0 0
      %3530 = vmatprep.subr.bf16.mxu0 0
      %3531 = vmatpush1.bf16.msra.mxu0 0
      %3532 = vmatprep.subr.bf16.mxu0 0
      %3533 = vmatpush1.bf16.msra.mxu0 0
      %3534 = vmatprep.subr.bf16.mxu0 0
      %3535 = vmatpush1.bf16.msra.mxu0 0
      %3536 = vmatprep.subr.bf16.mxu0 0
      %3537 = vmatpush1.bf16.msra.mxu0 0
      %3538 = vmatprep.subr.bf16.mxu0 0
      %3539 = vmatpush1.bf16.msra.mxu0 0
      %3540 = vmatprep.subr.bf16.mxu0 0
      %3541 = vmatpush1.bf16.msra.mxu0 0
      %3542 = vmatprep.subr.bf16.mxu0 0
      %3543 = vmatpush1.bf16.msra.mxu0 0
      %3544 = vmatprep.mubr.bf16.mxu0 0
      %3545 = vmatmul.mubr.bf16.gmra.mrb[0].mxu0 %v3363
      %v3546 = vpop.f32.mrb[0].mxu0
      %v3547 = vadd.f32 0.0, %v3546
      %v3548 = vpop.f32.mrb[0].mxu0
      %v3549 = vadd.f32 0.0, %v3548
      %v3550 = vpop.f32.mrb[0].mxu0
      %v3551 = vpop.f32.mrb[0].mxu0
      %3552 = vdwg.mxu0
      %v3553 = vadd.f32 %v3325, %v3424
      %v3554 = vadd.f32 %v3326, %v3426
      %v3555 = vadd.f32 %v3327, %v3465
      %v3556 = vadd.f32 %v3328, %v3467
      %v3557 = vadd.f32 %v3329, %v3506
      %v3558 = vadd.f32 %v3330, %v3508
      %v3559 = vadd.f32 %v3331, %v3547
      %v3560 = vadd.f32 %v3332, %v3549
      %s3561 = scalar_lea.vmem %s343, 56
      %v3562 = vld [vmem:[%s3561] sm:$0xf]
      %3563 = vrot.lane.b32.xlu0 %v375, 16
      %v3564 = vpop.permute.xlu0 %3563
      %3565 = vrot.lane.b32.xlu0 %v383, 16
      %v3566 = vpop.permute.xlu0 %3565
      %3567 = vrot.lane.b32.xlu0 %v382, 16
      %v3568 = vpop.permute.xlu0 %3567
      %3569 = vrot.lane.b32.xlu0 %v384, 16
      %v3570 = vpop.permute.xlu0 %3569
      %3571 = vrot.lane.b32.xlu0 %v392, 16
      %v3572 = vpop.permute.xlu0 %3571
      %3573 = vrot.lane.b32.xlu0 %v400, 16
      %v3574 = vpop.permute.xlu0 %3573
      %3575 = vrot.lane.b32.xlu0 %v399, 16
      %v3576 = vpop.permute.xlu0 %3575
      %3577 = vrot.lane.b32.xlu0 %v401, 16
      %v3578 = vpop.permute.xlu0 %3577
      %3579 = vrot.lane.b32.xlu0 %v409, 16
      %v3580 = vpop.permute.xlu0 %3579
      %vm3581 = vcmask 130048
      %v3582 = vsel %vm3581, %v3564, %v3566
      %v3583 = vsel %vm3581, %v3566, %v3568
      %v3584 = vsel %vm3581, %v3568, %v3570
      %v3585 = vsel %vm3581, %v3570, %v3572
      %v3586 = vsel %vm3581, %v3572, %v3574
      %v3587 = vsel %vm3581, %v3574, %v3576
      %v3588 = vsel %vm3581, %v3576, %v3578
      %v3589 = vsel %vm3581, %v3578, %v3580
      %v3591 = vsel %vm441, %v3562, 0
      %v3594 = vsel %vm445, %v3582, 0
      %v3597 = vsel %vm445, %v3583, 0
      %v3600 = vsel %vm445, %v3584, 0
      %v3603 = vsel %vm445, %v3585, 0
      %v3606 = vsel %vm445, %v3586, 0
      %v3609 = vsel %vm445, %v3587, 0
      %v3612 = vsel %vm445, %v3588, 0
      %v3615 = vsel %vm445, %v3589, 0
      %3617 = vmatprep.subr.bf16.mxu0 %v3597
      %3618 = vmatpush1.bf16.msra.mxu0 %v3594
      %3619 = vmatprep.subr.bf16.mxu0 0
      %3620 = vmatpush1.bf16.msra.mxu0 0
      %3621 = vmatprep.subr.bf16.mxu0 0
      %3622 = vmatpush1.bf16.msra.mxu0 0
      %3623 = vmatprep.subr.bf16.mxu0 0
      %3624 = vmatpush1.bf16.msra.mxu0 0
      %3625 = vmatprep.subr.bf16.mxu0 0
      %3626 = vmatpush1.bf16.msra.mxu0 0
      %3627 = vmatprep.subr.bf16.mxu0 0
      %3628 = vmatpush1.bf16.msra.mxu0 0
      %3629 = vmatprep.subr.bf16.mxu0 0
      %3630 = vmatpush1.bf16.msra.mxu0 0
      %3631 = vmatprep.subr.bf16.mxu0 0
      %3632 = vmatpush1.bf16.msra.mxu0 0
      %3633 = vmatprep.subr.bf16.mxu0 0
      %3634 = vmatpush1.bf16.msra.mxu0 0
      %3635 = vmatprep.subr.bf16.mxu0 0
      %3636 = vmatpush1.bf16.msra.mxu0 0
      %3637 = vmatprep.subr.bf16.mxu0 0
      %3638 = vmatpush1.bf16.msra.mxu0 0
      %3639 = vmatprep.subr.bf16.mxu0 0
      %3640 = vmatpush1.bf16.msra.mxu0 0
      %3641 = vmatprep.subr.bf16.mxu0 0
      %3642 = vmatpush1.bf16.msra.mxu0 0
      %3643 = vmatprep.subr.bf16.mxu0 0
      %3644 = vmatpush1.bf16.msra.mxu0 0
      %3645 = vmatprep.subr.bf16.mxu0 0
      %3646 = vmatpush1.bf16.msra.mxu0 0
      %3647 = vmatprep.subr.bf16.mxu0 0
      %3648 = vmatpush1.bf16.msra.mxu0 0
      %3649 = vmatprep.mubr.bf16.mxu0 0
      %3650 = vmatmul.mubr.bf16.gmra.mrb[0].mxu0 %v3591
      %v3651 = vpop.f32.mrb[0].mxu0
      %v3652 = vadd.f32 0.0, %v3651
      %v3653 = vpop.f32.mrb[0].mxu0
      %v3654 = vadd.f32 0.0, %v3653
      %v3655 = vpop.f32.mrb[0].mxu0
      %v3656 = vpop.f32.mrb[0].mxu0
      %3657 = vdwg.mxu0
      %3658 = vmatprep.subr.bf16.mxu0 %v3603
      %3659 = vmatpush1.bf16.msra.mxu0 %v3600
      %3660 = vmatprep.subr.bf16.mxu0 0
      %3661 = vmatpush1.bf16.msra.mxu0 0
      %3662 = vmatprep.subr.bf16.mxu0 0
      %3663 = vmatpush1.bf16.msra.mxu0 0
      %3664 = vmatprep.subr.bf16.mxu0 0
      %3665 = vmatpush1.bf16.msra.mxu0 0
      %3666 = vmatprep.subr.bf16.mxu0 0
      %3667 = vmatpush1.bf16.msra.mxu0 0
      %3668 = vmatprep.subr.bf16.mxu0 0
      %3669 = vmatpush1.bf16.msra.mxu0 0
      %3670 = vmatprep.subr.bf16.mxu0 0
      %3671 = vmatpush1.bf16.msra.mxu0 0
      %3672 = vmatprep.subr.bf16.mxu0 0
      %3673 = vmatpush1.bf16.msra.mxu0 0
      %3674 = vmatprep.subr.bf16.mxu0 0
      %3675 = vmatpush1.bf16.msra.mxu0 0
      %3676 = vmatprep.subr.bf16.mxu0 0
      %3677 = vmatpush1.bf16.msra.mxu0 0
      %3678 = vmatprep.subr.bf16.mxu0 0
      %3679 = vmatpush1.bf16.msra.mxu0 0
      %3680 = vmatprep.subr.bf16.mxu0 0
      %3681 = vmatpush1.bf16.msra.mxu0 0
      %3682 = vmatprep.subr.bf16.mxu0 0
      %3683 = vmatpush1.bf16.msra.mxu0 0
      %3684 = vmatprep.subr.bf16.mxu0 0
      %3685 = vmatpush1.bf16.msra.mxu0 0
      %3686 = vmatprep.subr.bf16.mxu0 0
      %3687 = vmatpush1.bf16.msra.mxu0 0
      %3688 = vmatprep.subr.bf16.mxu0 0
      %3689 = vmatpush1.bf16.msra.mxu0 0
      %3690 = vmatprep.mubr.bf16.mxu0 0
      %3691 = vmatmul.mubr.bf16.gmra.mrb[0].mxu0 %v3591
      %v3692 = vpop.f32.mrb[0].mxu0
      %v3693 = vadd.f32 0.0, %v3692
      %v3694 = vpop.f32.mrb[0].mxu0
      %v3695 = vadd.f32 0.0, %v3694
      %v3696 = vpop.f32.mrb[0].mxu0
      %v3697 = vpop.f32.mrb[0].mxu0
      %3698 = vdwg.mxu0
      %3699 = vmatprep.subr.bf16.mxu0 %v3609
      %3700 = vmatpush1.bf16.msra.mxu0 %v3606
      %3701 = vmatprep.subr.bf16.mxu0 0
      %3702 = vmatpush1.bf16.msra.mxu0 0
      %3703 = vmatprep.subr.bf16.mxu0 0
      %3704 = vmatpush1.bf16.msra.mxu0 0
      %3705 = vmatprep.subr.bf16.mxu0 0
      %3706 = vmatpush1.bf16.msra.mxu0 0
      %3707 = vmatprep.subr.bf16.mxu0 0
      %3708 = vmatpush1.bf16.msra.mxu0 0
      %3709 = vmatprep.subr.bf16.mxu0 0
      %3710 = vmatpush1.bf16.msra.mxu0 0
      %3711 = vmatprep.subr.bf16.mxu0 0
      %3712 = vmatpush1.bf16.msra.mxu0 0
      %3713 = vmatprep.subr.bf16.mxu0 0
      %3714 = vmatpush1.bf16.msra.mxu0 0
      %3715 = vmatprep.subr.bf16.mxu0 0
      %3716 = vmatpush1.bf16.msra.mxu0 0
      %3717 = vmatprep.subr.bf16.mxu0 0
      %3718 = vmatpush1.bf16.msra.mxu0 0
      %3719 = vmatprep.subr.bf16.mxu0 0
      %3720 = vmatpush1.bf16.msra.mxu0 0
      %3721 = vmatprep.subr.bf16.mxu0 0
      %3722 = vmatpush1.bf16.msra.mxu0 0
      %3723 = vmatprep.subr.bf16.mxu0 0
      %3724 = vmatpush1.bf16.msra.mxu0 0
      %3725 = vmatprep.subr.bf16.mxu0 0
      %3726 = vmatpush1.bf16.msra.mxu0 0
      %3727 = vmatprep.subr.bf16.mxu0 0
      %3728 = vmatpush1.bf16.msra.mxu0 0
      %3729 = vmatprep.subr.bf16.mxu0 0
      %3730 = vmatpush1.bf16.msra.mxu0 0
      %3731 = vmatprep.mubr.bf16.mxu0 0
      %3732 = vmatmul.mubr.bf16.gmra.mrb[0].mxu0 %v3591
      %v3733 = vpop.f32.mrb[0].mxu0
      %v3734 = vadd.f32 0.0, %v3733
      %v3735 = vpop.f32.mrb[0].mxu0
      %v3736 = vadd.f32 0.0, %v3735
      %v3737 = vpop.f32.mrb[0].mxu0
      %v3738 = vpop.f32.mrb[0].mxu0
      %3739 = vdwg.mxu0
      %3740 = vmatprep.subr.bf16.mxu0 %v3615
      %3741 = vmatpush1.bf16.msra.mxu0 %v3612
      %3742 = vmatprep.subr.bf16.mxu0 0
      %3743 = vmatpush1.bf16.msra.mxu0 0
      %3744 = vmatprep.subr.bf16.mxu0 0
      %3745 = vmatpush1.bf16.msra.mxu0 0
      %3746 = vmatprep.subr.bf16.mxu0 0
      %3747 = vmatpush1.bf16.msra.mxu0 0
      %3748 = vmatprep.subr.bf16.mxu0 0
      %3749 = vmatpush1.bf16.msra.mxu0 0
      %3750 = vmatprep.subr.bf16.mxu0 0
      %3751 = vmatpush1.bf16.msra.mxu0 0
      %3752 = vmatprep.subr.bf16.mxu0 0
      %3753 = vmatpush1.bf16.msra.mxu0 0
      %3754 = vmatprep.subr.bf16.mxu0 0
      %3755 = vmatpush1.bf16.msra.mxu0 0
      %3756 = vmatprep.subr.bf16.mxu0 0
      %3757 = vmatpush1.bf16.msra.mxu0 0
      %3758 = vmatprep.subr.bf16.mxu0 0
      %3759 = vmatpush1.bf16.msra.mxu0 0
      %3760 = vmatprep.subr.bf16.mxu0 0
      %3761 = vmatpush1.bf16.msra.mxu0 0
      %3762 = vmatprep.subr.bf16.mxu0 0
      %3763 = vmatpush1.bf16.msra.mxu0 0
      %3764 = vmatprep.subr.bf16.mxu0 0
      %3765 = vmatpush1.bf16.msra.mxu0 0
      %3766 = vmatprep.subr.bf16.mxu0 0
      %3767 = vmatpush1.bf16.msra.mxu0 0
      %3768 = vmatprep.subr.bf16.mxu0 0
      %3769 = vmatpush1.bf16.msra.mxu0 0
      %3770 = vmatprep.subr.bf16.mxu0 0
      %3771 = vmatpush1.bf16.msra.mxu0 0
      %3772 = vmatprep.mubr.bf16.mxu0 0
      %3773 = vmatmul.mubr.bf16.gmra.mrb[0].mxu0 %v3591
      %v3774 = vpop.f32.mrb[0].mxu0
      %v3775 = vadd.f32 0.0, %v3774
      %v3776 = vpop.f32.mrb[0].mxu0
      %v3777 = vadd.f32 0.0, %v3776
      %v3778 = vpop.f32.mrb[0].mxu0
      %v3779 = vpop.f32.mrb[0].mxu0
      %3780 = vdwg.mxu0
      %v3781 = vadd.f32 %v3553, %v3652
      %v3782 = vadd.f32 %v3554, %v3654
      %v3783 = vadd.f32 %v3555, %v3693
      %v3784 = vadd.f32 %v3556, %v3695
      %v3785 = vadd.f32 %v3557, %v3734
      %v3786 = vadd.f32 %v3558, %v3736
      %v3787 = vadd.f32 %v3559, %v3775
      %v3788 = vadd.f32 %v3560, %v3777
      %s3789 = scalar_lea.vmem %s343, 60
      %v3790 = vld [vmem:[%s3789] sm:$0xf]
      %3791 = vrot.lane.b32.xlu0 %v375, 8
      %v3792 = vpop.permute.xlu0 %3791
      %3793 = vrot.lane.b32.xlu0 %v383, 8
      %v3794 = vpop.permute.xlu0 %3793
      %3795 = vrot.lane.b32.xlu0 %v382, 8
      %v3796 = vpop.permute.xlu0 %3795
      %3797 = vrot.lane.b32.xlu0 %v384, 8
      %v3798 = vpop.permute.xlu0 %3797
      %3799 = vrot.lane.b32.xlu0 %v392, 8
      %v3800 = vpop.permute.xlu0 %3799
      %3801 = vrot.lane.b32.xlu0 %v400, 8
      %v3802 = vpop.permute.xlu0 %3801
      %3803 = vrot.lane.b32.xlu0 %v399, 8
      %v3804 = vpop.permute.xlu0 %3803
      %3805 = vrot.lane.b32.xlu0 %v401, 8
      %v3806 = vpop.permute.xlu0 %3805
      %3807 = vrot.lane.b32.xlu0 %v409, 8
      %v3808 = vpop.permute.xlu0 %3807
      %vm3809 = vcmask 64512
      %v3810 = vsel %vm3809, %v3792, %v3794
      %v3811 = vsel %vm3809, %v3794, %v3796
      %v3812 = vsel %vm3809, %v3796, %v3798
      %v3813 = vsel %vm3809, %v3798, %v3800
      %v3814 = vsel %vm3809, %v3800, %v3802
      %v3815 = vsel %vm3809, %v3802, %v3804
      %v3816 = vsel %vm3809, %v3804, %v3806
      %v3817 = vsel %vm3809, %v3806, %v3808
      %v3819 = vsel %vm441, %v3790, 0
      %v3822 = vsel %vm445, %v3810, 0
      %v3825 = vsel %vm445, %v3811, 0
      %v3828 = vsel %vm445, %v3812, 0
      %v3831 = vsel %vm445, %v3813, 0
      %v3834 = vsel %vm445, %v3814, 0
      %v3837 = vsel %vm445, %v3815, 0
      %v3840 = vsel %vm445, %v3816, 0
      %v3843 = vsel %vm445, %v3817, 0
      %3845 = vmatprep.subr.bf16.mxu0 %v3825
      %3846 = vmatpush1.bf16.msra.mxu0 %v3822
      %3847 = vmatprep.subr.bf16.mxu0 0
      %3848 = vmatpush1.bf16.msra.mxu0 0
      %3849 = vmatprep.subr.bf16.mxu0 0
      %3850 = vmatpush1.bf16.msra.mxu0 0
      %3851 = vmatprep.subr.bf16.mxu0 0
      %3852 = vmatpush1.bf16.msra.mxu0 0
      %3853 = vmatprep.subr.bf16.mxu0 0
      %3854 = vmatpush1.bf16.msra.mxu0 0
      %3855 = vmatprep.subr.bf16.mxu0 0
      %3856 = vmatpush1.bf16.msra.mxu0 0
      %3857 = vmatprep.subr.bf16.mxu0 0
      %3858 = vmatpush1.bf16.msra.mxu0 0
      %3859 = vmatprep.subr.bf16.mxu0 0
      %3860 = vmatpush1.bf16.msra.mxu0 0
      %3861 = vmatprep.subr.bf16.mxu0 0
      %3862 = vmatpush1.bf16.msra.mxu0 0
      %3863 = vmatprep.subr.bf16.mxu0 0
      %3864 = vmatpush1.bf16.msra.mxu0 0
      %3865 = vmatprep.subr.bf16.mxu0 0
      %3866 = vmatpush1.bf16.msra.mxu0 0
      %3867 = vmatprep.subr.bf16.mxu0 0
      %3868 = vmatpush1.bf16.msra.mxu0 0
      %3869 = vmatprep.subr.bf16.mxu0 0
      %3870 = vmatpush1.bf16.msra.mxu0 0
      %3871 = vmatprep.subr.bf16.mxu0 0
      %3872 = vmatpush1.bf16.msra.mxu0 0
      %3873 = vmatprep.subr.bf16.mxu0 0
      %3874 = vmatpush1.bf16.msra.mxu0 0
      %3875 = vmatprep.subr.bf16.mxu0 0
      %3876 = vmatpush1.bf16.msra.mxu0 0
      %3877 = vmatprep.mubr.bf16.mxu0 0
      %3878 = vmatmul.mubr.bf16.gmra.mrb[0].mxu0 %v3819
      %v3879 = vpop.f32.mrb[0].mxu0
      %v3880 = vadd.f32 0.0, %v3879
      %v3881 = vpop.f32.mrb[0].mxu0
      %v3882 = vadd.f32 0.0, %v3881
      %v3883 = vpop.f32.mrb[0].mxu0
      %v3884 = vpop.f32.mrb[0].mxu0
      %3885 = vdwg.mxu0
      %3886 = vmatprep.subr.bf16.mxu0 %v3831
      %3887 = vmatpush1.bf16.msra.mxu0 %v3828
      %3888 = vmatprep.subr.bf16.mxu0 0
      %3889 = vmatpush1.bf16.msra.mxu0 0
      %3890 = vmatprep.subr.bf16.mxu0 0
      %3891 = vmatpush1.bf16.msra.mxu0 0
      %3892 = vmatprep.subr.bf16.mxu0 0
      %3893 = vmatpush1.bf16.msra.mxu0 0
      %3894 = vmatprep.subr.bf16.mxu0 0
      %3895 = vmatpush1.bf16.msra.mxu0 0
      %3896 = vmatprep.subr.bf16.mxu0 0
      %3897 = vmatpush1.bf16.msra.mxu0 0
      %3898 = vmatprep.subr.bf16.mxu0 0
      %3899 = vmatpush1.bf16.msra.mxu0 0
      %3900 = vmatprep.subr.bf16.mxu0 0
      %3901 = vmatpush1.bf16.msra.mxu0 0
      %3902 = vmatprep.subr.bf16.mxu0 0
      %3903 = vmatpush1.bf16.msra.mxu0 0
      %3904 = vmatprep.subr.bf16.mxu0 0
      %3905 = vmatpush1.bf16.msra.mxu0 0
      %3906 = vmatprep.subr.bf16.mxu0 0
      %3907 = vmatpush1.bf16.msra.mxu0 0
      %3908 = vmatprep.subr.bf16.mxu0 0
      %3909 = vmatpush1.bf16.msra.mxu0 0
      %3910 = vmatprep.subr.bf16.mxu0 0
      %3911 = vmatpush1.bf16.msra.mxu0 0
      %3912 = vmatprep.subr.bf16.mxu0 0
      %3913 = vmatpush1.bf16.msra.mxu0 0
      %3914 = vmatprep.subr.bf16.mxu0 0
      %3915 = vmatpush1.bf16.msra.mxu0 0
      %3916 = vmatprep.subr.bf16.mxu0 0
      %3917 = vmatpush1.bf16.msra.mxu0 0
      %3918 = vmatprep.mubr.bf16.mxu0 0
      %3919 = vmatmul.mubr.bf16.gmra.mrb[0].mxu0 %v3819
      %v3920 = vpop.f32.mrb[0].mxu0
      %v3921 = vadd.f32 0.0, %v3920
      %v3922 = vpop.f32.mrb[0].mxu0
      %v3923 = vadd.f32 0.0, %v3922
      %v3924 = vpop.f32.mrb[0].mxu0
      %v3925 = vpop.f32.mrb[0].mxu0
      %3926 = vdwg.mxu0
      %3927 = vmatprep.subr.bf16.mxu0 %v3837
      %3928 = vmatpush1.bf16.msra.mxu0 %v3834
      %3929 = vmatprep.subr.bf16.mxu0 0
      %3930 = vmatpush1.bf16.msra.mxu0 0
      %3931 = vmatprep.subr.bf16.mxu0 0
      %3932 = vmatpush1.bf16.msra.mxu0 0
      %3933 = vmatprep.subr.bf16.mxu0 0
      %3934 = vmatpush1.bf16.msra.mxu0 0
      %3935 = vmatprep.subr.bf16.mxu0 0
      %3936 = vmatpush1.bf16.msra.mxu0 0
      %3937 = vmatprep.subr.bf16.mxu0 0
      %3938 = vmatpush1.bf16.msra.mxu0 0
      %3939 = vmatprep.subr.bf16.mxu0 0
      %3940 = vmatpush1.bf16.msra.mxu0 0
      %3941 = vmatprep.subr.bf16.mxu0 0
      %3942 = vmatpush1.bf16.msra.mxu0 0
      %3943 = vmatprep.subr.bf16.mxu0 0
      %3944 = vmatpush1.bf16.msra.mxu0 0
      %3945 = vmatprep.subr.bf16.mxu0 0
      %3946 = vmatpush1.bf16.msra.mxu0 0
      %3947 = vmatprep.subr.bf16.mxu0 0
      %3948 = vmatpush1.bf16.msra.mxu0 0
      %3949 = vmatprep.subr.bf16.mxu0 0
      %3950 = vmatpush1.bf16.msra.mxu0 0
      %3951 = vmatprep.subr.bf16.mxu0 0
      %3952 = vmatpush1.bf16.msra.mxu0 0
      %3953 = vmatprep.subr.bf16.mxu0 0
      %3954 = vmatpush1.bf16.msra.mxu0 0
      %3955 = vmatprep.subr.bf16.mxu0 0
      %3956 = vmatpush1.bf16.msra.mxu0 0
      %3957 = vmatprep.subr.bf16.mxu0 0
      %3958 = vmatpush1.bf16.msra.mxu0 0
      %3959 = vmatprep.mubr.bf16.mxu0 0
      %3960 = vmatmul.mubr.bf16.gmra.mrb[0].mxu0 %v3819
      %v3961 = vpop.f32.mrb[0].mxu0
      %v3962 = vadd.f32 0.0, %v3961
      %v3963 = vpop.f32.mrb[0].mxu0
      %v3964 = vadd.f32 0.0, %v3963
      %v3965 = vpop.f32.mrb[0].mxu0
      %v3966 = vpop.f32.mrb[0].mxu0
      %3967 = vdwg.mxu0
      %3968 = vmatprep.subr.bf16.mxu0 %v3843
      %3969 = vmatpush1.bf16.msra.mxu0 %v3840
      %3970 = vmatprep.subr.bf16.mxu0 0
      %3971 = vmatpush1.bf16.msra.mxu0 0
      %3972 = vmatprep.subr.bf16.mxu0 0
      %3973 = vmatpush1.bf16.msra.mxu0 0
      %3974 = vmatprep.subr.bf16.mxu0 0
      %3975 = vmatpush1.bf16.msra.mxu0 0
      %3976 = vmatprep.subr.bf16.mxu0 0
      %3977 = vmatpush1.bf16.msra.mxu0 0
      %3978 = vmatprep.subr.bf16.mxu0 0
      %3979 = vmatpush1.bf16.msra.mxu0 0
      %3980 = vmatprep.subr.bf16.mxu0 0
      %3981 = vmatpush1.bf16.msra.mxu0 0
      %3982 = vmatprep.subr.bf16.mxu0 0
      %3983 = vmatpush1.bf16.msra.mxu0 0
      %3984 = vmatprep.subr.bf16.mxu0 0
      %3985 = vmatpush1.bf16.msra.mxu0 0
      %3986 = vmatprep.subr.bf16.mxu0 0
      %3987 = vmatpush1.bf16.msra.mxu0 0
      %3988 = vmatprep.subr.bf16.mxu0 0
      %3989 = vmatpush1.bf16.msra.mxu0 0
      %3990 = vmatprep.subr.bf16.mxu0 0
      %3991 = vmatpush1.bf16.msra.mxu0 0
      %3992 = vmatprep.subr.bf16.mxu0 0
      %3993 = vmatpush1.bf16.msra.mxu0 0
      %3994 = vmatprep.subr.bf16.mxu0 0
      %3995 = vmatpush1.bf16.msra.mxu0 0
      %3996 = vmatprep.subr.bf16.mxu0 0
      %3997 = vmatpush1.bf16.msra.mxu0 0
      %3998 = vmatprep.subr.bf16.mxu0 0
      %3999 = vmatpush1.bf16.msra.mxu0 0
      %4000 = vmatprep.mubr.bf16.mxu0 0
      %4001 = vmatmul.mubr.bf16.gmra.mrb[0].mxu0 %v3819
      %v4002 = vpop.f32.mrb[0].mxu0
      %v4003 = vadd.f32 0.0, %v4002
      %v4004 = vpop.f32.mrb[0].mxu0
      %v4005 = vadd.f32 0.0, %v4004
      %v4006 = vpop.f32.mrb[0].mxu0
      %v4007 = vpop.f32.mrb[0].mxu0
      %4008 = vdwg.mxu0
      %v4009 = vadd.f32 %v3781, %v3880
      %v4010 = vadd.f32 %v3782, %v3882
      %v4011 = vadd.f32 %v3783, %v3921
      %v4012 = vadd.f32 %v3784, %v3923
      %v4013 = vadd.f32 %v3785, %v3962
      %v4014 = vadd.f32 %v3786, %v3964
      %v4015 = vadd.f32 %v3787, %v4003
      %v4016 = vadd.f32 %v3788, %v4005
      %s4017 = scalar_lea.vmem %s343, 64
      %v4018 = vld [vmem:[%s4017] sm:$0xf]
      %4019 = vrot.lane.b32.xlu0 %v375, 7
      %v4020 = vpop.permute.xlu0 %4019
      %4021 = vrot.lane.b32.xlu0 %v383, 7
      %v4022 = vpop.permute.xlu0 %4021
      %4023 = vrot.lane.b32.xlu0 %v382, 7
      %v4024 = vpop.permute.xlu0 %4023
      %4025 = vrot.lane.b32.xlu0 %v384, 7
      %v4026 = vpop.permute.xlu0 %4025
      %4027 = vrot.lane.b32.xlu0 %v392, 7
      %v4028 = vpop.permute.xlu0 %4027
      %4029 = vrot.lane.b32.xlu0 %v400, 7
      %v4030 = vpop.permute.xlu0 %4029
      %4031 = vrot.lane.b32.xlu0 %v399, 7
      %v4032 = vpop.permute.xlu0 %4031
      %4033 = vrot.lane.b32.xlu0 %v401, 7
      %v4034 = vpop.permute.xlu0 %4033
      %4035 = vrot.lane.b32.xlu0 %v409, 7
      %v4036 = vpop.permute.xlu0 %4035
      %vm4037 = vcmask 56320
      %v4038 = vsel %vm4037, %v4020, %v4022
      %v4039 = vsel %vm4037, %v4022, %v4024
      %v4040 = vsel %vm4037, %v4024, %v4026
      %v4041 = vsel %vm4037, %v4026, %v4028
      %v4042 = vsel %vm4037, %v4028, %v4030
      %v4043 = vsel %vm4037, %v4030, %v4032
      %v4044 = vsel %vm4037, %v4032, %v4034
      %v4045 = vsel %vm4037, %v4034, %v4036
      %v4047 = vsel %vm441, %v4018, 0
      %v4050 = vsel %vm445, %v4038, 0
      %v4053 = vsel %vm445, %v4039, 0
      %v4056 = vsel %vm445, %v4040, 0
      %v4059 = vsel %vm445, %v4041, 0
      %v4062 = vsel %vm445, %v4042, 0
      %v4065 = vsel %vm445, %v4043, 0
      %v4068 = vsel %vm445, %v4044, 0
      %v4071 = vsel %vm445, %v4045, 0
      %4073 = vmatprep.subr.bf16.mxu0 %v4053
      %4074 = vmatpush1.bf16.msra.mxu0 %v4050
      %4075 = vmatprep.subr.bf16.mxu0 0
      %4076 = vmatpush1.bf16.msra.mxu0 0
      %4077 = vmatprep.subr.bf16.mxu0 0
      %4078 = vmatpush1.bf16.msra.mxu0 0
      %4079 = vmatprep.subr.bf16.mxu0 0
      %4080 = vmatpush1.bf16.msra.mxu0 0
      %4081 = vmatprep.subr.bf16.mxu0 0
      %4082 = vmatpush1.bf16.msra.mxu0 0
      %4083 = vmatprep.subr.bf16.mxu0 0
      %4084 = vmatpush1.bf16.msra.mxu0 0
      %4085 = vmatprep.subr.bf16.mxu0 0
      %4086 = vmatpush1.bf16.msra.mxu0 0
      %4087 = vmatprep.subr.bf16.mxu0 0
      %4088 = vmatpush1.bf16.msra.mxu0 0
      %4089 = vmatprep.subr.bf16.mxu0 0
      %4090 = vmatpush1.bf16.msra.mxu0 0
      %4091 = vmatprep.subr.bf16.mxu0 0
      %4092 = vmatpush1.bf16.msra.mxu0 0
      %4093 = vmatprep.subr.bf16.mxu0 0
      %4094 = vmatpush1.bf16.msra.mxu0 0
      %4095 = vmatprep.subr.bf16.mxu0 0
      %4096 = vmatpush1.bf16.msra.mxu0 0
      %4097 = vmatprep.subr.bf16.mxu0 0
      %4098 = vmatpush1.bf16.msra.mxu0 0
      %4099 = vmatprep.subr.bf16.mxu0 0
      %4100 = vmatpush1.bf16.msra.mxu0 0
      %4101 = vmatprep.subr.bf16.mxu0 0
      %4102 = vmatpush1.bf16.msra.mxu0 0
      %4103 = vmatprep.subr.bf16.mxu0 0
      %4104 = vmatpush1.bf16.msra.mxu0 0
      %4105 = vmatprep.mubr.bf16.mxu0 0
      %4106 = vmatmul.mubr.bf16.gmra.mrb[0].mxu0 %v4047
      %v4107 = vpop.f32.mrb[0].mxu0
      %v4108 = vadd.f32 0.0, %v4107
      %v4109 = vpop.f32.mrb[0].mxu0
      %v4110 = vadd.f32 0.0, %v4109
      %v4111 = vpop.f32.mrb[0].mxu0
      %v4112 = vpop.f32.mrb[0].mxu0
      %4113 = vdwg.mxu0
      %4114 = vmatprep.subr.bf16.mxu0 %v4059
      %4115 = vmatpush1.bf16.msra.mxu0 %v4056
      %4116 = vmatprep.subr.bf16.mxu0 0
      %4117 = vmatpush1.bf16.msra.mxu0 0
      %4118 = vmatprep.subr.bf16.mxu0 0
      %4119 = vmatpush1.bf16.msra.mxu0 0
      %4120 = vmatprep.subr.bf16.mxu0 0
      %4121 = vmatpush1.bf16.msra.mxu0 0
      %4122 = vmatprep.subr.bf16.mxu0 0
      %4123 = vmatpush1.bf16.msra.mxu0 0
      %4124 = vmatprep.subr.bf16.mxu0 0
      %4125 = vmatpush1.bf16.msra.mxu0 0
      %4126 = vmatprep.subr.bf16.mxu0 0
      %4127 = vmatpush1.bf16.msra.mxu0 0
      %4128 = vmatprep.subr.bf16.mxu0 0
      %4129 = vmatpush1.bf16.msra.mxu0 0
      %4130 = vmatprep.subr.bf16.mxu0 0
      %4131 = vmatpush1.bf16.msra.mxu0 0
      %4132 = vmatprep.subr.bf16.mxu0 0
      %4133 = vmatpush1.bf16.msra.mxu0 0
      %4134 = vmatprep.subr.bf16.mxu0 0
      %4135 = vmatpush1.bf16.msra.mxu0 0
      %4136 = vmatprep.subr.bf16.mxu0 0
      %4137 = vmatpush1.bf16.msra.mxu0 0
      %4138 = vmatprep.subr.bf16.mxu0 0
      %4139 = vmatpush1.bf16.msra.mxu0 0
      %4140 = vmatprep.subr.bf16.mxu0 0
      %4141 = vmatpush1.bf16.msra.mxu0 0
      %4142 = vmatprep.subr.bf16.mxu0 0
      %4143 = vmatpush1.bf16.msra.mxu0 0
      %4144 = vmatprep.subr.bf16.mxu0 0
      %4145 = vmatpush1.bf16.msra.mxu0 0
      %4146 = vmatprep.mubr.bf16.mxu0 0
      %4147 = vmatmul.mubr.bf16.gmra.mrb[0].mxu0 %v4047
      %v4148 = vpop.f32.mrb[0].mxu0
      %v4149 = vadd.f32 0.0, %v4148
      %v4150 = vpop.f32.mrb[0].mxu0
      %v4151 = vadd.f32 0.0, %v4150
      %v4152 = vpop.f32.mrb[0].mxu0
      %v4153 = vpop.f32.mrb[0].mxu0
      %4154 = vdwg.mxu0
      %4155 = vmatprep.subr.bf16.mxu0 %v4065
      %4156 = vmatpush1.bf16.msra.mxu0 %v4062
      %4157 = vmatprep.subr.bf16.mxu0 0
      %4158 = vmatpush1.bf16.msra.mxu0 0
      %4159 = vmatprep.subr.bf16.mxu0 0
      %4160 = vmatpush1.bf16.msra.mxu0 0
      %4161 = vmatprep.subr.bf16.mxu0 0
      %4162 = vmatpush1.bf16.msra.mxu0 0
      %4163 = vmatprep.subr.bf16.mxu0 0
      %4164 = vmatpush1.bf16.msra.mxu0 0
      %4165 = vmatprep.subr.bf16.mxu0 0
      %4166 = vmatpush1.bf16.msra.mxu0 0
      %4167 = vmatprep.subr.bf16.mxu0 0
      %4168 = vmatpush1.bf16.msra.mxu0 0
      %4169 = vmatprep.subr.bf16.mxu0 0
      %4170 = vmatpush1.bf16.msra.mxu0 0
      %4171 = vmatprep.subr.bf16.mxu0 0
      %4172 = vmatpush1.bf16.msra.mxu0 0
      %4173 = vmatprep.subr.bf16.mxu0 0
      %4174 = vmatpush1.bf16.msra.mxu0 0
      %4175 = vmatprep.subr.bf16.mxu0 0
      %4176 = vmatpush1.bf16.msra.mxu0 0
      %4177 = vmatprep.subr.bf16.mxu0 0
      %4178 = vmatpush1.bf16.msra.mxu0 0
      %4179 = vmatprep.subr.bf16.mxu0 0
      %4180 = vmatpush1.bf16.msra.mxu0 0
      %4181 = vmatprep.subr.bf16.mxu0 0
      %4182 = vmatpush1.bf16.msra.mxu0 0
      %4183 = vmatprep.subr.bf16.mxu0 0
      %4184 = vmatpush1.bf16.msra.mxu0 0
      %4185 = vmatprep.subr.bf16.mxu0 0
      %4186 = vmatpush1.bf16.msra.mxu0 0
      %4187 = vmatprep.mubr.bf16.mxu0 0
      %4188 = vmatmul.mubr.bf16.gmra.mrb[0].mxu0 %v4047
      %v4189 = vpop.f32.mrb[0].mxu0
      %v4190 = vadd.f32 0.0, %v4189
      %v4191 = vpop.f32.mrb[0].mxu0
      %v4192 = vadd.f32 0.0, %v4191
      %v4193 = vpop.f32.mrb[0].mxu0
      %v4194 = vpop.f32.mrb[0].mxu0
      %4195 = vdwg.mxu0
      %4196 = vmatprep.subr.bf16.mxu0 %v4071
      %4197 = vmatpush1.bf16.msra.mxu0 %v4068
      %4198 = vmatprep.subr.bf16.mxu0 0
      %4199 = vmatpush1.bf16.msra.mxu0 0
      %4200 = vmatprep.subr.bf16.mxu0 0
      %4201 = vmatpush1.bf16.msra.mxu0 0
      %4202 = vmatprep.subr.bf16.mxu0 0
      %4203 = vmatpush1.bf16.msra.mxu0 0
      %4204 = vmatprep.subr.bf16.mxu0 0
      %4205 = vmatpush1.bf16.msra.mxu0 0
      %4206 = vmatprep.subr.bf16.mxu0 0
      %4207 = vmatpush1.bf16.msra.mxu0 0
      %4208 = vmatprep.subr.bf16.mxu0 0
      %4209 = vmatpush1.bf16.msra.mxu0 0
      %4210 = vmatprep.subr.bf16.mxu0 0
      %4211 = vmatpush1.bf16.msra.mxu0 0
      %4212 = vmatprep.subr.bf16.mxu0 0
      %4213 = vmatpush1.bf16.msra.mxu0 0
      %4214 = vmatprep.subr.bf16.mxu0 0
      %4215 = vmatpush1.bf16.msra.mxu0 0
      %4216 = vmatprep.subr.bf16.mxu0 0
      %4217 = vmatpush1.bf16.msra.mxu0 0
      %4218 = vmatprep.subr.bf16.mxu0 0
      %4219 = vmatpush1.bf16.msra.mxu0 0
      %4220 = vmatprep.subr.bf16.mxu0 0
      %4221 = vmatpush1.bf16.msra.mxu0 0
      %4222 = vmatprep.subr.bf16.mxu0 0
      %4223 = vmatpush1.bf16.msra.mxu0 0
      %4224 = vmatprep.subr.bf16.mxu0 0
      %4225 = vmatpush1.bf16.msra.mxu0 0
      %4226 = vmatprep.subr.bf16.mxu0 0
      %4227 = vmatpush1.bf16.msra.mxu0 0
      %4228 = vmatprep.mubr.bf16.mxu0 0
      %4229 = vmatmul.mubr.bf16.gmra.mrb[0].mxu0 %v4047
      %v4230 = vpop.f32.mrb[0].mxu0
      %v4231 = vadd.f32 0.0, %v4230
      %v4232 = vpop.f32.mrb[0].mxu0
      %v4233 = vadd.f32 0.0, %v4232
      %v4234 = vpop.f32.mrb[0].mxu0
      %v4235 = vpop.f32.mrb[0].mxu0
      %4236 = vdwg.mxu0
      %v4237 = vadd.f32 %v4009, %v4108
      %v4238 = vadd.f32 %v4010, %v4110
      %v4239 = vadd.f32 %v4011, %v4149
      %v4240 = vadd.f32 %v4012, %v4151
      %v4241 = vadd.f32 %v4013, %v4190
      %v4242 = vadd.f32 %v4014, %v4192
      %v4243 = vadd.f32 %v4015, %v4231
      %v4244 = vadd.f32 %v4016, %v4233
      %s4245 = scalar_lea.vmem %s343, 68
      %v4246 = vld [vmem:[%s4245] sm:$0xf]
      %4247 = vrot.lane.b32.xlu0 %v375, 6
      %v4248 = vpop.permute.xlu0 %4247
      %4249 = vrot.lane.b32.xlu0 %v383, 6
      %v4250 = vpop.permute.xlu0 %4249
      %4251 = vrot.lane.b32.xlu0 %v382, 6
      %v4252 = vpop.permute.xlu0 %4251
      %4253 = vrot.lane.b32.xlu0 %v384, 6
      %v4254 = vpop.permute.xlu0 %4253
      %4255 = vrot.lane.b32.xlu0 %v392, 6
      %v4256 = vpop.permute.xlu0 %4255
      %4257 = vrot.lane.b32.xlu0 %v400, 6
      %v4258 = vpop.permute.xlu0 %4257
      %4259 = vrot.lane.b32.xlu0 %v399, 6
      %v4260 = vpop.permute.xlu0 %4259
      %4261 = vrot.lane.b32.xlu0 %v401, 6
      %v4262 = vpop.permute.xlu0 %4261
      %4263 = vrot.lane.b32.xlu0 %v409, 6
      %v4264 = vpop.permute.xlu0 %4263
      %vm4265 = vcmask 48128
      %v4266 = vsel %vm4265, %v4248, %v4250
      %v4267 = vsel %vm4265, %v4250, %v4252
      %v4268 = vsel %vm4265, %v4252, %v4254
      %v4269 = vsel %vm4265, %v4254, %v4256
      %v4270 = vsel %vm4265, %v4256, %v4258
      %v4271 = vsel %vm4265, %v4258, %v4260
      %v4272 = vsel %vm4265, %v4260, %v4262
      %v4273 = vsel %vm4265, %v4262, %v4264
      %v4275 = vsel %vm441, %v4246, 0
      %v4278 = vsel %vm445, %v4266, 0
      %v4281 = vsel %vm445, %v4267, 0
      %v4284 = vsel %vm445, %v4268, 0
      %v4287 = vsel %vm445, %v4269, 0
      %v4290 = vsel %vm445, %v4270, 0
      %v4293 = vsel %vm445, %v4271, 0
      %v4296 = vsel %vm445, %v4272, 0
      %v4299 = vsel %vm445, %v4273, 0
      %4301 = vmatprep.subr.bf16.mxu0 %v4281
      %4302 = vmatpush1.bf16.msra.mxu0 %v4278
      %4303 = vmatprep.subr.bf16.mxu0 0
      %4304 = vmatpush1.bf16.msra.mxu0 0
      %4305 = vmatprep.subr.bf16.mxu0 0
      %4306 = vmatpush1.bf16.msra.mxu0 0
      %4307 = vmatprep.subr.bf16.mxu0 0
      %4308 = vmatpush1.bf16.msra.mxu0 0
      %4309 = vmatprep.subr.bf16.mxu0 0
      %4310 = vmatpush1.bf16.msra.mxu0 0
      %4311 = vmatprep.subr.bf16.mxu0 0
      %4312 = vmatpush1.bf16.msra.mxu0 0
      %4313 = vmatprep.subr.bf16.mxu0 0
      %4314 = vmatpush1.bf16.msra.mxu0 0
      %4315 = vmatprep.subr.bf16.mxu0 0
      %4316 = vmatpush1.bf16.msra.mxu0 0
      %4317 = vmatprep.subr.bf16.mxu0 0
      %4318 = vmatpush1.bf16.msra.mxu0 0
      %4319 = vmatprep.subr.bf16.mxu0 0
      %4320 = vmatpush1.bf16.msra.mxu0 0
      %4321 = vmatprep.subr.bf16.mxu0 0
      %4322 = vmatpush1.bf16.msra.mxu0 0
      %4323 = vmatprep.subr.bf16.mxu0 0
      %4324 = vmatpush1.bf16.msra.mxu0 0
      %4325 = vmatprep.subr.bf16.mxu0 0
      %4326 = vmatpush1.bf16.msra.mxu0 0
      %4327 = vmatprep.subr.bf16.mxu0 0
      %4328 = vmatpush1.bf16.msra.mxu0 0
      %4329 = vmatprep.subr.bf16.mxu0 0
      %4330 = vmatpush1.bf16.msra.mxu0 0
      %4331 = vmatprep.subr.bf16.mxu0 0
      %4332 = vmatpush1.bf16.msra.mxu0 0
      %4333 = vmatprep.mubr.bf16.mxu0 0
      %4334 = vmatmul.mubr.bf16.gmra.mrb[0].mxu0 %v4275
      %v4335 = vpop.f32.mrb[0].mxu0
      %v4336 = vadd.f32 0.0, %v4335
      %v4337 = vpop.f32.mrb[0].mxu0
      %v4338 = vadd.f32 0.0, %v4337
      %v4339 = vpop.f32.mrb[0].mxu0
      %v4340 = vpop.f32.mrb[0].mxu0
      %4341 = vdwg.mxu0
      %4342 = vmatprep.subr.bf16.mxu0 %v4287
      %4343 = vmatpush1.bf16.msra.mxu0 %v4284
      %4344 = vmatprep.subr.bf16.mxu0 0
      %4345 = vmatpush1.bf16.msra.mxu0 0
      %4346 = vmatprep.subr.bf16.mxu0 0
      %4347 = vmatpush1.bf16.msra.mxu0 0
      %4348 = vmatprep.subr.bf16.mxu0 0
      %4349 = vmatpush1.bf16.msra.mxu0 0
      %4350 = vmatprep.subr.bf16.mxu0 0
      %4351 = vmatpush1.bf16.msra.mxu0 0
      %4352 = vmatprep.subr.bf16.mxu0 0
      %4353 = vmatpush1.bf16.msra.mxu0 0
      %4354 = vmatprep.subr.bf16.mxu0 0
      %4355 = vmatpush1.bf16.msra.mxu0 0
      %4356 = vmatprep.subr.bf16.mxu0 0
      %4357 = vmatpush1.bf16.msra.mxu0 0
      %4358 = vmatprep.subr.bf16.mxu0 0
      %4359 = vmatpush1.bf16.msra.mxu0 0
      %4360 = vmatprep.subr.bf16.mxu0 0
      %4361 = vmatpush1.bf16.msra.mxu0 0
      %4362 = vmatprep.subr.bf16.mxu0 0
      %4363 = vmatpush1.bf16.msra.mxu0 0
      %4364 = vmatprep.subr.bf16.mxu0 0
      %4365 = vmatpush1.bf16.msra.mxu0 0
      %4366 = vmatprep.subr.bf16.mxu0 0
      %4367 = vmatpush1.bf16.msra.mxu0 0
      %4368 = vmatprep.subr.bf16.mxu0 0
      %4369 = vmatpush1.bf16.msra.mxu0 0
      %4370 = vmatprep.subr.bf16.mxu0 0
      %4371 = vmatpush1.bf16.msra.mxu0 0
      %4372 = vmatprep.subr.bf16.mxu0 0
      %4373 = vmatpush1.bf16.msra.mxu0 0
      %4374 = vmatprep.mubr.bf16.mxu0 0
      %4375 = vmatmul.mubr.bf16.gmra.mrb[0].mxu0 %v4275
      %v4376 = vpop.f32.mrb[0].mxu0
      %v4377 = vadd.f32 0.0, %v4376
      %v4378 = vpop.f32.mrb[0].mxu0
      %v4379 = vadd.f32 0.0, %v4378
      %v4380 = vpop.f32.mrb[0].mxu0
      %v4381 = vpop.f32.mrb[0].mxu0
      %4382 = vdwg.mxu0
      %4383 = vmatprep.subr.bf16.mxu0 %v4293
      %4384 = vmatpush1.bf16.msra.mxu0 %v4290
      %4385 = vmatprep.subr.bf16.mxu0 0
      %4386 = vmatpush1.bf16.msra.mxu0 0
      %4387 = vmatprep.subr.bf16.mxu0 0
      %4388 = vmatpush1.bf16.msra.mxu0 0
      %4389 = vmatprep.subr.bf16.mxu0 0
      %4390 = vmatpush1.bf16.msra.mxu0 0
      %4391 = vmatprep.subr.bf16.mxu0 0
      %4392 = vmatpush1.bf16.msra.mxu0 0
      %4393 = vmatprep.subr.bf16.mxu0 0
      %4394 = vmatpush1.bf16.msra.mxu0 0
      %4395 = vmatprep.subr.bf16.mxu0 0
      %4396 = vmatpush1.bf16.msra.mxu0 0
      %4397 = vmatprep.subr.bf16.mxu0 0
      %4398 = vmatpush1.bf16.msra.mxu0 0
      %4399 = vmatprep.subr.bf16.mxu0 0
      %4400 = vmatpush1.bf16.msra.mxu0 0
      %4401 = vmatprep.subr.bf16.mxu0 0
      %4402 = vmatpush1.bf16.msra.mxu0 0
      %4403 = vmatprep.subr.bf16.mxu0 0
      %4404 = vmatpush1.bf16.msra.mxu0 0
      %4405 = vmatprep.subr.bf16.mxu0 0
      %4406 = vmatpush1.bf16.msra.mxu0 0
      %4407 = vmatprep.subr.bf16.mxu0 0
      %4408 = vmatpush1.bf16.msra.mxu0 0
      %4409 = vmatprep.subr.bf16.mxu0 0
      %4410 = vmatpush1.bf16.msra.mxu0 0
      %4411 = vmatprep.subr.bf16.mxu0 0
      %4412 = vmatpush1.bf16.msra.mxu0 0
      %4413 = vmatprep.subr.bf16.mxu0 0
      %4414 = vmatpush1.bf16.msra.mxu0 0
      %4415 = vmatprep.mubr.bf16.mxu0 0
      %4416 = vmatmul.mubr.bf16.gmra.mrb[0].mxu0 %v4275
      %v4417 = vpop.f32.mrb[0].mxu0
      %v4418 = vadd.f32 0.0, %v4417
      %v4419 = vpop.f32.mrb[0].mxu0
      %v4420 = vadd.f32 0.0, %v4419
      %v4421 = vpop.f32.mrb[0].mxu0
      %v4422 = vpop.f32.mrb[0].mxu0
      %4423 = vdwg.mxu0
      %4424 = vmatprep.subr.bf16.mxu0 %v4299
      %4425 = vmatpush1.bf16.msra.mxu0 %v4296
      %4426 = vmatprep.subr.bf16.mxu0 0
      %4427 = vmatpush1.bf16.msra.mxu0 0
      %4428 = vmatprep.subr.bf16.mxu0 0
      %4429 = vmatpush1.bf16.msra.mxu0 0
      %4430 = vmatprep.subr.bf16.mxu0 0
      %4431 = vmatpush1.bf16.msra.mxu0 0
      %4432 = vmatprep.subr.bf16.mxu0 0
      %4433 = vmatpush1.bf16.msra.mxu0 0
      %4434 = vmatprep.subr.bf16.mxu0 0
      %4435 = vmatpush1.bf16.msra.mxu0 0
      %4436 = vmatprep.subr.bf16.mxu0 0
      %4437 = vmatpush1.bf16.msra.mxu0 0
      %4438 = vmatprep.subr.bf16.mxu0 0
      %4439 = vmatpush1.bf16.msra.mxu0 0
      %4440 = vmatprep.subr.bf16.mxu0 0
      %4441 = vmatpush1.bf16.msra.mxu0 0
      %4442 = vmatprep.subr.bf16.mxu0 0
      %4443 = vmatpush1.bf16.msra.mxu0 0
      %4444 = vmatprep.subr.bf16.mxu0 0
      %4445 = vmatpush1.bf16.msra.mxu0 0
      %4446 = vmatprep.subr.bf16.mxu0 0
      %4447 = vmatpush1.bf16.msra.mxu0 0
      %4448 = vmatprep.subr.bf16.mxu0 0
      %4449 = vmatpush1.bf16.msra.mxu0 0
      %4450 = vmatprep.subr.bf16.mxu0 0
      %4451 = vmatpush1.bf16.msra.mxu0 0
      %4452 = vmatprep.subr.bf16.mxu0 0
      %4453 = vmatpush1.bf16.msra.mxu0 0
      %4454 = vmatprep.subr.bf16.mxu0 0
      %4455 = vmatpush1.bf16.msra.mxu0 0
      %4456 = vmatprep.mubr.bf16.mxu0 0
      %4457 = vmatmul.mubr.bf16.gmra.mrb[0].mxu0 %v4275
      %v4458 = vpop.f32.mrb[0].mxu0
      %v4459 = vadd.f32 0.0, %v4458
      %v4460 = vpop.f32.mrb[0].mxu0
      %v4461 = vadd.f32 0.0, %v4460
      %v4462 = vpop.f32.mrb[0].mxu0
      %v4463 = vpop.f32.mrb[0].mxu0
      %4464 = vdwg.mxu0
      %v4465 = vadd.f32 %v4237, %v4336
      %v4466 = vadd.f32 %v4238, %v4338
      %v4467 = vadd.f32 %v4239, %v4377
      %v4468 = vadd.f32 %v4240, %v4379
      %v4469 = vadd.f32 %v4241, %v4418
      %v4470 = vadd.f32 %v4242, %v4420
      %v4471 = vadd.f32 %v4243, %v4459
      %v4472 = vadd.f32 %v4244, %v4461
      %s4473 = scalar_lea.vmem %s343, 72
      %v4474 = vld [vmem:[%s4473] sm:$0xf]
      %4475 = vrot.lane.b32.xlu0 %v383, 56
      %v4476 = vpop.permute.xlu0 %4475
      %4477 = vrot.lane.b32.xlu0 %v382, 56
      %v4478 = vpop.permute.xlu0 %4477
      %4479 = vrot.lane.b32.xlu0 %v384, 56
      %v4480 = vpop.permute.xlu0 %4479
      %4481 = vrot.lane.b32.xlu0 %v392, 56
      %v4482 = vpop.permute.xlu0 %4481
      %4483 = vrot.lane.b32.xlu0 %v400, 56
      %v4484 = vpop.permute.xlu0 %4483
      %4485 = vrot.lane.b32.xlu0 %v399, 56
      %v4486 = vpop.permute.xlu0 %4485
      %4487 = vrot.lane.b32.xlu0 %v401, 56
      %v4488 = vpop.permute.xlu0 %4487
      %4489 = vrot.lane.b32.xlu0 %v409, 56
      %v4490 = vpop.permute.xlu0 %4489
      %4491 = vrot.lane.b32.xlu0 %v410, 56
      %v4492 = vpop.permute.xlu0 %4491
      %vm4493 = vcmask 457728
      %v4494 = vsel %vm4493, %v4476, %v4478
      %v4495 = vsel %vm4493, %v4478, %v4480
      %v4496 = vsel %vm4493, %v4480, %v4482
      %v4497 = vsel %vm4493, %v4482, %v4484
      %v4498 = vsel %vm4493, %v4484, %v4486
      %v4499 = vsel %vm4493, %v4486, %v4488
      %v4500 = vsel %vm4493, %v4488, %v4490
      %v4501 = vsel %vm4493, %v4490, %v4492
      %v4503 = vsel %vm441, %v4474, 0
      %v4506 = vsel %vm445, %v4494, 0
      %v4509 = vsel %vm445, %v4495, 0
      %v4512 = vsel %vm445, %v4496, 0
      %v4515 = vsel %vm445, %v4497, 0
      %v4518 = vsel %vm445, %v4498, 0
      %v4521 = vsel %vm445, %v4499, 0
      %v4524 = vsel %vm445, %v4500, 0
      %v4527 = vsel %vm445, %v4501, 0
      %4529 = vmatprep.subr.bf16.mxu0 %v4509
      %4530 = vmatpush1.bf16.msra.mxu0 %v4506
      %4531 = vmatprep.subr.bf16.mxu0 0
      %4532 = vmatpush1.bf16.msra.mxu0 0
      %4533 = vmatprep.subr.bf16.mxu0 0
      %4534 = vmatpush1.bf16.msra.mxu0 0
      %4535 = vmatprep.subr.bf16.mxu0 0
      %4536 = vmatpush1.bf16.msra.mxu0 0
      %4537 = vmatprep.subr.bf16.mxu0 0
      %4538 = vmatpush1.bf16.msra.mxu0 0
      %4539 = vmatprep.subr.bf16.mxu0 0
      %4540 = vmatpush1.bf16.msra.mxu0 0
      %4541 = vmatprep.subr.bf16.mxu0 0
      %4542 = vmatpush1.bf16.msra.mxu0 0
      %4543 = vmatprep.subr.bf16.mxu0 0
      %4544 = vmatpush1.bf16.msra.mxu0 0
      %4545 = vmatprep.subr.bf16.mxu0 0
      %4546 = vmatpush1.bf16.msra.mxu0 0
      %4547 = vmatprep.subr.bf16.mxu0 0
      %4548 = vmatpush1.bf16.msra.mxu0 0
      %4549 = vmatprep.subr.bf16.mxu0 0
      %4550 = vmatpush1.bf16.msra.mxu0 0
      %4551 = vmatprep.subr.bf16.mxu0 0
      %4552 = vmatpush1.bf16.msra.mxu0 0
      %4553 = vmatprep.subr.bf16.mxu0 0
      %4554 = vmatpush1.bf16.msra.mxu0 0
      %4555 = vmatprep.subr.bf16.mxu0 0
      %4556 = vmatpush1.bf16.msra.mxu0 0
      %4557 = vmatprep.subr.bf16.mxu0 0
      %4558 = vmatpush1.bf16.msra.mxu0 0
      %4559 = vmatprep.subr.bf16.mxu0 0
      %4560 = vmatpush1.bf16.msra.mxu0 0
      %4561 = vmatprep.mubr.bf16.mxu0 0
      %4562 = vmatmul.mubr.bf16.gmra.mrb[0].mxu0 %v4503
      %v4563 = vpop.f32.mrb[0].mxu0
      %v4564 = vadd.f32 0.0, %v4563
      %v4565 = vpop.f32.mrb[0].mxu0
      %v4566 = vadd.f32 0.0, %v4565
      %v4567 = vpop.f32.mrb[0].mxu0
      %v4568 = vpop.f32.mrb[0].mxu0
      %4569 = vdwg.mxu0
      %4570 = vmatprep.subr.bf16.mxu0 %v4515
      %4571 = vmatpush1.bf16.msra.mxu0 %v4512
      %4572 = vmatprep.subr.bf16.mxu0 0
      %4573 = vmatpush1.bf16.msra.mxu0 0
      %4574 = vmatprep.subr.bf16.mxu0 0
      %4575 = vmatpush1.bf16.msra.mxu0 0
      %4576 = vmatprep.subr.bf16.mxu0 0
      %4577 = vmatpush1.bf16.msra.mxu0 0
      %4578 = vmatprep.subr.bf16.mxu0 0
      %4579 = vmatpush1.bf16.msra.mxu0 0
      %4580 = vmatprep.subr.bf16.mxu0 0
      %4581 = vmatpush1.bf16.msra.mxu0 0
      %4582 = vmatprep.subr.bf16.mxu0 0
      %4583 = vmatpush1.bf16.msra.mxu0 0
      %4584 = vmatprep.subr.bf16.mxu0 0
      %4585 = vmatpush1.bf16.msra.mxu0 0
      %4586 = vmatprep.subr.bf16.mxu0 0
      %4587 = vmatpush1.bf16.msra.mxu0 0
      %4588 = vmatprep.subr.bf16.mxu0 0
      %4589 = vmatpush1.bf16.msra.mxu0 0
      %4590 = vmatprep.subr.bf16.mxu0 0
      %4591 = vmatpush1.bf16.msra.mxu0 0
      %4592 = vmatprep.subr.bf16.mxu0 0
      %4593 = vmatpush1.bf16.msra.mxu0 0
      %4594 = vmatprep.subr.bf16.mxu0 0
      %4595 = vmatpush1.bf16.msra.mxu0 0
      %4596 = vmatprep.subr.bf16.mxu0 0
      %4597 = vmatpush1.bf16.msra.mxu0 0
      %4598 = vmatprep.subr.bf16.mxu0 0
      %4599 = vmatpush1.bf16.msra.mxu0 0
      %4600 = vmatprep.subr.bf16.mxu0 0
      %4601 = vmatpush1.bf16.msra.mxu0 0
      %4602 = vmatprep.mubr.bf16.mxu0 0
      %4603 = vmatmul.mubr.bf16.gmra.mrb[0].mxu0 %v4503
      %v4604 = vpop.f32.mrb[0].mxu0
      %v4605 = vadd.f32 0.0, %v4604
      %v4606 = vpop.f32.mrb[0].mxu0
      %v4607 = vadd.f32 0.0, %v4606
      %v4608 = vpop.f32.mrb[0].mxu0
      %v4609 = vpop.f32.mrb[0].mxu0
      %4610 = vdwg.mxu0
      %4611 = vmatprep.subr.bf16.mxu0 %v4521
      %4612 = vmatpush1.bf16.msra.mxu0 %v4518
      %4613 = vmatprep.subr.bf16.mxu0 0
      %4614 = vmatpush1.bf16.msra.mxu0 0
      %4615 = vmatprep.subr.bf16.mxu0 0
      %4616 = vmatpush1.bf16.msra.mxu0 0
      %4617 = vmatprep.subr.bf16.mxu0 0
      %4618 = vmatpush1.bf16.msra.mxu0 0
      %4619 = vmatprep.subr.bf16.mxu0 0
      %4620 = vmatpush1.bf16.msra.mxu0 0
      %4621 = vmatprep.subr.bf16.mxu0 0
      %4622 = vmatpush1.bf16.msra.mxu0 0
      %4623 = vmatprep.subr.bf16.mxu0 0
      %4624 = vmatpush1.bf16.msra.mxu0 0
      %4625 = vmatprep.subr.bf16.mxu0 0
      %4626 = vmatpush1.bf16.msra.mxu0 0
      %4627 = vmatprep.subr.bf16.mxu0 0
      %4628 = vmatpush1.bf16.msra.mxu0 0
      %4629 = vmatprep.subr.bf16.mxu0 0
      %4630 = vmatpush1.bf16.msra.mxu0 0
      %4631 = vmatprep.subr.bf16.mxu0 0
      %4632 = vmatpush1.bf16.msra.mxu0 0
      %4633 = vmatprep.subr.bf16.mxu0 0
      %4634 = vmatpush1.bf16.msra.mxu0 0
      %4635 = vmatprep.subr.bf16.mxu0 0
      %4636 = vmatpush1.bf16.msra.mxu0 0
      %4637 = vmatprep.subr.bf16.mxu0 0
      %4638 = vmatpush1.bf16.msra.mxu0 0
      %4639 = vmatprep.subr.bf16.mxu0 0
      %4640 = vmatpush1.bf16.msra.mxu0 0
      %4641 = vmatprep.subr.bf16.mxu0 0
      %4642 = vmatpush1.bf16.msra.mxu0 0
      %4643 = vmatprep.mubr.bf16.mxu0 0
      %4644 = vmatmul.mubr.bf16.gmra.mrb[0].mxu0 %v4503
      %v4645 = vpop.f32.mrb[0].mxu0
      %v4646 = vadd.f32 0.0, %v4645
      %v4647 = vpop.f32.mrb[0].mxu0
      %v4648 = vadd.f32 0.0, %v4647
      %v4649 = vpop.f32.mrb[0].mxu0
      %v4650 = vpop.f32.mrb[0].mxu0
      %4651 = vdwg.mxu0
      %4652 = vmatprep.subr.bf16.mxu0 %v4527
      %4653 = vmatpush1.bf16.msra.mxu0 %v4524
      %4654 = vmatprep.subr.bf16.mxu0 0
      %4655 = vmatpush1.bf16.msra.mxu0 0
      %4656 = vmatprep.subr.bf16.mxu0 0
      %4657 = vmatpush1.bf16.msra.mxu0 0
      %4658 = vmatprep.subr.bf16.mxu0 0
      %4659 = vmatpush1.bf16.msra.mxu0 0
      %4660 = vmatprep.subr.bf16.mxu0 0
      %4661 = vmatpush1.bf16.msra.mxu0 0
      %4662 = vmatprep.subr.bf16.mxu0 0
      %4663 = vmatpush1.bf16.msra.mxu0 0
      %4664 = vmatprep.subr.bf16.mxu0 0
      %4665 = vmatpush1.bf16.msra.mxu0 0
      %4666 = vmatprep.subr.bf16.mxu0 0
      %4667 = vmatpush1.bf16.msra.mxu0 0
      %4668 = vmatprep.subr.bf16.mxu0 0
      %4669 = vmatpush1.bf16.msra.mxu0 0
      %4670 = vmatprep.subr.bf16.mxu0 0
      %4671 = vmatpush1.bf16.msra.mxu0 0
      %4672 = vmatprep.subr.bf16.mxu0 0
      %4673 = vmatpush1.bf16.msra.mxu0 0
      %4674 = vmatprep.subr.bf16.mxu0 0
      %4675 = vmatpush1.bf16.msra.mxu0 0
      %4676 = vmatprep.subr.bf16.mxu0 0
      %4677 = vmatpush1.bf16.msra.mxu0 0
      %4678 = vmatprep.subr.bf16.mxu0 0
      %4679 = vmatpush1.bf16.msra.mxu0 0
      %4680 = vmatprep.subr.bf16.mxu0 0
      %4681 = vmatpush1.bf16.msra.mxu0 0
      %4682 = vmatprep.subr.bf16.mxu0 0
      %4683 = vmatpush1.bf16.msra.mxu0 0
      %4684 = vmatprep.mubr.bf16.mxu0 0
      %4685 = vmatmul.mubr.bf16.gmra.mrb[0].mxu0 %v4503
      %v4686 = vpop.f32.mrb[0].mxu0
      %v4687 = vadd.f32 0.0, %v4686
      %v4688 = vpop.f32.mrb[0].mxu0
      %v4689 = vadd.f32 0.0, %v4688
      %v4690 = vpop.f32.mrb[0].mxu0
      %v4691 = vpop.f32.mrb[0].mxu0
      %4692 = vdwg.mxu0
      %v4693 = vadd.f32 %v4465, %v4564
      %v4694 = vadd.f32 %v4466, %v4566
      %v4695 = vadd.f32 %v4467, %v4605
      %v4696 = vadd.f32 %v4468, %v4607
      %v4697 = vadd.f32 %v4469, %v4646
      %v4698 = vadd.f32 %v4470, %v4648
      %v4699 = vadd.f32 %v4471, %v4687
      %v4700 = vadd.f32 %v4472, %v4689
      %s4701 = scalar_lea.vmem %s343, 76
      %v4702 = vld [vmem:[%s4701] sm:$0xf]
      %4703 = vrot.lane.b32.xlu0 %v383, 55
      %v4704 = vpop.permute.xlu0 %4703
      %4705 = vrot.lane.b32.xlu0 %v382, 55
      %v4706 = vpop.permute.xlu0 %4705
      %4707 = vrot.lane.b32.xlu0 %v384, 55
      %v4708 = vpop.permute.xlu0 %4707
      %4709 = vrot.lane.b32.xlu0 %v392, 55
      %v4710 = vpop.permute.xlu0 %4709
      %4711 = vrot.lane.b32.xlu0 %v400, 55
      %v4712 = vpop.permute.xlu0 %4711
      %4713 = vrot.lane.b32.xlu0 %v399, 55
      %v4714 = vpop.permute.xlu0 %4713
      %4715 = vrot.lane.b32.xlu0 %v401, 55
      %v4716 = vpop.permute.xlu0 %4715
      %4717 = vrot.lane.b32.xlu0 %v409, 55
      %v4718 = vpop.permute.xlu0 %4717
      %4719 = vrot.lane.b32.xlu0 %v410, 55
      %v4720 = vpop.permute.xlu0 %4719
      %vm4721 = vcmask 449536
      %v4722 = vsel %vm4721, %v4704, %v4706
      %v4723 = vsel %vm4721, %v4706, %v4708
      %v4724 = vsel %vm4721, %v4708, %v4710
      %v4725 = vsel %vm4721, %v4710, %v4712
      %v4726 = vsel %vm4721, %v4712, %v4714
      %v4727 = vsel %vm4721, %v4714, %v4716
      %v4728 = vsel %vm4721, %v4716, %v4718
      %v4729 = vsel %vm4721, %v4718, %v4720
      %v4731 = vsel %vm441, %v4702, 0
      %v4734 = vsel %vm445, %v4722, 0
      %v4737 = vsel %vm445, %v4723, 0
      %v4740 = vsel %vm445, %v4724, 0
      %v4743 = vsel %vm445, %v4725, 0
      %v4746 = vsel %vm445, %v4726, 0
      %v4749 = vsel %vm445, %v4727, 0
      %v4752 = vsel %vm445, %v4728, 0
      %v4755 = vsel %vm445, %v4729, 0
      %4757 = vmatprep.subr.bf16.mxu0 %v4737
      %4758 = vmatpush1.bf16.msra.mxu0 %v4734
      %4759 = vmatprep.subr.bf16.mxu0 0
      %4760 = vmatpush1.bf16.msra.mxu0 0
      %4761 = vmatprep.subr.bf16.mxu0 0
      %4762 = vmatpush1.bf16.msra.mxu0 0
      %4763 = vmatprep.subr.bf16.mxu0 0
      %4764 = vmatpush1.bf16.msra.mxu0 0
      %4765 = vmatprep.subr.bf16.mxu0 0
      %4766 = vmatpush1.bf16.msra.mxu0 0
      %4767 = vmatprep.subr.bf16.mxu0 0
      %4768 = vmatpush1.bf16.msra.mxu0 0
      %4769 = vmatprep.subr.bf16.mxu0 0
      %4770 = vmatpush1.bf16.msra.mxu0 0
      %4771 = vmatprep.subr.bf16.mxu0 0
      %4772 = vmatpush1.bf16.msra.mxu0 0
      %4773 = vmatprep.subr.bf16.mxu0 0
      %4774 = vmatpush1.bf16.msra.mxu0 0
      %4775 = vmatprep.subr.bf16.mxu0 0
      %4776 = vmatpush1.bf16.msra.mxu0 0
      %4777 = vmatprep.subr.bf16.mxu0 0
      %4778 = vmatpush1.bf16.msra.mxu0 0
      %4779 = vmatprep.subr.bf16.mxu0 0
      %4780 = vmatpush1.bf16.msra.mxu0 0
      %4781 = vmatprep.subr.bf16.mxu0 0
      %4782 = vmatpush1.bf16.msra.mxu0 0
      %4783 = vmatprep.subr.bf16.mxu0 0
      %4784 = vmatpush1.bf16.msra.mxu0 0
      %4785 = vmatprep.subr.bf16.mxu0 0
      %4786 = vmatpush1.bf16.msra.mxu0 0
      %4787 = vmatprep.subr.bf16.mxu0 0
      %4788 = vmatpush1.bf16.msra.mxu0 0
      %4789 = vmatprep.mubr.bf16.mxu0 0
      %4790 = vmatmul.mubr.bf16.gmra.mrb[0].mxu0 %v4731
      %v4791 = vpop.f32.mrb[0].mxu0
      %v4792 = vadd.f32 0.0, %v4791
      %v4793 = vpop.f32.mrb[0].mxu0
      %v4794 = vadd.f32 0.0, %v4793
      %v4795 = vpop.f32.mrb[0].mxu0
      %v4796 = vpop.f32.mrb[0].mxu0
      %4797 = vdwg.mxu0
      %4798 = vmatprep.subr.bf16.mxu0 %v4743
      %4799 = vmatpush1.bf16.msra.mxu0 %v4740
      %4800 = vmatprep.subr.bf16.mxu0 0
      %4801 = vmatpush1.bf16.msra.mxu0 0
      %4802 = vmatprep.subr.bf16.mxu0 0
      %4803 = vmatpush1.bf16.msra.mxu0 0
      %4804 = vmatprep.subr.bf16.mxu0 0
      %4805 = vmatpush1.bf16.msra.mxu0 0
      %4806 = vmatprep.subr.bf16.mxu0 0
      %4807 = vmatpush1.bf16.msra.mxu0 0
      %4808 = vmatprep.subr.bf16.mxu0 0
      %4809 = vmatpush1.bf16.msra.mxu0 0
      %4810 = vmatprep.subr.bf16.mxu0 0
      %4811 = vmatpush1.bf16.msra.mxu0 0
      %4812 = vmatprep.subr.bf16.mxu0 0
      %4813 = vmatpush1.bf16.msra.mxu0 0
      %4814 = vmatprep.subr.bf16.mxu0 0
      %4815 = vmatpush1.bf16.msra.mxu0 0
      %4816 = vmatprep.subr.bf16.mxu0 0
      %4817 = vmatpush1.bf16.msra.mxu0 0
      %4818 = vmatprep.subr.bf16.mxu0 0
      %4819 = vmatpush1.bf16.msra.mxu0 0
      %4820 = vmatprep.subr.bf16.mxu0 0
      %4821 = vmatpush1.bf16.msra.mxu0 0
      %4822 = vmatprep.subr.bf16.mxu0 0
      %4823 = vmatpush1.bf16.msra.mxu0 0
      %4824 = vmatprep.subr.bf16.mxu0 0
      %4825 = vmatpush1.bf16.msra.mxu0 0
      %4826 = vmatprep.subr.bf16.mxu0 0
      %4827 = vmatpush1.bf16.msra.mxu0 0
      %4828 = vmatprep.subr.bf16.mxu0 0
      %4829 = vmatpush1.bf16.msra.mxu0 0
      %4830 = vmatprep.mubr.bf16.mxu0 0
      %4831 = vmatmul.mubr.bf16.gmra.mrb[0].mxu0 %v4731
      %v4832 = vpop.f32.mrb[0].mxu0
      %v4833 = vadd.f32 0.0, %v4832
      %v4834 = vpop.f32.mrb[0].mxu0
      %v4835 = vadd.f32 0.0, %v4834
      %v4836 = vpop.f32.mrb[0].mxu0
      %v4837 = vpop.f32.mrb[0].mxu0
      %4838 = vdwg.mxu0
      %4839 = vmatprep.subr.bf16.mxu0 %v4749
      %4840 = vmatpush1.bf16.msra.mxu0 %v4746
      %4841 = vmatprep.subr.bf16.mxu0 0
      %4842 = vmatpush1.bf16.msra.mxu0 0
      %4843 = vmatprep.subr.bf16.mxu0 0
      %4844 = vmatpush1.bf16.msra.mxu0 0
      %4845 = vmatprep.subr.bf16.mxu0 0
      %4846 = vmatpush1.bf16.msra.mxu0 0
      %4847 = vmatprep.subr.bf16.mxu0 0
      %4848 = vmatpush1.bf16.msra.mxu0 0
      %4849 = vmatprep.subr.bf16.mxu0 0
      %4850 = vmatpush1.bf16.msra.mxu0 0
      %4851 = vmatprep.subr.bf16.mxu0 0
      %4852 = vmatpush1.bf16.msra.mxu0 0
      %4853 = vmatprep.subr.bf16.mxu0 0
      %4854 = vmatpush1.bf16.msra.mxu0 0
      %4855 = vmatprep.subr.bf16.mxu0 0
      %4856 = vmatpush1.bf16.msra.mxu0 0
      %4857 = vmatprep.subr.bf16.mxu0 0
      %4858 = vmatpush1.bf16.msra.mxu0 0
      %4859 = vmatprep.subr.bf16.mxu0 0
      %4860 = vmatpush1.bf16.msra.mxu0 0
      %4861 = vmatprep.subr.bf16.mxu0 0
      %4862 = vmatpush1.bf16.msra.mxu0 0
      %4863 = vmatprep.subr.bf16.mxu0 0
      %4864 = vmatpush1.bf16.msra.mxu0 0
      %4865 = vmatprep.subr.bf16.mxu0 0
      %4866 = vmatpush1.bf16.msra.mxu0 0
      %4867 = vmatprep.subr.bf16.mxu0 0
      %4868 = vmatpush1.bf16.msra.mxu0 0
      %4869 = vmatprep.subr.bf16.mxu0 0
      %4870 = vmatpush1.bf16.msra.mxu0 0
      %4871 = vmatprep.mubr.bf16.mxu0 0
      %4872 = vmatmul.mubr.bf16.gmra.mrb[0].mxu0 %v4731
      %v4873 = vpop.f32.mrb[0].mxu0
      %v4874 = vadd.f32 0.0, %v4873
      %v4875 = vpop.f32.mrb[0].mxu0
      %v4876 = vadd.f32 0.0, %v4875
      %v4877 = vpop.f32.mrb[0].mxu0
      %v4878 = vpop.f32.mrb[0].mxu0
      %4879 = vdwg.mxu0
      %4880 = vmatprep.subr.bf16.mxu0 %v4755
      %4881 = vmatpush1.bf16.msra.mxu0 %v4752
      %4882 = vmatprep.subr.bf16.mxu0 0
      %4883 = vmatpush1.bf16.msra.mxu0 0
      %4884 = vmatprep.subr.bf16.mxu0 0
      %4885 = vmatpush1.bf16.msra.mxu0 0
      %4886 = vmatprep.subr.bf16.mxu0 0
      %4887 = vmatpush1.bf16.msra.mxu0 0
      %4888 = vmatprep.subr.bf16.mxu0 0
      %4889 = vmatpush1.bf16.msra.mxu0 0
      %4890 = vmatprep.subr.bf16.mxu0 0
      %4891 = vmatpush1.bf16.msra.mxu0 0
      %4892 = vmatprep.subr.bf16.mxu0 0
      %4893 = vmatpush1.bf16.msra.mxu0 0
      %4894 = vmatprep.subr.bf16.mxu0 0
      %4895 = vmatpush1.bf16.msra.mxu0 0
      %4896 = vmatprep.subr.bf16.mxu0 0
      %4897 = vmatpush1.bf16.msra.mxu0 0
      %4898 = vmatprep.subr.bf16.mxu0 0
      %4899 = vmatpush1.bf16.msra.mxu0 0
      %4900 = vmatprep.subr.bf16.mxu0 0
      %4901 = vmatpush1.bf16.msra.mxu0 0
      %4902 = vmatprep.subr.bf16.mxu0 0
      %4903 = vmatpush1.bf16.msra.mxu0 0
      %4904 = vmatprep.subr.bf16.mxu0 0
      %4905 = vmatpush1.bf16.msra.mxu0 0
      %4906 = vmatprep.subr.bf16.mxu0 0
      %4907 = vmatpush1.bf16.msra.mxu0 0
      %4908 = vmatprep.subr.bf16.mxu0 0
      %4909 = vmatpush1.bf16.msra.mxu0 0
      %4910 = vmatprep.subr.bf16.mxu0 0
      %4911 = vmatpush1.bf16.msra.mxu0 0
      %4912 = vmatprep.mubr.bf16.mxu0 0
      %4913 = vmatmul.mubr.bf16.gmra.mrb[0].mxu0 %v4731
      %v4914 = vpop.f32.mrb[0].mxu0
      %v4915 = vadd.f32 0.0, %v4914
      %v4916 = vpop.f32.mrb[0].mxu0
      %v4917 = vadd.f32 0.0, %v4916
      %v4918 = vpop.f32.mrb[0].mxu0
      %v4919 = vpop.f32.mrb[0].mxu0
      %4920 = vdwg.mxu0
      %v4921 = vadd.f32 %v4693, %v4792
      %v4922 = vadd.f32 %v4694, %v4794
      %v4923 = vadd.f32 %v4695, %v4833
      %v4924 = vadd.f32 %v4696, %v4835
      %v4925 = vadd.f32 %v4697, %v4874
      %v4926 = vadd.f32 %v4698, %v4876
      %v4927 = vadd.f32 %v4699, %v4915
      %v4928 = vadd.f32 %v4700, %v4917
      %s4929 = scalar_lea.vmem %s343, 80
      %v4930 = vld [vmem:[%s4929] sm:$0xf]
      %4931 = vrot.lane.b32.xlu0 %v383, 54
      %v4932 = vpop.permute.xlu0 %4931
      %4933 = vrot.lane.b32.xlu0 %v382, 54
      %v4934 = vpop.permute.xlu0 %4933
      %4935 = vrot.lane.b32.xlu0 %v384, 54
      %v4936 = vpop.permute.xlu0 %4935
      %4937 = vrot.lane.b32.xlu0 %v392, 54
      %v4938 = vpop.permute.xlu0 %4937
      %4939 = vrot.lane.b32.xlu0 %v400, 54
      %v4940 = vpop.permute.xlu0 %4939
      %4941 = vrot.lane.b32.xlu0 %v399, 54
      %v4942 = vpop.permute.xlu0 %4941
      %4943 = vrot.lane.b32.xlu0 %v401, 54
      %v4944 = vpop.permute.xlu0 %4943
      %4945 = vrot.lane.b32.xlu0 %v409, 54
      %v4946 = vpop.permute.xlu0 %4945
      %4947 = vrot.lane.b32.xlu0 %v410, 54
      %v4948 = vpop.permute.xlu0 %4947
      %vm4949 = vcmask 441344
      %v4950 = vsel %vm4949, %v4932, %v4934
      %v4951 = vsel %vm4949, %v4934, %v4936
      %v4952 = vsel %vm4949, %v4936, %v4938
      %v4953 = vsel %vm4949, %v4938, %v4940
      %v4954 = vsel %vm4949, %v4940, %v4942
      %v4955 = vsel %vm4949, %v4942, %v4944
      %v4956 = vsel %vm4949, %v4944, %v4946
      %v4957 = vsel %vm4949, %v4946, %v4948
      %v4959 = vsel %vm441, %v4930, 0
      %v4962 = vsel %vm445, %v4950, 0
      %v4965 = vsel %vm445, %v4951, 0
      %v4968 = vsel %vm445, %v4952, 0
      %v4971 = vsel %vm445, %v4953, 0
      %v4974 = vsel %vm445, %v4954, 0
      %v4977 = vsel %vm445, %v4955, 0
      %v4980 = vsel %vm445, %v4956, 0
      %v4983 = vsel %vm445, %v4957, 0
      %4985 = vmatprep.subr.bf16.mxu0 %v4965
      %4986 = vmatpush1.bf16.msra.mxu0 %v4962
      %4987 = vmatprep.subr.bf16.mxu0 0
      %4988 = vmatpush1.bf16.msra.mxu0 0
      %4989 = vmatprep.subr.bf16.mxu0 0
      %4990 = vmatpush1.bf16.msra.mxu0 0
      %4991 = vmatprep.subr.bf16.mxu0 0
      %4992 = vmatpush1.bf16.msra.mxu0 0
      %4993 = vmatprep.subr.bf16.mxu0 0
      %4994 = vmatpush1.bf16.msra.mxu0 0
      %4995 = vmatprep.subr.bf16.mxu0 0
      %4996 = vmatpush1.bf16.msra.mxu0 0
      %4997 = vmatprep.subr.bf16.mxu0 0
      %4998 = vmatpush1.bf16.msra.mxu0 0
      %4999 = vmatprep.subr.bf16.mxu0 0
      %5000 = vmatpush1.bf16.msra.mxu0 0
      %5001 = vmatprep.subr.bf16.mxu0 0
      %5002 = vmatpush1.bf16.msra.mxu0 0
      %5003 = vmatprep.subr.bf16.mxu0 0
      %5004 = vmatpush1.bf16.msra.mxu0 0
      %5005 = vmatprep.subr.bf16.mxu0 0
      %5006 = vmatpush1.bf16.msra.mxu0 0
      %5007 = vmatprep.subr.bf16.mxu0 0
      %5008 = vmatpush1.bf16.msra.mxu0 0
      %5009 = vmatprep.subr.bf16.mxu0 0
      %5010 = vmatpush1.bf16.msra.mxu0 0
      %5011 = vmatprep.subr.bf16.mxu0 0
      %5012 = vmatpush1.bf16.msra.mxu0 0
      %5013 = vmatprep.subr.bf16.mxu0 0
      %5014 = vmatpush1.bf16.msra.mxu0 0
      %5015 = vmatprep.subr.bf16.mxu0 0
      %5016 = vmatpush1.bf16.msra.mxu0 0
      %5017 = vmatprep.mubr.bf16.mxu0 0
      %5018 = vmatmul.mubr.bf16.gmra.mrb[0].mxu0 %v4959
      %v5019 = vpop.f32.mrb[0].mxu0
      %v5020 = vadd.f32 0.0, %v5019
      %v5021 = vpop.f32.mrb[0].mxu0
      %v5022 = vadd.f32 0.0, %v5021
      %v5023 = vpop.f32.mrb[0].mxu0
      %v5024 = vpop.f32.mrb[0].mxu0
      %5025 = vdwg.mxu0
      %5026 = vmatprep.subr.bf16.mxu0 %v4971
      %5027 = vmatpush1.bf16.msra.mxu0 %v4968
      %5028 = vmatprep.subr.bf16.mxu0 0
      %5029 = vmatpush1.bf16.msra.mxu0 0
      %5030 = vmatprep.subr.bf16.mxu0 0
      %5031 = vmatpush1.bf16.msra.mxu0 0
      %5032 = vmatprep.subr.bf16.mxu0 0
      %5033 = vmatpush1.bf16.msra.mxu0 0
      %5034 = vmatprep.subr.bf16.mxu0 0
      %5035 = vmatpush1.bf16.msra.mxu0 0
      %5036 = vmatprep.subr.bf16.mxu0 0
      %5037 = vmatpush1.bf16.msra.mxu0 0
      %5038 = vmatprep.subr.bf16.mxu0 0
      %5039 = vmatpush1.bf16.msra.mxu0 0
      %5040 = vmatprep.subr.bf16.mxu0 0
      %5041 = vmatpush1.bf16.msra.mxu0 0
      %5042 = vmatprep.subr.bf16.mxu0 0
      %5043 = vmatpush1.bf16.msra.mxu0 0
      %5044 = vmatprep.subr.bf16.mxu0 0
      %5045 = vmatpush1.bf16.msra.mxu0 0
      %5046 = vmatprep.subr.bf16.mxu0 0
      %5047 = vmatpush1.bf16.msra.mxu0 0
      %5048 = vmatprep.subr.bf16.mxu0 0
      %5049 = vmatpush1.bf16.msra.mxu0 0
      %5050 = vmatprep.subr.bf16.mxu0 0
      %5051 = vmatpush1.bf16.msra.mxu0 0
      %5052 = vmatprep.subr.bf16.mxu0 0
      %5053 = vmatpush1.bf16.msra.mxu0 0
      %5054 = vmatprep.subr.bf16.mxu0 0
      %5055 = vmatpush1.bf16.msra.mxu0 0
      %5056 = vmatprep.subr.bf16.mxu0 0
      %5057 = vmatpush1.bf16.msra.mxu0 0
      %5058 = vmatprep.mubr.bf16.mxu0 0
      %5059 = vmatmul.mubr.bf16.gmra.mrb[0].mxu0 %v4959
      %v5060 = vpop.f32.mrb[0].mxu0
      %v5061 = vadd.f32 0.0, %v5060
      %v5062 = vpop.f32.mrb[0].mxu0
      %v5063 = vadd.f32 0.0, %v5062
      %v5064 = vpop.f32.mrb[0].mxu0
      %v5065 = vpop.f32.mrb[0].mxu0
      %5066 = vdwg.mxu0
      %5067 = vmatprep.subr.bf16.mxu0 %v4977
      %5068 = vmatpush1.bf16.msra.mxu0 %v4974
      %5069 = vmatprep.subr.bf16.mxu0 0
      %5070 = vmatpush1.bf16.msra.mxu0 0
      %5071 = vmatprep.subr.bf16.mxu0 0
      %5072 = vmatpush1.bf16.msra.mxu0 0
      %5073 = vmatprep.subr.bf16.mxu0 0
      %5074 = vmatpush1.bf16.msra.mxu0 0
      %5075 = vmatprep.subr.bf16.mxu0 0
      %5076 = vmatpush1.bf16.msra.mxu0 0
      %5077 = vmatprep.subr.bf16.mxu0 0
      %5078 = vmatpush1.bf16.msra.mxu0 0
      %5079 = vmatprep.subr.bf16.mxu0 0
      %5080 = vmatpush1.bf16.msra.mxu0 0
      %5081 = vmatprep.subr.bf16.mxu0 0
      %5082 = vmatpush1.bf16.msra.mxu0 0
      %5083 = vmatprep.subr.bf16.mxu0 0
      %5084 = vmatpush1.bf16.msra.mxu0 0
      %5085 = vmatprep.subr.bf16.mxu0 0
      %5086 = vmatpush1.bf16.msra.mxu0 0
      %5087 = vmatprep.subr.bf16.mxu0 0
      %5088 = vmatpush1.bf16.msra.mxu0 0
      %5089 = vmatprep.subr.bf16.mxu0 0
      %5090 = vmatpush1.bf16.msra.mxu0 0
      %5091 = vmatprep.subr.bf16.mxu0 0
      %5092 = vmatpush1.bf16.msra.mxu0 0
      %5093 = vmatprep.subr.bf16.mxu0 0
      %5094 = vmatpush1.bf16.msra.mxu0 0
      %5095 = vmatprep.subr.bf16.mxu0 0
      %5096 = vmatpush1.bf16.msra.mxu0 0
      %5097 = vmatprep.subr.bf16.mxu0 0
      %5098 = vmatpush1.bf16.msra.mxu0 0
      %5099 = vmatprep.mubr.bf16.mxu0 0
      %5100 = vmatmul.mubr.bf16.gmra.mrb[0].mxu0 %v4959
      %v5101 = vpop.f32.mrb[0].mxu0
      %v5102 = vadd.f32 0.0, %v5101
      %v5103 = vpop.f32.mrb[0].mxu0
      %v5104 = vadd.f32 0.0, %v5103
      %v5105 = vpop.f32.mrb[0].mxu0
      %v5106 = vpop.f32.mrb[0].mxu0
      %5107 = vdwg.mxu0
      %5108 = vmatprep.subr.bf16.mxu0 %v4983
      %5109 = vmatpush1.bf16.msra.mxu0 %v4980
      %5110 = vmatprep.subr.bf16.mxu0 0
      %5111 = vmatpush1.bf16.msra.mxu0 0
      %5112 = vmatprep.subr.bf16.mxu0 0
      %5113 = vmatpush1.bf16.msra.mxu0 0
      %5114 = vmatprep.subr.bf16.mxu0 0
      %5115 = vmatpush1.bf16.msra.mxu0 0
      %5116 = vmatprep.subr.bf16.mxu0 0
      %5117 = vmatpush1.bf16.msra.mxu0 0
      %5118 = vmatprep.subr.bf16.mxu0 0
      %5119 = vmatpush1.bf16.msra.mxu0 0
      %5120 = vmatprep.subr.bf16.mxu0 0
      %5121 = vmatpush1.bf16.msra.mxu0 0
      %5122 = vmatprep.subr.bf16.mxu0 0
      %5123 = vmatpush1.bf16.msra.mxu0 0
      %5124 = vmatprep.subr.bf16.mxu0 0
      %5125 = vmatpush1.bf16.msra.mxu0 0
      %5126 = vmatprep.subr.bf16.mxu0 0
      %5127 = vmatpush1.bf16.msra.mxu0 0
      %5128 = vmatprep.subr.bf16.mxu0 0
      %5129 = vmatpush1.bf16.msra.mxu0 0
      %5130 = vmatprep.subr.bf16.mxu0 0
      %5131 = vmatpush1.bf16.msra.mxu0 0
      %5132 = vmatprep.subr.bf16.mxu0 0
      %5133 = vmatpush1.bf16.msra.mxu0 0
      %5134 = vmatprep.subr.bf16.mxu0 0
      %5135 = vmatpush1.bf16.msra.mxu0 0
      %5136 = vmatprep.subr.bf16.mxu0 0
      %5137 = vmatpush1.bf16.msra.mxu0 0
      %5138 = vmatprep.subr.bf16.mxu0 0
      %5139 = vmatpush1.bf16.msra.mxu0 0
      %5140 = vmatprep.mubr.bf16.mxu0 0
      %5141 = vmatmul.mubr.bf16.gmra.mrb[0].mxu0 %v4959
      %v5142 = vpop.f32.mrb[0].mxu0
      %v5143 = vadd.f32 0.0, %v5142
      %v5144 = vpop.f32.mrb[0].mxu0
      %v5145 = vadd.f32 0.0, %v5144
      %v5146 = vpop.f32.mrb[0].mxu0
      %v5147 = vpop.f32.mrb[0].mxu0
      %5148 = vdwg.mxu0
      %v5149 = vadd.f32 %v4921, %v5020
      %v5150 = vadd.f32 %v4922, %v5022
      %v5151 = vadd.f32 %v4923, %v5061
      %v5152 = vadd.f32 %v4924, %v5063
      %v5153 = vadd.f32 %v4925, %v5102
      %v5154 = vadd.f32 %v4926, %v5104
      %v5155 = vadd.f32 %v4927, %v5143
      %v5156 = vadd.f32 %v4928, %v5145
      %s5157 = scalar_lea.vmem %s343, 84
      %v5158 = vld [vmem:[%s5157] sm:$0xf]
      %5159 = vrot.lane.b32.xlu0 %v383, 46
      %v5160 = vpop.permute.xlu0 %5159
      %5161 = vrot.lane.b32.xlu0 %v382, 46
      %v5162 = vpop.permute.xlu0 %5161
      %5163 = vrot.lane.b32.xlu0 %v384, 46
      %v5164 = vpop.permute.xlu0 %5163
      %5165 = vrot.lane.b32.xlu0 %v392, 46
      %v5166 = vpop.permute.xlu0 %5165
      %5167 = vrot.lane.b32.xlu0 %v400, 46
      %v5168 = vpop.permute.xlu0 %5167
      %5169 = vrot.lane.b32.xlu0 %v399, 46
      %v5170 = vpop.permute.xlu0 %5169
      %5171 = vrot.lane.b32.xlu0 %v401, 46
      %v5172 = vpop.permute.xlu0 %5171
      %5173 = vrot.lane.b32.xlu0 %v409, 46
      %v5174 = vpop.permute.xlu0 %5173
      %5175 = vrot.lane.b32.xlu0 %v410, 46
      %v5176 = vpop.permute.xlu0 %5175
      %vm5177 = vcmask 375808
      %v5178 = vsel %vm5177, %v5160, %v5162
      %v5179 = vsel %vm5177, %v5162, %v5164
      %v5180 = vsel %vm5177, %v5164, %v5166
      %v5181 = vsel %vm5177, %v5166, %v5168
      %v5182 = vsel %vm5177, %v5168, %v5170
      %v5183 = vsel %vm5177, %v5170, %v5172
      %v5184 = vsel %vm5177, %v5172, %v5174
      %v5185 = vsel %vm5177, %v5174, %v5176
      %v5187 = vsel %vm441, %v5158, 0
      %v5190 = vsel %vm445, %v5178, 0
      %v5193 = vsel %vm445, %v5179, 0
      %v5196 = vsel %vm445, %v5180, 0
      %v5199 = vsel %vm445, %v5181, 0
      %v5202 = vsel %vm445, %v5182, 0
      %v5205 = vsel %vm445, %v5183, 0
      %v5208 = vsel %vm445, %v5184, 0
      %v5211 = vsel %vm445, %v5185, 0
      %5213 = vmatprep.subr.bf16.mxu0 %v5193
      %5214 = vmatpush1.bf16.msra.mxu0 %v5190
      %5215 = vmatprep.subr.bf16.mxu0 0
      %5216 = vmatpush1.bf16.msra.mxu0 0
      %5217 = vmatprep.subr.bf16.mxu0 0
      %5218 = vmatpush1.bf16.msra.mxu0 0
      %5219 = vmatprep.subr.bf16.mxu0 0
      %5220 = vmatpush1.bf16.msra.mxu0 0
      %5221 = vmatprep.subr.bf16.mxu0 0
      %5222 = vmatpush1.bf16.msra.mxu0 0
      %5223 = vmatprep.subr.bf16.mxu0 0
      %5224 = vmatpush1.bf16.msra.mxu0 0
      %5225 = vmatprep.subr.bf16.mxu0 0
      %5226 = vmatpush1.bf16.msra.mxu0 0
      %5227 = vmatprep.subr.bf16.mxu0 0
      %5228 = vmatpush1.bf16.msra.mxu0 0
      %5229 = vmatprep.subr.bf16.mxu0 0
      %5230 = vmatpush1.bf16.msra.mxu0 0
      %5231 = vmatprep.subr.bf16.mxu0 0
      %5232 = vmatpush1.bf16.msra.mxu0 0
      %5233 = vmatprep.subr.bf16.mxu0 0
      %5234 = vmatpush1.bf16.msra.mxu0 0
      %5235 = vmatprep.subr.bf16.mxu0 0
      %5236 = vmatpush1.bf16.msra.mxu0 0
      %5237 = vmatprep.subr.bf16.mxu0 0
      %5238 = vmatpush1.bf16.msra.mxu0 0
      %5239 = vmatprep.subr.bf16.mxu0 0
      %5240 = vmatpush1.bf16.msra.mxu0 0
      %5241 = vmatprep.subr.bf16.mxu0 0
      %5242 = vmatpush1.bf16.msra.mxu0 0
      %5243 = vmatprep.subr.bf16.mxu0 0
      %5244 = vmatpush1.bf16.msra.mxu0 0
      %5245 = vmatprep.mubr.bf16.mxu0 0
      %5246 = vmatmul.mubr.bf16.gmra.mrb[0].mxu0 %v5187
      %v5247 = vpop.f32.mrb[0].mxu0
      %v5248 = vadd.f32 0.0, %v5247
      %v5249 = vpop.f32.mrb[0].mxu0
      %v5250 = vadd.f32 0.0, %v5249
      %v5251 = vpop.f32.mrb[0].mxu0
      %v5252 = vpop.f32.mrb[0].mxu0
      %5253 = vdwg.mxu0
      %5254 = vmatprep.subr.bf16.mxu0 %v5199
      %5255 = vmatpush1.bf16.msra.mxu0 %v5196
      %5256 = vmatprep.subr.bf16.mxu0 0
      %5257 = vmatpush1.bf16.msra.mxu0 0
      %5258 = vmatprep.subr.bf16.mxu0 0
      %5259 = vmatpush1.bf16.msra.mxu0 0
      %5260 = vmatprep.subr.bf16.mxu0 0
      %5261 = vmatpush1.bf16.msra.mxu0 0
      %5262 = vmatprep.subr.bf16.mxu0 0
      %5263 = vmatpush1.bf16.msra.mxu0 0
      %5264 = vmatprep.subr.bf16.mxu0 0
      %5265 = vmatpush1.bf16.msra.mxu0 0
      %5266 = vmatprep.subr.bf16.mxu0 0
      %5267 = vmatpush1.bf16.msra.mxu0 0
      %5268 = vmatprep.subr.bf16.mxu0 0
      %5269 = vmatpush1.bf16.msra.mxu0 0
      %5270 = vmatprep.subr.bf16.mxu0 0
      %5271 = vmatpush1.bf16.msra.mxu0 0
      %5272 = vmatprep.subr.bf16.mxu0 0
      %5273 = vmatpush1.bf16.msra.mxu0 0
      %5274 = vmatprep.subr.bf16.mxu0 0
      %5275 = vmatpush1.bf16.msra.mxu0 0
      %5276 = vmatprep.subr.bf16.mxu0 0
      %5277 = vmatpush1.bf16.msra.mxu0 0
      %5278 = vmatprep.subr.bf16.mxu0 0
      %5279 = vmatpush1.bf16.msra.mxu0 0
      %5280 = vmatprep.subr.bf16.mxu0 0
      %5281 = vmatpush1.bf16.msra.mxu0 0
      %5282 = vmatprep.subr.bf16.mxu0 0
      %5283 = vmatpush1.bf16.msra.mxu0 0
      %5284 = vmatprep.subr.bf16.mxu0 0
      %5285 = vmatpush1.bf16.msra.mxu0 0
      %5286 = vmatprep.mubr.bf16.mxu0 0
      %5287 = vmatmul.mubr.bf16.gmra.mrb[0].mxu0 %v5187
      %v5288 = vpop.f32.mrb[0].mxu0
      %v5289 = vadd.f32 0.0, %v5288
      %v5290 = vpop.f32.mrb[0].mxu0
      %v5291 = vadd.f32 0.0, %v5290
      %v5292 = vpop.f32.mrb[0].mxu0
      %v5293 = vpop.f32.mrb[0].mxu0
      %5294 = vdwg.mxu0
      %5295 = vmatprep.subr.bf16.mxu0 %v5205
      %5296 = vmatpush1.bf16.msra.mxu0 %v5202
      %5297 = vmatprep.subr.bf16.mxu0 0
      %5298 = vmatpush1.bf16.msra.mxu0 0
      %5299 = vmatprep.subr.bf16.mxu0 0
      %5300 = vmatpush1.bf16.msra.mxu0 0
      %5301 = vmatprep.subr.bf16.mxu0 0
      %5302 = vmatpush1.bf16.msra.mxu0 0
      %5303 = vmatprep.subr.bf16.mxu0 0
      %5304 = vmatpush1.bf16.msra.mxu0 0
      %5305 = vmatprep.subr.bf16.mxu0 0
      %5306 = vmatpush1.bf16.msra.mxu0 0
      %5307 = vmatprep.subr.bf16.mxu0 0
      %5308 = vmatpush1.bf16.msra.mxu0 0
      %5309 = vmatprep.subr.bf16.mxu0 0
      %5310 = vmatpush1.bf16.msra.mxu0 0
      %5311 = vmatprep.subr.bf16.mxu0 0
      %5312 = vmatpush1.bf16.msra.mxu0 0
      %5313 = vmatprep.subr.bf16.mxu0 0
      %5314 = vmatpush1.bf16.msra.mxu0 0
      %5315 = vmatprep.subr.bf16.mxu0 0
      %5316 = vmatpush1.bf16.msra.mxu0 0
      %5317 = vmatprep.subr.bf16.mxu0 0
      %5318 = vmatpush1.bf16.msra.mxu0 0
      %5319 = vmatprep.subr.bf16.mxu0 0
      %5320 = vmatpush1.bf16.msra.mxu0 0
      %5321 = vmatprep.subr.bf16.mxu0 0
      %5322 = vmatpush1.bf16.msra.mxu0 0
      %5323 = vmatprep.subr.bf16.mxu0 0
      %5324 = vmatpush1.bf16.msra.mxu0 0
      %5325 = vmatprep.subr.bf16.mxu0 0
      %5326 = vmatpush1.bf16.msra.mxu0 0
      %5327 = vmatprep.mubr.bf16.mxu0 0
      %5328 = vmatmul.mubr.bf16.gmra.mrb[0].mxu0 %v5187
      %v5329 = vpop.f32.mrb[0].mxu0
      %v5330 = vadd.f32 0.0, %v5329
      %v5331 = vpop.f32.mrb[0].mxu0
      %v5332 = vadd.f32 0.0, %v5331
      %v5333 = vpop.f32.mrb[0].mxu0
      %v5334 = vpop.f32.mrb[0].mxu0
      %5335 = vdwg.mxu0
      %5336 = vmatprep.subr.bf16.mxu0 %v5211
      %5337 = vmatpush1.bf16.msra.mxu0 %v5208
      %5338 = vmatprep.subr.bf16.mxu0 0
      %5339 = vmatpush1.bf16.msra.mxu0 0
      %5340 = vmatprep.subr.bf16.mxu0 0
      %5341 = vmatpush1.bf16.msra.mxu0 0
      %5342 = vmatprep.subr.bf16.mxu0 0
      %5343 = vmatpush1.bf16.msra.mxu0 0
      %5344 = vmatprep.subr.bf16.mxu0 0
      %5345 = vmatpush1.bf16.msra.mxu0 0
      %5346 = vmatprep.subr.bf16.mxu0 0
      %5347 = vmatpush1.bf16.msra.mxu0 0
      %5348 = vmatprep.subr.bf16.mxu0 0
      %5349 = vmatpush1.bf16.msra.mxu0 0
      %5350 = vmatprep.subr.bf16.mxu0 0
      %5351 = vmatpush1.bf16.msra.mxu0 0
      %5352 = vmatprep.subr.bf16.mxu0 0
      %5353 = vmatpush1.bf16.msra.mxu0 0
      %5354 = vmatprep.subr.bf16.mxu0 0
      %5355 = vmatpush1.bf16.msra.mxu0 0
      %5356 = vmatprep.subr.bf16.mxu0 0
      %5357 = vmatpush1.bf16.msra.mxu0 0
      %5358 = vmatprep.subr.bf16.mxu0 0
      %5359 = vmatpush1.bf16.msra.mxu0 0
      %5360 = vmatprep.subr.bf16.mxu0 0
      %5361 = vmatpush1.bf16.msra.mxu0 0
      %5362 = vmatprep.subr.bf16.mxu0 0
      %5363 = vmatpush1.bf16.msra.mxu0 0
      %5364 = vmatprep.subr.bf16.mxu0 0
      %5365 = vmatpush1.bf16.msra.mxu0 0
      %5366 = vmatprep.subr.bf16.mxu0 0
      %5367 = vmatpush1.bf16.msra.mxu0 0
      %5368 = vmatprep.mubr.bf16.mxu0 0
      %5369 = vmatmul.mubr.bf16.gmra.mrb[0].mxu0 %v5187
      %v5370 = vpop.f32.mrb[0].mxu0
      %v5371 = vadd.f32 0.0, %v5370
      %v5372 = vpop.f32.mrb[0].mxu0
      %v5373 = vadd.f32 0.0, %v5372
      %v5374 = vpop.f32.mrb[0].mxu0
      %v5375 = vpop.f32.mrb[0].mxu0
      %5376 = vdwg.mxu0
      %v5377 = vadd.f32 %v5149, %v5248
      %v5378 = vadd.f32 %v5150, %v5250
      %v5379 = vadd.f32 %v5151, %v5289
      %v5380 = vadd.f32 %v5152, %v5291
      %v5381 = vadd.f32 %v5153, %v5330
      %v5382 = vadd.f32 %v5154, %v5332
      %v5383 = vadd.f32 %v5155, %v5371
      %v5384 = vadd.f32 %v5156, %v5373
      %s5385 = scalar_lea.vmem %s343, 88
      %v5386 = vld [vmem:[%s5385] sm:$0xf]
      %5387 = vrot.lane.b32.xlu0 %v383, 45
      %v5388 = vpop.permute.xlu0 %5387
      %5389 = vrot.lane.b32.xlu0 %v382, 45
      %v5390 = vpop.permute.xlu0 %5389
      %5391 = vrot.lane.b32.xlu0 %v384, 45
      %v5392 = vpop.permute.xlu0 %5391
      %5393 = vrot.lane.b32.xlu0 %v392, 45
      %v5394 = vpop.permute.xlu0 %5393
      %5395 = vrot.lane.b32.xlu0 %v400, 45
      %v5396 = vpop.permute.xlu0 %5395
      %5397 = vrot.lane.b32.xlu0 %v399, 45
      %v5398 = vpop.permute.xlu0 %5397
      %5399 = vrot.lane.b32.xlu0 %v401, 45
      %v5400 = vpop.permute.xlu0 %5399
      %5401 = vrot.lane.b32.xlu0 %v409, 45
      %v5402 = vpop.permute.xlu0 %5401
      %5403 = vrot.lane.b32.xlu0 %v410, 45
      %v5404 = vpop.permute.xlu0 %5403
      %vm5405 = vcmask 367616
      %v5406 = vsel %vm5405, %v5388, %v5390
      %v5407 = vsel %vm5405, %v5390, %v5392
      %v5408 = vsel %vm5405, %v5392, %v5394
      %v5409 = vsel %vm5405, %v5394, %v5396
      %v5410 = vsel %vm5405, %v5396, %v5398
      %v5411 = vsel %vm5405, %v5398, %v5400
      %v5412 = vsel %vm5405, %v5400, %v5402
      %v5413 = vsel %vm5405, %v5402, %v5404
      %v5415 = vsel %vm441, %v5386, 0
      %v5418 = vsel %vm445, %v5406, 0
      %v5421 = vsel %vm445, %v5407, 0
      %v5424 = vsel %vm445, %v5408, 0
      %v5427 = vsel %vm445, %v5409, 0
      %v5430 = vsel %vm445, %v5410, 0
      %v5433 = vsel %vm445, %v5411, 0
      %v5436 = vsel %vm445, %v5412, 0
      %v5439 = vsel %vm445, %v5413, 0
      %5441 = vmatprep.subr.bf16.mxu0 %v5421
      %5442 = vmatpush1.bf16.msra.mxu0 %v5418
      %5443 = vmatprep.subr.bf16.mxu0 0
      %5444 = vmatpush1.bf16.msra.mxu0 0
      %5445 = vmatprep.subr.bf16.mxu0 0
      %5446 = vmatpush1.bf16.msra.mxu0 0
      %5447 = vmatprep.subr.bf16.mxu0 0
      %5448 = vmatpush1.bf16.msra.mxu0 0
      %5449 = vmatprep.subr.bf16.mxu0 0
      %5450 = vmatpush1.bf16.msra.mxu0 0
      %5451 = vmatprep.subr.bf16.mxu0 0
      %5452 = vmatpush1.bf16.msra.mxu0 0
      %5453 = vmatprep.subr.bf16.mxu0 0
      %5454 = vmatpush1.bf16.msra.mxu0 0
      %5455 = vmatprep.subr.bf16.mxu0 0
      %5456 = vmatpush1.bf16.msra.mxu0 0
      %5457 = vmatprep.subr.bf16.mxu0 0
      %5458 = vmatpush1.bf16.msra.mxu0 0
      %5459 = vmatprep.subr.bf16.mxu0 0
      %5460 = vmatpush1.bf16.msra.mxu0 0
      %5461 = vmatprep.subr.bf16.mxu0 0
      %5462 = vmatpush1.bf16.msra.mxu0 0
      %5463 = vmatprep.subr.bf16.mxu0 0
      %5464 = vmatpush1.bf16.msra.mxu0 0
      %5465 = vmatprep.subr.bf16.mxu0 0
      %5466 = vmatpush1.bf16.msra.mxu0 0
      %5467 = vmatprep.subr.bf16.mxu0 0
      %5468 = vmatpush1.bf16.msra.mxu0 0
      %5469 = vmatprep.subr.bf16.mxu0 0
      %5470 = vmatpush1.bf16.msra.mxu0 0
      %5471 = vmatprep.subr.bf16.mxu0 0
      %5472 = vmatpush1.bf16.msra.mxu0 0
      %5473 = vmatprep.mubr.bf16.mxu0 0
      %5474 = vmatmul.mubr.bf16.gmra.mrb[0].mxu0 %v5415
      %v5475 = vpop.f32.mrb[0].mxu0
      %v5476 = vadd.f32 0.0, %v5475
      %v5477 = vpop.f32.mrb[0].mxu0
      %v5478 = vadd.f32 0.0, %v5477
      %v5479 = vpop.f32.mrb[0].mxu0
      %v5480 = vpop.f32.mrb[0].mxu0
      %5481 = vdwg.mxu0
      %5482 = vmatprep.subr.bf16.mxu0 %v5427
      %5483 = vmatpush1.bf16.msra.mxu0 %v5424
      %5484 = vmatprep.subr.bf16.mxu0 0
      %5485 = vmatpush1.bf16.msra.mxu0 0
      %5486 = vmatprep.subr.bf16.mxu0 0
      %5487 = vmatpush1.bf16.msra.mxu0 0
      %5488 = vmatprep.subr.bf16.mxu0 0
      %5489 = vmatpush1.bf16.msra.mxu0 0
      %5490 = vmatprep.subr.bf16.mxu0 0
      %5491 = vmatpush1.bf16.msra.mxu0 0
      %5492 = vmatprep.subr.bf16.mxu0 0
      %5493 = vmatpush1.bf16.msra.mxu0 0
      %5494 = vmatprep.subr.bf16.mxu0 0
      %5495 = vmatpush1.bf16.msra.mxu0 0
      %5496 = vmatprep.subr.bf16.mxu0 0
      %5497 = vmatpush1.bf16.msra.mxu0 0
      %5498 = vmatprep.subr.bf16.mxu0 0
      %5499 = vmatpush1.bf16.msra.mxu0 0
      %5500 = vmatprep.subr.bf16.mxu0 0
      %5501 = vmatpush1.bf16.msra.mxu0 0
      %5502 = vmatprep.subr.bf16.mxu0 0
      %5503 = vmatpush1.bf16.msra.mxu0 0
      %5504 = vmatprep.subr.bf16.mxu0 0
      %5505 = vmatpush1.bf16.msra.mxu0 0
      %5506 = vmatprep.subr.bf16.mxu0 0
      %5507 = vmatpush1.bf16.msra.mxu0 0
      %5508 = vmatprep.subr.bf16.mxu0 0
      %5509 = vmatpush1.bf16.msra.mxu0 0
      %5510 = vmatprep.subr.bf16.mxu0 0
      %5511 = vmatpush1.bf16.msra.mxu0 0
      %5512 = vmatprep.subr.bf16.mxu0 0
      %5513 = vmatpush1.bf16.msra.mxu0 0
      %5514 = vmatprep.mubr.bf16.mxu0 0
      %5515 = vmatmul.mubr.bf16.gmra.mrb[0].mxu0 %v5415
      %v5516 = vpop.f32.mrb[0].mxu0
      %v5517 = vadd.f32 0.0, %v5516
      %v5518 = vpop.f32.mrb[0].mxu0
      %v5519 = vadd.f32 0.0, %v5518
      %v5520 = vpop.f32.mrb[0].mxu0
      %v5521 = vpop.f32.mrb[0].mxu0
      %5522 = vdwg.mxu0
      %5523 = vmatprep.subr.bf16.mxu0 %v5433
      %5524 = vmatpush1.bf16.msra.mxu0 %v5430
      %5525 = vmatprep.subr.bf16.mxu0 0
      %5526 = vmatpush1.bf16.msra.mxu0 0
      %5527 = vmatprep.subr.bf16.mxu0 0
      %5528 = vmatpush1.bf16.msra.mxu0 0
      %5529 = vmatprep.subr.bf16.mxu0 0
      %5530 = vmatpush1.bf16.msra.mxu0 0
      %5531 = vmatprep.subr.bf16.mxu0 0
      %5532 = vmatpush1.bf16.msra.mxu0 0
      %5533 = vmatprep.subr.bf16.mxu0 0
      %5534 = vmatpush1.bf16.msra.mxu0 0
      %5535 = vmatprep.subr.bf16.mxu0 0
      %5536 = vmatpush1.bf16.msra.mxu0 0
      %5537 = vmatprep.subr.bf16.mxu0 0
      %5538 = vmatpush1.bf16.msra.mxu0 0
      %5539 = vmatprep.subr.bf16.mxu0 0
      %5540 = vmatpush1.bf16.msra.mxu0 0
      %5541 = vmatprep.subr.bf16.mxu0 0
      %5542 = vmatpush1.bf16.msra.mxu0 0
      %5543 = vmatprep.subr.bf16.mxu0 0
      %5544 = vmatpush1.bf16.msra.mxu0 0
      %5545 = vmatprep.subr.bf16.mxu0 0
      %5546 = vmatpush1.bf16.msra.mxu0 0
      %5547 = vmatprep.subr.bf16.mxu0 0
      %5548 = vmatpush1.bf16.msra.mxu0 0
      %5549 = vmatprep.subr.bf16.mxu0 0
      %5550 = vmatpush1.bf16.msra.mxu0 0
      %5551 = vmatprep.subr.bf16.mxu0 0
      %5552 = vmatpush1.bf16.msra.mxu0 0
      %5553 = vmatprep.subr.bf16.mxu0 0
      %5554 = vmatpush1.bf16.msra.mxu0 0
      %5555 = vmatprep.mubr.bf16.mxu0 0
      %5556 = vmatmul.mubr.bf16.gmra.mrb[0].mxu0 %v5415
      %v5557 = vpop.f32.mrb[0].mxu0
      %v5558 = vadd.f32 0.0, %v5557
      %v5559 = vpop.f32.mrb[0].mxu0
      %v5560 = vadd.f32 0.0, %v5559
      %v5561 = vpop.f32.mrb[0].mxu0
      %v5562 = vpop.f32.mrb[0].mxu0
      %5563 = vdwg.mxu0
      %5564 = vmatprep.subr.bf16.mxu0 %v5439
      %5565 = vmatpush1.bf16.msra.mxu0 %v5436
      %5566 = vmatprep.subr.bf16.mxu0 0
      %5567 = vmatpush1.bf16.msra.mxu0 0
      %5568 = vmatprep.subr.bf16.mxu0 0
      %5569 = vmatpush1.bf16.msra.mxu0 0
      %5570 = vmatprep.subr.bf16.mxu0 0
      %5571 = vmatpush1.bf16.msra.mxu0 0
      %5572 = vmatprep.subr.bf16.mxu0 0
      %5573 = vmatpush1.bf16.msra.mxu0 0
      %5574 = vmatprep.subr.bf16.mxu0 0
      %5575 = vmatpush1.bf16.msra.mxu0 0
      %5576 = vmatprep.subr.bf16.mxu0 0
      %5577 = vmatpush1.bf16.msra.mxu0 0
      %5578 = vmatprep.subr.bf16.mxu0 0
      %5579 = vmatpush1.bf16.msra.mxu0 0
      %5580 = vmatprep.subr.bf16.mxu0 0
      %5581 = vmatpush1.bf16.msra.mxu0 0
      %5582 = vmatprep.subr.bf16.mxu0 0
      %5583 = vmatpush1.bf16.msra.mxu0 0
      %5584 = vmatprep.subr.bf16.mxu0 0
      %5585 = vmatpush1.bf16.msra.mxu0 0
      %5586 = vmatprep.subr.bf16.mxu0 0
      %5587 = vmatpush1.bf16.msra.mxu0 0
      %5588 = vmatprep.subr.bf16.mxu0 0
      %5589 = vmatpush1.bf16.msra.mxu0 0
      %5590 = vmatprep.subr.bf16.mxu0 0
      %5591 = vmatpush1.bf16.msra.mxu0 0
      %5592 = vmatprep.subr.bf16.mxu0 0
      %5593 = vmatpush1.bf16.msra.mxu0 0
      %5594 = vmatprep.subr.bf16.mxu0 0
      %5595 = vmatpush1.bf16.msra.mxu0 0
      %5596 = vmatprep.mubr.bf16.mxu0 0
      %5597 = vmatmul.mubr.bf16.gmra.mrb[0].mxu0 %v5415
      %v5598 = vpop.f32.mrb[0].mxu0
      %v5599 = vadd.f32 0.0, %v5598
      %v5600 = vpop.f32.mrb[0].mxu0
      %v5601 = vadd.f32 0.0, %v5600
      %v5602 = vpop.f32.mrb[0].mxu0
      %v5603 = vpop.f32.mrb[0].mxu0
      %5604 = vdwg.mxu0
      %v5605 = vadd.f32 %v5377, %v5476
      %v5606 = vadd.f32 %v5378, %v5478
      %v5607 = vadd.f32 %v5379, %v5517
      %v5608 = vadd.f32 %v5380, %v5519
      %v5609 = vadd.f32 %v5381, %v5558
      %v5610 = vadd.f32 %v5382, %v5560
      %v5611 = vadd.f32 %v5383, %v5599
      %v5612 = vadd.f32 %v5384, %v5601
      %s5613 = scalar_lea.vmem %s343, 92
      %v5614 = vld [vmem:[%s5613] sm:$0xf]
      %5615 = vrot.lane.b32.xlu0 %v383, 44
      %v5616 = vpop.permute.xlu0 %5615
      %5617 = vrot.lane.b32.xlu0 %v382, 44
      %v5618 = vpop.permute.xlu0 %5617
      %5619 = vrot.lane.b32.xlu0 %v384, 44
      %v5620 = vpop.permute.xlu0 %5619
      %5621 = vrot.lane.b32.xlu0 %v392, 44
      %v5622 = vpop.permute.xlu0 %5621
      %5623 = vrot.lane.b32.xlu0 %v400, 44
      %v5624 = vpop.permute.xlu0 %5623
      %5625 = vrot.lane.b32.xlu0 %v399, 44
      %v5626 = vpop.permute.xlu0 %5625
      %5627 = vrot.lane.b32.xlu0 %v401, 44
      %v5628 = vpop.permute.xlu0 %5627
      %5629 = vrot.lane.b32.xlu0 %v409, 44
      %v5630 = vpop.permute.xlu0 %5629
      %5631 = vrot.lane.b32.xlu0 %v410, 44
      %v5632 = vpop.permute.xlu0 %5631
      %vm5633 = vcmask 359424
      %v5634 = vsel %vm5633, %v5616, %v5618
      %v5635 = vsel %vm5633, %v5618, %v5620
      %v5636 = vsel %vm5633, %v5620, %v5622
      %v5637 = vsel %vm5633, %v5622, %v5624
      %v5638 = vsel %vm5633, %v5624, %v5626
      %v5639 = vsel %vm5633, %v5626, %v5628
      %v5640 = vsel %vm5633, %v5628, %v5630
      %v5641 = vsel %vm5633, %v5630, %v5632
      %v5643 = vsel %vm441, %v5614, 0
      %v5646 = vsel %vm445, %v5634, 0
      %v5649 = vsel %vm445, %v5635, 0
      %v5652 = vsel %vm445, %v5636, 0
      %v5655 = vsel %vm445, %v5637, 0
      %v5658 = vsel %vm445, %v5638, 0
      %v5661 = vsel %vm445, %v5639, 0
      %v5664 = vsel %vm445, %v5640, 0
      %v5667 = vsel %vm445, %v5641, 0
      %5669 = vmatprep.subr.bf16.mxu0 %v5649
      %5670 = vmatpush1.bf16.msra.mxu0 %v5646
      %5671 = vmatprep.subr.bf16.mxu0 0
      %5672 = vmatpush1.bf16.msra.mxu0 0
      %5673 = vmatprep.subr.bf16.mxu0 0
      %5674 = vmatpush1.bf16.msra.mxu0 0
      %5675 = vmatprep.subr.bf16.mxu0 0
      %5676 = vmatpush1.bf16.msra.mxu0 0
      %5677 = vmatprep.subr.bf16.mxu0 0
      %5678 = vmatpush1.bf16.msra.mxu0 0
      %5679 = vmatprep.subr.bf16.mxu0 0
      %5680 = vmatpush1.bf16.msra.mxu0 0
      %5681 = vmatprep.subr.bf16.mxu0 0
      %5682 = vmatpush1.bf16.msra.mxu0 0
      %5683 = vmatprep.subr.bf16.mxu0 0
      %5684 = vmatpush1.bf16.msra.mxu0 0
      %5685 = vmatprep.subr.bf16.mxu0 0
      %5686 = vmatpush1.bf16.msra.mxu0 0
      %5687 = vmatprep.subr.bf16.mxu0 0
      %5688 = vmatpush1.bf16.msra.mxu0 0
      %5689 = vmatprep.subr.bf16.mxu0 0
      %5690 = vmatpush1.bf16.msra.mxu0 0
      %5691 = vmatprep.subr.bf16.mxu0 0
      %5692 = vmatpush1.bf16.msra.mxu0 0
      %5693 = vmatprep.subr.bf16.mxu0 0
      %5694 = vmatpush1.bf16.msra.mxu0 0
      %5695 = vmatprep.subr.bf16.mxu0 0
      %5696 = vmatpush1.bf16.msra.mxu0 0
      %5697 = vmatprep.subr.bf16.mxu0 0
      %5698 = vmatpush1.bf16.msra.mxu0 0
      %5699 = vmatprep.subr.bf16.mxu0 0
      %5700 = vmatpush1.bf16.msra.mxu0 0
      %5701 = vmatprep.mubr.bf16.mxu0 0
      %5702 = vmatmul.mubr.bf16.gmra.mrb[0].mxu0 %v5643
      %v5703 = vpop.f32.mrb[0].mxu0
      %v5704 = vadd.f32 0.0, %v5703
      %v5705 = vpop.f32.mrb[0].mxu0
      %v5706 = vadd.f32 0.0, %v5705
      %v5707 = vpop.f32.mrb[0].mxu0
      %v5708 = vpop.f32.mrb[0].mxu0
      %5709 = vdwg.mxu0
      %5710 = vmatprep.subr.bf16.mxu0 %v5655
      %5711 = vmatpush1.bf16.msra.mxu0 %v5652
      %5712 = vmatprep.subr.bf16.mxu0 0
      %5713 = vmatpush1.bf16.msra.mxu0 0
      %5714 = vmatprep.subr.bf16.mxu0 0
      %5715 = vmatpush1.bf16.msra.mxu0 0
      %5716 = vmatprep.subr.bf16.mxu0 0
      %5717 = vmatpush1.bf16.msra.mxu0 0
      %5718 = vmatprep.subr.bf16.mxu0 0
      %5719 = vmatpush1.bf16.msra.mxu0 0
      %5720 = vmatprep.subr.bf16.mxu0 0
      %5721 = vmatpush1.bf16.msra.mxu0 0
      %5722 = vmatprep.subr.bf16.mxu0 0
      %5723 = vmatpush1.bf16.msra.mxu0 0
      %5724 = vmatprep.subr.bf16.mxu0 0
      %5725 = vmatpush1.bf16.msra.mxu0 0
      %5726 = vmatprep.subr.bf16.mxu0 0
      %5727 = vmatpush1.bf16.msra.mxu0 0
      %5728 = vmatprep.subr.bf16.mxu0 0
      %5729 = vmatpush1.bf16.msra.mxu0 0
      %5730 = vmatprep.subr.bf16.mxu0 0
      %5731 = vmatpush1.bf16.msra.mxu0 0
      %5732 = vmatprep.subr.bf16.mxu0 0
      %5733 = vmatpush1.bf16.msra.mxu0 0
      %5734 = vmatprep.subr.bf16.mxu0 0
      %5735 = vmatpush1.bf16.msra.mxu0 0
      %5736 = vmatprep.subr.bf16.mxu0 0
      %5737 = vmatpush1.bf16.msra.mxu0 0
      %5738 = vmatprep.subr.bf16.mxu0 0
      %5739 = vmatpush1.bf16.msra.mxu0 0
      %5740 = vmatprep.subr.bf16.mxu0 0
      %5741 = vmatpush1.bf16.msra.mxu0 0
      %5742 = vmatprep.mubr.bf16.mxu0 0
      %5743 = vmatmul.mubr.bf16.gmra.mrb[0].mxu0 %v5643
      %v5744 = vpop.f32.mrb[0].mxu0
      %v5745 = vadd.f32 0.0, %v5744
      %v5746 = vpop.f32.mrb[0].mxu0
      %v5747 = vadd.f32 0.0, %v5746
      %v5748 = vpop.f32.mrb[0].mxu0
      %v5749 = vpop.f32.mrb[0].mxu0
      %5750 = vdwg.mxu0
      %5751 = vmatprep.subr.bf16.mxu0 %v5661
      %5752 = vmatpush1.bf16.msra.mxu0 %v5658
      %5753 = vmatprep.subr.bf16.mxu0 0
      %5754 = vmatpush1.bf16.msra.mxu0 0
      %5755 = vmatprep.subr.bf16.mxu0 0
      %5756 = vmatpush1.bf16.msra.mxu0 0
      %5757 = vmatprep.subr.bf16.mxu0 0
      %5758 = vmatpush1.bf16.msra.mxu0 0
      %5759 = vmatprep.subr.bf16.mxu0 0
      %5760 = vmatpush1.bf16.msra.mxu0 0
      %5761 = vmatprep.subr.bf16.mxu0 0
      %5762 = vmatpush1.bf16.msra.mxu0 0
      %5763 = vmatprep.subr.bf16.mxu0 0
      %5764 = vmatpush1.bf16.msra.mxu0 0
      %5765 = vmatprep.subr.bf16.mxu0 0
      %5766 = vmatpush1.bf16.msra.mxu0 0
      %5767 = vmatprep.subr.bf16.mxu0 0
      %5768 = vmatpush1.bf16.msra.mxu0 0
      %5769 = vmatprep.subr.bf16.mxu0 0
      %5770 = vmatpush1.bf16.msra.mxu0 0
      %5771 = vmatprep.subr.bf16.mxu0 0
      %5772 = vmatpush1.bf16.msra.mxu0 0
      %5773 = vmatprep.subr.bf16.mxu0 0
      %5774 = vmatpush1.bf16.msra.mxu0 0
      %5775 = vmatprep.subr.bf16.mxu0 0
      %5776 = vmatpush1.bf16.msra.mxu0 0
      %5777 = vmatprep.subr.bf16.mxu0 0
      %5778 = vmatpush1.bf16.msra.mxu0 0
      %5779 = vmatprep.subr.bf16.mxu0 0
      %5780 = vmatpush1.bf16.msra.mxu0 0
      %5781 = vmatprep.subr.bf16.mxu0 0
      %5782 = vmatpush1.bf16.msra.mxu0 0
      %5783 = vmatprep.mubr.bf16.mxu0 0
      %5784 = vmatmul.mubr.bf16.gmra.mrb[0].mxu0 %v5643
      %v5785 = vpop.f32.mrb[0].mxu0
      %v5786 = vadd.f32 0.0, %v5785
      %v5787 = vpop.f32.mrb[0].mxu0
      %v5788 = vadd.f32 0.0, %v5787
      %v5789 = vpop.f32.mrb[0].mxu0
      %v5790 = vpop.f32.mrb[0].mxu0
      %5791 = vdwg.mxu0
      %5792 = vmatprep.subr.bf16.mxu0 %v5667
      %5793 = vmatpush1.bf16.msra.mxu0 %v5664
      %5794 = vmatprep.subr.bf16.mxu0 0
      %5795 = vmatpush1.bf16.msra.mxu0 0
      %5796 = vmatprep.subr.bf16.mxu0 0
      %5797 = vmatpush1.bf16.msra.mxu0 0
      %5798 = vmatprep.subr.bf16.mxu0 0
      %5799 = vmatpush1.bf16.msra.mxu0 0
      %5800 = vmatprep.subr.bf16.mxu0 0
      %5801 = vmatpush1.bf16.msra.mxu0 0
      %5802 = vmatprep.subr.bf16.mxu0 0
      %5803 = vmatpush1.bf16.msra.mxu0 0
      %5804 = vmatprep.subr.bf16.mxu0 0
      %5805 = vmatpush1.bf16.msra.mxu0 0
      %5806 = vmatprep.subr.bf16.mxu0 0
      %5807 = vmatpush1.bf16.msra.mxu0 0
      %5808 = vmatprep.subr.bf16.mxu0 0
      %5809 = vmatpush1.bf16.msra.mxu0 0
      %5810 = vmatprep.subr.bf16.mxu0 0
      %5811 = vmatpush1.bf16.msra.mxu0 0
      %5812 = vmatprep.subr.bf16.mxu0 0
      %5813 = vmatpush1.bf16.msra.mxu0 0
      %5814 = vmatprep.subr.bf16.mxu0 0
      %5815 = vmatpush1.bf16.msra.mxu0 0
      %5816 = vmatprep.subr.bf16.mxu0 0
      %5817 = vmatpush1.bf16.msra.mxu0 0
      %5818 = vmatprep.subr.bf16.mxu0 0
      %5819 = vmatpush1.bf16.msra.mxu0 0
      %5820 = vmatprep.subr.bf16.mxu0 0
      %5821 = vmatpush1.bf16.msra.mxu0 0
      %5822 = vmatprep.subr.bf16.mxu0 0
      %5823 = vmatpush1.bf16.msra.mxu0 0
      %5824 = vmatprep.mubr.bf16.mxu0 0
      %5825 = vmatmul.mubr.bf16.gmra.mrb[0].mxu0 %v5643
      %v5826 = vpop.f32.mrb[0].mxu0
      %v5827 = vadd.f32 0.0, %v5826
      %v5828 = vpop.f32.mrb[0].mxu0
      %v5829 = vadd.f32 0.0, %v5828
      %v5830 = vpop.f32.mrb[0].mxu0
      %v5831 = vpop.f32.mrb[0].mxu0
      %5832 = vdwg.mxu0
      %v5833 = vadd.f32 %v5605, %v5704
      %v5834 = vadd.f32 %v5606, %v5706
      %v5835 = vadd.f32 %v5607, %v5745
      %v5836 = vadd.f32 %v5608, %v5747
      %v5837 = vadd.f32 %v5609, %v5786
      %v5838 = vadd.f32 %v5610, %v5788
      %v5839 = vadd.f32 %v5611, %v5827
      %v5840 = vadd.f32 %v5612, %v5829
      %s5841 = scalar_lea.vmem %s343, 96
      %v5842 = vld [vmem:[%s5841] sm:$0xf]
      %5843 = vrot.lane.b32.xlu0 %v383, 36
      %v5844 = vpop.permute.xlu0 %5843
      %5845 = vrot.lane.b32.xlu0 %v382, 36
      %v5846 = vpop.permute.xlu0 %5845
      %5847 = vrot.lane.b32.xlu0 %v384, 36
      %v5848 = vpop.permute.xlu0 %5847
      %5849 = vrot.lane.b32.xlu0 %v392, 36
      %v5850 = vpop.permute.xlu0 %5849
      %5851 = vrot.lane.b32.xlu0 %v400, 36
      %v5852 = vpop.permute.xlu0 %5851
      %5853 = vrot.lane.b32.xlu0 %v399, 36
      %v5854 = vpop.permute.xlu0 %5853
      %5855 = vrot.lane.b32.xlu0 %v401, 36
      %v5856 = vpop.permute.xlu0 %5855
      %5857 = vrot.lane.b32.xlu0 %v409, 36
      %v5858 = vpop.permute.xlu0 %5857
      %5859 = vrot.lane.b32.xlu0 %v410, 36
      %v5860 = vpop.permute.xlu0 %5859
      %vm5861 = vcmask 293888
      %v5862 = vsel %vm5861, %v5844, %v5846
      %v5863 = vsel %vm5861, %v5846, %v5848
      %v5864 = vsel %vm5861, %v5848, %v5850
      %v5865 = vsel %vm5861, %v5850, %v5852
      %v5866 = vsel %vm5861, %v5852, %v5854
      %v5867 = vsel %vm5861, %v5854, %v5856
      %v5868 = vsel %vm5861, %v5856, %v5858
      %v5869 = vsel %vm5861, %v5858, %v5860
      %v5871 = vsel %vm441, %v5842, 0
      %v5874 = vsel %vm445, %v5862, 0
      %v5877 = vsel %vm445, %v5863, 0
      %v5880 = vsel %vm445, %v5864, 0
      %v5883 = vsel %vm445, %v5865, 0
      %v5886 = vsel %vm445, %v5866, 0
      %v5889 = vsel %vm445, %v5867, 0
      %v5892 = vsel %vm445, %v5868, 0
      %v5895 = vsel %vm445, %v5869, 0
      %5897 = vmatprep.subr.bf16.mxu0 %v5877
      %5898 = vmatpush1.bf16.msra.mxu0 %v5874
      %5899 = vmatprep.subr.bf16.mxu0 0
      %5900 = vmatpush1.bf16.msra.mxu0 0
      %5901 = vmatprep.subr.bf16.mxu0 0
      %5902 = vmatpush1.bf16.msra.mxu0 0
      %5903 = vmatprep.subr.bf16.mxu0 0
      %5904 = vmatpush1.bf16.msra.mxu0 0
      %5905 = vmatprep.subr.bf16.mxu0 0
      %5906 = vmatpush1.bf16.msra.mxu0 0
      %5907 = vmatprep.subr.bf16.mxu0 0
      %5908 = vmatpush1.bf16.msra.mxu0 0
      %5909 = vmatprep.subr.bf16.mxu0 0
      %5910 = vmatpush1.bf16.msra.mxu0 0
      %5911 = vmatprep.subr.bf16.mxu0 0
      %5912 = vmatpush1.bf16.msra.mxu0 0
      %5913 = vmatprep.subr.bf16.mxu0 0
      %5914 = vmatpush1.bf16.msra.mxu0 0
      %5915 = vmatprep.subr.bf16.mxu0 0
      %5916 = vmatpush1.bf16.msra.mxu0 0
      %5917 = vmatprep.subr.bf16.mxu0 0
      %5918 = vmatpush1.bf16.msra.mxu0 0
      %5919 = vmatprep.subr.bf16.mxu0 0
      %5920 = vmatpush1.bf16.msra.mxu0 0
      %5921 = vmatprep.subr.bf16.mxu0 0
      %5922 = vmatpush1.bf16.msra.mxu0 0
      %5923 = vmatprep.subr.bf16.mxu0 0
      %5924 = vmatpush1.bf16.msra.mxu0 0
      %5925 = vmatprep.subr.bf16.mxu0 0
      %5926 = vmatpush1.bf16.msra.mxu0 0
      %5927 = vmatprep.subr.bf16.mxu0 0
      %5928 = vmatpush1.bf16.msra.mxu0 0
      %5929 = vmatprep.mubr.bf16.mxu0 0
      %5930 = vmatmul.mubr.bf16.gmra.mrb[0].mxu0 %v5871
      %v5931 = vpop.f32.mrb[0].mxu0
      %v5932 = vadd.f32 0.0, %v5931
      %v5933 = vpop.f32.mrb[0].mxu0
      %v5934 = vadd.f32 0.0, %v5933
      %v5935 = vpop.f32.mrb[0].mxu0
      %v5936 = vpop.f32.mrb[0].mxu0
      %5937 = vdwg.mxu0
      %5938 = vmatprep.subr.bf16.mxu0 %v5883
      %5939 = vmatpush1.bf16.msra.mxu0 %v5880
      %5940 = vmatprep.subr.bf16.mxu0 0
      %5941 = vmatpush1.bf16.msra.mxu0 0
      %5942 = vmatprep.subr.bf16.mxu0 0
      %5943 = vmatpush1.bf16.msra.mxu0 0
      %5944 = vmatprep.subr.bf16.mxu0 0
      %5945 = vmatpush1.bf16.msra.mxu0 0
      %5946 = vmatprep.subr.bf16.mxu0 0
      %5947 = vmatpush1.bf16.msra.mxu0 0
      %5948 = vmatprep.subr.bf16.mxu0 0
      %5949 = vmatpush1.bf16.msra.mxu0 0
      %5950 = vmatprep.subr.bf16.mxu0 0
      %5951 = vmatpush1.bf16.msra.mxu0 0
      %5952 = vmatprep.subr.bf16.mxu0 0
      %5953 = vmatpush1.bf16.msra.mxu0 0
      %5954 = vmatprep.subr.bf16.mxu0 0
      %5955 = vmatpush1.bf16.msra.mxu0 0
      %5956 = vmatprep.subr.bf16.mxu0 0
      %5957 = vmatpush1.bf16.msra.mxu0 0
      %5958 = vmatprep.subr.bf16.mxu0 0
      %5959 = vmatpush1.bf16.msra.mxu0 0
      %5960 = vmatprep.subr.bf16.mxu0 0
      %5961 = vmatpush1.bf16.msra.mxu0 0
      %5962 = vmatprep.subr.bf16.mxu0 0
      %5963 = vmatpush1.bf16.msra.mxu0 0
      %5964 = vmatprep.subr.bf16.mxu0 0
      %5965 = vmatpush1.bf16.msra.mxu0 0
      %5966 = vmatprep.subr.bf16.mxu0 0
      %5967 = vmatpush1.bf16.msra.mxu0 0
      %5968 = vmatprep.subr.bf16.mxu0 0
      %5969 = vmatpush1.bf16.msra.mxu0 0
      %5970 = vmatprep.mubr.bf16.mxu0 0
      %5971 = vmatmul.mubr.bf16.gmra.mrb[0].mxu0 %v5871
      %v5972 = vpop.f32.mrb[0].mxu0
      %v5973 = vadd.f32 0.0, %v5972
      %v5974 = vpop.f32.mrb[0].mxu0
      %v5975 = vadd.f32 0.0, %v5974
      %v5976 = vpop.f32.mrb[0].mxu0
      %v5977 = vpop.f32.mrb[0].mxu0
      %5978 = vdwg.mxu0
      %5979 = vmatprep.subr.bf16.mxu0 %v5889
      %5980 = vmatpush1.bf16.msra.mxu0 %v5886
      %5981 = vmatprep.subr.bf16.mxu0 0
      %5982 = vmatpush1.bf16.msra.mxu0 0
      %5983 = vmatprep.subr.bf16.mxu0 0
      %5984 = vmatpush1.bf16.msra.mxu0 0
      %5985 = vmatprep.subr.bf16.mxu0 0
      %5986 = vmatpush1.bf16.msra.mxu0 0
      %5987 = vmatprep.subr.bf16.mxu0 0
      %5988 = vmatpush1.bf16.msra.mxu0 0
      %5989 = vmatprep.subr.bf16.mxu0 0
      %5990 = vmatpush1.bf16.msra.mxu0 0
      %5991 = vmatprep.subr.bf16.mxu0 0
      %5992 = vmatpush1.bf16.msra.mxu0 0
      %5993 = vmatprep.subr.bf16.mxu0 0
      %5994 = vmatpush1.bf16.msra.mxu0 0
      %5995 = vmatprep.subr.bf16.mxu0 0
      %5996 = vmatpush1.bf16.msra.mxu0 0
      %5997 = vmatprep.subr.bf16.mxu0 0
      %5998 = vmatpush1.bf16.msra.mxu0 0
      %5999 = vmatprep.subr.bf16.mxu0 0
      %6000 = vmatpush1.bf16.msra.mxu0 0
      %6001 = vmatprep.subr.bf16.mxu0 0
      %6002 = vmatpush1.bf16.msra.mxu0 0
      %6003 = vmatprep.subr.bf16.mxu0 0
      %6004 = vmatpush1.bf16.msra.mxu0 0
      %6005 = vmatprep.subr.bf16.mxu0 0
      %6006 = vmatpush1.bf16.msra.mxu0 0
      %6007 = vmatprep.subr.bf16.mxu0 0
      %6008 = vmatpush1.bf16.msra.mxu0 0
      %6009 = vmatprep.subr.bf16.mxu0 0
      %6010 = vmatpush1.bf16.msra.mxu0 0
      %6011 = vmatprep.mubr.bf16.mxu0 0
      %6012 = vmatmul.mubr.bf16.gmra.mrb[0].mxu0 %v5871
      %v6013 = vpop.f32.mrb[0].mxu0
      %v6014 = vadd.f32 0.0, %v6013
      %v6015 = vpop.f32.mrb[0].mxu0
      %v6016 = vadd.f32 0.0, %v6015
      %v6017 = vpop.f32.mrb[0].mxu0
      %v6018 = vpop.f32.mrb[0].mxu0
      %6019 = vdwg.mxu0
      %6020 = vmatprep.subr.bf16.mxu0 %v5895
      %6021 = vmatpush1.bf16.msra.mxu0 %v5892
      %6022 = vmatprep.subr.bf16.mxu0 0
      %6023 = vmatpush1.bf16.msra.mxu0 0
      %6024 = vmatprep.subr.bf16.mxu0 0
      %6025 = vmatpush1.bf16.msra.mxu0 0
      %6026 = vmatprep.subr.bf16.mxu0 0
      %6027 = vmatpush1.bf16.msra.mxu0 0
      %6028 = vmatprep.subr.bf16.mxu0 0
      %6029 = vmatpush1.bf16.msra.mxu0 0
      %6030 = vmatprep.subr.bf16.mxu0 0
      %6031 = vmatpush1.bf16.msra.mxu0 0
      %6032 = vmatprep.subr.bf16.mxu0 0
      %6033 = vmatpush1.bf16.msra.mxu0 0
      %6034 = vmatprep.subr.bf16.mxu0 0
      %6035 = vmatpush1.bf16.msra.mxu0 0
      %6036 = vmatprep.subr.bf16.mxu0 0
      %6037 = vmatpush1.bf16.msra.mxu0 0
      %6038 = vmatprep.subr.bf16.mxu0 0
      %6039 = vmatpush1.bf16.msra.mxu0 0
      %6040 = vmatprep.subr.bf16.mxu0 0
      %6041 = vmatpush1.bf16.msra.mxu0 0
      %6042 = vmatprep.subr.bf16.mxu0 0
      %6043 = vmatpush1.bf16.msra.mxu0 0
      %6044 = vmatprep.subr.bf16.mxu0 0
      %6045 = vmatpush1.bf16.msra.mxu0 0
      %6046 = vmatprep.subr.bf16.mxu0 0
      %6047 = vmatpush1.bf16.msra.mxu0 0
      %6048 = vmatprep.subr.bf16.mxu0 0
      %6049 = vmatpush1.bf16.msra.mxu0 0
      %6050 = vmatprep.subr.bf16.mxu0 0
      %6051 = vmatpush1.bf16.msra.mxu0 0
      %6052 = vmatprep.mubr.bf16.mxu0 0
      %6053 = vmatmul.mubr.bf16.gmra.mrb[0].mxu0 %v5871
      %v6054 = vpop.f32.mrb[0].mxu0
      %v6055 = vadd.f32 0.0, %v6054
      %v6056 = vpop.f32.mrb[0].mxu0
      %v6057 = vadd.f32 0.0, %v6056
      %v6058 = vpop.f32.mrb[0].mxu0
      %v6059 = vpop.f32.mrb[0].mxu0
      %6060 = vdwg.mxu0
      %v6061 = vadd.f32 %v5833, %v5932
      %v6062 = vadd.f32 %v5834, %v5934
      %v6063 = vadd.f32 %v5835, %v5973
      %v6064 = vadd.f32 %v5836, %v5975
      %v6065 = vadd.f32 %v5837, %v6014
      %v6066 = vadd.f32 %v5838, %v6016
      %v6067 = vadd.f32 %v5839, %v6055
      %v6068 = vadd.f32 %v5840, %v6057
      %s6069 = scalar_lea.vmem %s343, 100
      %v6070 = vld [vmem:[%s6069] sm:$0xf]
      %6071 = vrot.lane.b32.xlu0 %v383, 35
      %v6072 = vpop.permute.xlu0 %6071
      %6073 = vrot.lane.b32.xlu0 %v382, 35
      %v6074 = vpop.permute.xlu0 %6073
      %6075 = vrot.lane.b32.xlu0 %v384, 35
      %v6076 = vpop.permute.xlu0 %6075
      %6077 = vrot.lane.b32.xlu0 %v392, 35
      %v6078 = vpop.permute.xlu0 %6077
      %6079 = vrot.lane.b32.xlu0 %v400, 35
      %v6080 = vpop.permute.xlu0 %6079
      %6081 = vrot.lane.b32.xlu0 %v399, 35
      %v6082 = vpop.permute.xlu0 %6081
      %6083 = vrot.lane.b32.xlu0 %v401, 35
      %v6084 = vpop.permute.xlu0 %6083
      %6085 = vrot.lane.b32.xlu0 %v409, 35
      %v6086 = vpop.permute.xlu0 %6085
      %6087 = vrot.lane.b32.xlu0 %v410, 35
      %v6088 = vpop.permute.xlu0 %6087
      %vm6089 = vcmask 285696
      %v6090 = vsel %vm6089, %v6072, %v6074
      %v6091 = vsel %vm6089, %v6074, %v6076
      %v6092 = vsel %vm6089, %v6076, %v6078
      %v6093 = vsel %vm6089, %v6078, %v6080
      %v6094 = vsel %vm6089, %v6080, %v6082
      %v6095 = vsel %vm6089, %v6082, %v6084
      %v6096 = vsel %vm6089, %v6084, %v6086
      %v6097 = vsel %vm6089, %v6086, %v6088
      %v6099 = vsel %vm441, %v6070, 0
      %v6102 = vsel %vm445, %v6090, 0
      %v6105 = vsel %vm445, %v6091, 0
      %v6108 = vsel %vm445, %v6092, 0
      %v6111 = vsel %vm445, %v6093, 0
      %v6114 = vsel %vm445, %v6094, 0
      %v6117 = vsel %vm445, %v6095, 0
      %v6120 = vsel %vm445, %v6096, 0
      %v6123 = vsel %vm445, %v6097, 0
      %6125 = vmatprep.subr.bf16.mxu0 %v6105
      %6126 = vmatpush1.bf16.msra.mxu0 %v6102
      %6127 = vmatprep.subr.bf16.mxu0 0
      %6128 = vmatpush1.bf16.msra.mxu0 0
      %6129 = vmatprep.subr.bf16.mxu0 0
      %6130 = vmatpush1.bf16.msra.mxu0 0
      %6131 = vmatprep.subr.bf16.mxu0 0
      %6132 = vmatpush1.bf16.msra.mxu0 0
      %6133 = vmatprep.subr.bf16.mxu0 0
      %6134 = vmatpush1.bf16.msra.mxu0 0
      %6135 = vmatprep.subr.bf16.mxu0 0
      %6136 = vmatpush1.bf16.msra.mxu0 0
      %6137 = vmatprep.subr.bf16.mxu0 0
      %6138 = vmatpush1.bf16.msra.mxu0 0
      %6139 = vmatprep.subr.bf16.mxu0 0
      %6140 = vmatpush1.bf16.msra.mxu0 0
      %6141 = vmatprep.subr.bf16.mxu0 0
      %6142 = vmatpush1.bf16.msra.mxu0 0
      %6143 = vmatprep.subr.bf16.mxu0 0
      %6144 = vmatpush1.bf16.msra.mxu0 0
      %6145 = vmatprep.subr.bf16.mxu0 0
      %6146 = vmatpush1.bf16.msra.mxu0 0
      %6147 = vmatprep.subr.bf16.mxu0 0
      %6148 = vmatpush1.bf16.msra.mxu0 0
      %6149 = vmatprep.subr.bf16.mxu0 0
      %6150 = vmatpush1.bf16.msra.mxu0 0
      %6151 = vmatprep.subr.bf16.mxu0 0
      %6152 = vmatpush1.bf16.msra.mxu0 0
      %6153 = vmatprep.subr.bf16.mxu0 0
      %6154 = vmatpush1.bf16.msra.mxu0 0
      %6155 = vmatprep.subr.bf16.mxu0 0
      %6156 = vmatpush1.bf16.msra.mxu0 0
      %6157 = vmatprep.mubr.bf16.mxu0 0
      %6158 = vmatmul.mubr.bf16.gmra.mrb[0].mxu0 %v6099
      %v6159 = vpop.f32.mrb[0].mxu0
      %v6160 = vadd.f32 0.0, %v6159
      %v6161 = vpop.f32.mrb[0].mxu0
      %v6162 = vadd.f32 0.0, %v6161
      %v6163 = vpop.f32.mrb[0].mxu0
      %v6164 = vpop.f32.mrb[0].mxu0
      %6165 = vdwg.mxu0
      %6166 = vmatprep.subr.bf16.mxu0 %v6111
      %6167 = vmatpush1.bf16.msra.mxu0 %v6108
      %6168 = vmatprep.subr.bf16.mxu0 0
      %6169 = vmatpush1.bf16.msra.mxu0 0
      %6170 = vmatprep.subr.bf16.mxu0 0
      %6171 = vmatpush1.bf16.msra.mxu0 0
      %6172 = vmatprep.subr.bf16.mxu0 0
      %6173 = vmatpush1.bf16.msra.mxu0 0
      %6174 = vmatprep.subr.bf16.mxu0 0
      %6175 = vmatpush1.bf16.msra.mxu0 0
      %6176 = vmatprep.subr.bf16.mxu0 0
      %6177 = vmatpush1.bf16.msra.mxu0 0
      %6178 = vmatprep.subr.bf16.mxu0 0
      %6179 = vmatpush1.bf16.msra.mxu0 0
      %6180 = vmatprep.subr.bf16.mxu0 0
      %6181 = vmatpush1.bf16.msra.mxu0 0
      %6182 = vmatprep.subr.bf16.mxu0 0
      %6183 = vmatpush1.bf16.msra.mxu0 0
      %6184 = vmatprep.subr.bf16.mxu0 0
      %6185 = vmatpush1.bf16.msra.mxu0 0
      %6186 = vmatprep.subr.bf16.mxu0 0
      %6187 = vmatpush1.bf16.msra.mxu0 0
      %6188 = vmatprep.subr.bf16.mxu0 0
      %6189 = vmatpush1.bf16.msra.mxu0 0
      %6190 = vmatprep.subr.bf16.mxu0 0
      %6191 = vmatpush1.bf16.msra.mxu0 0
      %6192 = vmatprep.subr.bf16.mxu0 0
      %6193 = vmatpush1.bf16.msra.mxu0 0
      %6194 = vmatprep.subr.bf16.mxu0 0
      %6195 = vmatpush1.bf16.msra.mxu0 0
      %6196 = vmatprep.subr.bf16.mxu0 0
      %6197 = vmatpush1.bf16.msra.mxu0 0
      %6198 = vmatprep.mubr.bf16.mxu0 0
      %6199 = vmatmul.mubr.bf16.gmra.mrb[0].mxu0 %v6099
      %v6200 = vpop.f32.mrb[0].mxu0
      %v6201 = vadd.f32 0.0, %v6200
      %v6202 = vpop.f32.mrb[0].mxu0
      %v6203 = vadd.f32 0.0, %v6202
      %v6204 = vpop.f32.mrb[0].mxu0
      %v6205 = vpop.f32.mrb[0].mxu0
      %6206 = vdwg.mxu0
      %6207 = vmatprep.subr.bf16.mxu0 %v6117
      %6208 = vmatpush1.bf16.msra.mxu0 %v6114
      %6209 = vmatprep.subr.bf16.mxu0 0
      %6210 = vmatpush1.bf16.msra.mxu0 0
      %6211 = vmatprep.subr.bf16.mxu0 0
      %6212 = vmatpush1.bf16.msra.mxu0 0
      %6213 = vmatprep.subr.bf16.mxu0 0
      %6214 = vmatpush1.bf16.msra.mxu0 0
      %6215 = vmatprep.subr.bf16.mxu0 0
      %6216 = vmatpush1.bf16.msra.mxu0 0
      %6217 = vmatprep.subr.bf16.mxu0 0
      %6218 = vmatpush1.bf16.msra.mxu0 0
      %6219 = vmatprep.subr.bf16.mxu0 0
      %6220 = vmatpush1.bf16.msra.mxu0 0
      %6221 = vmatprep.subr.bf16.mxu0 0
      %6222 = vmatpush1.bf16.msra.mxu0 0
      %6223 = vmatprep.subr.bf16.mxu0 0
      %6224 = vmatpush1.bf16.msra.mxu0 0
      %6225 = vmatprep.subr.bf16.mxu0 0
      %6226 = vmatpush1.bf16.msra.mxu0 0
      %6227 = vmatprep.subr.bf16.mxu0 0
      %6228 = vmatpush1.bf16.msra.mxu0 0
      %6229 = vmatprep.subr.bf16.mxu0 0
      %6230 = vmatpush1.bf16.msra.mxu0 0
      %6231 = vmatprep.subr.bf16.mxu0 0
      %6232 = vmatpush1.bf16.msra.mxu0 0
      %6233 = vmatprep.subr.bf16.mxu0 0
      %6234 = vmatpush1.bf16.msra.mxu0 0
      %6235 = vmatprep.subr.bf16.mxu0 0
      %6236 = vmatpush1.bf16.msra.mxu0 0
      %6237 = vmatprep.subr.bf16.mxu0 0
      %6238 = vmatpush1.bf16.msra.mxu0 0
      %6239 = vmatprep.mubr.bf16.mxu0 0
      %6240 = vmatmul.mubr.bf16.gmra.mrb[0].mxu0 %v6099
      %v6241 = vpop.f32.mrb[0].mxu0
      %v6242 = vadd.f32 0.0, %v6241
      %v6243 = vpop.f32.mrb[0].mxu0
      %v6244 = vadd.f32 0.0, %v6243
      %v6245 = vpop.f32.mrb[0].mxu0
      %v6246 = vpop.f32.mrb[0].mxu0
      %6247 = vdwg.mxu0
      %6248 = vmatprep.subr.bf16.mxu0 %v6123
      %6249 = vmatpush1.bf16.msra.mxu0 %v6120
      %6250 = vmatprep.subr.bf16.mxu0 0
      %6251 = vmatpush1.bf16.msra.mxu0 0
      %6252 = vmatprep.subr.bf16.mxu0 0
      %6253 = vmatpush1.bf16.msra.mxu0 0
      %6254 = vmatprep.subr.bf16.mxu0 0
      %6255 = vmatpush1.bf16.msra.mxu0 0
      %6256 = vmatprep.subr.bf16.mxu0 0
      %6257 = vmatpush1.bf16.msra.mxu0 0
      %6258 = vmatprep.subr.bf16.mxu0 0
      %6259 = vmatpush1.bf16.msra.mxu0 0
      %6260 = vmatprep.subr.bf16.mxu0 0
      %6261 = vmatpush1.bf16.msra.mxu0 0
      %6262 = vmatprep.subr.bf16.mxu0 0
      %6263 = vmatpush1.bf16.msra.mxu0 0
      %6264 = vmatprep.subr.bf16.mxu0 0
      %6265 = vmatpush1.bf16.msra.mxu0 0
      %6266 = vmatprep.subr.bf16.mxu0 0
      %6267 = vmatpush1.bf16.msra.mxu0 0
      %6268 = vmatprep.subr.bf16.mxu0 0
      %6269 = vmatpush1.bf16.msra.mxu0 0
      %6270 = vmatprep.subr.bf16.mxu0 0
      %6271 = vmatpush1.bf16.msra.mxu0 0
      %6272 = vmatprep.subr.bf16.mxu0 0
      %6273 = vmatpush1.bf16.msra.mxu0 0
      %6274 = vmatprep.subr.bf16.mxu0 0
      %6275 = vmatpush1.bf16.msra.mxu0 0
      %6276 = vmatprep.subr.bf16.mxu0 0
      %6277 = vmatpush1.bf16.msra.mxu0 0
      %6278 = vmatprep.subr.bf16.mxu0 0
      %6279 = vmatpush1.bf16.msra.mxu0 0
      %6280 = vmatprep.mubr.bf16.mxu0 0
      %6281 = vmatmul.mubr.bf16.gmra.mrb[0].mxu0 %v6099
      %v6282 = vpop.f32.mrb[0].mxu0
      %v6283 = vadd.f32 0.0, %v6282
      %v6284 = vpop.f32.mrb[0].mxu0
      %v6285 = vadd.f32 0.0, %v6284
      %v6286 = vpop.f32.mrb[0].mxu0
      %v6287 = vpop.f32.mrb[0].mxu0
      %6288 = vdwg.mxu0
      %v6289 = vadd.f32 %v6061, %v6160
      %v6290 = vadd.f32 %v6062, %v6162
      %v6291 = vadd.f32 %v6063, %v6201
      %v6292 = vadd.f32 %v6064, %v6203
      %v6293 = vadd.f32 %v6065, %v6242
      %v6294 = vadd.f32 %v6066, %v6244
      %v6295 = vadd.f32 %v6067, %v6283
      %v6296 = vadd.f32 %v6068, %v6285
      %s6297 = scalar_lea.vmem %s343, 104
      %v6298 = vld [vmem:[%s6297] sm:$0xf]
      %6299 = vrot.lane.b32.xlu0 %v383, 34
      %v6300 = vpop.permute.xlu0 %6299
      %6301 = vrot.lane.b32.xlu0 %v382, 34
      %v6302 = vpop.permute.xlu0 %6301
      %6303 = vrot.lane.b32.xlu0 %v384, 34
      %v6304 = vpop.permute.xlu0 %6303
      %6305 = vrot.lane.b32.xlu0 %v392, 34
      %v6306 = vpop.permute.xlu0 %6305
      %6307 = vrot.lane.b32.xlu0 %v400, 34
      %v6308 = vpop.permute.xlu0 %6307
      %6309 = vrot.lane.b32.xlu0 %v399, 34
      %v6310 = vpop.permute.xlu0 %6309
      %6311 = vrot.lane.b32.xlu0 %v401, 34
      %v6312 = vpop.permute.xlu0 %6311
      %6313 = vrot.lane.b32.xlu0 %v409, 34
      %v6314 = vpop.permute.xlu0 %6313
      %6315 = vrot.lane.b32.xlu0 %v410, 34
      %v6316 = vpop.permute.xlu0 %6315
      %vm6317 = vcmask 277504
      %v6318 = vsel %vm6317, %v6300, %v6302
      %v6319 = vsel %vm6317, %v6302, %v6304
      %v6320 = vsel %vm6317, %v6304, %v6306
      %v6321 = vsel %vm6317, %v6306, %v6308
      %v6322 = vsel %vm6317, %v6308, %v6310
      %v6323 = vsel %vm6317, %v6310, %v6312
      %v6324 = vsel %vm6317, %v6312, %v6314
      %v6325 = vsel %vm6317, %v6314, %v6316
      %v6327 = vsel %vm441, %v6298, 0
      %v6330 = vsel %vm445, %v6318, 0
      %v6333 = vsel %vm445, %v6319, 0
      %v6336 = vsel %vm445, %v6320, 0
      %v6339 = vsel %vm445, %v6321, 0
      %v6342 = vsel %vm445, %v6322, 0
      %v6345 = vsel %vm445, %v6323, 0
      %v6348 = vsel %vm445, %v6324, 0
      %v6351 = vsel %vm445, %v6325, 0
      %6353 = vmatprep.subr.bf16.mxu0 %v6333
      %6354 = vmatpush1.bf16.msra.mxu0 %v6330
      %6355 = vmatprep.subr.bf16.mxu0 0
      %6356 = vmatpush1.bf16.msra.mxu0 0
      %6357 = vmatprep.subr.bf16.mxu0 0
      %6358 = vmatpush1.bf16.msra.mxu0 0
      %6359 = vmatprep.subr.bf16.mxu0 0
      %6360 = vmatpush1.bf16.msra.mxu0 0
      %6361 = vmatprep.subr.bf16.mxu0 0
      %6362 = vmatpush1.bf16.msra.mxu0 0
      %6363 = vmatprep.subr.bf16.mxu0 0
      %6364 = vmatpush1.bf16.msra.mxu0 0
      %6365 = vmatprep.subr.bf16.mxu0 0
      %6366 = vmatpush1.bf16.msra.mxu0 0
      %6367 = vmatprep.subr.bf16.mxu0 0
      %6368 = vmatpush1.bf16.msra.mxu0 0
      %6369 = vmatprep.subr.bf16.mxu0 0
      %6370 = vmatpush1.bf16.msra.mxu0 0
      %6371 = vmatprep.subr.bf16.mxu0 0
      %6372 = vmatpush1.bf16.msra.mxu0 0
      %6373 = vmatprep.subr.bf16.mxu0 0
      %6374 = vmatpush1.bf16.msra.mxu0 0
      %6375 = vmatprep.subr.bf16.mxu0 0
      %6376 = vmatpush1.bf16.msra.mxu0 0
      %6377 = vmatprep.subr.bf16.mxu0 0
      %6378 = vmatpush1.bf16.msra.mxu0 0
      %6379 = vmatprep.subr.bf16.mxu0 0
      %6380 = vmatpush1.bf16.msra.mxu0 0
      %6381 = vmatprep.subr.bf16.mxu0 0
      %6382 = vmatpush1.bf16.msra.mxu0 0
      %6383 = vmatprep.subr.bf16.mxu0 0
      %6384 = vmatpush1.bf16.msra.mxu0 0
      %6385 = vmatprep.mubr.bf16.mxu0 0
      %6386 = vmatmul.mubr.bf16.gmra.mrb[0].mxu0 %v6327
      %v6387 = vpop.f32.mrb[0].mxu0
      %v6388 = vadd.f32 0.0, %v6387
      %v6389 = vpop.f32.mrb[0].mxu0
      %v6390 = vadd.f32 0.0, %v6389
      %v6391 = vpop.f32.mrb[0].mxu0
      %v6392 = vpop.f32.mrb[0].mxu0
      %6393 = vdwg.mxu0
      %6394 = vmatprep.subr.bf16.mxu0 %v6339
      %6395 = vmatpush1.bf16.msra.mxu0 %v6336
      %6396 = vmatprep.subr.bf16.mxu0 0
      %6397 = vmatpush1.bf16.msra.mxu0 0
      %6398 = vmatprep.subr.bf16.mxu0 0
      %6399 = vmatpush1.bf16.msra.mxu0 0
      %6400 = vmatprep.subr.bf16.mxu0 0
      %6401 = vmatpush1.bf16.msra.mxu0 0
      %6402 = vmatprep.subr.bf16.mxu0 0
      %6403 = vmatpush1.bf16.msra.mxu0 0
      %6404 = vmatprep.subr.bf16.mxu0 0
      %6405 = vmatpush1.bf16.msra.mxu0 0
      %6406 = vmatprep.subr.bf16.mxu0 0
      %6407 = vmatpush1.bf16.msra.mxu0 0
      %6408 = vmatprep.subr.bf16.mxu0 0
      %6409 = vmatpush1.bf16.msra.mxu0 0
      %6410 = vmatprep.subr.bf16.mxu0 0
      %6411 = vmatpush1.bf16.msra.mxu0 0
      %6412 = vmatprep.subr.bf16.mxu0 0
      %6413 = vmatpush1.bf16.msra.mxu0 0
      %6414 = vmatprep.subr.bf16.mxu0 0
      %6415 = vmatpush1.bf16.msra.mxu0 0
      %6416 = vmatprep.subr.bf16.mxu0 0
      %6417 = vmatpush1.bf16.msra.mxu0 0
      %6418 = vmatprep.subr.bf16.mxu0 0
      %6419 = vmatpush1.bf16.msra.mxu0 0
      %6420 = vmatprep.subr.bf16.mxu0 0
      %6421 = vmatpush1.bf16.msra.mxu0 0
      %6422 = vmatprep.subr.bf16.mxu0 0
      %6423 = vmatpush1.bf16.msra.mxu0 0
      %6424 = vmatprep.subr.bf16.mxu0 0
      %6425 = vmatpush1.bf16.msra.mxu0 0
      %6426 = vmatprep.mubr.bf16.mxu0 0
      %6427 = vmatmul.mubr.bf16.gmra.mrb[0].mxu0 %v6327
      %v6428 = vpop.f32.mrb[0].mxu0
      %v6429 = vadd.f32 0.0, %v6428
      %v6430 = vpop.f32.mrb[0].mxu0
      %v6431 = vadd.f32 0.0, %v6430
      %v6432 = vpop.f32.mrb[0].mxu0
      %v6433 = vpop.f32.mrb[0].mxu0
      %6434 = vdwg.mxu0
      %6435 = vmatprep.subr.bf16.mxu0 %v6345
      %6436 = vmatpush1.bf16.msra.mxu0 %v6342
      %6437 = vmatprep.subr.bf16.mxu0 0
      %6438 = vmatpush1.bf16.msra.mxu0 0
      %6439 = vmatprep.subr.bf16.mxu0 0
      %6440 = vmatpush1.bf16.msra.mxu0 0
      %6441 = vmatprep.subr.bf16.mxu0 0
      %6442 = vmatpush1.bf16.msra.mxu0 0
      %6443 = vmatprep.subr.bf16.mxu0 0
      %6444 = vmatpush1.bf16.msra.mxu0 0
      %6445 = vmatprep.subr.bf16.mxu0 0
      %6446 = vmatpush1.bf16.msra.mxu0 0
      %6447 = vmatprep.subr.bf16.mxu0 0
      %6448 = vmatpush1.bf16.msra.mxu0 0
      %6449 = vmatprep.subr.bf16.mxu0 0
      %6450 = vmatpush1.bf16.msra.mxu0 0
      %6451 = vmatprep.subr.bf16.mxu0 0
      %6452 = vmatpush1.bf16.msra.mxu0 0
      %6453 = vmatprep.subr.bf16.mxu0 0
      %6454 = vmatpush1.bf16.msra.mxu0 0
      %6455 = vmatprep.subr.bf16.mxu0 0
      %6456 = vmatpush1.bf16.msra.mxu0 0
      %6457 = vmatprep.subr.bf16.mxu0 0
      %6458 = vmatpush1.bf16.msra.mxu0 0
      %6459 = vmatprep.subr.bf16.mxu0 0
      %6460 = vmatpush1.bf16.msra.mxu0 0
      %6461 = vmatprep.subr.bf16.mxu0 0
      %6462 = vmatpush1.bf16.msra.mxu0 0
      %6463 = vmatprep.subr.bf16.mxu0 0
      %6464 = vmatpush1.bf16.msra.mxu0 0
      %6465 = vmatprep.subr.bf16.mxu0 0
      %6466 = vmatpush1.bf16.msra.mxu0 0
      %6467 = vmatprep.mubr.bf16.mxu0 0
      %6468 = vmatmul.mubr.bf16.gmra.mrb[0].mxu0 %v6327
      %v6469 = vpop.f32.mrb[0].mxu0
      %v6470 = vadd.f32 0.0, %v6469
      %v6471 = vpop.f32.mrb[0].mxu0
      %v6472 = vadd.f32 0.0, %v6471
      %v6473 = vpop.f32.mrb[0].mxu0
      %v6474 = vpop.f32.mrb[0].mxu0
      %6475 = vdwg.mxu0
      %6476 = vmatprep.subr.bf16.mxu0 %v6351
      %6477 = vmatpush1.bf16.msra.mxu0 %v6348
      %6478 = vmatprep.subr.bf16.mxu0 0
      %6479 = vmatpush1.bf16.msra.mxu0 0
      %6480 = vmatprep.subr.bf16.mxu0 0
      %6481 = vmatpush1.bf16.msra.mxu0 0
      %6482 = vmatprep.subr.bf16.mxu0 0
      %6483 = vmatpush1.bf16.msra.mxu0 0
      %6484 = vmatprep.subr.bf16.mxu0 0
      %6485 = vmatpush1.bf16.msra.mxu0 0
      %6486 = vmatprep.subr.bf16.mxu0 0
      %6487 = vmatpush1.bf16.msra.mxu0 0
      %6488 = vmatprep.subr.bf16.mxu0 0
      %6489 = vmatpush1.bf16.msra.mxu0 0
      %6490 = vmatprep.subr.bf16.mxu0 0
      %6491 = vmatpush1.bf16.msra.mxu0 0
      %6492 = vmatprep.subr.bf16.mxu0 0
      %6493 = vmatpush1.bf16.msra.mxu0 0
      %6494 = vmatprep.subr.bf16.mxu0 0
      %6495 = vmatpush1.bf16.msra.mxu0 0
      %6496 = vmatprep.subr.bf16.mxu0 0
      %6497 = vmatpush1.bf16.msra.mxu0 0
      %6498 = vmatprep.subr.bf16.mxu0 0
      %6499 = vmatpush1.bf16.msra.mxu0 0
      %6500 = vmatprep.subr.bf16.mxu0 0
      %6501 = vmatpush1.bf16.msra.mxu0 0
      %6502 = vmatprep.subr.bf16.mxu0 0
      %6503 = vmatpush1.bf16.msra.mxu0 0
      %6504 = vmatprep.subr.bf16.mxu0 0
      %6505 = vmatpush1.bf16.msra.mxu0 0
      %6506 = vmatprep.subr.bf16.mxu0 0
      %6507 = vmatpush1.bf16.msra.mxu0 0
      %6508 = vmatprep.mubr.bf16.mxu0 0
      %6509 = vmatmul.mubr.bf16.gmra.mrb[0].mxu0 %v6327
      %v6510 = vpop.f32.mrb[0].mxu0
      %v6511 = vadd.f32 0.0, %v6510
      %v6512 = vpop.f32.mrb[0].mxu0
      %v6513 = vadd.f32 0.0, %v6512
      %v6514 = vpop.f32.mrb[0].mxu0
      %v6515 = vpop.f32.mrb[0].mxu0
      %6516 = vdwg.mxu0
      %v6517 = vadd.f32 %v6289, %v6388
      %v6518 = vadd.f32 %v6290, %v6390
      %v6519 = vadd.f32 %v6291, %v6429
      %v6520 = vadd.f32 %v6292, %v6431
      %v6521 = vadd.f32 %v6293, %v6470
      %v6522 = vadd.f32 %v6294, %v6472
      %v6523 = vadd.f32 %v6295, %v6511
      %v6524 = vadd.f32 %v6296, %v6513
      %v6525 = vld [vmem:[%s347] sm:$0xff]
      %6527 = vset.pattern.permute.xlu0 0
      %6528 = vperm.xlu0 %6527, %v6525
      %v6529 = vpop.permute.xlu0 %6528
      %v6531 = vadd.f32 %v6517, %v6529
      %v6532 = vadd.f32 %v6518, %v6529
      %v6533 = vadd.f32 %v6519, %v6529
      %v6534 = vadd.f32 %v6520, %v6529
      %v6535 = vadd.f32 %v6521, %v6529
      %v6536 = vadd.f32 %v6522, %v6529
      %v6537 = vadd.f32 %v6523, %v6529
      %v6538 = vadd.f32 %v6524, %v6529
      %6539 = vst [vmem:[%s360] sm:$0xff] %v6531
      %6540 = vst [vmem:[%s360 + $0x8] sm:$0xff] %v6532
      %6541 = vst [vmem:[%s360 + $0x10] sm:$0xff] %v6533
      %6542 = vst [vmem:[%s360 + $0x18] sm:$0xff] %v6534
      %6543 = vst [vmem:[%s360 + $0x20] sm:$0xff] %v6535
      %6544 = vst [vmem:[%s360 + $0x28] sm:$0xff] %v6536
      %6545 = vst [vmem:[%s360 + $0x30] sm:$0xff] %v6537
      %6546 = vst [vmem:[%s360 + $0x38] sm:$0xff] %v6538
      %s6547 = smul.u32 8, %s22
      %p6548 = scmp.lt.s32.totalorder %s20, 1
      %s6549 = scalar_select %p6548, %s20, 1
      %p6550 = scmp.lt.s32.totalorder %s21, 1
      %s6551 = scalar_select %p6550, %s21, 1
      %p6552 = scmp.lt.s32.totalorder %s6547, 7
      %s6553 = scalar_select %p6552, %s6547, 7
      %s6554 = smul.addr %s6551, 8
      %s6555 = sadd.s32 %s6553, %s6554
      %s6556 = smul.addr %s6549, 16
      %s6557 = sadd.s32 %s6555, %s6556
      %s6558 = smul.addr %s6557, 8
      %s6559 = scalar_lea.vmem %s4, %s6558
      // Predicated region
      $region37: #{_forward.1} parent=35 // pred_check
        %p6560 = pneg %p170
      $region38: #{_forward.1} parent=35 // pred_check_branch
        %6562 = sbr.rel (%p6560) target = $region40
      $region39: #{_forward.1} parent=35 // pred_region
        %s6563 = smul.u32 8, %s22
      $region40: #{_forward.1} parent=35 // pred_fallthru
        _
    $region36: #{_forward.1} parent=5 // pred_fallthru
      _
    %p6564 = scmp.le.s32.totalorder 2, %s10
    // Predicated region
    $region41: #{_forward.1} parent=5 // pred_check
      %p6565 = pneg %p6564
    $region42: #{_forward.1} parent=5 // pred_check_branch
      %6567 = sbr.rel (%p6565) target = $region44
    $region43: #{_forward.1} parent=5 // pred_region
      %s6568 = ssub.s32 %s10, 2
      // Predicated region
      $region45: #{_forward.1} parent=43 // pred_check
        %p6569 = pneg %p176
      $region46: #{_forward.1} parent=43 // pred_check_branch
        %6571 = sbr.rel (%p6569) target = $region48
      $region47: #{_forward.1} parent=43 // pred_region
        %s6572 = smul.u32 8, %s25
        %p6573 = scmp.lt.s32.totalorder %s23, 1
        %s6574 = scalar_select %p6573, %s23, 1
        %p6575 = scmp.lt.s32.totalorder %s24, 1
        %s6576 = scalar_select %p6575, %s24, 1
        %p6577 = scmp.lt.s32.totalorder %s6572, 7
        %s6578 = scalar_select %p6577, %s6572, 7
        %s6579 = smul.addr %s6576, 8
        %s6580 = sadd.s32 %s6578, %s6579
        %s6581 = smul.addr %s6574, 16
        %s6582 = sadd.s32 %s6580, %s6581
        %s6583 = smul.addr %s6582, 8
        %s6584 = scalar_lea.vmem %s4, %s6583
      $region48: #{_forward.1} parent=43 // pred_fallthru
        _
    $region44: #{_forward.1} parent=5 // pred_fallthru
      _
  $region6: #{_forward.1} parent=0 // loop_footer
    %s14 = sadd.s32 1, %s10
  $region7: #{_forward.1} parent=0 // loop_footer_branch
    %9 = sbr.rel target = $region3
  $region8: #{_forward.1} parent=0 // loop_exit
    _

</llo_original>
